<compile_context>
chip_gen: v5e
topology: v5e:2x2
jax: 0.10.0
libtpu: 0.0.40
codegen_flags: <defaults>
</compile_context>

<pallas_src>
import functools

import jax
import jax.numpy as jnp
from jax.experimental import pallas as pl
from jax.experimental.pallas import tpu as pltpu

MAX_TM = 256    # M-tile cap (feeds the 256-wide MXU on v6e/v7x; harmless on v5e)
MAX_TK = 2048   # single-step K cap; K is padded/split only beyond this


def _cdiv(a, b):
    return -(-a // b)


def _round_up(x, m):
    return ((x + m - 1) // m) * m


# ----------------------------------------------------------------------------
# Pallas kernel: out = relu?(A @ B + bias), bf16 operands, f32 accumulation.
# The output block's index_map ignores k, so it stays resident in VMEM across
# the K axis and doubles as the accumulator (no scratch, no extra tile copy).
# ----------------------------------------------------------------------------
def _matmul_bias_act_kernel(a_ref, b_ref, bias_ref, o_ref, *, apply_relu, n_k):
    acc = jnp.dot(a_ref[...], b_ref[...], preferred_element_type=jnp.float32)
    if n_k == 1:                         # common case here: one full-K step
        out = acc + bias_ref[...]
        if apply_relu:
            out = jnp.maximum(out, 0.0)
        o_ref[...] = out
    else:
        @pl.when(pl.program_id(2) == 0)
        def _init():
            o_ref[...] = jnp.zeros_like(o_ref)

        o_ref[...] += acc

        @pl.when(pl.program_id(2) == n_k - 1)
        def _finalize():
            out = o_ref[...] + bias_ref[...]
            if apply_relu:
                out = jnp.maximum(out, 0.0)
            o_ref[...] = out


def matmul_bias_act(a, b, bias, apply_relu):
    """relu?(a @ b + bias): bf16 operands, f32 accumulation, tiled on the MXU."""
    M, K = a.shape
    K2, N = b.shape
    assert K == K2
    a = a.astype(jnp.bfloat16)
    b = b.astype(jnp.bfloat16)
    bias2d = bias.reshape(1, N).astype(jnp.float32)

    # K: one full-width block when it fits (no padding at all).  Otherwise K
    # MUST be zero-padded (garbage in a K tail would pollute valid outputs).
    if K <= MAX_TK:
        TK, Kp = K, K
    else:
        TK = MAX_TK
        Kp = _round_up(K, TK)
        a = jnp.pad(a, ((0, 0), (0, Kp - K)))
        b = jnp.pad(b, ((0, Kp - K), (0, 0)))
    n_k = Kp // TK

    # N: every layer here has Cout <= 128 -> a single (full-dim) lane block.
    TN = N if N <= 128 else 128
    assert N <= 128 or N % 128 == 0

    # M: no padded copies.  Full-dim block for small M, balanced multiple-of-16
    # tiles (partial edge block handled by Pallas masking) for large M.
    if M <= MAX_TM:
        TM = M
    else:
        TM = min(_round_up(_cdiv(M, _cdiv(M, MAX_TM)), 16), MAX_TM)

    grid = (_cdiv(M, TM), _cdiv(N, TN), n_k)
    kernel = functools.partial(_matmul_bias_act_kernel,
                               apply_relu=apply_relu, n_k=n_k)
    return pl.pallas_call(
        kernel,
        out_shape=jax.ShapeDtypeStruct((M, N), jnp.float32),
        grid_spec=pltpu.PrefetchScalarGridSpec(
            num_scalar_prefetch=0,
            grid=grid,
            in_specs=[
                pl.BlockSpec((TM, TK), lambda i, j, k: (i, k)),
                pl.BlockSpec((TK, TN), lambda i, j, k: (k, j)),
                pl.BlockSpec((1, TN), lambda i, j, k: (0, j)),
            ],
            out_specs=pl.BlockSpec((TM, TN), lambda i, j, k: (i, j)),
        ),
        compiler_params=pltpu.CompilerParams(
            dimension_semantics=("parallel", "parallel", "arbitrary")),
    )(a, b, bias2d)


# ----------------------------------------------------------------------------
# Conv / ConvTranspose lowered to patch extraction (XLA glue) + the Pallas
# matmul (hot path).
# ----------------------------------------------------------------------------
def _im2col(x, kh, kw, sh, sw, padding):
    """x: (N,H,W,C) -> bf16 patches (N*OH*OW, C*kh*kw); K-order = (c, i, j)."""
    x = x.astype(jnp.bfloat16)
    patches = jax.lax.conv_general_dilated_patches(
        x, filter_shape=(kh, kw), window_strides=(sh, sw), padding=padding,
        dimension_numbers=("NHWC", "HWIO", "NHWC"))
    Nb, OH, OW, KF = patches.shape
    return patches.reshape(Nb * OH * OW, KF), (Nb, OH, OW)


def conv2d(x, w, b, stride, relu):
    """x: NHWC, w: (Cout, Cin, kh, kw) (PyTorch layout), 'VALID' convolution."""
    Cout, Cin, kh, kw = w.shape
    patches, (Nb, OH, OW) = _im2col(x, kh, kw, stride[0], stride[1], "VALID")
    w_mat = jnp.transpose(w, (1, 2, 3, 0)).reshape(Cin * kh * kw, Cout)
    out = matmul_bias_act(patches, w_mat, b, relu)
    return out.reshape(Nb, OH, OW, Cout)


def conv_transpose2d(x, w, b, stride, relu):
    """x: NHWC, w: (Cin, Cout, kh, kw) (PyTorch ConvTranspose2d layout).

    Sub-pixel decomposition: output phase (rh, rw) is a stride-1 full conv of x
    with the sub-kernel w[:, :, rh::sh, rw::sw] (zero-padded to a uniform
    (Lh, Lw) tap grid).  All phases are stacked along the N axis of ONE matmul,
    then interleaved into the full-resolution output.
    """
    Cin, Cout, kh, kw = w.shape
    sh, sw = stride
    Nb, H, W, C = x.shape
    assert C == Cin
    Lh, Lw = _cdiv(kh, sh), _cdiv(kw, sw)
    OH, OW = (H - 1) * sh + kh, (W - 1) * sw + kw

    # Pad kernel so every phase has exactly Lh x Lw taps (zero taps where the
    # original kernel runs out), regroup (taps, phases), flip taps so the full
    # convolution becomes a plain cross-correlation over the im2col patches.
    wp = jnp.zeros((Cin, Cout, sh * Lh, sw * Lw), w.dtype).at[:, :, :kh, :kw].set(w)
    wp = wp.reshape(Cin, Cout, Lh, sh, Lw, sw)           # (ci, co, mh, rh, mw, rw)
    wp = wp[:, :, ::-1, :, ::-1, :]                      # flip taps: a = L-1-m
    wp = jnp.transpose(wp, (0, 2, 4, 3, 5, 1))           # (ci, ah, aw, rh, rw, co)
    w_mat = wp.reshape(Cin * Lh * Lw, sh * sw * Cout)    # K=(c,i,j), N=(rh,rw,co)
    bias_all = jnp.tile(b, sh * sw)

    pad = ((Lh - 1, Lh - 1), (Lw - 1, Lw - 1))           # "full" convolution
    patches, (Nb, Ho, Wo) = _im2col(x, Lh, Lw, 1, 1, pad)
    y = matmul_bias_act(patches, w_mat, bias_all, relu)  # (Nb*Ho*Wo, sh*sw*Cout)
    y = y.reshape(Nb, Ho, Wo, sh, sw, Cout)

    if kh % sh == 0 and kw % sw == 0:
        # Phase interleave is a pure reshape/transpose (Ho*sh == OH, Wo*sw == OW).
        out = jnp.transpose(y, (0, 1, 3, 2, 4, 5)).reshape(Nb, Ho * sh, Wo * sw, Cout)
    else:
        # General case: each phase contributes a (possibly shorter) strided slab.
        out = jnp.zeros((Nb, OH, OW, Cout), y.dtype)
        for rh in range(sh):
            nh = H - 1 + _cdiv(kh - rh, sh)
            for rw in range(sw):
                nw = W - 1 + _cdiv(kw - rw, sw)
                out = out.at[:, rh::sh, rw::sw, :].set(y[:, :nh, :nw, rh, rw, :])
    return out


# ----------------------------------------------------------------------------
# Parameters (deterministic, PyTorch-default-style uniform init)
# ----------------------------------------------------------------------------
def init_params(key):
    def uinit(k, shape, fan_in):
        bound = 1.0 / jnp.sqrt(float(fan_in))
        return jax.random.uniform(k, shape, jnp.float32, -bound, bound)

    ks = jax.random.split(key, 12)
    p = {}
    # encoder
    p["enc1_w"] = uinit(ks[0], (32, 3, 12, 12), 3 * 12 * 12)
    p["enc1_b"] = uinit(ks[1], (32,), 3 * 12 * 12)
    p["enc2_w"] = uinit(ks[2], (64, 32, 8, 8), 32 * 8 * 8)
    p["enc2_b"] = uinit(ks[3], (64,), 32 * 8 * 8)
    p["enc3_w"] = uinit(ks[4], (128, 64, 2, 3), 64 * 2 * 3)
    p["enc3_b"] = uinit(ks[5], (128,), 64 * 2 * 3)
    # decoder (ConvTranspose2d weights are (Cin, Cout, kh, kw))
    p["dec1_w"] = uinit(ks[6], (128, 64, 2, 3), 64 * 2 * 3)
    p["dec1_b"] = uinit(ks[7], (64,), 64 * 2 * 3)
    p["dec2_w"] = uinit(ks[8], (64, 32, 8, 8), 32 * 8 * 8)
    p["dec2_b"] = uinit(ks[9], (32,), 32 * 8 * 8)
    p["dec3_w"] = uinit(ks[10], (32, 3, 12, 12), 3 * 12 * 12)
    p["dec3_b"] = uinit(ks[11], (3,), 3 * 12 * 12)
    return p


# ----------------------------------------------------------------------------
# Full forward (Pallas) and a pure-lax reference for sanity checking
# ----------------------------------------------------------------------------
def autoencoder_forward(params, x_nchw):
    x = jnp.transpose(x_nchw, (0, 2, 3, 1)).astype(jnp.float32)  # NCHW -> NHWC
    # encoder
    x = conv2d(x, params["enc1_w"], params["enc1_b"], (4, 4), relu=True)
    x = conv2d(x, params["enc2_w"], params["enc2_b"], (2, 2), relu=True)
    x = conv2d(x, params["enc3_w"], params["enc3_b"], (1, 2), relu=False)
    # decoder
    x = conv_transpose2d(x, params["dec1_w"], params["dec1_b"], (1, 2), relu=True)
    x = conv_transpose2d(x, params["dec2_w"], params["dec2_b"], (2, 2), relu=True)
    x = conv_transpose2d(x, params["dec3_w"], params["dec3_b"], (4, 4), relu=False)
    return jnp.transpose(x, (0, 3, 1, 2))  # NHWC -> NCHW


def reference_forward(params, x):  # pure-lax NCHW reference (f32)
    dn = ("NCHW", "OIHW", "NCHW")

    def conv(x, w, b, s):
        y = jax.lax.conv_general_dilated(x, w, s, "VALID", dimension_numbers=dn)
        return y + b[None, :, None, None]

    def convt(x, w, b, s):
        _, _, kh, kw = w.shape
        wf = jnp.transpose(w[:, :, ::-1, ::-1], (1, 0, 2, 3))
        y = jax.lax.conv_general_dilated(
            x, wf, (1, 1), [(kh - 1, kh - 1), (kw - 1, kw - 1)],
            lhs_dilation=s, dimension_numbers=dn)
        return y + b[None, :, None, None]

    x = x.astype(jnp.float32)
    x = jax.nn.relu(conv(x, params["enc1_w"], params["enc1_b"], (4, 4)))
    x = jax.nn.relu(conv(x, params["enc2_w"], params["enc2_b"], (2, 2)))
    x = conv(x, params["enc3_w"], params["enc3_b"], (1, 2))
    x = jax.nn.relu(convt(x, params["dec1_w"], params["dec1_b"], (1, 2)))
    x = jax.nn.relu(convt(x, params["dec2_w"], params["dec2_b"], (2, 2)))
    x = convt(x, params["dec3_w"], params["dec3_b"], (4, 4))
    return x


if __name__ == "__main__":
    key = jax.random.PRNGKey(0)
    k_param, k_data = jax.random.split(key)
    params = init_params(k_param)

    # Smallest "nice" input that keeps every stage valid: N=2, C=3, 64x64.
    x = jax.random.normal(k_data, (2, 3, 64, 64), dtype=jnp.float32)

    fwd = jax.jit(autoencoder_forward)
    out = jax.block_until_ready(fwd(params, x))

    # shape check: encoder 64x64 -> 14x14 -> 4x4 -> 3x1; decoder -> 4x3 -> 14x12 -> 64x56
    assert out.shape == (2, 3, 64, 56), out.shape

    # numerical sanity check vs a pure-lax f32 reference (bf16 operands in the
    # Pallas path keep us well inside this tolerance)
    ref = jax.block_until_ready(jax.jit(reference_forward)(params, x))
    assert jnp.all(jnp.abs(out - ref) < 1e-1), float(jnp.max(jnp.abs(out - ref)))

    print("KERNEL_OK")
</pallas_src>

<mosaic_0001>
module attributes {stable_mosaic.version = 11 : i64} {
  func.func @_matmul_bias_act_kernel(%arg0: i32, %arg1: i32, %arg2: i32, %arg3: memref<208x432xbf16, #tpu.memory_space<vmem>>, %arg4: memref<432x32xbf16, #tpu.memory_space<vmem>>, %arg5: memref<1x32xf32, #tpu.memory_space<vmem>>, %arg6: memref<208x32xf32, #tpu.memory_space<vmem>>) attributes {dimension_semantics = [#tpu.dimension_semantics<parallel>, #tpu.dimension_semantics<parallel>, #tpu.dimension_semantics<arbitrary>], iteration_bounds = array<i64: 2, 1, 1>, scalar_prefetch = 0 : i64, scratch_operands = 0 : i64, tpu.core_type = #tpu.core_type<tc>, window_params = [{transform_indices = @transform_0, window_bounds = array<i64: 208, 432>}, {transform_indices = @transform_1, window_bounds = array<i64: 432, 32>}, {transform_indices = @transform_2, window_bounds = array<i64: 1, 32>}, {transform_indices = @transform_3, window_bounds = array<i64: 208, 32>}]} {
    %c0 = arith.constant 0 : index
    %c0_0 = arith.constant 0 : index
    %0 = vector.load %arg3[%c0, %c0_0] : memref<208x432xbf16, #tpu.memory_space<vmem>>, vector<208x432xbf16>
    %c0_1 = arith.constant 0 : index
    %c0_2 = arith.constant 0 : index
    %1 = vector.load %arg4[%c0_1, %c0_2] : memref<432x32xbf16, #tpu.memory_space<vmem>>, vector<432x32xbf16>
    %cst = arith.constant dense<0.000000e+00> : vector<208x32xf32>
    %2 = tpu.matmul %0, %1, %cst {dimension_numbers = #tpu.dot_dimension_numbers<[1], [0], [0], [1], [0, 0, 1, 1], [], []>} : vector<208x432xbf16>, vector<432x32xbf16>, vector<208x32xf32> -> vector<208x32xf32>
    %c0_3 = arith.constant 0 : index
    %c0_4 = arith.constant 0 : index
    %3 = vector.load %arg5[%c0_3, %c0_4] : memref<1x32xf32, #tpu.memory_space<vmem>>, vector<1x32xf32>
    %4 = vector.broadcast %3 : vector<1x32xf32> to vector<208x32xf32>
    %5 = arith.addf %2, %4 : vector<208x32xf32>
    %cst_5 = arith.constant 0.000000e+00 : f32
    %6 = vector.broadcast %cst_5 : f32 to vector<208x32xf32>
    %7 = arith.maximumf %5, %6 : vector<208x32xf32>
    %c0_6 = arith.constant 0 : index
    %c0_7 = arith.constant 0 : index
    %8 = vector.load %arg6[%c0_6, %c0_7] : memref<208x32xf32, #tpu.memory_space<vmem>>, vector<208x32xf32>
    tpu.vector_store %arg6[%c0_6, %c0_7], %7 {strides = array<i32>} : memref<208x32xf32, #tpu.memory_space<vmem>>, vector<208x32xf32>,
    return
  }
  func.func @transform_0(%arg0: i32, %arg1: i32, %arg2: i32) -> (i32, i32) {
    %c0_i32 = arith.constant 0 : i32
    return %arg0, %arg2 : i32, i32
  }
  func.func @transform_1(%arg0: i32, %arg1: i32, %arg2: i32) -> (i32, i32) {
    %c0_i32 = arith.constant 0 : i32
    return %arg2, %arg1 : i32, i32
  }
  func.func @transform_2(%arg0: i32, %arg1: i32, %arg2: i32) -> (i32, i32) {
    %c0_i32 = arith.constant 0 : i32
    %c0_i32_0 = arith.constant 0 : i32
    return %c0_i32, %arg1 : i32, i32
  }
  func.func @transform_3(%arg0: i32, %arg1: i32, %arg2: i32) -> (i32, i32) {
    %c0_i32 = arith.constant 0 : i32
    return %arg0, %arg1 : i32, i32
  }
}

module attributes {stable_mosaic.version = 11 : i64} {
  func.func @_matmul_bias_act_kernel(%arg0: i32, %arg1: i32, %arg2: i32, %arg3: memref<32x2048xbf16, #tpu.memory_space<vmem>>, %arg4: memref<2048x64xbf16, #tpu.memory_space<vmem>>, %arg5: memref<1x64xf32, #tpu.memory_space<vmem>>, %arg6: memref<32x64xf32, #tpu.memory_space<vmem>>) attributes {dimension_semantics = [#tpu.dimension_semantics<parallel>, #tpu.dimension_semantics<parallel>, #tpu.dimension_semantics<arbitrary>], iteration_bounds = array<i64: 1, 1, 1>, scalar_prefetch = 0 : i64, scratch_operands = 0 : i64, tpu.core_type = #tpu.core_type<tc>, window_params = [{transform_indices = @transform_0, window_bounds = array<i64: 32, 2048>}, {transform_indices = @transform_1, window_bounds = array<i64: 2048, 64>}, {transform_indices = @transform_2, window_bounds = array<i64: 1, 64>}, {transform_indices = @transform_3, window_bounds = array<i64: 32, 64>}]} {
    %c0 = arith.constant 0 : index
    %c0_0 = arith.constant 0 : index
    %0 = vector.load %arg3[%c0, %c0_0] : memref<32x2048xbf16, #tpu.memory_space<vmem>>, vector<32x2048xbf16>
    %c0_1 = arith.constant 0 : index
    %c0_2 = arith.constant 0 : index
    %1 = vector.load %arg4[%c0_1, %c0_2] : memref<2048x64xbf16, #tpu.memory_space<vmem>>, vector<2048x64xbf16>
    %cst = arith.constant dense<0.000000e+00> : vector<32x64xf32>
    %2 = tpu.matmul %0, %1, %cst {dimension_numbers = #tpu.dot_dimension_numbers<[1], [0], [0], [1], [0, 0, 1, 1], [], []>} : vector<32x2048xbf16>, vector<2048x64xbf16>, vector<32x64xf32> -> vector<32x64xf32>
    %c0_3 = arith.constant 0 : index
    %c0_4 = arith.constant 0 : index
    %3 = vector.load %arg5[%c0_3, %c0_4] : memref<1x64xf32, #tpu.memory_space<vmem>>, vector<1x64xf32>
    %4 = vector.broadcast %3 : vector<1x64xf32> to vector<32x64xf32>
    %5 = arith.addf %2, %4 : vector<32x64xf32>
    %cst_5 = arith.constant 0.000000e+00 : f32
    %6 = vector.broadcast %cst_5 : f32 to vector<32x64xf32>
    %7 = arith.maximumf %5, %6 : vector<32x64xf32>
    %c0_6 = arith.constant 0 : index
    %c0_7 = arith.constant 0 : index
    %8 = vector.load %arg6[%c0_6, %c0_7] : memref<32x64xf32, #tpu.memory_space<vmem>>, vector<32x64xf32>
    tpu.vector_store %arg6[%c0_6, %c0_7], %7 {strides = array<i32>} : memref<32x64xf32, #tpu.memory_space<vmem>>, vector<32x64xf32>,
    return
  }
  func.func @transform_0(%arg0: i32, %arg1: i32, %arg2: i32) -> (i32, i32) {
    %c0_i32 = arith.constant 0 : i32
    return %arg0, %arg2 : i32, i32
  }
  func.func @transform_1(%arg0: i32, %arg1: i32, %arg2: i32) -> (i32, i32) {
    %c0_i32 = arith.constant 0 : i32
    return %arg2, %arg1 : i32, i32
  }
  func.func @transform_2(%arg0: i32, %arg1: i32, %arg2: i32) -> (i32, i32) {
    %c0_i32 = arith.constant 0 : i32
    %c0_i32_0 = arith.constant 0 : i32
    return %c0_i32, %arg1 : i32, i32
  }
  func.func @transform_3(%arg0: i32, %arg1: i32, %arg2: i32) -> (i32, i32) {
    %c0_i32 = arith.constant 0 : i32
    return %arg0, %arg1 : i32, i32
  }
}

module attributes {stable_mosaic.version = 11 : i64} {
  func.func @_matmul_bias_act_kernel(%arg0: i32, %arg1: i32, %arg2: i32, %arg3: memref<6x384xbf16, #tpu.memory_space<vmem>>, %arg4: memref<384x128xbf16, #tpu.memory_space<vmem>>, %arg5: memref<1x128xf32, #tpu.memory_space<vmem>>, %arg6: memref<6x128xf32, #tpu.memory_space<vmem>>) attributes {dimension_semantics = [#tpu.dimension_semantics<parallel>, #tpu.dimension_semantics<parallel>, #tpu.dimension_semantics<arbitrary>], iteration_bounds = array<i64: 1, 1, 1>, scalar_prefetch = 0 : i64, scratch_operands = 0 : i64, tpu.core_type = #tpu.core_type<tc>, window_params = [{transform_indices = @transform_0, window_bounds = array<i64: 6, 384>}, {transform_indices = @transform_1, window_bounds = array<i64: 384, 128>}, {transform_indices = @transform_2, window_bounds = array<i64: 1, 128>}, {transform_indices = @transform_3, window_bounds = array<i64: 6, 128>}]} {
    %c0 = arith.constant 0 : index
    %c0_0 = arith.constant 0 : index
    %0 = vector.load %arg3[%c0, %c0_0] : memref<6x384xbf16, #tpu.memory_space<vmem>>, vector<6x384xbf16>
    %c0_1 = arith.constant 0 : index
    %c0_2 = arith.constant 0 : index
    %1 = vector.load %arg4[%c0_1, %c0_2] : memref<384x128xbf16, #tpu.memory_space<vmem>>, vector<384x128xbf16>
    %cst = arith.constant dense<0.000000e+00> : vector<6x128xf32>
    %2 = tpu.matmul %0, %1, %cst {dimension_numbers = #tpu.dot_dimension_numbers<[1], [0], [0], [1], [0, 0, 1, 1], [], []>} : vector<6x384xbf16>, vector<384x128xbf16>, vector<6x128xf32> -> vector<6x128xf32>
    %c0_3 = arith.constant 0 : index
    %c0_4 = arith.constant 0 : index
    %3 = vector.load %arg5[%c0_3, %c0_4] : memref<1x128xf32, #tpu.memory_space<vmem>>, vector<1x128xf32>
    %4 = vector.broadcast %3 : vector<1x128xf32> to vector<6x128xf32>
    %5 = arith.addf %2, %4 : vector<6x128xf32>
    %c0_5 = arith.constant 0 : index
    %c0_6 = arith.constant 0 : index
    %6 = vector.load %arg6[%c0_5, %c0_6] : memref<6x128xf32, #tpu.memory_space<vmem>>, vector<6x128xf32>
    tpu.vector_store %arg6[%c0_5, %c0_6], %5 {strides = array<i32>} : memref<6x128xf32, #tpu.memory_space<vmem>>, vector<6x128xf32>,
    return
  }
  func.func @transform_0(%arg0: i32, %arg1: i32, %arg2: i32) -> (i32, i32) {
    %c0_i32 = arith.constant 0 : i32
    return %arg0, %arg2 : i32, i32
  }
  func.func @transform_1(%arg0: i32, %arg1: i32, %arg2: i32) -> (i32, i32) {
    %c0_i32 = arith.constant 0 : i32
    return %arg2, %arg1 : i32, i32
  }
  func.func @transform_2(%arg0: i32, %arg1: i32, %arg2: i32) -> (i32, i32) {
    %c0_i32 = arith.constant 0 : i32
    %c0_i32_0 = arith.constant 0 : i32
    return %c0_i32, %arg1 : i32, i32
  }
  func.func @transform_3(%arg0: i32, %arg1: i32, %arg2: i32) -> (i32, i32) {
    %c0_i32 = arith.constant 0 : i32
    return %arg0, %arg1 : i32, i32
  }
}

module attributes {stable_mosaic.version = 11 : i64} {
  func.func @_matmul_bias_act_kernel(%arg0: i32, %arg1: i32, %arg2: i32, %arg3: memref<16x512xbf16, #tpu.memory_space<vmem>>, %arg4: memref<512x128xbf16, #tpu.memory_space<vmem>>, %arg5: memref<1x128xf32, #tpu.memory_space<vmem>>, %arg6: memref<16x128xf32, #tpu.memory_space<vmem>>) attributes {dimension_semantics = [#tpu.dimension_semantics<parallel>, #tpu.dimension_semantics<parallel>, #tpu.dimension_semantics<arbitrary>], iteration_bounds = array<i64: 1, 1, 1>, scalar_prefetch = 0 : i64, scratch_operands = 0 : i64, tpu.core_type = #tpu.core_type<tc>, window_params = [{transform_indices = @transform_0, window_bounds = array<i64: 16, 512>}, {transform_indices = @transform_1, window_bounds = array<i64: 512, 128>}, {transform_indices = @transform_2, window_bounds = array<i64: 1, 128>}, {transform_indices = @transform_3, window_bounds = array<i64: 16, 128>}]} {
    %c0 = arith.constant 0 : index
    %c0_0 = arith.constant 0 : index
    %0 = vector.load %arg3[%c0, %c0_0] : memref<16x512xbf16, #tpu.memory_space<vmem>>, vector<16x512xbf16>
    %c0_1 = arith.constant 0 : index
    %c0_2 = arith.constant 0 : index
    %1 = vector.load %arg4[%c0_1, %c0_2] : memref<512x128xbf16, #tpu.memory_space<vmem>>, vector<512x128xbf16>
    %cst = arith.constant dense<0.000000e+00> : vector<16x128xf32>
    %2 = tpu.matmul %0, %1, %cst {dimension_numbers = #tpu.dot_dimension_numbers<[1], [0], [0], [1], [0, 0, 1, 1], [], []>} : vector<16x512xbf16>, vector<512x128xbf16>, vector<16x128xf32> -> vector<16x128xf32>
    %c0_3 = arith.constant 0 : index
    %c0_4 = arith.constant 0 : index
    %3 = vector.load %arg5[%c0_3, %c0_4] : memref<1x128xf32, #tpu.memory_space<vmem>>, vector<1x128xf32>
    %4 = vector.broadcast %3 : vector<1x128xf32> to vector<16x128xf32>
    %5 = arith.addf %2, %4 : vector<16x128xf32>
    %cst_5 = arith.constant 0.000000e+00 : f32
    %6 = vector.broadcast %cst_5 : f32 to vector<16x128xf32>
    %7 = arith.maximumf %5, %6 : vector<16x128xf32>
    %c0_6 = arith.constant 0 : index
    %c0_7 = arith.constant 0 : index
    %8 = vector.load %arg6[%c0_6, %c0_7] : memref<16x128xf32, #tpu.memory_space<vmem>>, vector<16x128xf32>
    tpu.vector_store %arg6[%c0_6, %c0_7], %7 {strides = array<i32>} : memref<16x128xf32, #tpu.memory_space<vmem>>, vector<16x128xf32>,
    return
  }
  func.func @transform_0(%arg0: i32, %arg1: i32, %arg2: i32) -> (i32, i32) {
    %c0_i32 = arith.constant 0 : i32
    return %arg0, %arg2 : i32, i32
  }
  func.func @transform_1(%arg0: i32, %arg1: i32, %arg2: i32) -> (i32, i32) {
    %c0_i32 = arith.constant 0 : i32
    return %arg2, %arg1 : i32, i32
  }
  func.func @transform_2(%arg0: i32, %arg1: i32, %arg2: i32) -> (i32, i32) {
    %c0_i32 = arith.constant 0 : i32
    %c0_i32_0 = arith.constant 0 : i32
    return %c0_i32, %arg1 : i32, i32
  }
  func.func @transform_3(%arg0: i32, %arg1: i32, %arg2: i32) -> (i32, i32) {
    %c0_i32 = arith.constant 0 : i32
    return %arg0, %arg1 : i32, i32
  }
}

module attributes {stable_mosaic.version = 11 : i64} {
  func.func @_matmul_bias_act_kernel(%arg0: i32, %arg1: i32, %arg2: i32, %arg3: memref<84x1024xbf16, #tpu.memory_space<vmem>>, %arg4: memref<1024x128xbf16, #tpu.memory_space<vmem>>, %arg5: memref<1x128xf32, #tpu.memory_space<vmem>>, %arg6: memref<84x128xf32, #tpu.memory_space<vmem>>) attributes {dimension_semantics = [#tpu.dimension_semantics<parallel>, #tpu.dimension_semantics<parallel>, #tpu.dimension_semantics<arbitrary>], iteration_bounds = array<i64: 1, 1, 1>, scalar_prefetch = 0 : i64, scratch_operands = 0 : i64, tpu.core_type = #tpu.core_type<tc>, window_params = [{transform_indices = @transform_0, window_bounds = array<i64: 84, 1024>}, {transform_indices = @transform_1, window_bounds = array<i64: 1024, 128>}, {transform_indices = @transform_2, window_bounds = array<i64: 1, 128>}, {transform_indices = @transform_3, window_bounds = array<i64: 84, 128>}]} {
    %c0 = arith.constant 0 : index
    %c0_0 = arith.constant 0 : index
    %0 = vector.load %arg3[%c0, %c0_0] : memref<84x1024xbf16, #tpu.memory_space<vmem>>, vector<84x1024xbf16>
    %c0_1 = arith.constant 0 : index
    %c0_2 = arith.constant 0 : index
    %1 = vector.load %arg4[%c0_1, %c0_2] : memref<1024x128xbf16, #tpu.memory_space<vmem>>, vector<1024x128xbf16>
    %cst = arith.constant dense<0.000000e+00> : vector<84x128xf32>
    %2 = tpu.matmul %0, %1, %cst {dimension_numbers = #tpu.dot_dimension_numbers<[1], [0], [0], [1], [0, 0, 1, 1], [], []>} : vector<84x1024xbf16>, vector<1024x128xbf16>, vector<84x128xf32> -> vector<84x128xf32>
    %c0_3 = arith.constant 0 : index
    %c0_4 = arith.constant 0 : index
    %3 = vector.load %arg5[%c0_3, %c0_4] : memref<1x128xf32, #tpu.memory_space<vmem>>, vector<1x128xf32>
    %4 = vector.broadcast %3 : vector<1x128xf32> to vector<84x128xf32>
    %5 = arith.addf %2, %4 : vector<84x128xf32>
    %cst_5 = arith.constant 0.000000e+00 : f32
    %6 = vector.broadcast %cst_5 : f32 to vector<84x128xf32>
    %7 = arith.maximumf %5, %6 : vector<84x128xf32>
    %c0_6 = arith.constant 0 : index
    %c0_7 = arith.constant 0 : index
    %8 = vector.load %arg6[%c0_6, %c0_7] : memref<84x128xf32, #tpu.memory_space<vmem>>, vector<84x128xf32>
    tpu.vector_store %arg6[%c0_6, %c0_7], %7 {strides = array<i32>} : memref<84x128xf32, #tpu.memory_space<vmem>>, vector<84x128xf32>,
    return
  }
  func.func @transform_0(%arg0: i32, %arg1: i32, %arg2: i32) -> (i32, i32) {
    %c0_i32 = arith.constant 0 : i32
    return %arg0, %arg2 : i32, i32
  }
  func.func @transform_1(%arg0: i32, %arg1: i32, %arg2: i32) -> (i32, i32) {
    %c0_i32 = arith.constant 0 : i32
    return %arg2, %arg1 : i32, i32
  }
  func.func @transform_2(%arg0: i32, %arg1: i32, %arg2: i32) -> (i32, i32) {
    %c0_i32 = arith.constant 0 : i32
    %c0_i32_0 = arith.constant 0 : i32
    return %c0_i32, %arg1 : i32, i32
  }
  func.func @transform_3(%arg0: i32, %arg1: i32, %arg2: i32) -> (i32, i32) {
    %c0_i32 = arith.constant 0 : i32
    return %arg0, %arg1 : i32, i32
  }
}

module attributes {stable_mosaic.version = 11 : i64} {
  func.func @_matmul_bias_act_kernel(%arg0: i32, %arg1: i32, %arg2: i32, %arg3: memref<224x288xbf16, #tpu.memory_space<vmem>>, %arg4: memref<288x48xbf16, #tpu.memory_space<vmem>>, %arg5: memref<1x48xf32, #tpu.memory_space<vmem>>, %arg6: memref<224x48xf32, #tpu.memory_space<vmem>>) attributes {dimension_semantics = [#tpu.dimension_semantics<parallel>, #tpu.dimension_semantics<parallel>, #tpu.dimension_semantics<arbitrary>], iteration_bounds = array<i64: 2, 1, 1>, scalar_prefetch = 0 : i64, scratch_operands = 0 : i64, tpu.core_type = #tpu.core_type<tc>, window_params = [{transform_indices = @transform_0, window_bounds = array<i64: 224, 288>}, {transform_indices = @transform_1, window_bounds = array<i64: 288, 48>}, {transform_indices = @transform_2, window_bounds = array<i64: 1, 48>}, {transform_indices = @transform_3, window_bounds = array<i64: 224, 48>}]} {
    %c0 = arith.constant 0 : index
    %c0_0 = arith.constant 0 : index
    %0 = vector.load %arg3[%c0, %c0_0] : memref<224x288xbf16, #tpu.memory_space<vmem>>, vector<224x288xbf16>
    %c0_1 = arith.constant 0 : index
    %c0_2 = arith.constant 0 : index
    %1 = vector.load %arg4[%c0_1, %c0_2] : memref<288x48xbf16, #tpu.memory_space<vmem>>, vector<288x48xbf16>
    %cst = arith.constant dense<0.000000e+00> : vector<224x48xf32>
    %2 = tpu.matmul %0, %1, %cst {dimension_numbers = #tpu.dot_dimension_numbers<[1], [0], [0], [1], [0, 0, 1, 1], [], []>} : vector<224x288xbf16>, vector<288x48xbf16>, vector<224x48xf32> -> vector<224x48xf32>
    %c0_3 = arith.constant 0 : index
    %c0_4 = arith.constant 0 : index
    %3 = vector.load %arg5[%c0_3, %c0_4] : memref<1x48xf32, #tpu.memory_space<vmem>>, vector<1x48xf32>
    %4 = vector.broadcast %3 : vector<1x48xf32> to vector<224x48xf32>
    %5 = arith.addf %2, %4 : vector<224x48xf32>
    %c0_5 = arith.constant 0 : index
    %c0_6 = arith.constant 0 : index
    %6 = vector.load %arg6[%c0_5, %c0_6] : memref<224x48xf32, #tpu.memory_space<vmem>>, vector<224x48xf32>
    tpu.vector_store %arg6[%c0_5, %c0_6], %5 {strides = array<i32>} : memref<224x48xf32, #tpu.memory_space<vmem>>, vector<224x48xf32>,
    return
  }
  func.func @transform_0(%arg0: i32, %arg1: i32, %arg2: i32) -> (i32, i32) {
    %c0_i32 = arith.constant 0 : i32
    return %arg0, %arg2 : i32, i32
  }
  func.func @transform_1(%arg0: i32, %arg1: i32, %arg2: i32) -> (i32, i32) {
    %c0_i32 = arith.constant 0 : i32
    return %arg2, %arg1 : i32, i32
  }
  func.func @transform_2(%arg0: i32, %arg1: i32, %arg2: i32) -> (i32, i32) {
    %c0_i32 = arith.constant 0 : i32
    %c0_i32_0 = arith.constant 0 : i32
    return %c0_i32, %arg1 : i32, i32
  }
  func.func @transform_3(%arg0: i32, %arg1: i32, %arg2: i32) -> (i32, i32) {
    %c0_i32 = arith.constant 0 : i32
    return %arg0, %arg1 : i32, i32
  }
}

</mosaic_0001>

<llo_original>
// kernel: autoencoder_forward.6
$region0: #{autoencoder_forward.6}
  #allocation0 [shape = 'u32[]', space=smem, size = 0x4, offset = 0x4, fixed_abs, tag = 'smem constant byte address 0x4 - core index']
  #allocation1 [shape = 'u32[72,128]{1,0:T(1,128)}', space=vmem, size = 0x9000, scoped, tag = 'internal scratch']
  %s0 = inlined_call_operand.vmem [shape: bf16[392,432], index: 0, kind: input, shape index: {}]
  %s1 = inlined_call_operand.vmem [shape: bf16[432,32], index: 1, kind: input, shape index: {}]
  %s2 = inlined_call_operand.vmem [shape: f32[1,32], index: 2, kind: input, shape index: {}]
  %s3 = inlined_call_operand.vmem [shape: f32[392,32], index: 3, kind: output, shape index: {}]
  %s4 = sld [smem:[#allocation0]]
  $region93: #{autoencoder_forward.6} parent=0
    _
  %s6 = ssub.s32 1, %s4
  %s7 = scalar_select 0, %s6, %s4
  $region1: #{autoencoder_forward.6} parent=0
    #allocation2 [shape = 'u8[212992]{0}', space=vmem, size = 0x34000, scoped, tag = 'output window, operand 0']
    loop: start=0, step=1, limit=4
    $region2: #{autoencoder_forward.6} parent=1 // loop_pre_header
      _
    $region3: #{autoencoder_forward.6} parent=1 // loop_header
      %s9 = sphi 0, %s13
      %p10 = scmp.ge.s32.totalorder %s9, 4
      %s16 = sphi 0, %s35
      %s17 = sphi 0, %s31
      %s18 = sphi 0, %s27
      %s19 = sphi 0, %s16
      %s20 = sphi 0, %s17
      %s21 = sphi 0, %s18
      %s22 = sphi 0, %s19
      %s23 = sphi 0, %s20
      %s24 = sphi 0, %s21
      %s40 = sphi 0, %s42
      %s43 = sphi 0, %s40
      %s44 = sphi 0, %s43
      %s60 = sphi 0, %s44
      %s68 = sphi 0, %s70
      %s71 = sphi 0, %s68
      %s72 = sphi 0, %s71
      %s88 = sphi 0, %s72
      %s94 = sphi 0, %s96
      %s97 = sphi 0, %s94
      %s98 = sphi 0, %s97
      %s114 = sphi 0, %s98
      %s122 = sphi 0, %s124
      %s125 = sphi 0, %s122
      %s126 = sphi 0, %s125
      %s142 = sphi 0, %s126
    $region4: #{autoencoder_forward.6} parent=1 // loop_header_branch
      %12 = sbr.rel (%p10) target = $region8
    $region5: #{autoencoder_forward.6} parent=1 // loop_body
      %s14 = ssub.s32 %s9, 1
      %s15 = ssub.s32 %s9, 2
      %s25 = sadd.s32 1, %s18
      %p26 = scmp.ge.s32.totalorder %s25, 1
      %s27 = scalar_select %p26, 0, %s25
      %s28 = sadd.s32 1, %s17
      %s29 = scalar_select %p26, %s28, %s17
      %p30 = scmp.ge.s32.totalorder %s29, 1
      %s31 = scalar_select %p30, 0, %s29
      %s32 = sadd.s32 1, %s16
      %s33 = scalar_select %p30, %s32, %s16
      %p34 = scmp.ge.s32.totalorder %s33, 2
      %s35 = scalar_select %p34, 0, %s33
      %s36 = ssub.s32 %s16, %s35
      %s37 = ssub.s32 %s18, %s27
      %s38 = sor.u32 %s36, %s37
      %p39 = scmp.eq.s32.totalorder %s38, 0
      %s41 = sadd.s32 %s40, 1
      %s42 = scalar_select %p39, %s40, %s41
      %p45 = pneg %p39
      %p46 = scmp.eq.s32.totalorder %s9, 1
      %p47 = por %p45, %p46
      %p48 = scmp.ne.s32.totalorder %s40, %s43
      %p49 = scmp.eq.s32.totalorder %s9, 0
      %p50 = por %p48, %p49
      %p51 = scmp.ne.s32.totalorder %s40, %s43
      %p52 = scmp.eq.s32.totalorder %s14, 1
      %p53 = por %p51, %p52
      %p54 = scmp.ne.s32.totalorder %s43, %s44
      %p55 = scmp.eq.s32.totalorder %s14, 0
      %p56 = por %p54, %p55
      %p57 = scmp.ne.s32.totalorder %s43, %s44
      %p58 = scmp.eq.s32.totalorder %s15, 1
      %p59 = por %p57, %p58
      %p61 = scmp.ne.s32.totalorder %s44, %s60
      %p62 = scmp.eq.s32.totalorder %s15, 0
      %p63 = por %p61, %p62
      %s64 = ssub.s32 %s18, %s27
      %s65 = ssub.s32 %s17, %s31
      %s66 = sor.u32 %s64, %s65
      %p67 = scmp.eq.s32.totalorder %s66, 0
      %s69 = sadd.s32 %s68, 1
      %s70 = scalar_select %p67, %s68, %s69
      %p73 = pneg %p67
      %p74 = scmp.eq.s32.totalorder %s9, 1
      %p75 = por %p73, %p74
      %p76 = scmp.ne.s32.totalorder %s68, %s71
      %p77 = scmp.eq.s32.totalorder %s9, 0
      %p78 = por %p76, %p77
      %p79 = scmp.ne.s32.totalorder %s68, %s71
      %p80 = scmp.eq.s32.totalorder %s14, 1
      %p81 = por %p79, %p80
      %p82 = scmp.ne.s32.totalorder %s71, %s72
      %p83 = scmp.eq.s32.totalorder %s14, 0
      %p84 = por %p82, %p83
      %p85 = scmp.ne.s32.totalorder %s71, %s72
      %p86 = scmp.eq.s32.totalorder %s15, 1
      %p87 = por %p85, %p86
      %p89 = scmp.ne.s32.totalorder %s72, %s88
      %p90 = scmp.eq.s32.totalorder %s15, 0
      %p91 = por %p89, %p90
      %s92 = ssub.s32 %s17, %s31
      %p93 = scmp.eq.s32.totalorder %s92, 0
      %s95 = sadd.s32 %s94, 1
      %s96 = scalar_select %p93, %s94, %s95
      %p99 = pneg %p93
      %p100 = scmp.eq.s32.totalorder %s9, 1
      %p101 = por %p99, %p100
      %p102 = scmp.ne.s32.totalorder %s94, %s97
      %p103 = scmp.eq.s32.totalorder %s9, 0
      %p104 = por %p102, %p103
      %p105 = scmp.ne.s32.totalorder %s94, %s97
      %p106 = scmp.eq.s32.totalorder %s14, 1
      %p107 = por %p105, %p106
      %p108 = scmp.ne.s32.totalorder %s97, %s98
      %p109 = scmp.eq.s32.totalorder %s14, 0
      %p110 = por %p108, %p109
      %p111 = scmp.ne.s32.totalorder %s97, %s98
      %p112 = scmp.eq.s32.totalorder %s15, 1
      %p113 = por %p111, %p112
      %p115 = scmp.ne.s32.totalorder %s98, %s114
      %p116 = scmp.eq.s32.totalorder %s15, 0
      %p117 = por %p115, %p116
      %s118 = ssub.s32 %s16, %s35
      %s119 = ssub.s32 %s17, %s31
      %s120 = sor.u32 %s118, %s119
      %p121 = scmp.eq.s32.totalorder %s120, 0
      %s123 = sadd.s32 %s122, 1
      %s124 = scalar_select %p121, %s122, %s123
      %p127 = pneg %p121
      %p128 = scmp.eq.s32.totalorder %s9, 1
      %p129 = por %p127, %p128
      %p130 = scmp.ne.s32.totalorder %s122, %s125
      %p131 = scmp.eq.s32.totalorder %s9, 0
      %p132 = por %p130, %p131
      %p133 = scmp.ne.s32.totalorder %s122, %s125
      %p134 = scmp.eq.s32.totalorder %s14, 1
      %p135 = por %p133, %p134
      %p136 = scmp.ne.s32.totalorder %s125, %s126
      %p137 = scmp.eq.s32.totalorder %s14, 0
      %p138 = por %p136, %p137
      %p139 = scmp.ne.s32.totalorder %s125, %s126
      %p140 = scmp.eq.s32.totalorder %s15, 1
      %p141 = por %p139, %p140
      %p143 = scmp.ne.s32.totalorder %s126, %s142
      %p144 = scmp.eq.s32.totalorder %s15, 0
      %p145 = por %p143, %p144
      %p146 = scmp.le.s32.totalorder 1, %s9
      %p147 = scmp.lt.s32.totalorder %s9, 3
      %p148 = pnand %p146, %p147
      %p149 = pneg %p148
      // Predicated region
      $region9: #{autoencoder_forward.6} parent=5 // pred_check
        _
      $region10: #{autoencoder_forward.6} parent=5 // pred_check_branch
        %151 = sbr.rel (%p148) target = $region12
      $region11: #{autoencoder_forward.6} parent=5 // pred_region
        %s152 = ssub.s32 %s9, 1
        // Predicated region
        $region13: #{autoencoder_forward.6} parent=11 // pred_check
          %p153 = pneg %p84
        $region14: #{autoencoder_forward.6} parent=11 // pred_check_branch
          %155 = sbr.rel (%p153) target = $region16
        $region15: #{autoencoder_forward.6} parent=11 // pred_region
          %s156 = smul.u32 54, %s21
          %p157 = scmp.lt.s32.totalorder %s156, 53
          %s158 = scalar_select %p157, %s156, 53
          %p159 = scmp.lt.s32.totalorder %s20, 0
          %s160 = scalar_select %p159, %s20, 0
          %s161 = sadd.s32 %s160, %s158
          %s162 = smul.addr %s161, 4
          %s163 = scalar_lea.vmem %s1, %s162
          %s164 = smul.u32 54, %s21
        $region16: #{autoencoder_forward.6} parent=11 // pred_fallthru
          _
        // Predicated region
        $region17: #{autoencoder_forward.6} parent=11 // pred_check
          %p165 = pneg %p110
        $region18: #{autoencoder_forward.6} parent=11 // pred_check_branch
          %167 = sbr.rel (%p165) target = $region20
        $region19: #{autoencoder_forward.6} parent=11 // pred_region
          %p168 = scmp.lt.s32.totalorder %s20, 0
          %s169 = scalar_select %p168, %s20, 0
          %s170 = scalar_lea.vmem %s2, %s169
        $region20: #{autoencoder_forward.6} parent=11 // pred_fallthru
          _
      $region12: #{autoencoder_forward.6} parent=5 // pred_fallthru
        _
      %p171 = scmp.lt.s32.totalorder %s9, 2
      // Predicated region
      $region21: #{autoencoder_forward.6} parent=5 // pred_check
        %p172 = pneg %p171
      $region22: #{autoencoder_forward.6} parent=5 // pred_check_branch
        %174 = sbr.rel (%p172) target = $region24
      $region23: #{autoencoder_forward.6} parent=5 // pred_region
        // Predicated region
        $region25: #{autoencoder_forward.6} parent=23 // pred_check
          %p175 = pneg %p50
        $region26: #{autoencoder_forward.6} parent=23 // pred_check_branch
          %177 = sbr.rel (%p175) target = $region28
        $region27: #{autoencoder_forward.6} parent=23 // pred_region
          %s178 = smul.u32 26, %s16
          %s179 = smul.u32 4, %s18
          %s180 = ssub.s32 49, %s178
          %p181 = scmp.lt.s32.totalorder %s180, 26
          %s182 = scalar_select %p181, %s180, 26
          %s183 = smul.u32 4, %s182
          %s184 = smul.u32 %s183, 4
          %p185 = scmp.lt.s32.totalorder %s178, 48
          %s186 = scalar_select %p185, %s178, 48
          %p187 = scmp.lt.s32.totalorder %s179, 3
          %s188 = scalar_select %p187, %s179, 3
          %s189 = smul.addr %s186, 4
          %s190 = sadd.s32 %s188, %s189
          %s191 = smul.addr %s190, 4
          %s192 = scalar_lea.vmem %s0, %s191
          %s193 = smul.u32 26, %s16
          %s194 = smul.u32 4, %s18
          %s195 = ssub.s32 49, %s193
          %p196 = scmp.lt.s32.totalorder %s195, 26
          %s197 = scalar_select %p196, %s195, 26
          %s198 = smul.u32 4, %s197
          %s199 = smul.u32 %s198, 4
        $region28: #{autoencoder_forward.6} parent=23 // pred_fallthru
          _
      $region24: #{autoencoder_forward.6} parent=5 // pred_fallthru
        _
      %p200 = scmp.le.s32.totalorder 1, %s9
      %p201 = scmp.lt.s32.totalorder %s9, 3
      %p202 = pnand %p200, %p201
      %p203 = pneg %p202
      // Predicated region
      $region29: #{autoencoder_forward.6} parent=5 // pred_check
        _
      $region30: #{autoencoder_forward.6} parent=5 // pred_check_branch
        %205 = sbr.rel (%p202) target = $region32
      $region31: #{autoencoder_forward.6} parent=5 // pred_region
        %s206 = ssub.s32 %s9, 1
        %s207 = smul.u32 26, %s19
        %s208 = smul.u32 4, %s21
        %s209 = ssub.s32 49, %s207
        %p210 = scmp.lt.s32.totalorder %s209, 26
        %s211 = scalar_select %p210, %s209, 26
        %s212 = smul.u32 4, %s211
        %s213 = smul.u32 %s212, 4
        %p214 = scmp.lt.s32.totalorder %s207, 48
        %s215 = scalar_select %p214, %s207, 48
        %p216 = scmp.lt.s32.totalorder %s208, 3
        %s217 = scalar_select %p216, %s208, 3
        %s218 = smul.addr %s215, 4
        %s219 = sadd.s32 %s217, %s218
        %s220 = smul.addr %s219, 4
        %s221 = scalar_lea.vmem %s0, %s220
        %p222 = pneg %p56
        %p223 = pneg %p53
        %s224 = smul.u32 54, %s21
        %p225 = scmp.lt.s32.totalorder %s224, 53
        %s226 = scalar_select %p225, %s224, 53
        %p227 = scmp.lt.s32.totalorder %s20, 0
        %s228 = scalar_select %p227, %s20, 0
        %s229 = sadd.s32 %s228, %s226
        %s230 = smul.addr %s229, 4
        %s231 = scalar_lea.vmem %s1, %s230
        %p232 = pneg %p84
        %p233 = pneg %p81
        %p234 = scmp.lt.s32.totalorder %s20, 0
        %s235 = scalar_select %p234, %s20, 0
        %s236 = scalar_lea.vmem %s2, %s235
        %p237 = pneg %p110
        %p238 = pneg %p107
        %p239 = pneg %p138
        %p240 = pneg %p135
        %s241 = sand.u32 %s125, 1
        %s242 = sand.u32 %s125, 1
        %s243 = smul.addr %s242, 208
        %s244 = scalar_lea.vmem [#allocation2], %s243
        %s245 = smul.u32 26, %s19
        %s246 = smul.u32 4, %s21
        %s247 = ssub.s32 49, %s245
        %p248 = scmp.lt.s32.totalorder %s247, 26
        %s249 = scalar_select %p248, %s247, 26
        %s250 = smul.u32 4, %s249
        %s251 = smul.u32 %s250, 4
        %p252 = scmp.lt.s32.totalorder %s245, 48
        %s253 = scalar_select %p252, %s245, 48
        %p254 = scmp.lt.s32.totalorder %s246, 3
        %s255 = scalar_select %p254, %s246, 3
        %s256 = smul.addr %s253, 4
        %s257 = sadd.s32 %s255, %s256
        %s258 = smul.addr %s257, 4
        %s259 = scalar_lea.vmem %s0, %s258
        %s260 = smul.u32 26, %s19
        %s261 = smul.u32 4, %s21
        %s262 = ssub.s32 49, %s260
        %p263 = scmp.lt.s32.totalorder %s262, 26
        %s264 = scalar_select %p263, %s262, 26
        %s265 = smul.u32 4, %s264
        %s266 = smul.u32 %s265, 4
        %s267 = smul.u32 54, %s21
        %p268 = scmp.lt.s32.totalorder %s267, 53
        %s269 = scalar_select %p268, %s267, 53
        %p270 = scmp.lt.s32.totalorder %s20, 0
        %s271 = scalar_select %p270, %s20, 0
        %s272 = sadd.s32 %s271, %s269
        %s273 = smul.addr %s272, 4
        %s274 = scalar_lea.vmem %s1, %s273
        %s275 = smul.u32 54, %s21
        %p276 = scmp.lt.s32.totalorder %s20, 0
        %s277 = scalar_select %p276, %s20, 0
        %s278 = scalar_lea.vmem %s2, %s277
        %s279 = smul.u32 26, %s19
        %s280 = ssub.s32 49, %s279
        %p281 = scmp.lt.s32.totalorder %s280, 26
        %s282 = scalar_select %p281, %s280, 26
        %s283 = smul.u32 8, %s282
        %v285 = vld [vmem:[%s259] sm:$0xff]
        %v286 = vld [vmem:[%s259 + $0x8] sm:$0xff]
        %v287 = vld [vmem:[%s259 + $0x10] sm:$0xff]
        %v288 = vld [vmem:[%s259 + $0x18] sm:$0xff]
        %v289 = vld [vmem:[%s259 + $0x20] sm:$0xff]
        %v290 = vld [vmem:[%s259 + $0x28] sm:$0xff]
        %v291 = vld [vmem:[%s259 + $0x30] sm:$0xff]
        %v292 = vld [vmem:[%s259 + $0x38] sm:$0xff]
        %v293 = vld [vmem:[%s259 + $0x40] sm:$0xff]
        %v294 = vld [vmem:[%s259 + $0x48] sm:$0xff]
        %v295 = vld [vmem:[%s259 + $0x50] sm:$0xff]
        %v296 = vld [vmem:[%s259 + $0x58] sm:$0xff]
        %v297 = vld [vmem:[%s259 + $0x60] sm:$0xff]
        %v298 = vld [vmem:[%s259 + $0x68] sm:$0xff]
        %v299 = vld [vmem:[%s259 + $0x70] sm:$0xff]
        %v300 = vld [vmem:[%s259 + $0x78] sm:$0xff]
        %v301 = vld [vmem:[%s259 + $0x80] sm:$0xff]
        %v302 = vld [vmem:[%s259 + $0x88] sm:$0xff]
        %v303 = vld [vmem:[%s259 + $0x90] sm:$0xff]
        %v304 = vld [vmem:[%s259 + $0x98] sm:$0xff]
        %v305 = vld [vmem:[%s259 + $0xa0] sm:$0xff]
        %v306 = vld [vmem:[%s259 + $0xa8] sm:$0xff]
        %v307 = vld [vmem:[%s259 + $0xb0] sm:$0xff]
        %v308 = vld [vmem:[%s259 + $0xb8] sm:$0xff]
        %v309 = vld [vmem:[%s259 + $0xc0] sm:$0xff]
        %v310 = vld [vmem:[%s259 + $0xc8] sm:$0xff]
        %v311 = vld [vmem:[%s259 + $0xd0] sm:$0xff]
        %v312 = vld [vmem:[%s259 + $0xd8] sm:$0xff]
        %v313 = vld [vmem:[%s259 + $0xe0] sm:$0xff]
        %v314 = vld [vmem:[%s259 + $0xe8] sm:$0xff]
        %v315 = vld [vmem:[%s259 + $0xf0] sm:$0xff]
        %v316 = vld [vmem:[%s259 + $0xf8] sm:$0xff]
        %v317 = vld [vmem:[%s259 + $0x100] sm:$0xff]
        %v318 = vld [vmem:[%s259 + $0x108] sm:$0xff]
        %v319 = vld [vmem:[%s259 + $0x110] sm:$0xff]
        %v320 = vld [vmem:[%s259 + $0x118] sm:$0xff]
        %v321 = vld [vmem:[%s259 + $0x120] sm:$0xff]
        %v322 = vld [vmem:[%s259 + $0x128] sm:$0xff]
        %v323 = vld [vmem:[%s259 + $0x130] sm:$0xff]
        %v324 = vld [vmem:[%s259 + $0x138] sm:$0xff]
        %v325 = vld [vmem:[%s259 + $0x140] sm:$0xff]
        %v326 = vld [vmem:[%s259 + $0x148] sm:$0xff]
        %v327 = vld [vmem:[%s259 + $0x150] sm:$0xff]
        %v328 = vld [vmem:[%s259 + $0x158] sm:$0xff]
        %v329 = vld [vmem:[%s259 + $0x160] sm:$0xff]
        %v330 = vld [vmem:[%s259 + $0x168] sm:$0xff]
        %v331 = vld [vmem:[%s259 + $0x170] sm:$0xff]
        %v332 = vld [vmem:[%s259 + $0x178] sm:$0xff]
        %v333 = vld [vmem:[%s259 + $0x180] sm:$0xff]
        %v334 = vld [vmem:[%s259 + $0x188] sm:$0xff]
        %v335 = vld [vmem:[%s259 + $0x190] sm:$0xff]
        %v336 = vld [vmem:[%s259 + $0x198] sm:$0xff]
        %v337 = vld [vmem:[%s274] sm:$0xf]
        %v338 = vld [vmem:[%s274 + $0x4] sm:$0xf]
        %v339 = vld [vmem:[%s274 + $0x8] sm:$0xf]
        %v340 = vld [vmem:[%s274 + $0xc] sm:$0xf]
        %v341 = vld [vmem:[%s274 + $0x10] sm:$0xf]
        %v342 = vld [vmem:[%s274 + $0x14] sm:$0xf]
        %v343 = vld [vmem:[%s274 + $0x18] sm:$0xf]
        %v344 = vld [vmem:[%s274 + $0x1c] sm:$0xf]
        %v345 = vld [vmem:[%s274 + $0x20] sm:$0xf]
        %v346 = vld [vmem:[%s274 + $0x24] sm:$0xf]
        %v347 = vld [vmem:[%s274 + $0x28] sm:$0xf]
        %v348 = vld [vmem:[%s274 + $0x2c] sm:$0xf]
        %v349 = vld [vmem:[%s274 + $0x30] sm:$0xf]
        %v350 = vld [vmem:[%s274 + $0x34] sm:$0xf]
        %v351 = vld [vmem:[%s274 + $0x38] sm:$0xf]
        %v352 = vld [vmem:[%s274 + $0x3c] sm:$0xf]
        %v353 = vld [vmem:[%s274 + $0x40] sm:$0xf]
        %v354 = vld [vmem:[%s274 + $0x44] sm:$0xf]
        %v355 = vld [vmem:[%s274 + $0x48] sm:$0xf]
        %v356 = vld [vmem:[%s274 + $0x4c] sm:$0xf]
        %v357 = vld [vmem:[%s274 + $0x50] sm:$0xf]
        %v358 = vld [vmem:[%s274 + $0x54] sm:$0xf]
        %v359 = vld [vmem:[%s274 + $0x58] sm:$0xf]
        %v360 = vld [vmem:[%s274 + $0x5c] sm:$0xf]
        %v361 = vld [vmem:[%s274 + $0x60] sm:$0xf]
        %v362 = vld [vmem:[%s274 + $0x64] sm:$0xf]
        %v363 = vld [vmem:[%s274 + $0x68] sm:$0xf]
        %v364 = vld [vmem:[%s274 + $0x6c] sm:$0xf]
        %v365 = vld [vmem:[%s274 + $0x70] sm:$0xf]
        %v366 = vld [vmem:[%s274 + $0x74] sm:$0xf]
        %v367 = vld [vmem:[%s274 + $0x78] sm:$0xf]
        %v368 = vld [vmem:[%s274 + $0x7c] sm:$0xf]
        %v369 = vld [vmem:[%s274 + $0x80] sm:$0xf]
        %v370 = vld [vmem:[%s274 + $0x84] sm:$0xf]
        %v371 = vld [vmem:[%s274 + $0x88] sm:$0xf]
        %v372 = vld [vmem:[%s274 + $0x8c] sm:$0xf]
        %v373 = vld [vmem:[%s274 + $0x90] sm:$0xf]
        %v374 = vld [vmem:[%s274 + $0x94] sm:$0xf]
        %v375 = vld [vmem:[%s274 + $0x98] sm:$0xf]
        %v376 = vld [vmem:[%s274 + $0x9c] sm:$0xf]
        %v377 = vld [vmem:[%s274 + $0xa0] sm:$0xf]
        %v378 = vld [vmem:[%s274 + $0xa4] sm:$0xf]
        %v379 = vld [vmem:[%s274 + $0xa8] sm:$0xf]
        %v380 = vld [vmem:[%s274 + $0xac] sm:$0xf]
        %v381 = vld [vmem:[%s274 + $0xb0] sm:$0xf]
        %v382 = vld [vmem:[%s274 + $0xb4] sm:$0xf]
        %v383 = vld [vmem:[%s274 + $0xb8] sm:$0xf]
        %v384 = vld [vmem:[%s274 + $0xbc] sm:$0xf]
        %v385 = vld [vmem:[%s274 + $0xc0] sm:$0xf]
        %v386 = vld [vmem:[%s274 + $0xc4] sm:$0xf]
        %v387 = vld [vmem:[%s274 + $0xc8] sm:$0xf]
        %v388 = vld [vmem:[%s274 + $0xcc] sm:$0xf]
        %v389 = vld [vmem:[%s274 + $0xd0] sm:$0xf]
        %v390 = vld [vmem:[%s274 + $0xd4] sm:$0xf]
        %v391 = vld [vmem:[%s278] sm:$0x1]
        %v393 = vperm.slane %v391, 0
        %v447 = vunpack.c.l.b16 %v285
        %v448 = vunpack.c.h.b16 %v285
        %v449 = vunpack.c.l.b16 %v286
        %v450 = vunpack.c.h.b16 %v286
        %v451 = vunpack.c.l.b16 %v287
        %v452 = vunpack.c.h.b16 %v287
        %v453 = vunpack.c.l.b16 %v288
        %v454 = vunpack.c.h.b16 %v288
        %v455 = vunpack.c.l.b16 %v289
        %v456 = vunpack.c.h.b16 %v289
        %v457 = vunpack.c.l.b16 %v290
        %v458 = vunpack.c.h.b16 %v290
        %v459 = vunpack.c.l.b16 %v291
        %v460 = vunpack.c.h.b16 %v291
        %v461 = vunpack.c.l.b16 %v292
        %v462 = vunpack.c.h.b16 %v292
        %v463 = vunpack.c.l.b16 %v293
        %v464 = vunpack.c.h.b16 %v293
        %v465 = vunpack.c.l.b16 %v294
        %v466 = vunpack.c.h.b16 %v294
        %v467 = vunpack.c.l.b16 %v295
        %v468 = vunpack.c.h.b16 %v295
        %v469 = vunpack.c.l.b16 %v296
        %v470 = vunpack.c.h.b16 %v296
        %v471 = vunpack.c.l.b16 %v297
        %v472 = vunpack.c.h.b16 %v297
        %v473 = vunpack.c.l.b16 %v298
        %v474 = vunpack.c.h.b16 %v298
        %v475 = vunpack.c.l.b16 %v299
        %v476 = vunpack.c.h.b16 %v299
        %v477 = vunpack.c.l.b16 %v300
        %v478 = vunpack.c.h.b16 %v300
        %v479 = vunpack.c.l.b16 %v301
        %v480 = vunpack.c.h.b16 %v301
        %v481 = vunpack.c.l.b16 %v302
        %v482 = vunpack.c.h.b16 %v302
        %v483 = vunpack.c.l.b16 %v303
        %v484 = vunpack.c.h.b16 %v303
        %v485 = vunpack.c.l.b16 %v304
        %v486 = vunpack.c.h.b16 %v304
        %v487 = vunpack.c.l.b16 %v305
        %v488 = vunpack.c.h.b16 %v305
        %v489 = vunpack.c.l.b16 %v306
        %v490 = vunpack.c.h.b16 %v306
        %v491 = vunpack.c.l.b16 %v307
        %v492 = vunpack.c.h.b16 %v307
        %v493 = vunpack.c.l.b16 %v308
        %v494 = vunpack.c.h.b16 %v308
        %v495 = vunpack.c.l.b16 %v309
        %v496 = vunpack.c.h.b16 %v309
        %v497 = vunpack.c.l.b16 %v310
        %v498 = vunpack.c.h.b16 %v310
        %v499 = vunpack.c.l.b16 %v311
        %v500 = vunpack.c.h.b16 %v311
        %v501 = vunpack.c.l.b16 %v312
        %v502 = vunpack.c.h.b16 %v312
        %v503 = vunpack.c.l.b16 %v313
        %v504 = vunpack.c.h.b16 %v313
        %v505 = vunpack.c.l.b16 %v314
        %v506 = vunpack.c.h.b16 %v314
        %v507 = vunpack.c.l.b16 %v315
        %v508 = vunpack.c.h.b16 %v315
        %v509 = vunpack.c.l.b16 %v316
        %v510 = vunpack.c.h.b16 %v316
        %v511 = vunpack.c.l.b16 %v317
        %v512 = vunpack.c.h.b16 %v317
        %v513 = vunpack.c.l.b16 %v318
        %v514 = vunpack.c.h.b16 %v318
        %v515 = vunpack.c.l.b16 %v319
        %v516 = vunpack.c.h.b16 %v319
        %v517 = vunpack.c.l.b16 %v320
        %v518 = vunpack.c.h.b16 %v320
        %v519 = vunpack.c.l.b16 %v321
        %v520 = vunpack.c.h.b16 %v321
        %v521 = vunpack.c.l.b16 %v322
        %v522 = vunpack.c.h.b16 %v322
        %v523 = vunpack.c.l.b16 %v323
        %v524 = vunpack.c.h.b16 %v323
        %v525 = vunpack.c.l.b16 %v324
        %v526 = vunpack.c.h.b16 %v324
        %v527 = vunpack.c.l.b16 %v325
        %v528 = vunpack.c.h.b16 %v325
        %v529 = vunpack.c.l.b16 %v326
        %v530 = vunpack.c.h.b16 %v326
        %v531 = vunpack.c.l.b16 %v327
        %v532 = vunpack.c.h.b16 %v327
        %v533 = vunpack.c.l.b16 %v328
        %v534 = vunpack.c.h.b16 %v328
        %v535 = vunpack.c.l.b16 %v329
        %v536 = vunpack.c.h.b16 %v329
        %v537 = vunpack.c.l.b16 %v330
        %v538 = vunpack.c.h.b16 %v330
        %v539 = vunpack.c.l.b16 %v331
        %v540 = vunpack.c.h.b16 %v331
        %v541 = vunpack.c.l.b16 %v332
        %v542 = vunpack.c.h.b16 %v332
        %v543 = vunpack.c.l.b16 %v333
        %v544 = vunpack.c.h.b16 %v333
        %v545 = vunpack.c.l.b16 %v334
        %v546 = vunpack.c.h.b16 %v334
        %v547 = vunpack.c.l.b16 %v335
        %v548 = vunpack.c.h.b16 %v335
        %v549 = vunpack.c.l.b16 %v336
        %v550 = vunpack.c.h.b16 %v336
        %v551 = vpack.c.b16 %v451, %v447
        %v552 = vpack.c.b16 %v452, %v448
        %v553 = vpack.c.b16 %v453, %v449
        %v554 = vpack.c.b16 %v454, %v450
        %v555 = vpack.c.b16 %v459, %v455
        %v556 = vpack.c.b16 %v460, %v456
        %v557 = vpack.c.b16 %v461, %v457
        %v558 = vpack.c.b16 %v462, %v458
        %v559 = vpack.c.b16 %v467, %v463
        %v560 = vpack.c.b16 %v468, %v464
        %v561 = vpack.c.b16 %v469, %v465
        %v562 = vpack.c.b16 %v470, %v466
        %v563 = vpack.c.b16 %v475, %v471
        %v564 = vpack.c.b16 %v476, %v472
        %v565 = vpack.c.b16 %v477, %v473
        %v566 = vpack.c.b16 %v478, %v474
        %v567 = vpack.c.b16 %v483, %v479
        %v568 = vpack.c.b16 %v484, %v480
        %v569 = vpack.c.b16 %v485, %v481
        %v570 = vpack.c.b16 %v486, %v482
        %v571 = vpack.c.b16 %v491, %v487
        %v572 = vpack.c.b16 %v492, %v488
        %v573 = vpack.c.b16 %v493, %v489
        %v574 = vpack.c.b16 %v494, %v490
        %v575 = vpack.c.b16 %v499, %v495
        %v576 = vpack.c.b16 %v500, %v496
        %v577 = vpack.c.b16 %v501, %v497
        %v578 = vpack.c.b16 %v502, %v498
        %v579 = vpack.c.b16 %v507, %v503
        %v580 = vpack.c.b16 %v508, %v504
        %v581 = vpack.c.b16 %v509, %v505
        %v582 = vpack.c.b16 %v510, %v506
        %v583 = vpack.c.b16 %v515, %v511
        %v584 = vpack.c.b16 %v516, %v512
        %v585 = vpack.c.b16 %v517, %v513
        %v586 = vpack.c.b16 %v518, %v514
        %v587 = vpack.c.b16 %v523, %v519
        %v588 = vpack.c.b16 %v524, %v520
        %v589 = vpack.c.b16 %v525, %v521
        %v590 = vpack.c.b16 %v526, %v522
        %v591 = vpack.c.b16 %v531, %v527
        %v592 = vpack.c.b16 %v532, %v528
        %v593 = vpack.c.b16 %v533, %v529
        %v594 = vpack.c.b16 %v534, %v530
        %v595 = vpack.c.b16 %v539, %v535
        %v596 = vpack.c.b16 %v540, %v536
        %v597 = vpack.c.b16 %v541, %v537
        %v598 = vpack.c.b16 %v542, %v538
        %v599 = vpack.c.b16 %v547, %v543
        %v600 = vpack.c.b16 %v548, %v544
        %v601 = vpack.c.b16 %v549, %v545
        %v602 = vpack.c.b16 %v550, %v546
        %v696 = vunpack.c.l.b16 %v337
        %v697 = vunpack.c.l.b16 %v338
        %v698 = vunpack.c.l.b16 %v339
        %v699 = vunpack.c.l.b16 %v340
        %v700 = vunpack.c.l.b16 %v341
        %v701 = vunpack.c.l.b16 %v342
        %v702 = vunpack.c.l.b16 %v343
        %v703 = vunpack.c.l.b16 %v344
        %v704 = vunpack.c.l.b16 %v345
        %v705 = vunpack.c.l.b16 %v346
        %v706 = vunpack.c.l.b16 %v347
        %v707 = vunpack.c.l.b16 %v348
        %v708 = vunpack.c.l.b16 %v349
        %v709 = vunpack.c.l.b16 %v350
        %v710 = vunpack.c.l.b16 %v351
        %v711 = vunpack.c.l.b16 %v352
        %v712 = vunpack.c.l.b16 %v353
        %v713 = vunpack.c.l.b16 %v354
        %v714 = vunpack.c.l.b16 %v355
        %v715 = vunpack.c.l.b16 %v356
        %v716 = vunpack.c.l.b16 %v357
        %v717 = vunpack.c.l.b16 %v358
        %v718 = vunpack.c.l.b16 %v359
        %v719 = vunpack.c.l.b16 %v360
        %v720 = vunpack.c.l.b16 %v361
        %v721 = vunpack.c.l.b16 %v362
        %v722 = vunpack.c.l.b16 %v363
        %v723 = vunpack.c.l.b16 %v364
        %v724 = vunpack.c.l.b16 %v365
        %v725 = vunpack.c.l.b16 %v366
        %v726 = vunpack.c.l.b16 %v367
        %v727 = vunpack.c.l.b16 %v368
        %v728 = vunpack.c.l.b16 %v369
        %v729 = vunpack.c.l.b16 %v370
        %v730 = vunpack.c.l.b16 %v371
        %v731 = vunpack.c.l.b16 %v372
        %v732 = vunpack.c.l.b16 %v373
        %v733 = vunpack.c.l.b16 %v374
        %v734 = vunpack.c.l.b16 %v375
        %v735 = vunpack.c.l.b16 %v376
        %v736 = vunpack.c.l.b16 %v377
        %v737 = vunpack.c.l.b16 %v378
        %v738 = vunpack.c.l.b16 %v379
        %v739 = vunpack.c.l.b16 %v380
        %v740 = vunpack.c.l.b16 %v381
        %v741 = vunpack.c.l.b16 %v382
        %v742 = vunpack.c.l.b16 %v383
        %v743 = vunpack.c.l.b16 %v384
        %v744 = vunpack.c.l.b16 %v385
        %v745 = vunpack.c.l.b16 %v386
        %v746 = vunpack.c.l.b16 %v387
        %v747 = vunpack.c.l.b16 %v388
        %v748 = vunpack.c.l.b16 %v389
        %v749 = vunpack.c.l.b16 %v390
        %v750 = vpack.c.b16 %v697, %v696
        %v751 = vpack.c.b16 %v699, %v698
        %v752 = vpack.c.b16 %v701, %v700
        %v753 = vpack.c.b16 %v703, %v702
        %v754 = vpack.c.b16 %v705, %v704
        %v755 = vpack.c.b16 %v707, %v706
        %v756 = vpack.c.b16 %v709, %v708
        %v757 = vpack.c.b16 %v711, %v710
        %v758 = vpack.c.b16 %v713, %v712
        %v759 = vpack.c.b16 %v715, %v714
        %v760 = vpack.c.b16 %v717, %v716
        %v761 = vpack.c.b16 %v719, %v718
        %v762 = vpack.c.b16 %v721, %v720
        %v763 = vpack.c.b16 %v723, %v722
        %v764 = vpack.c.b16 %v725, %v724
        %v765 = vpack.c.b16 %v727, %v726
        %v766 = vpack.c.b16 %v729, %v728
        %v767 = vpack.c.b16 %v731, %v730
        %v768 = vpack.c.b16 %v733, %v732
        %v769 = vpack.c.b16 %v735, %v734
        %v770 = vpack.c.b16 %v737, %v736
        %v771 = vpack.c.b16 %v739, %v738
        %v772 = vpack.c.b16 %v741, %v740
        %v773 = vpack.c.b16 %v743, %v742
        %v774 = vpack.c.b16 %v745, %v744
        %v775 = vpack.c.b16 %v747, %v746
        %v776 = vpack.c.b16 %v749, %v748
        %vm804 = vcmask 392192
        %v806 = vsel %vm804, %v554, 0
        %v809 = vsel %vm804, %v558, 0
        %v812 = vsel %vm804, %v562, 0
        %v815 = vsel %vm804, %v566, 0
        %v818 = vsel %vm804, %v570, 0
        %v821 = vsel %vm804, %v574, 0
        %v824 = vsel %vm804, %v578, 0
        %v827 = vsel %vm804, %v582, 0
        %v830 = vsel %vm804, %v586, 0
        %v833 = vsel %vm804, %v590, 0
        %v836 = vsel %vm804, %v594, 0
        %v839 = vsel %vm804, %v598, 0
        %v842 = vsel %vm804, %v602, 0
        %844 = vmatpush.bf16.msra.mxu0 %v757
        %845 = vmatpush.bf16.msra.mxu0 %v756
        %846 = vmatpush.bf16.msra.mxu0 %v755
        %847 = vmatpush.bf16.msra.mxu0 %v754
        %848 = vmatpush.bf16.msra.mxu0 %v753
        %849 = vmatpush.bf16.msra.mxu0 %v752
        %850 = vmatpush.bf16.msra.mxu0 %v751
        %851 = vmatpush.bf16.msra.mxu0 %v750
        %852 = vmatmul.bf16.gmra.mxu0 %v551
        %v853 = vpop.f32.mrf.mxu0
        %v854 = vadd.f32 %v393, %v853
        %v855 = vpop.f32.mrf.mxu0
        %v856 = vadd.f32 %v393, %v855
        %857 = vmatmul.bf16.gmra.mxu0 %v555
        %v858 = vpop.f32.mrf.mxu0
        %v859 = vadd.f32 %v393, %v858
        %v860 = vpop.f32.mrf.mxu0
        %v861 = vadd.f32 %v393, %v860
        %862 = vmatmul.bf16.gmra.mxu0 %v559
        %v863 = vpop.f32.mrf.mxu0
        %v864 = vadd.f32 %v393, %v863
        %v865 = vpop.f32.mrf.mxu0
        %v866 = vadd.f32 %v393, %v865
        %867 = vmatmul.bf16.gmra.mxu0 %v563
        %v868 = vpop.f32.mrf.mxu0
        %v869 = vadd.f32 %v393, %v868
        %v870 = vpop.f32.mrf.mxu0
        %v871 = vadd.f32 %v393, %v870
        %872 = vmatmul.bf16.gmra.mxu0 %v567
        %v873 = vpop.f32.mrf.mxu0
        %v874 = vadd.f32 %v393, %v873
        %v875 = vpop.f32.mrf.mxu0
        %v876 = vadd.f32 %v393, %v875
        %877 = vmatmul.bf16.gmra.mxu0 %v571
        %v878 = vpop.f32.mrf.mxu0
        %v879 = vadd.f32 %v393, %v878
        %v880 = vpop.f32.mrf.mxu0
        %v881 = vadd.f32 %v393, %v880
        %882 = vmatmul.bf16.gmra.mxu0 %v575
        %v883 = vpop.f32.mrf.mxu0
        %v884 = vadd.f32 %v393, %v883
        %v885 = vpop.f32.mrf.mxu0
        %v886 = vadd.f32 %v393, %v885
        %887 = vmatmul.bf16.gmra.mxu0 %v579
        %v888 = vpop.f32.mrf.mxu0
        %v889 = vadd.f32 %v393, %v888
        %v890 = vpop.f32.mrf.mxu0
        %v891 = vadd.f32 %v393, %v890
        %892 = vmatmul.bf16.gmra.mxu0 %v583
        %v893 = vpop.f32.mrf.mxu0
        %v894 = vadd.f32 %v393, %v893
        %v895 = vpop.f32.mrf.mxu0
        %v896 = vadd.f32 %v393, %v895
        %897 = vmatmul.bf16.gmra.mxu0 %v587
        %v898 = vpop.f32.mrf.mxu0
        %v899 = vadd.f32 %v393, %v898
        %v900 = vpop.f32.mrf.mxu0
        %v901 = vadd.f32 %v393, %v900
        %902 = vmatmul.bf16.gmra.mxu0 %v591
        %v903 = vpop.f32.mrf.mxu0
        %v904 = vadd.f32 %v393, %v903
        %v905 = vpop.f32.mrf.mxu0
        %v906 = vadd.f32 %v393, %v905
        %907 = vmatmul.bf16.gmra.mxu0 %v595
        %v908 = vpop.f32.mrf.mxu0
        %v909 = vadd.f32 %v393, %v908
        %v910 = vpop.f32.mrf.mxu0
        %v911 = vadd.f32 %v393, %v910
        %912 = vmatmul.bf16.gmra.mxu0 %v599
        %v913 = vpop.f32.mrf.mxu0
        %v914 = vadd.f32 %v393, %v913
        %v915 = vpop.f32.mrf.mxu0
        %v916 = vadd.f32 %v393, %v915
        %917 = vdwg.mxu0
        %918 = vmatpush.bf16.msra.mxu0 %v765
        %919 = vmatpush.bf16.msra.mxu0 %v764
        %920 = vmatpush.bf16.msra.mxu0 %v763
        %921 = vmatpush.bf16.msra.mxu0 %v762
        %922 = vmatpush.bf16.msra.mxu0 %v761
        %923 = vmatpush.bf16.msra.mxu0 %v760
        %924 = vmatpush.bf16.msra.mxu0 %v759
        %925 = vmatpush.bf16.msra.mxu0 %v758
        %926 = vmatmul.bf16.gmra.mxu0 %v552
        %v927 = vpop.f32.mrf.mxu0
        %v928 = vadd.f32 %v854, %v927
        %v929 = vpop.f32.mrf.mxu0
        %v930 = vadd.f32 %v856, %v929
        %931 = vmatmul.bf16.gmra.mxu0 %v556
        %v932 = vpop.f32.mrf.mxu0
        %v933 = vadd.f32 %v859, %v932
        %v934 = vpop.f32.mrf.mxu0
        %v935 = vadd.f32 %v861, %v934
        %936 = vmatmul.bf16.gmra.mxu0 %v560
        %v937 = vpop.f32.mrf.mxu0
        %v938 = vadd.f32 %v864, %v937
        %v939 = vpop.f32.mrf.mxu0
        %v940 = vadd.f32 %v866, %v939
        %941 = vmatmul.bf16.gmra.mxu0 %v564
        %v942 = vpop.f32.mrf.mxu0
        %v943 = vadd.f32 %v869, %v942
        %v944 = vpop.f32.mrf.mxu0
        %v945 = vadd.f32 %v871, %v944
        %946 = vmatmul.bf16.gmra.mxu0 %v568
        %v947 = vpop.f32.mrf.mxu0
        %v948 = vadd.f32 %v874, %v947
        %v949 = vpop.f32.mrf.mxu0
        %v950 = vadd.f32 %v876, %v949
        %951 = vmatmul.bf16.gmra.mxu0 %v572
        %v952 = vpop.f32.mrf.mxu0
        %v953 = vadd.f32 %v879, %v952
        %v954 = vpop.f32.mrf.mxu0
        %v955 = vadd.f32 %v881, %v954
        %956 = vmatmul.bf16.gmra.mxu0 %v576
        %v957 = vpop.f32.mrf.mxu0
        %v958 = vadd.f32 %v884, %v957
        %v959 = vpop.f32.mrf.mxu0
        %v960 = vadd.f32 %v886, %v959
        %961 = vmatmul.bf16.gmra.mxu0 %v580
        %v962 = vpop.f32.mrf.mxu0
        %v963 = vadd.f32 %v889, %v962
        %v964 = vpop.f32.mrf.mxu0
        %v965 = vadd.f32 %v891, %v964
        %966 = vmatmul.bf16.gmra.mxu0 %v584
        %v967 = vpop.f32.mrf.mxu0
        %v968 = vadd.f32 %v894, %v967
        %v969 = vpop.f32.mrf.mxu0
        %v970 = vadd.f32 %v896, %v969
        %971 = vmatmul.bf16.gmra.mxu0 %v588
        %v972 = vpop.f32.mrf.mxu0
        %v973 = vadd.f32 %v899, %v972
        %v974 = vpop.f32.mrf.mxu0
        %v975 = vadd.f32 %v901, %v974
        %976 = vmatmul.bf16.gmra.mxu0 %v592
        %v977 = vpop.f32.mrf.mxu0
        %v978 = vadd.f32 %v904, %v977
        %v979 = vpop.f32.mrf.mxu0
        %v980 = vadd.f32 %v906, %v979
        %981 = vmatmul.bf16.gmra.mxu0 %v596
        %v982 = vpop.f32.mrf.mxu0
        %v983 = vadd.f32 %v909, %v982
        %v984 = vpop.f32.mrf.mxu0
        %v985 = vadd.f32 %v911, %v984
        %986 = vmatmul.bf16.gmra.mxu0 %v600
        %v987 = vpop.f32.mrf.mxu0
        %v988 = vadd.f32 %v914, %v987
        %v989 = vpop.f32.mrf.mxu0
        %v990 = vadd.f32 %v916, %v989
        %991 = vdwg.mxu0
        %992 = vmatpush.bf16.msra.mxu0 %v773
        %993 = vmatpush.bf16.msra.mxu0 %v772
        %994 = vmatpush.bf16.msra.mxu0 %v771
        %995 = vmatpush.bf16.msra.mxu0 %v770
        %996 = vmatpush.bf16.msra.mxu0 %v769
        %997 = vmatpush.bf16.msra.mxu0 %v768
        %998 = vmatpush.bf16.msra.mxu0 %v767
        %999 = vmatpush.bf16.msra.mxu0 %v766
        %1000 = vmatmul.bf16.gmra.mxu0 %v553
        %v1001 = vpop.f32.mrf.mxu0
        %v1002 = vadd.f32 %v928, %v1001
        %v1003 = vpop.f32.mrf.mxu0
        %v1004 = vadd.f32 %v930, %v1003
        %1005 = vmatmul.bf16.gmra.mxu0 %v557
        %v1006 = vpop.f32.mrf.mxu0
        %v1007 = vadd.f32 %v933, %v1006
        %v1008 = vpop.f32.mrf.mxu0
        %v1009 = vadd.f32 %v935, %v1008
        %1010 = vmatmul.bf16.gmra.mxu0 %v561
        %v1011 = vpop.f32.mrf.mxu0
        %v1012 = vadd.f32 %v938, %v1011
        %v1013 = vpop.f32.mrf.mxu0
        %v1014 = vadd.f32 %v940, %v1013
        %1015 = vmatmul.bf16.gmra.mxu0 %v565
        %v1016 = vpop.f32.mrf.mxu0
        %v1017 = vadd.f32 %v943, %v1016
        %v1018 = vpop.f32.mrf.mxu0
        %v1019 = vadd.f32 %v945, %v1018
        %1020 = vmatmul.bf16.gmra.mxu0 %v569
        %v1021 = vpop.f32.mrf.mxu0
        %v1022 = vadd.f32 %v948, %v1021
        %v1023 = vpop.f32.mrf.mxu0
        %v1024 = vadd.f32 %v950, %v1023
        %1025 = vmatmul.bf16.gmra.mxu0 %v573
        %v1026 = vpop.f32.mrf.mxu0
        %v1027 = vadd.f32 %v953, %v1026
        %v1028 = vpop.f32.mrf.mxu0
        %v1029 = vadd.f32 %v955, %v1028
        %1030 = vmatmul.bf16.gmra.mxu0 %v577
        %v1031 = vpop.f32.mrf.mxu0
        %v1032 = vadd.f32 %v958, %v1031
        %v1033 = vpop.f32.mrf.mxu0
        %v1034 = vadd.f32 %v960, %v1033
        %1035 = vmatmul.bf16.gmra.mxu0 %v581
        %v1036 = vpop.f32.mrf.mxu0
        %v1037 = vadd.f32 %v963, %v1036
        %v1038 = vpop.f32.mrf.mxu0
        %v1039 = vadd.f32 %v965, %v1038
        %1040 = vmatmul.bf16.gmra.mxu0 %v585
        %v1041 = vpop.f32.mrf.mxu0
        %v1042 = vadd.f32 %v968, %v1041
        %v1043 = vpop.f32.mrf.mxu0
        %v1044 = vadd.f32 %v970, %v1043
        %1045 = vmatmul.bf16.gmra.mxu0 %v589
        %v1046 = vpop.f32.mrf.mxu0
        %v1047 = vadd.f32 %v973, %v1046
        %v1048 = vpop.f32.mrf.mxu0
        %v1049 = vadd.f32 %v975, %v1048
        %1050 = vmatmul.bf16.gmra.mxu0 %v593
        %v1051 = vpop.f32.mrf.mxu0
        %v1052 = vadd.f32 %v978, %v1051
        %v1053 = vpop.f32.mrf.mxu0
        %v1054 = vadd.f32 %v980, %v1053
        %1055 = vmatmul.bf16.gmra.mxu0 %v597
        %v1056 = vpop.f32.mrf.mxu0
        %v1057 = vadd.f32 %v983, %v1056
        %v1058 = vpop.f32.mrf.mxu0
        %v1059 = vadd.f32 %v985, %v1058
        %1060 = vmatmul.bf16.gmra.mxu0 %v601
        %v1061 = vpop.f32.mrf.mxu0
        %v1062 = vadd.f32 %v988, %v1061
        %v1063 = vpop.f32.mrf.mxu0
        %v1064 = vadd.f32 %v990, %v1063
        %1065 = vdwg.mxu0
        %1066 = vmatpush.bf16.msra.mxu0 0
        %1067 = vmatpush.bf16.msra.mxu0 0
        %1068 = vmatpush.bf16.msra.mxu0 0
        %1069 = vmatpush.bf16.msra.mxu0 0
        %1070 = vmatpush.bf16.msra.mxu0 0
        %1071 = vmatpush.bf16.msra.mxu0 %v776
        %1072 = vmatpush.bf16.msra.mxu0 %v775
        %1073 = vmatpush.bf16.msra.mxu0 %v774
        %1074 = vmatmul.bf16.gmra.mxu0 %v806
        %v1075 = vpop.f32.mrf.mxu0
        %v1076 = vadd.f32 %v1002, %v1075
        %v1077 = vpop.f32.mrf.mxu0
        %v1078 = vadd.f32 %v1004, %v1077
        %1079 = vmatmul.bf16.gmra.mxu0 %v809
        %v1080 = vpop.f32.mrf.mxu0
        %v1081 = vadd.f32 %v1007, %v1080
        %v1082 = vpop.f32.mrf.mxu0
        %v1083 = vadd.f32 %v1009, %v1082
        %1084 = vmatmul.bf16.gmra.mxu0 %v812
        %v1085 = vpop.f32.mrf.mxu0
        %v1086 = vadd.f32 %v1012, %v1085
        %v1087 = vpop.f32.mrf.mxu0
        %v1088 = vadd.f32 %v1014, %v1087
        %1089 = vmatmul.bf16.gmra.mxu0 %v815
        %v1090 = vpop.f32.mrf.mxu0
        %v1091 = vadd.f32 %v1017, %v1090
        %v1092 = vpop.f32.mrf.mxu0
        %v1093 = vadd.f32 %v1019, %v1092
        %1094 = vmatmul.bf16.gmra.mxu0 %v818
        %v1095 = vpop.f32.mrf.mxu0
        %v1096 = vadd.f32 %v1022, %v1095
        %v1097 = vpop.f32.mrf.mxu0
        %v1098 = vadd.f32 %v1024, %v1097
        %1099 = vmatmul.bf16.gmra.mxu0 %v821
        %v1100 = vpop.f32.mrf.mxu0
        %v1101 = vadd.f32 %v1027, %v1100
        %v1102 = vpop.f32.mrf.mxu0
        %v1103 = vadd.f32 %v1029, %v1102
        %1104 = vmatmul.bf16.gmra.mxu0 %v824
        %v1105 = vpop.f32.mrf.mxu0
        %v1106 = vadd.f32 %v1032, %v1105
        %v1107 = vpop.f32.mrf.mxu0
        %v1108 = vadd.f32 %v1034, %v1107
        %1109 = vmatmul.bf16.gmra.mxu0 %v827
        %v1110 = vpop.f32.mrf.mxu0
        %v1111 = vadd.f32 %v1037, %v1110
        %v1112 = vpop.f32.mrf.mxu0
        %v1113 = vadd.f32 %v1039, %v1112
        %1114 = vmatmul.bf16.gmra.mxu0 %v830
        %v1115 = vpop.f32.mrf.mxu0
        %v1116 = vadd.f32 %v1042, %v1115
        %v1117 = vpop.f32.mrf.mxu0
        %v1118 = vadd.f32 %v1044, %v1117
        %1119 = vmatmul.bf16.gmra.mxu0 %v833
        %v1120 = vpop.f32.mrf.mxu0
        %v1121 = vadd.f32 %v1047, %v1120
        %v1122 = vpop.f32.mrf.mxu0
        %v1123 = vadd.f32 %v1049, %v1122
        %1124 = vmatmul.bf16.gmra.mxu0 %v836
        %v1125 = vpop.f32.mrf.mxu0
        %v1126 = vadd.f32 %v1052, %v1125
        %v1127 = vpop.f32.mrf.mxu0
        %v1128 = vadd.f32 %v1054, %v1127
        %1129 = vmatmul.bf16.gmra.mxu0 %v839
        %v1130 = vpop.f32.mrf.mxu0
        %v1131 = vadd.f32 %v1057, %v1130
        %v1132 = vpop.f32.mrf.mxu0
        %v1133 = vadd.f32 %v1059, %v1132
        %1134 = vmatmul.bf16.gmra.mxu0 %v842
        %v1135 = vpop.f32.mrf.mxu0
        %v1136 = vadd.f32 %v1062, %v1135
        %v1137 = vpop.f32.mrf.mxu0
        %v1138 = vadd.f32 %v1064, %v1137
        %1139 = vdwg.mxu0
        %v1140 = vmax.f32 %v1076, 0.0
        %v1141 = vmax.f32 %v1078, 0.0
        %v1142 = vmax.f32 %v1081, 0.0
        %v1143 = vmax.f32 %v1083, 0.0
        %v1144 = vmax.f32 %v1086, 0.0
        %v1145 = vmax.f32 %v1088, 0.0
        %v1146 = vmax.f32 %v1091, 0.0
        %v1147 = vmax.f32 %v1093, 0.0
        %v1148 = vmax.f32 %v1096, 0.0
        %v1149 = vmax.f32 %v1098, 0.0
        %v1150 = vmax.f32 %v1101, 0.0
        %v1151 = vmax.f32 %v1103, 0.0
        %v1152 = vmax.f32 %v1106, 0.0
        %v1153 = vmax.f32 %v1108, 0.0
        %v1154 = vmax.f32 %v1111, 0.0
        %v1155 = vmax.f32 %v1113, 0.0
        %v1156 = vmax.f32 %v1116, 0.0
        %v1157 = vmax.f32 %v1118, 0.0
        %v1158 = vmax.f32 %v1121, 0.0
        %v1159 = vmax.f32 %v1123, 0.0
        %v1160 = vmax.f32 %v1126, 0.0
        %v1161 = vmax.f32 %v1128, 0.0
        %v1162 = vmax.f32 %v1131, 0.0
        %v1163 = vmax.f32 %v1133, 0.0
        %v1164 = vmax.f32 %v1136, 0.0
        %v1165 = vmax.f32 %v1138, 0.0
        %vm1166 = vcmask 261120
        %1167 = vst.msk [vmem:[%s244] sm:$0xff] %vm1166, %v1140
        %1168 = vst.msk [vmem:[%s244 + $0x8] sm:$0xff] %vm1166, %v1141
        %1169 = vst.msk [vmem:[%s244 + $0x10] sm:$0xff] %vm1166, %v1142
        %1170 = vst.msk [vmem:[%s244 + $0x18] sm:$0xff] %vm1166, %v1143
        %1171 = vst.msk [vmem:[%s244 + $0x20] sm:$0xff] %vm1166, %v1144
        %1172 = vst.msk [vmem:[%s244 + $0x28] sm:$0xff] %vm1166, %v1145
        %1173 = vst.msk [vmem:[%s244 + $0x30] sm:$0xff] %vm1166, %v1146
        %1174 = vst.msk [vmem:[%s244 + $0x38] sm:$0xff] %vm1166, %v1147
        %1175 = vst.msk [vmem:[%s244 + $0x40] sm:$0xff] %vm1166, %v1148
        %1176 = vst.msk [vmem:[%s244 + $0x48] sm:$0xff] %vm1166, %v1149
        %1177 = vst.msk [vmem:[%s244 + $0x50] sm:$0xff] %vm1166, %v1150
        %1178 = vst.msk [vmem:[%s244 + $0x58] sm:$0xff] %vm1166, %v1151
        %1179 = vst.msk [vmem:[%s244 + $0x60] sm:$0xff] %vm1166, %v1152
        %1180 = vst.msk [vmem:[%s244 + $0x68] sm:$0xff] %vm1166, %v1153
        %1181 = vst.msk [vmem:[%s244 + $0x70] sm:$0xff] %vm1166, %v1154
        %1182 = vst.msk [vmem:[%s244 + $0x78] sm:$0xff] %vm1166, %v1155
        %1183 = vst.msk [vmem:[%s244 + $0x80] sm:$0xff] %vm1166, %v1156
        %1184 = vst.msk [vmem:[%s244 + $0x88] sm:$0xff] %vm1166, %v1157
        %1185 = vst.msk [vmem:[%s244 + $0x90] sm:$0xff] %vm1166, %v1158
        %1186 = vst.msk [vmem:[%s244 + $0x98] sm:$0xff] %vm1166, %v1159
        %1187 = vst.msk [vmem:[%s244 + $0xa0] sm:$0xff] %vm1166, %v1160
        %1188 = vst.msk [vmem:[%s244 + $0xa8] sm:$0xff] %vm1166, %v1161
        %1189 = vst.msk [vmem:[%s244 + $0xb0] sm:$0xff] %vm1166, %v1162
        %1190 = vst.msk [vmem:[%s244 + $0xb8] sm:$0xff] %vm1166, %v1163
        %1191 = vst.msk [vmem:[%s244 + $0xc0] sm:$0xff] %vm1166, %v1164
        %1192 = vst.msk [vmem:[%s244 + $0xc8] sm:$0xff] %vm1166, %v1165
        %s1193 = sand.u32 %s125, 1
        %s1194 = sand.u32 %s125, 1
        %s1195 = smul.addr %s1194, 208
        %s1196 = scalar_lea.vmem [#allocation2], %s1195
        // Predicated region
        $region33: #{autoencoder_forward.6} parent=31 // pred_check
          %p1197 = pneg %p135
        $region34: #{autoencoder_forward.6} parent=31 // pred_check_branch
          %1199 = sbr.rel (%p1197) target = $region36
        $region35: #{autoencoder_forward.6} parent=31 // pred_region
          %s1200 = smul.u32 26, %s19
          %s1201 = ssub.s32 49, %s1200
          %p1202 = scmp.lt.s32.totalorder %s1201, 26
          %s1203 = scalar_select %p1202, %s1201, 26
          %s1204 = smul.u32 8, %s1203
          %p1205 = scmp.ne.s32.totalorder 0, %s1204
          %s1206 = sadd.s32 %s20, %s1200
          %s1207 = smul.addr %s1206, 8
          %s1208 = scalar_lea.vmem %s3, %s1207
          // Predicated region
          $region37: #{autoencoder_forward.6} parent=35 // pred_check
            %p1209 = pneg %p1205
          $region38: #{autoencoder_forward.6} parent=35 // pred_check_branch
            %1211 = sbr.rel (%p1209) target = $region40
          $region39: #{autoencoder_forward.6} parent=35 // pred_region
            // Predicated region
            $region41: #{autoencoder_forward.6} parent=39 // pred_check
              _
            $region42: #{autoencoder_forward.6} parent=39 // pred_check_branch
              %1213 = sbr.rel (0) target = $region44
            $region43: #{autoencoder_forward.6} parent=39 // pred_region
              // Predicated region
              $region63: #{autoencoder_forward.6} parent=43 // pred_check
                _
              $region64: #{autoencoder_forward.6} parent=43 // pred_check_branch
                %1314 = sbr.rel (0) target = $region66
              $region65: #{autoencoder_forward.6} parent=43 // pred_region
                %s1315 = sdiv.u32.pop %s1203, 26
                %s1316 = srem.u32.pop %s1203, 26
                // While loop
                $region67: #{autoencoder_forward.6} parent=65 // loop_pre_header
                  _
                $region68: #{autoencoder_forward.6} parent=65 // loop_header
                  %s1318 = sphi 0, %s1320
                  %p1319 = scmp.ge.s32.totalorder %s1318, %s1315
                  %s1323 = sphi 0, %s1380
                  %s1324 = sphi %s1196, %s1383
                  %s1325 = sphi %s1208, %s1384
                $region69: #{autoencoder_forward.6} parent=65 // loop_header_branch
                  %1322 = sbr.rel (%p1319) target = $region73
                $region70: #{autoencoder_forward.6} parent=65 // loop_body
                  %v1326 = vld [vmem:[%s1324] sm:$0xff]
                  %1327 = vst [vmem:[%s1325] sm:$0xff] %v1326
                  %v1328 = vld [vmem:[%s1324 + $0x8] sm:$0xff]
                  %1329 = vst [vmem:[%s1325 + $0x8] sm:$0xff] %v1328
                  %v1330 = vld [vmem:[%s1324 + $0x10] sm:$0xff]
                  %1331 = vst [vmem:[%s1325 + $0x10] sm:$0xff] %v1330
                  %v1332 = vld [vmem:[%s1324 + $0x18] sm:$0xff]
                  %1333 = vst [vmem:[%s1325 + $0x18] sm:$0xff] %v1332
                  %v1334 = vld [vmem:[%s1324 + $0x20] sm:$0xff]
                  %1335 = vst [vmem:[%s1325 + $0x20] sm:$0xff] %v1334
                  %v1336 = vld [vmem:[%s1324 + $0x28] sm:$0xff]
                  %1337 = vst [vmem:[%s1325 + $0x28] sm:$0xff] %v1336
                  %v1338 = vld [vmem:[%s1324 + $0x30] sm:$0xff]
                  %1339 = vst [vmem:[%s1325 + $0x30] sm:$0xff] %v1338
                  %v1340 = vld [vmem:[%s1324 + $0x38] sm:$0xff]
                  %1341 = vst [vmem:[%s1325 + $0x38] sm:$0xff] %v1340
                  %v1342 = vld [vmem:[%s1324 + $0x40] sm:$0xff]
                  %1343 = vst [vmem:[%s1325 + $0x40] sm:$0xff] %v1342
                  %v1344 = vld [vmem:[%s1324 + $0x48] sm:$0xff]
                  %1345 = vst [vmem:[%s1325 + $0x48] sm:$0xff] %v1344
                  %v1346 = vld [vmem:[%s1324 + $0x50] sm:$0xff]
                  %1347 = vst [vmem:[%s1325 + $0x50] sm:$0xff] %v1346
                  %v1348 = vld [vmem:[%s1324 + $0x58] sm:$0xff]
                  %1349 = vst [vmem:[%s1325 + $0x58] sm:$0xff] %v1348
                  %v1350 = vld [vmem:[%s1324 + $0x60] sm:$0xff]
                  %1351 = vst [vmem:[%s1325 + $0x60] sm:$0xff] %v1350
                  %v1352 = vld [vmem:[%s1324 + $0x68] sm:$0xff]
                  %1353 = vst [vmem:[%s1325 + $0x68] sm:$0xff] %v1352
                  %v1354 = vld [vmem:[%s1324 + $0x70] sm:$0xff]
                  %1355 = vst [vmem:[%s1325 + $0x70] sm:$0xff] %v1354
                  %v1356 = vld [vmem:[%s1324 + $0x78] sm:$0xff]
                  %1357 = vst [vmem:[%s1325 + $0x78] sm:$0xff] %v1356
                  %v1358 = vld [vmem:[%s1324 + $0x80] sm:$0xff]
                  %1359 = vst [vmem:[%s1325 + $0x80] sm:$0xff] %v1358
                  %v1360 = vld [vmem:[%s1324 + $0x88] sm:$0xff]
                  %1361 = vst [vmem:[%s1325 + $0x88] sm:$0xff] %v1360
                  %v1362 = vld [vmem:[%s1324 + $0x90] sm:$0xff]
                  %1363 = vst [vmem:[%s1325 + $0x90] sm:$0xff] %v1362
                  %v1364 = vld [vmem:[%s1324 + $0x98] sm:$0xff]
                  %1365 = vst [vmem:[%s1325 + $0x98] sm:$0xff] %v1364
                  %v1366 = vld [vmem:[%s1324 + $0xa0] sm:$0xff]
                  %1367 = vst [vmem:[%s1325 + $0xa0] sm:$0xff] %v1366
                  %v1368 = vld [vmem:[%s1324 + $0xa8] sm:$0xff]
                  %1369 = vst [vmem:[%s1325 + $0xa8] sm:$0xff] %v1368
                  %v1370 = vld [vmem:[%s1324 + $0xb0] sm:$0xff]
                  %1371 = vst [vmem:[%s1325 + $0xb0] sm:$0xff] %v1370
                  %v1372 = vld [vmem:[%s1324 + $0xb8] sm:$0xff]
                  %1373 = vst [vmem:[%s1325 + $0xb8] sm:$0xff] %v1372
                  %v1374 = vld [vmem:[%s1324 + $0xc0] sm:$0xff]
                  %1375 = vst [vmem:[%s1325 + $0xc0] sm:$0xff] %v1374
                  %v1376 = vld [vmem:[%s1324 + $0xc8] sm:$0xff]
                  %1377 = vst [vmem:[%s1325 + $0xc8] sm:$0xff] %v1376
                  %s1378 = sadd.s32 1, %s1323
                  %p1379 = scmp.ge.s32.totalorder %s1378, %s1315
                  %s1380 = scalar_select %p1379, 0, %s1378
                  %s1381 = smul.u32 %s1380, 208
                  %s1382 = smul.u32 %s1380, 208
                  %s1383 = scalar_lea.vmem %s1196, %s1381 [#allocation2]
                  %s1384 = scalar_lea.vmem %s1208, %s1382
                $region71: #{autoencoder_forward.6} parent=65 // loop_footer
                  %s1320 = sadd.s32 %s1318, 1
                $region72: #{autoencoder_forward.6} parent=65 // loop_footer_branch
                  %1317 = sbr.rel target = $region68
                $region73: #{autoencoder_forward.6} parent=65 // loop_exit
                  _
                %s1385 = sdiv.u32.pop %s1203, 26
                %s1386 = srem.u32.pop %s1203, 26
                %s1387 = smul.u32 %s1385, 26
                %s1388 = smul.u32 8, %s1387
                %s1389 = scalar_lea.vmem %s1196, %s1388 [#allocation2]
                %s1390 = smul.u32 8, %s1387
                %s1391 = scalar_lea.vmem %s1208, %s1390
                // While loop
                $region74: #{autoencoder_forward.6} parent=65 // loop_pre_header
                  _
                $region75: #{autoencoder_forward.6} parent=65 // loop_header
                  %s1393 = sphi 0, %s1395
                  %p1394 = scmp.ge.s32.totalorder %s1393, %s1386
                  %s1398 = sphi 0, %s1405
                  %s1399 = sphi %s1389, %s1408
                  %s1400 = sphi %s1391, %s1409
                $region76: #{autoencoder_forward.6} parent=65 // loop_header_branch
                  %1397 = sbr.rel (%p1394) target = $region80
                $region77: #{autoencoder_forward.6} parent=65 // loop_body
                  %v1401 = vld [vmem:[%s1399] sm:$0xff]
                  %1402 = vst [vmem:[%s1400] sm:$0xff] %v1401
                  %s1403 = sadd.s32 1, %s1398
                  %p1404 = scmp.ge.s32.totalorder %s1403, %s1386
                  %s1405 = scalar_select %p1404, 0, %s1403
                  %s1406 = smul.u32 %s1405, 8
                  %s1407 = smul.u32 %s1405, 8
                  %s1408 = scalar_lea.vmem %s1389, %s1406 [#allocation2]
                  %s1409 = scalar_lea.vmem %s1391, %s1407
                $region78: #{autoencoder_forward.6} parent=65 // loop_footer
                  %s1395 = sadd.s32 %s1393, 1
                $region79: #{autoencoder_forward.6} parent=65 // loop_footer_branch
                  %1392 = sbr.rel target = $region75
                $region80: #{autoencoder_forward.6} parent=65 // loop_exit
                  _
              $region66: #{autoencoder_forward.6} parent=43 // pred_fallthru
                _
              // Predicated region
              $region81: #{autoencoder_forward.6} parent=43 // pred_check
                _
              $region82: #{autoencoder_forward.6} parent=43 // pred_check_branch
                %1411 = sbr.rel target = $region84
              $region83: #{autoencoder_forward.6} parent=43 // pred_region
                _
              $region84: #{autoencoder_forward.6} parent=43 // pred_fallthru
                _
            $region44: #{autoencoder_forward.6} parent=39 // pred_fallthru
              _
            // Predicated region
            $region45: #{autoencoder_forward.6} parent=39 // pred_check
              _
            $region46: #{autoencoder_forward.6} parent=39 // pred_check_branch
              %1215 = sbr.rel target = $region48
            $region47: #{autoencoder_forward.6} parent=39 // pred_region
              %s1217 = ssub.s32 256, 1
              %s1218 = sdiv.u32.pop %s1203, 26
              %s1219 = srem.u32.pop %s1203, 26
              // While loop
              $region49: #{autoencoder_forward.6} parent=47 // loop_pre_header
                _
              $region50: #{autoencoder_forward.6} parent=47 // loop_header
                %s1221 = sphi 0, %s1223
                %p1222 = scmp.ge.s32.totalorder %s1221, %s1218
                %s1226 = sphi 0, %s1283
                %s1227 = sphi %s1196, %s1286
                %s1228 = sphi %s1208, %s1287
              $region51: #{autoencoder_forward.6} parent=47 // loop_header_branch
                %1225 = sbr.rel (%p1222) target = $region55
              $region52: #{autoencoder_forward.6} parent=47 // loop_body
                %v1229 = vld [vmem:[%s1227] sm:%s1217]
                %1230 = vst [vmem:[%s1228] sm:%s1217] %v1229
                %v1231 = vld [vmem:[%s1227 + $0x8] sm:%s1217]
                %1232 = vst [vmem:[%s1228 + $0x8] sm:%s1217] %v1231
                %v1233 = vld [vmem:[%s1227 + $0x10] sm:%s1217]
                %1234 = vst [vmem:[%s1228 + $0x10] sm:%s1217] %v1233
                %v1235 = vld [vmem:[%s1227 + $0x18] sm:%s1217]
                %1236 = vst [vmem:[%s1228 + $0x18] sm:%s1217] %v1235
                %v1237 = vld [vmem:[%s1227 + $0x20] sm:%s1217]
                %1238 = vst [vmem:[%s1228 + $0x20] sm:%s1217] %v1237
                %v1239 = vld [vmem:[%s1227 + $0x28] sm:%s1217]
                %1240 = vst [vmem:[%s1228 + $0x28] sm:%s1217] %v1239
                %v1241 = vld [vmem:[%s1227 + $0x30] sm:%s1217]
                %1242 = vst [vmem:[%s1228 + $0x30] sm:%s1217] %v1241
                %v1243 = vld [vmem:[%s1227 + $0x38] sm:%s1217]
                %1244 = vst [vmem:[%s1228 + $0x38] sm:%s1217] %v1243
                %v1245 = vld [vmem:[%s1227 + $0x40] sm:%s1217]
                %1246 = vst [vmem:[%s1228 + $0x40] sm:%s1217] %v1245
                %v1247 = vld [vmem:[%s1227 + $0x48] sm:%s1217]
                %1248 = vst [vmem:[%s1228 + $0x48] sm:%s1217] %v1247
                %v1249 = vld [vmem:[%s1227 + $0x50] sm:%s1217]
                %1250 = vst [vmem:[%s1228 + $0x50] sm:%s1217] %v1249
                %v1251 = vld [vmem:[%s1227 + $0x58] sm:%s1217]
                %1252 = vst [vmem:[%s1228 + $0x58] sm:%s1217] %v1251
                %v1253 = vld [vmem:[%s1227 + $0x60] sm:%s1217]
                %1254 = vst [vmem:[%s1228 + $0x60] sm:%s1217] %v1253
                %v1255 = vld [vmem:[%s1227 + $0x68] sm:%s1217]
                %1256 = vst [vmem:[%s1228 + $0x68] sm:%s1217] %v1255
                %v1257 = vld [vmem:[%s1227 + $0x70] sm:%s1217]
                %1258 = vst [vmem:[%s1228 + $0x70] sm:%s1217] %v1257
                %v1259 = vld [vmem:[%s1227 + $0x78] sm:%s1217]
                %1260 = vst [vmem:[%s1228 + $0x78] sm:%s1217] %v1259
                %v1261 = vld [vmem:[%s1227 + $0x80] sm:%s1217]
                %1262 = vst [vmem:[%s1228 + $0x80] sm:%s1217] %v1261
                %v1263 = vld [vmem:[%s1227 + $0x88] sm:%s1217]
                %1264 = vst [vmem:[%s1228 + $0x88] sm:%s1217] %v1263
                %v1265 = vld [vmem:[%s1227 + $0x90] sm:%s1217]
                %1266 = vst [vmem:[%s1228 + $0x90] sm:%s1217] %v1265
                %v1267 = vld [vmem:[%s1227 + $0x98] sm:%s1217]
                %1268 = vst [vmem:[%s1228 + $0x98] sm:%s1217] %v1267
                %v1269 = vld [vmem:[%s1227 + $0xa0] sm:%s1217]
                %1270 = vst [vmem:[%s1228 + $0xa0] sm:%s1217] %v1269
                %v1271 = vld [vmem:[%s1227 + $0xa8] sm:%s1217]
                %1272 = vst [vmem:[%s1228 + $0xa8] sm:%s1217] %v1271
                %v1273 = vld [vmem:[%s1227 + $0xb0] sm:%s1217]
                %1274 = vst [vmem:[%s1228 + $0xb0] sm:%s1217] %v1273
                %v1275 = vld [vmem:[%s1227 + $0xb8] sm:%s1217]
                %1276 = vst [vmem:[%s1228 + $0xb8] sm:%s1217] %v1275
                %v1277 = vld [vmem:[%s1227 + $0xc0] sm:%s1217]
                %1278 = vst [vmem:[%s1228 + $0xc0] sm:%s1217] %v1277
                %v1279 = vld [vmem:[%s1227 + $0xc8] sm:%s1217]
                %1280 = vst [vmem:[%s1228 + $0xc8] sm:%s1217] %v1279
                %s1281 = sadd.s32 1, %s1226
                %p1282 = scmp.ge.s32.totalorder %s1281, %s1218
                %s1283 = scalar_select %p1282, 0, %s1281
                %s1284 = smul.u32 %s1283, 208
                %s1285 = smul.u32 %s1283, 208
                %s1286 = scalar_lea.vmem %s1196, %s1284 [#allocation2]
                %s1287 = scalar_lea.vmem %s1208, %s1285
              $region53: #{autoencoder_forward.6} parent=47 // loop_footer
                %s1223 = sadd.s32 %s1221, 1
              $region54: #{autoencoder_forward.6} parent=47 // loop_footer_branch
                %1220 = sbr.rel target = $region50
              $region55: #{autoencoder_forward.6} parent=47 // loop_exit
                _
              %s1288 = sdiv.u32.pop %s1203, 26
              %s1289 = srem.u32.pop %s1203, 26
              %s1290 = smul.u32 %s1288, 26
              %s1291 = smul.u32 8, %s1290
              %s1292 = scalar_lea.vmem %s1196, %s1291 [#allocation2]
              %s1293 = smul.u32 8, %s1290
              %s1294 = scalar_lea.vmem %s1208, %s1293
              // While loop
              $region56: #{autoencoder_forward.6} parent=47 // loop_pre_header
                _
              $region57: #{autoencoder_forward.6} parent=47 // loop_header
                %s1296 = sphi 0, %s1298
                %p1297 = scmp.ge.s32.totalorder %s1296, %s1289
                %s1301 = sphi 0, %s1308
                %s1302 = sphi %s1292, %s1311
                %s1303 = sphi %s1294, %s1312
              $region58: #{autoencoder_forward.6} parent=47 // loop_header_branch
                %1300 = sbr.rel (%p1297) target = $region62
              $region59: #{autoencoder_forward.6} parent=47 // loop_body
                %v1304 = vld [vmem:[%s1302] sm:%s1217]
                %1305 = vst [vmem:[%s1303] sm:%s1217] %v1304
                %s1306 = sadd.s32 1, %s1301
                %p1307 = scmp.ge.s32.totalorder %s1306, %s1289
                %s1308 = scalar_select %p1307, 0, %s1306
                %s1309 = smul.u32 %s1308, 8
                %s1310 = smul.u32 %s1308, 8
                %s1311 = scalar_lea.vmem %s1292, %s1309 [#allocation2]
                %s1312 = scalar_lea.vmem %s1294, %s1310
              $region60: #{autoencoder_forward.6} parent=47 // loop_footer
                %s1298 = sadd.s32 %s1296, 1
              $region61: #{autoencoder_forward.6} parent=47 // loop_footer_branch
                %1295 = sbr.rel target = $region57
              $region62: #{autoencoder_forward.6} parent=47 // loop_exit
                _
            $region48: #{autoencoder_forward.6} parent=39 // pred_fallthru
              _
          $region40: #{autoencoder_forward.6} parent=35 // pred_fallthru
            _
          %1412 = vnop
        $region36: #{autoencoder_forward.6} parent=31 // pred_fallthru
          _
      $region32: #{autoencoder_forward.6} parent=5 // pred_fallthru
        _
      %p1413 = scmp.le.s32.totalorder 2, %s9
      // Predicated region
      $region85: #{autoencoder_forward.6} parent=5 // pred_check
        %p1414 = pneg %p1413
      $region86: #{autoencoder_forward.6} parent=5 // pred_check_branch
        %1416 = sbr.rel (%p1414) target = $region88
      $region87: #{autoencoder_forward.6} parent=5 // pred_region
        %s1417 = ssub.s32 %s9, 2
        // Predicated region
        $region89: #{autoencoder_forward.6} parent=87 // pred_check
          %p1418 = pneg %p141
        $region90: #{autoencoder_forward.6} parent=87 // pred_check_branch
          %1420 = sbr.rel (%p1418) target = $region92
        $region91: #{autoencoder_forward.6} parent=87 // pred_region
          %s1421 = sand.u32 %s126, 1
          %s1422 = sand.u32 %s126, 1
          %s1423 = smul.addr %s1422, 208
          %s1424 = scalar_lea.vmem [#allocation2], %s1423
        $region92: #{autoencoder_forward.6} parent=87 // pred_fallthru
          _
      $region88: #{autoencoder_forward.6} parent=5 // pred_fallthru
        _
    $region6: #{autoencoder_forward.6} parent=1 // loop_footer
      %s13 = sadd.s32 1, %s9
    $region7: #{autoencoder_forward.6} parent=1 // loop_footer_branch
      %8 = sbr.rel target = $region3
    $region8: #{autoencoder_forward.6} parent=1 // loop_exit
      _

// kernel: autoencoder_forward.7
$region0: #{autoencoder_forward.7}
  #allocation0 [shape = 'u32[]', space=smem, size = 0x4, offset = 0x4, fixed_abs, tag = 'smem constant byte address 0x4 - core index']
  #allocation1 [shape = 'u32[72,128]{1,0:T(1,128)}', space=vmem, size = 0x9000, scoped, tag = 'internal scratch']
  %s0 = inlined_call_operand.vmem [shape: bf16[32,2048], index: 0, kind: input, shape index: {}]
  %s1 = inlined_call_operand.vmem [shape: bf16[2048,64], index: 1, kind: input, shape index: {}]
  %s2 = inlined_call_operand.vmem [shape: f32[1,64], index: 2, kind: input, shape index: {}]
  %s3 = inlined_call_operand.vmem [shape: f32[32,64], index: 3, kind: output, shape index: {}]
  %s4 = sld [smem:[#allocation0]]
  $region22: #{autoencoder_forward.7} parent=0
    _
  %s6 = ssub.s32 1, %s4
  %s7 = scalar_select 0, %s6, %s4
  // Predicated region
  $region2: #{autoencoder_forward.7} parent=0 // pred_check
    _
  $region3: #{autoencoder_forward.7} parent=0 // pred_check_branch
    %9 = sbr.rel (0) target = $region5
  $region4: #{autoencoder_forward.7} parent=0 // pred_region
    _
  $region5: #{autoencoder_forward.7} parent=0 // pred_fallthru
    _
  // Predicated region
  $region6: #{autoencoder_forward.7} parent=0 // pred_check
    _
  $region7: #{autoencoder_forward.7} parent=0 // pred_check_branch
    %11 = sbr.rel (0) target = $region9
  $region8: #{autoencoder_forward.7} parent=0 // pred_region
    _
  $region9: #{autoencoder_forward.7} parent=0 // pred_fallthru
    _
  // Predicated region
  $region10: #{autoencoder_forward.7} parent=0 // pred_check
    _
  $region11: #{autoencoder_forward.7} parent=0 // pred_check_branch
    %13 = sbr.rel (0) target = $region13
  $region12: #{autoencoder_forward.7} parent=0 // pred_region
    _
  $region13: #{autoencoder_forward.7} parent=0 // pred_fallthru
    _
  %v14 = vld [vmem:[%s0] sm:$0xff]
  %v15 = vld [vmem:[%s0 + $0x8] sm:$0xff]
  %v16 = vld [vmem:[%s0 + $0x10] sm:$0xff]
  %v17 = vld [vmem:[%s0 + $0x18] sm:$0xff]
  %v18 = vld [vmem:[%s0 + $0x20] sm:$0xff]
  %v19 = vld [vmem:[%s0 + $0x28] sm:$0xff]
  %v20 = vld [vmem:[%s0 + $0x30] sm:$0xff]
  %v21 = vld [vmem:[%s0 + $0x38] sm:$0xff]
  %v22 = vld [vmem:[%s0 + $0x40] sm:$0xff]
  %v23 = vld [vmem:[%s0 + $0x48] sm:$0xff]
  %v24 = vld [vmem:[%s0 + $0x50] sm:$0xff]
  %v25 = vld [vmem:[%s0 + $0x58] sm:$0xff]
  %v26 = vld [vmem:[%s0 + $0x60] sm:$0xff]
  %v27 = vld [vmem:[%s0 + $0x68] sm:$0xff]
  %v28 = vld [vmem:[%s0 + $0x70] sm:$0xff]
  %v29 = vld [vmem:[%s0 + $0x78] sm:$0xff]
  %v30 = vld [vmem:[%s0 + $0x80] sm:$0xff]
  %v31 = vld [vmem:[%s0 + $0x88] sm:$0xff]
  %v32 = vld [vmem:[%s0 + $0x90] sm:$0xff]
  %v33 = vld [vmem:[%s0 + $0x98] sm:$0xff]
  %v34 = vld [vmem:[%s0 + $0xa0] sm:$0xff]
  %v35 = vld [vmem:[%s0 + $0xa8] sm:$0xff]
  %v36 = vld [vmem:[%s0 + $0xb0] sm:$0xff]
  %v37 = vld [vmem:[%s0 + $0xb8] sm:$0xff]
  %v38 = vld [vmem:[%s0 + $0xc0] sm:$0xff]
  %v39 = vld [vmem:[%s0 + $0xc8] sm:$0xff]
  %v40 = vld [vmem:[%s0 + $0xd0] sm:$0xff]
  %v41 = vld [vmem:[%s0 + $0xd8] sm:$0xff]
  %v42 = vld [vmem:[%s0 + $0xe0] sm:$0xff]
  %v43 = vld [vmem:[%s0 + $0xe8] sm:$0xff]
  %v44 = vld [vmem:[%s0 + $0xf0] sm:$0xff]
  %v45 = vld [vmem:[%s0 + $0xf8] sm:$0xff]
  %v46 = vld [vmem:[%s1] sm:$0xf]
  %v47 = vld [vmem:[%s1 + $0x4] sm:$0xf]
  %v48 = vld [vmem:[%s1 + $0x8] sm:$0xf]
  %v49 = vld [vmem:[%s1 + $0xc] sm:$0xf]
  %v50 = vld [vmem:[%s1 + $0x10] sm:$0xf]
  %v51 = vld [vmem:[%s1 + $0x14] sm:$0xf]
  %v52 = vld [vmem:[%s1 + $0x18] sm:$0xf]
  %v53 = vld [vmem:[%s1 + $0x1c] sm:$0xf]
  %v54 = vld [vmem:[%s1 + $0x20] sm:$0xf]
  %v55 = vld [vmem:[%s1 + $0x24] sm:$0xf]
  %v56 = vld [vmem:[%s1 + $0x28] sm:$0xf]
  %v57 = vld [vmem:[%s1 + $0x2c] sm:$0xf]
  %v58 = vld [vmem:[%s1 + $0x30] sm:$0xf]
  %v59 = vld [vmem:[%s1 + $0x34] sm:$0xf]
  %v60 = vld [vmem:[%s1 + $0x38] sm:$0xf]
  %v61 = vld [vmem:[%s1 + $0x3c] sm:$0xf]
  %v62 = vld [vmem:[%s1 + $0x40] sm:$0xf]
  %v63 = vld [vmem:[%s1 + $0x44] sm:$0xf]
  %v64 = vld [vmem:[%s1 + $0x48] sm:$0xf]
  %v65 = vld [vmem:[%s1 + $0x4c] sm:$0xf]
  %v66 = vld [vmem:[%s1 + $0x50] sm:$0xf]
  %v67 = vld [vmem:[%s1 + $0x54] sm:$0xf]
  %v68 = vld [vmem:[%s1 + $0x58] sm:$0xf]
  %v69 = vld [vmem:[%s1 + $0x5c] sm:$0xf]
  %v70 = vld [vmem:[%s1 + $0x60] sm:$0xf]
  %v71 = vld [vmem:[%s1 + $0x64] sm:$0xf]
  %v72 = vld [vmem:[%s1 + $0x68] sm:$0xf]
  %v73 = vld [vmem:[%s1 + $0x6c] sm:$0xf]
  %v74 = vld [vmem:[%s1 + $0x70] sm:$0xf]
  %v75 = vld [vmem:[%s1 + $0x74] sm:$0xf]
  %v76 = vld [vmem:[%s1 + $0x78] sm:$0xf]
  %v77 = vld [vmem:[%s1 + $0x7c] sm:$0xf]
  %v78 = vld [vmem:[%s1 + $0x80] sm:$0xf]
  %v79 = vld [vmem:[%s1 + $0x84] sm:$0xf]
  %v80 = vld [vmem:[%s1 + $0x88] sm:$0xf]
  %v81 = vld [vmem:[%s1 + $0x8c] sm:$0xf]
  %v82 = vld [vmem:[%s1 + $0x90] sm:$0xf]
  %v83 = vld [vmem:[%s1 + $0x94] sm:$0xf]
  %v84 = vld [vmem:[%s1 + $0x98] sm:$0xf]
  %v85 = vld [vmem:[%s1 + $0x9c] sm:$0xf]
  %v86 = vld [vmem:[%s1 + $0xa0] sm:$0xf]
  %v87 = vld [vmem:[%s1 + $0xa4] sm:$0xf]
  %v88 = vld [vmem:[%s1 + $0xa8] sm:$0xf]
  %v89 = vld [vmem:[%s1 + $0xac] sm:$0xf]
  %v90 = vld [vmem:[%s1 + $0xb0] sm:$0xf]
  %v91 = vld [vmem:[%s1 + $0xb4] sm:$0xf]
  %v92 = vld [vmem:[%s1 + $0xb8] sm:$0xf]
  %v93 = vld [vmem:[%s1 + $0xbc] sm:$0xf]
  %v94 = vld [vmem:[%s1 + $0xc0] sm:$0xf]
  %v95 = vld [vmem:[%s1 + $0xc4] sm:$0xf]
  %v96 = vld [vmem:[%s1 + $0xc8] sm:$0xf]
  %v97 = vld [vmem:[%s1 + $0xcc] sm:$0xf]
  %v98 = vld [vmem:[%s1 + $0xd0] sm:$0xf]
  %v99 = vld [vmem:[%s1 + $0xd4] sm:$0xf]
  %v100 = vld [vmem:[%s1 + $0xd8] sm:$0xf]
  %v101 = vld [vmem:[%s1 + $0xdc] sm:$0xf]
  %v102 = vld [vmem:[%s1 + $0xe0] sm:$0xf]
  %v103 = vld [vmem:[%s1 + $0xe4] sm:$0xf]
  %v104 = vld [vmem:[%s1 + $0xe8] sm:$0xf]
  %v105 = vld [vmem:[%s1 + $0xec] sm:$0xf]
  %v106 = vld [vmem:[%s1 + $0xf0] sm:$0xf]
  %v107 = vld [vmem:[%s1 + $0xf4] sm:$0xf]
  %v108 = vld [vmem:[%s1 + $0xf8] sm:$0xf]
  %v109 = vld [vmem:[%s1 + $0xfc] sm:$0xf]
  %v110 = vld [vmem:[%s1 + $0x100] sm:$0xf]
  %v111 = vld [vmem:[%s1 + $0x104] sm:$0xf]
  %v112 = vld [vmem:[%s1 + $0x108] sm:$0xf]
  %v113 = vld [vmem:[%s1 + $0x10c] sm:$0xf]
  %v114 = vld [vmem:[%s1 + $0x110] sm:$0xf]
  %v115 = vld [vmem:[%s1 + $0x114] sm:$0xf]
  %v116 = vld [vmem:[%s1 + $0x118] sm:$0xf]
  %v117 = vld [vmem:[%s1 + $0x11c] sm:$0xf]
  %v118 = vld [vmem:[%s1 + $0x120] sm:$0xf]
  %v119 = vld [vmem:[%s1 + $0x124] sm:$0xf]
  %v120 = vld [vmem:[%s1 + $0x128] sm:$0xf]
  %v121 = vld [vmem:[%s1 + $0x12c] sm:$0xf]
  %v122 = vld [vmem:[%s1 + $0x130] sm:$0xf]
  %v123 = vld [vmem:[%s1 + $0x134] sm:$0xf]
  %v124 = vld [vmem:[%s1 + $0x138] sm:$0xf]
  %v125 = vld [vmem:[%s1 + $0x13c] sm:$0xf]
  %v126 = vld [vmem:[%s1 + $0x140] sm:$0xf]
  %v127 = vld [vmem:[%s1 + $0x144] sm:$0xf]
  %v128 = vld [vmem:[%s1 + $0x148] sm:$0xf]
  %v129 = vld [vmem:[%s1 + $0x14c] sm:$0xf]
  %v130 = vld [vmem:[%s1 + $0x150] sm:$0xf]
  %v131 = vld [vmem:[%s1 + $0x154] sm:$0xf]
  %v132 = vld [vmem:[%s1 + $0x158] sm:$0xf]
  %v133 = vld [vmem:[%s1 + $0x15c] sm:$0xf]
  %v134 = vld [vmem:[%s1 + $0x160] sm:$0xf]
  %v135 = vld [vmem:[%s1 + $0x164] sm:$0xf]
  %v136 = vld [vmem:[%s1 + $0x168] sm:$0xf]
  %v137 = vld [vmem:[%s1 + $0x16c] sm:$0xf]
  %v138 = vld [vmem:[%s1 + $0x170] sm:$0xf]
  %v139 = vld [vmem:[%s1 + $0x174] sm:$0xf]
  %v140 = vld [vmem:[%s1 + $0x178] sm:$0xf]
  %v141 = vld [vmem:[%s1 + $0x17c] sm:$0xf]
  %v142 = vld [vmem:[%s1 + $0x180] sm:$0xf]
  %v143 = vld [vmem:[%s1 + $0x184] sm:$0xf]
  %v144 = vld [vmem:[%s1 + $0x188] sm:$0xf]
  %v145 = vld [vmem:[%s1 + $0x18c] sm:$0xf]
  %v146 = vld [vmem:[%s1 + $0x190] sm:$0xf]
  %v147 = vld [vmem:[%s1 + $0x194] sm:$0xf]
  %v148 = vld [vmem:[%s1 + $0x198] sm:$0xf]
  %v149 = vld [vmem:[%s1 + $0x19c] sm:$0xf]
  %v150 = vld [vmem:[%s1 + $0x1a0] sm:$0xf]
  %v151 = vld [vmem:[%s1 + $0x1a4] sm:$0xf]
  %v152 = vld [vmem:[%s1 + $0x1a8] sm:$0xf]
  %v153 = vld [vmem:[%s1 + $0x1ac] sm:$0xf]
  %v154 = vld [vmem:[%s1 + $0x1b0] sm:$0xf]
  %v155 = vld [vmem:[%s1 + $0x1b4] sm:$0xf]
  %v156 = vld [vmem:[%s1 + $0x1b8] sm:$0xf]
  %v157 = vld [vmem:[%s1 + $0x1bc] sm:$0xf]
  %v158 = vld [vmem:[%s1 + $0x1c0] sm:$0xf]
  %v159 = vld [vmem:[%s1 + $0x1c4] sm:$0xf]
  %v160 = vld [vmem:[%s1 + $0x1c8] sm:$0xf]
  %v161 = vld [vmem:[%s1 + $0x1cc] sm:$0xf]
  %v162 = vld [vmem:[%s1 + $0x1d0] sm:$0xf]
  %v163 = vld [vmem:[%s1 + $0x1d4] sm:$0xf]
  %v164 = vld [vmem:[%s1 + $0x1d8] sm:$0xf]
  %v165 = vld [vmem:[%s1 + $0x1dc] sm:$0xf]
  %v166 = vld [vmem:[%s1 + $0x1e0] sm:$0xf]
  %v167 = vld [vmem:[%s1 + $0x1e4] sm:$0xf]
  %v168 = vld [vmem:[%s1 + $0x1e8] sm:$0xf]
  %v169 = vld [vmem:[%s1 + $0x1ec] sm:$0xf]
  %v170 = vld [vmem:[%s1 + $0x1f0] sm:$0xf]
  %v171 = vld [vmem:[%s1 + $0x1f4] sm:$0xf]
  %v172 = vld [vmem:[%s1 + $0x1f8] sm:$0xf]
  %v173 = vld [vmem:[%s1 + $0x1fc] sm:$0xf]
  %v174 = vld [vmem:[%s1 + $0x200] sm:$0xf]
  %v175 = vld [vmem:[%s1 + $0x204] sm:$0xf]
  %v176 = vld [vmem:[%s1 + $0x208] sm:$0xf]
  %v177 = vld [vmem:[%s1 + $0x20c] sm:$0xf]
  %v178 = vld [vmem:[%s1 + $0x210] sm:$0xf]
  %v179 = vld [vmem:[%s1 + $0x214] sm:$0xf]
  %v180 = vld [vmem:[%s1 + $0x218] sm:$0xf]
  %v181 = vld [vmem:[%s1 + $0x21c] sm:$0xf]
  %v182 = vld [vmem:[%s1 + $0x220] sm:$0xf]
  %v183 = vld [vmem:[%s1 + $0x224] sm:$0xf]
  %v184 = vld [vmem:[%s1 + $0x228] sm:$0xf]
  %v185 = vld [vmem:[%s1 + $0x22c] sm:$0xf]
  %v186 = vld [vmem:[%s1 + $0x230] sm:$0xf]
  %v187 = vld [vmem:[%s1 + $0x234] sm:$0xf]
  %v188 = vld [vmem:[%s1 + $0x238] sm:$0xf]
  %v189 = vld [vmem:[%s1 + $0x23c] sm:$0xf]
  %v190 = vld [vmem:[%s1 + $0x240] sm:$0xf]
  %v191 = vld [vmem:[%s1 + $0x244] sm:$0xf]
  %v192 = vld [vmem:[%s1 + $0x248] sm:$0xf]
  %v193 = vld [vmem:[%s1 + $0x24c] sm:$0xf]
  %v194 = vld [vmem:[%s1 + $0x250] sm:$0xf]
  %v195 = vld [vmem:[%s1 + $0x254] sm:$0xf]
  %v196 = vld [vmem:[%s1 + $0x258] sm:$0xf]
  %v197 = vld [vmem:[%s1 + $0x25c] sm:$0xf]
  %v198 = vld [vmem:[%s1 + $0x260] sm:$0xf]
  %v199 = vld [vmem:[%s1 + $0x264] sm:$0xf]
  %v200 = vld [vmem:[%s1 + $0x268] sm:$0xf]
  %v201 = vld [vmem:[%s1 + $0x26c] sm:$0xf]
  %v202 = vld [vmem:[%s1 + $0x270] sm:$0xf]
  %v203 = vld [vmem:[%s1 + $0x274] sm:$0xf]
  %v204 = vld [vmem:[%s1 + $0x278] sm:$0xf]
  %v205 = vld [vmem:[%s1 + $0x27c] sm:$0xf]
  %v206 = vld [vmem:[%s1 + $0x280] sm:$0xf]
  %v207 = vld [vmem:[%s1 + $0x284] sm:$0xf]
  %v208 = vld [vmem:[%s1 + $0x288] sm:$0xf]
  %v209 = vld [vmem:[%s1 + $0x28c] sm:$0xf]
  %v210 = vld [vmem:[%s1 + $0x290] sm:$0xf]
  %v211 = vld [vmem:[%s1 + $0x294] sm:$0xf]
  %v212 = vld [vmem:[%s1 + $0x298] sm:$0xf]
  %v213 = vld [vmem:[%s1 + $0x29c] sm:$0xf]
  %v214 = vld [vmem:[%s1 + $0x2a0] sm:$0xf]
  %v215 = vld [vmem:[%s1 + $0x2a4] sm:$0xf]
  %v216 = vld [vmem:[%s1 + $0x2a8] sm:$0xf]
  %v217 = vld [vmem:[%s1 + $0x2ac] sm:$0xf]
  %v218 = vld [vmem:[%s1 + $0x2b0] sm:$0xf]
  %v219 = vld [vmem:[%s1 + $0x2b4] sm:$0xf]
  %v220 = vld [vmem:[%s1 + $0x2b8] sm:$0xf]
  %v221 = vld [vmem:[%s1 + $0x2bc] sm:$0xf]
  %v222 = vld [vmem:[%s1 + $0x2c0] sm:$0xf]
  %v223 = vld [vmem:[%s1 + $0x2c4] sm:$0xf]
  %v224 = vld [vmem:[%s1 + $0x2c8] sm:$0xf]
  %v225 = vld [vmem:[%s1 + $0x2cc] sm:$0xf]
  %v226 = vld [vmem:[%s1 + $0x2d0] sm:$0xf]
  %v227 = vld [vmem:[%s1 + $0x2d4] sm:$0xf]
  %v228 = vld [vmem:[%s1 + $0x2d8] sm:$0xf]
  %v229 = vld [vmem:[%s1 + $0x2dc] sm:$0xf]
  %v230 = vld [vmem:[%s1 + $0x2e0] sm:$0xf]
  %v231 = vld [vmem:[%s1 + $0x2e4] sm:$0xf]
  %v232 = vld [vmem:[%s1 + $0x2e8] sm:$0xf]
  %v233 = vld [vmem:[%s1 + $0x2ec] sm:$0xf]
  %v234 = vld [vmem:[%s1 + $0x2f0] sm:$0xf]
  %v235 = vld [vmem:[%s1 + $0x2f4] sm:$0xf]
  %v236 = vld [vmem:[%s1 + $0x2f8] sm:$0xf]
  %v237 = vld [vmem:[%s1 + $0x2fc] sm:$0xf]
  %v238 = vld [vmem:[%s1 + $0x300] sm:$0xf]
  %v239 = vld [vmem:[%s1 + $0x304] sm:$0xf]
  %v240 = vld [vmem:[%s1 + $0x308] sm:$0xf]
  %v241 = vld [vmem:[%s1 + $0x30c] sm:$0xf]
  %v242 = vld [vmem:[%s1 + $0x310] sm:$0xf]
  %v243 = vld [vmem:[%s1 + $0x314] sm:$0xf]
  %v244 = vld [vmem:[%s1 + $0x318] sm:$0xf]
  %v245 = vld [vmem:[%s1 + $0x31c] sm:$0xf]
  %v246 = vld [vmem:[%s1 + $0x320] sm:$0xf]
  %v247 = vld [vmem:[%s1 + $0x324] sm:$0xf]
  %v248 = vld [vmem:[%s1 + $0x328] sm:$0xf]
  %v249 = vld [vmem:[%s1 + $0x32c] sm:$0xf]
  %v250 = vld [vmem:[%s1 + $0x330] sm:$0xf]
  %v251 = vld [vmem:[%s1 + $0x334] sm:$0xf]
  %v252 = vld [vmem:[%s1 + $0x338] sm:$0xf]
  %v253 = vld [vmem:[%s1 + $0x33c] sm:$0xf]
  %v254 = vld [vmem:[%s1 + $0x340] sm:$0xf]
  %v255 = vld [vmem:[%s1 + $0x344] sm:$0xf]
  %v256 = vld [vmem:[%s1 + $0x348] sm:$0xf]
  %v257 = vld [vmem:[%s1 + $0x34c] sm:$0xf]
  %v258 = vld [vmem:[%s1 + $0x350] sm:$0xf]
  %v259 = vld [vmem:[%s1 + $0x354] sm:$0xf]
  %v260 = vld [vmem:[%s1 + $0x358] sm:$0xf]
  %v261 = vld [vmem:[%s1 + $0x35c] sm:$0xf]
  %v262 = vld [vmem:[%s1 + $0x360] sm:$0xf]
  %v263 = vld [vmem:[%s1 + $0x364] sm:$0xf]
  %v264 = vld [vmem:[%s1 + $0x368] sm:$0xf]
  %v265 = vld [vmem:[%s1 + $0x36c] sm:$0xf]
  %v266 = vld [vmem:[%s1 + $0x370] sm:$0xf]
  %v267 = vld [vmem:[%s1 + $0x374] sm:$0xf]
  %v268 = vld [vmem:[%s1 + $0x378] sm:$0xf]
  %v269 = vld [vmem:[%s1 + $0x37c] sm:$0xf]
  %v270 = vld [vmem:[%s1 + $0x380] sm:$0xf]
  %v271 = vld [vmem:[%s1 + $0x384] sm:$0xf]
  %v272 = vld [vmem:[%s1 + $0x388] sm:$0xf]
  %v273 = vld [vmem:[%s1 + $0x38c] sm:$0xf]
  %v274 = vld [vmem:[%s1 + $0x390] sm:$0xf]
  %v275 = vld [vmem:[%s1 + $0x394] sm:$0xf]
  %v276 = vld [vmem:[%s1 + $0x398] sm:$0xf]
  %v277 = vld [vmem:[%s1 + $0x39c] sm:$0xf]
  %v278 = vld [vmem:[%s1 + $0x3a0] sm:$0xf]
  %v279 = vld [vmem:[%s1 + $0x3a4] sm:$0xf]
  %v280 = vld [vmem:[%s1 + $0x3a8] sm:$0xf]
  %v281 = vld [vmem:[%s1 + $0x3ac] sm:$0xf]
  %v282 = vld [vmem:[%s1 + $0x3b0] sm:$0xf]
  %v283 = vld [vmem:[%s1 + $0x3b4] sm:$0xf]
  %v284 = vld [vmem:[%s1 + $0x3b8] sm:$0xf]
  %v285 = vld [vmem:[%s1 + $0x3bc] sm:$0xf]
  %v286 = vld [vmem:[%s1 + $0x3c0] sm:$0xf]
  %v287 = vld [vmem:[%s1 + $0x3c4] sm:$0xf]
  %v288 = vld [vmem:[%s1 + $0x3c8] sm:$0xf]
  %v289 = vld [vmem:[%s1 + $0x3cc] sm:$0xf]
  %v290 = vld [vmem:[%s1 + $0x3d0] sm:$0xf]
  %v291 = vld [vmem:[%s1 + $0x3d4] sm:$0xf]
  %v292 = vld [vmem:[%s1 + $0x3d8] sm:$0xf]
  %v293 = vld [vmem:[%s1 + $0x3dc] sm:$0xf]
  %v294 = vld [vmem:[%s1 + $0x3e0] sm:$0xf]
  %v295 = vld [vmem:[%s1 + $0x3e4] sm:$0xf]
  %v296 = vld [vmem:[%s1 + $0x3e8] sm:$0xf]
  %v297 = vld [vmem:[%s1 + $0x3ec] sm:$0xf]
  %v298 = vld [vmem:[%s1 + $0x3f0] sm:$0xf]
  %v299 = vld [vmem:[%s1 + $0x3f4] sm:$0xf]
  %v300 = vld [vmem:[%s1 + $0x3f8] sm:$0xf]
  %v301 = vld [vmem:[%s1 + $0x3fc] sm:$0xf]
  %v302 = vld [vmem:[%s2] sm:$0x1]
  %v304 = vperm.slane %v302, 0
  %v338 = vunpack.c.l.b16 %v14
  %v339 = vunpack.c.h.b16 %v14
  %v340 = vunpack.c.l.b16 %v15
  %v341 = vunpack.c.h.b16 %v15
  %v342 = vunpack.c.l.b16 %v16
  %v343 = vunpack.c.h.b16 %v16
  %v344 = vunpack.c.l.b16 %v17
  %v345 = vunpack.c.h.b16 %v17
  %v346 = vunpack.c.l.b16 %v18
  %v347 = vunpack.c.h.b16 %v18
  %v348 = vunpack.c.l.b16 %v19
  %v349 = vunpack.c.h.b16 %v19
  %v350 = vunpack.c.l.b16 %v20
  %v351 = vunpack.c.h.b16 %v20
  %v352 = vunpack.c.l.b16 %v21
  %v353 = vunpack.c.h.b16 %v21
  %v354 = vunpack.c.l.b16 %v22
  %v355 = vunpack.c.h.b16 %v22
  %v356 = vunpack.c.l.b16 %v23
  %v357 = vunpack.c.h.b16 %v23
  %v358 = vunpack.c.l.b16 %v24
  %v359 = vunpack.c.h.b16 %v24
  %v360 = vunpack.c.l.b16 %v25
  %v361 = vunpack.c.h.b16 %v25
  %v362 = vunpack.c.l.b16 %v26
  %v363 = vunpack.c.h.b16 %v26
  %v364 = vunpack.c.l.b16 %v27
  %v365 = vunpack.c.h.b16 %v27
  %v366 = vunpack.c.l.b16 %v28
  %v367 = vunpack.c.h.b16 %v28
  %v368 = vunpack.c.l.b16 %v29
  %v369 = vunpack.c.h.b16 %v29
  %v370 = vunpack.c.l.b16 %v30
  %v371 = vunpack.c.h.b16 %v30
  %v372 = vunpack.c.l.b16 %v31
  %v373 = vunpack.c.h.b16 %v31
  %v374 = vunpack.c.l.b16 %v32
  %v375 = vunpack.c.h.b16 %v32
  %v376 = vunpack.c.l.b16 %v33
  %v377 = vunpack.c.h.b16 %v33
  %v378 = vunpack.c.l.b16 %v34
  %v379 = vunpack.c.h.b16 %v34
  %v380 = vunpack.c.l.b16 %v35
  %v381 = vunpack.c.h.b16 %v35
  %v382 = vunpack.c.l.b16 %v36
  %v383 = vunpack.c.h.b16 %v36
  %v384 = vunpack.c.l.b16 %v37
  %v385 = vunpack.c.h.b16 %v37
  %v386 = vunpack.c.l.b16 %v38
  %v387 = vunpack.c.h.b16 %v38
  %v388 = vunpack.c.l.b16 %v39
  %v389 = vunpack.c.h.b16 %v39
  %v390 = vunpack.c.l.b16 %v40
  %v391 = vunpack.c.h.b16 %v40
  %v392 = vunpack.c.l.b16 %v41
  %v393 = vunpack.c.h.b16 %v41
  %v394 = vunpack.c.l.b16 %v42
  %v395 = vunpack.c.h.b16 %v42
  %v396 = vunpack.c.l.b16 %v43
  %v397 = vunpack.c.h.b16 %v43
  %v398 = vunpack.c.l.b16 %v44
  %v399 = vunpack.c.h.b16 %v44
  %v400 = vunpack.c.l.b16 %v45
  %v401 = vunpack.c.h.b16 %v45
  %v402 = vpack.c.b16 %v354, %v338
  %v403 = vpack.c.b16 %v355, %v339
  %v404 = vpack.c.b16 %v356, %v340
  %v405 = vpack.c.b16 %v357, %v341
  %v406 = vpack.c.b16 %v358, %v342
  %v407 = vpack.c.b16 %v359, %v343
  %v408 = vpack.c.b16 %v360, %v344
  %v409 = vpack.c.b16 %v361, %v345
  %v410 = vpack.c.b16 %v362, %v346
  %v411 = vpack.c.b16 %v363, %v347
  %v412 = vpack.c.b16 %v364, %v348
  %v413 = vpack.c.b16 %v365, %v349
  %v414 = vpack.c.b16 %v366, %v350
  %v415 = vpack.c.b16 %v367, %v351
  %v416 = vpack.c.b16 %v368, %v352
  %v417 = vpack.c.b16 %v369, %v353
  %v418 = vpack.c.b16 %v386, %v370
  %v419 = vpack.c.b16 %v387, %v371
  %v420 = vpack.c.b16 %v388, %v372
  %v421 = vpack.c.b16 %v389, %v373
  %v422 = vpack.c.b16 %v390, %v374
  %v423 = vpack.c.b16 %v391, %v375
  %v424 = vpack.c.b16 %v392, %v376
  %v425 = vpack.c.b16 %v393, %v377
  %v426 = vpack.c.b16 %v394, %v378
  %v427 = vpack.c.b16 %v395, %v379
  %v428 = vpack.c.b16 %v396, %v380
  %v429 = vpack.c.b16 %v397, %v381
  %v430 = vpack.c.b16 %v398, %v382
  %v431 = vpack.c.b16 %v399, %v383
  %v432 = vpack.c.b16 %v400, %v384
  %v433 = vpack.c.b16 %v401, %v385
  %v722 = vunpack.c.l.b16 %v46
  %v723 = vunpack.c.l.b16 %v47
  %v724 = vunpack.c.l.b16 %v48
  %v725 = vunpack.c.l.b16 %v49
  %v726 = vunpack.c.l.b16 %v50
  %v727 = vunpack.c.l.b16 %v51
  %v728 = vunpack.c.l.b16 %v52
  %v729 = vunpack.c.l.b16 %v53
  %v730 = vunpack.c.l.b16 %v54
  %v731 = vunpack.c.l.b16 %v55
  %v732 = vunpack.c.l.b16 %v56
  %v733 = vunpack.c.l.b16 %v57
  %v734 = vunpack.c.l.b16 %v58
  %v735 = vunpack.c.l.b16 %v59
  %v736 = vunpack.c.l.b16 %v60
  %v737 = vunpack.c.l.b16 %v61
  %v738 = vunpack.c.l.b16 %v62
  %v739 = vunpack.c.l.b16 %v63
  %v740 = vunpack.c.l.b16 %v64
  %v741 = vunpack.c.l.b16 %v65
  %v742 = vunpack.c.l.b16 %v66
  %v743 = vunpack.c.l.b16 %v67
  %v744 = vunpack.c.l.b16 %v68
  %v745 = vunpack.c.l.b16 %v69
  %v746 = vunpack.c.l.b16 %v70
  %v747 = vunpack.c.l.b16 %v71
  %v748 = vunpack.c.l.b16 %v72
  %v749 = vunpack.c.l.b16 %v73
  %v750 = vunpack.c.l.b16 %v74
  %v751 = vunpack.c.l.b16 %v75
  %v752 = vunpack.c.l.b16 %v76
  %v753 = vunpack.c.l.b16 %v77
  %v754 = vunpack.c.l.b16 %v78
  %v755 = vunpack.c.l.b16 %v79
  %v756 = vunpack.c.l.b16 %v80
  %v757 = vunpack.c.l.b16 %v81
  %v758 = vunpack.c.l.b16 %v82
  %v759 = vunpack.c.l.b16 %v83
  %v760 = vunpack.c.l.b16 %v84
  %v761 = vunpack.c.l.b16 %v85
  %v762 = vunpack.c.l.b16 %v86
  %v763 = vunpack.c.l.b16 %v87
  %v764 = vunpack.c.l.b16 %v88
  %v765 = vunpack.c.l.b16 %v89
  %v766 = vunpack.c.l.b16 %v90
  %v767 = vunpack.c.l.b16 %v91
  %v768 = vunpack.c.l.b16 %v92
  %v769 = vunpack.c.l.b16 %v93
  %v770 = vunpack.c.l.b16 %v94
  %v771 = vunpack.c.l.b16 %v95
  %v772 = vunpack.c.l.b16 %v96
  %v773 = vunpack.c.l.b16 %v97
  %v774 = vunpack.c.l.b16 %v98
  %v775 = vunpack.c.l.b16 %v99
  %v776 = vunpack.c.l.b16 %v100
  %v777 = vunpack.c.l.b16 %v101
  %v778 = vunpack.c.l.b16 %v102
  %v779 = vunpack.c.l.b16 %v103
  %v780 = vunpack.c.l.b16 %v104
  %v781 = vunpack.c.l.b16 %v105
  %v782 = vunpack.c.l.b16 %v106
  %v783 = vunpack.c.l.b16 %v107
  %v784 = vunpack.c.l.b16 %v108
  %v785 = vunpack.c.l.b16 %v109
  %v786 = vunpack.c.l.b16 %v110
  %v787 = vunpack.c.l.b16 %v111
  %v788 = vunpack.c.l.b16 %v112
  %v789 = vunpack.c.l.b16 %v113
  %v790 = vunpack.c.l.b16 %v114
  %v791 = vunpack.c.l.b16 %v115
  %v792 = vunpack.c.l.b16 %v116
  %v793 = vunpack.c.l.b16 %v117
  %v794 = vunpack.c.l.b16 %v118
  %v795 = vunpack.c.l.b16 %v119
  %v796 = vunpack.c.l.b16 %v120
  %v797 = vunpack.c.l.b16 %v121
  %v798 = vunpack.c.l.b16 %v122
  %v799 = vunpack.c.l.b16 %v123
  %v800 = vunpack.c.l.b16 %v124
  %v801 = vunpack.c.l.b16 %v125
  %v802 = vunpack.c.l.b16 %v126
  %v803 = vunpack.c.l.b16 %v127
  %v804 = vunpack.c.l.b16 %v128
  %v805 = vunpack.c.l.b16 %v129
  %v806 = vunpack.c.l.b16 %v130
  %v807 = vunpack.c.l.b16 %v131
  %v808 = vunpack.c.l.b16 %v132
  %v809 = vunpack.c.l.b16 %v133
  %v810 = vunpack.c.l.b16 %v134
  %v811 = vunpack.c.l.b16 %v135
  %v812 = vunpack.c.l.b16 %v136
  %v813 = vunpack.c.l.b16 %v137
  %v814 = vunpack.c.l.b16 %v138
  %v815 = vunpack.c.l.b16 %v139
  %v816 = vunpack.c.l.b16 %v140
  %v817 = vunpack.c.l.b16 %v141
  %v818 = vunpack.c.l.b16 %v142
  %v819 = vunpack.c.l.b16 %v143
  %v820 = vunpack.c.l.b16 %v144
  %v821 = vunpack.c.l.b16 %v145
  %v822 = vunpack.c.l.b16 %v146
  %v823 = vunpack.c.l.b16 %v147
  %v824 = vunpack.c.l.b16 %v148
  %v825 = vunpack.c.l.b16 %v149
  %v826 = vunpack.c.l.b16 %v150
  %v827 = vunpack.c.l.b16 %v151
  %v828 = vunpack.c.l.b16 %v152
  %v829 = vunpack.c.l.b16 %v153
  %v830 = vunpack.c.l.b16 %v154
  %v831 = vunpack.c.l.b16 %v155
  %v832 = vunpack.c.l.b16 %v156
  %v833 = vunpack.c.l.b16 %v157
  %v834 = vunpack.c.l.b16 %v158
  %v835 = vunpack.c.l.b16 %v159
  %v836 = vunpack.c.l.b16 %v160
  %v837 = vunpack.c.l.b16 %v161
  %v838 = vunpack.c.l.b16 %v162
  %v839 = vunpack.c.l.b16 %v163
  %v840 = vunpack.c.l.b16 %v164
  %v841 = vunpack.c.l.b16 %v165
  %v842 = vunpack.c.l.b16 %v166
  %v843 = vunpack.c.l.b16 %v167
  %v844 = vunpack.c.l.b16 %v168
  %v845 = vunpack.c.l.b16 %v169
  %v846 = vunpack.c.l.b16 %v170
  %v847 = vunpack.c.l.b16 %v171
  %v848 = vunpack.c.l.b16 %v172
  %v849 = vunpack.c.l.b16 %v173
  %v850 = vunpack.c.l.b16 %v174
  %v851 = vunpack.c.l.b16 %v175
  %v852 = vunpack.c.l.b16 %v176
  %v853 = vunpack.c.l.b16 %v177
  %v854 = vunpack.c.l.b16 %v178
  %v855 = vunpack.c.l.b16 %v179
  %v856 = vunpack.c.l.b16 %v180
  %v857 = vunpack.c.l.b16 %v181
  %v858 = vunpack.c.l.b16 %v182
  %v859 = vunpack.c.l.b16 %v183
  %v860 = vunpack.c.l.b16 %v184
  %v861 = vunpack.c.l.b16 %v185
  %v862 = vunpack.c.l.b16 %v186
  %v863 = vunpack.c.l.b16 %v187
  %v864 = vunpack.c.l.b16 %v188
  %v865 = vunpack.c.l.b16 %v189
  %v866 = vunpack.c.l.b16 %v190
  %v867 = vunpack.c.l.b16 %v191
  %v868 = vunpack.c.l.b16 %v192
  %v869 = vunpack.c.l.b16 %v193
  %v870 = vunpack.c.l.b16 %v194
  %v871 = vunpack.c.l.b16 %v195
  %v872 = vunpack.c.l.b16 %v196
  %v873 = vunpack.c.l.b16 %v197
  %v874 = vunpack.c.l.b16 %v198
  %v875 = vunpack.c.l.b16 %v199
  %v876 = vunpack.c.l.b16 %v200
  %v877 = vunpack.c.l.b16 %v201
  %v878 = vunpack.c.l.b16 %v202
  %v879 = vunpack.c.l.b16 %v203
  %v880 = vunpack.c.l.b16 %v204
  %v881 = vunpack.c.l.b16 %v205
  %v882 = vunpack.c.l.b16 %v206
  %v883 = vunpack.c.l.b16 %v207
  %v884 = vunpack.c.l.b16 %v208
  %v885 = vunpack.c.l.b16 %v209
  %v886 = vunpack.c.l.b16 %v210
  %v887 = vunpack.c.l.b16 %v211
  %v888 = vunpack.c.l.b16 %v212
  %v889 = vunpack.c.l.b16 %v213
  %v890 = vunpack.c.l.b16 %v214
  %v891 = vunpack.c.l.b16 %v215
  %v892 = vunpack.c.l.b16 %v216
  %v893 = vunpack.c.l.b16 %v217
  %v894 = vunpack.c.l.b16 %v218
  %v895 = vunpack.c.l.b16 %v219
  %v896 = vunpack.c.l.b16 %v220
  %v897 = vunpack.c.l.b16 %v221
  %v898 = vunpack.c.l.b16 %v222
  %v899 = vunpack.c.l.b16 %v223
  %v900 = vunpack.c.l.b16 %v224
  %v901 = vunpack.c.l.b16 %v225
  %v902 = vunpack.c.l.b16 %v226
  %v903 = vunpack.c.l.b16 %v227
  %v904 = vunpack.c.l.b16 %v228
  %v905 = vunpack.c.l.b16 %v229
  %v906 = vunpack.c.l.b16 %v230
  %v907 = vunpack.c.l.b16 %v231
  %v908 = vunpack.c.l.b16 %v232
  %v909 = vunpack.c.l.b16 %v233
  %v910 = vunpack.c.l.b16 %v234
  %v911 = vunpack.c.l.b16 %v235
  %v912 = vunpack.c.l.b16 %v236
  %v913 = vunpack.c.l.b16 %v237
  %v914 = vunpack.c.l.b16 %v238
  %v915 = vunpack.c.l.b16 %v239
  %v916 = vunpack.c.l.b16 %v240
  %v917 = vunpack.c.l.b16 %v241
  %v918 = vunpack.c.l.b16 %v242
  %v919 = vunpack.c.l.b16 %v243
  %v920 = vunpack.c.l.b16 %v244
  %v921 = vunpack.c.l.b16 %v245
  %v922 = vunpack.c.l.b16 %v246
  %v923 = vunpack.c.l.b16 %v247
  %v924 = vunpack.c.l.b16 %v248
  %v925 = vunpack.c.l.b16 %v249
  %v926 = vunpack.c.l.b16 %v250
  %v927 = vunpack.c.l.b16 %v251
  %v928 = vunpack.c.l.b16 %v252
  %v929 = vunpack.c.l.b16 %v253
  %v930 = vunpack.c.l.b16 %v254
  %v931 = vunpack.c.l.b16 %v255
  %v932 = vunpack.c.l.b16 %v256
  %v933 = vunpack.c.l.b16 %v257
  %v934 = vunpack.c.l.b16 %v258
  %v935 = vunpack.c.l.b16 %v259
  %v936 = vunpack.c.l.b16 %v260
  %v937 = vunpack.c.l.b16 %v261
  %v938 = vunpack.c.l.b16 %v262
  %v939 = vunpack.c.l.b16 %v263
  %v940 = vunpack.c.l.b16 %v264
  %v941 = vunpack.c.l.b16 %v265
  %v942 = vunpack.c.l.b16 %v266
  %v943 = vunpack.c.l.b16 %v267
  %v944 = vunpack.c.l.b16 %v268
  %v945 = vunpack.c.l.b16 %v269
  %v946 = vunpack.c.l.b16 %v270
  %v947 = vunpack.c.l.b16 %v271
  %v948 = vunpack.c.l.b16 %v272
  %v949 = vunpack.c.l.b16 %v273
  %v950 = vunpack.c.l.b16 %v274
  %v951 = vunpack.c.l.b16 %v275
  %v952 = vunpack.c.l.b16 %v276
  %v953 = vunpack.c.l.b16 %v277
  %v954 = vunpack.c.l.b16 %v278
  %v955 = vunpack.c.l.b16 %v279
  %v956 = vunpack.c.l.b16 %v280
  %v957 = vunpack.c.l.b16 %v281
  %v958 = vunpack.c.l.b16 %v282
  %v959 = vunpack.c.l.b16 %v283
  %v960 = vunpack.c.l.b16 %v284
  %v961 = vunpack.c.l.b16 %v285
  %v962 = vunpack.c.l.b16 %v286
  %v963 = vunpack.c.l.b16 %v287
  %v964 = vunpack.c.l.b16 %v288
  %v965 = vunpack.c.l.b16 %v289
  %v966 = vunpack.c.l.b16 %v290
  %v967 = vunpack.c.l.b16 %v291
  %v968 = vunpack.c.l.b16 %v292
  %v969 = vunpack.c.l.b16 %v293
  %v970 = vunpack.c.l.b16 %v294
  %v971 = vunpack.c.l.b16 %v295
  %v972 = vunpack.c.l.b16 %v296
  %v973 = vunpack.c.l.b16 %v297
  %v974 = vunpack.c.l.b16 %v298
  %v975 = vunpack.c.l.b16 %v299
  %v976 = vunpack.c.l.b16 %v300
  %v977 = vunpack.c.l.b16 %v301
  %v978 = vpack.c.b16 %v723, %v722
  %v979 = vpack.c.b16 %v725, %v724
  %v980 = vpack.c.b16 %v727, %v726
  %v981 = vpack.c.b16 %v729, %v728
  %v982 = vpack.c.b16 %v731, %v730
  %v983 = vpack.c.b16 %v733, %v732
  %v984 = vpack.c.b16 %v735, %v734
  %v985 = vpack.c.b16 %v737, %v736
  %v986 = vpack.c.b16 %v739, %v738
  %v987 = vpack.c.b16 %v741, %v740
  %v988 = vpack.c.b16 %v743, %v742
  %v989 = vpack.c.b16 %v745, %v744
  %v990 = vpack.c.b16 %v747, %v746
  %v991 = vpack.c.b16 %v749, %v748
  %v992 = vpack.c.b16 %v751, %v750
  %v993 = vpack.c.b16 %v753, %v752
  %v994 = vpack.c.b16 %v755, %v754
  %v995 = vpack.c.b16 %v757, %v756
  %v996 = vpack.c.b16 %v759, %v758
  %v997 = vpack.c.b16 %v761, %v760
  %v998 = vpack.c.b16 %v763, %v762
  %v999 = vpack.c.b16 %v765, %v764
  %v1000 = vpack.c.b16 %v767, %v766
  %v1001 = vpack.c.b16 %v769, %v768
  %v1002 = vpack.c.b16 %v771, %v770
  %v1003 = vpack.c.b16 %v773, %v772
  %v1004 = vpack.c.b16 %v775, %v774
  %v1005 = vpack.c.b16 %v777, %v776
  %v1006 = vpack.c.b16 %v779, %v778
  %v1007 = vpack.c.b16 %v781, %v780
  %v1008 = vpack.c.b16 %v783, %v782
  %v1009 = vpack.c.b16 %v785, %v784
  %v1010 = vpack.c.b16 %v787, %v786
  %v1011 = vpack.c.b16 %v789, %v788
  %v1012 = vpack.c.b16 %v791, %v790
  %v1013 = vpack.c.b16 %v793, %v792
  %v1014 = vpack.c.b16 %v795, %v794
  %v1015 = vpack.c.b16 %v797, %v796
  %v1016 = vpack.c.b16 %v799, %v798
  %v1017 = vpack.c.b16 %v801, %v800
  %v1018 = vpack.c.b16 %v803, %v802
  %v1019 = vpack.c.b16 %v805, %v804
  %v1020 = vpack.c.b16 %v807, %v806
  %v1021 = vpack.c.b16 %v809, %v808
  %v1022 = vpack.c.b16 %v811, %v810
  %v1023 = vpack.c.b16 %v813, %v812
  %v1024 = vpack.c.b16 %v815, %v814
  %v1025 = vpack.c.b16 %v817, %v816
  %v1026 = vpack.c.b16 %v819, %v818
  %v1027 = vpack.c.b16 %v821, %v820
  %v1028 = vpack.c.b16 %v823, %v822
  %v1029 = vpack.c.b16 %v825, %v824
  %v1030 = vpack.c.b16 %v827, %v826
  %v1031 = vpack.c.b16 %v829, %v828
  %v1032 = vpack.c.b16 %v831, %v830
  %v1033 = vpack.c.b16 %v833, %v832
  %v1034 = vpack.c.b16 %v835, %v834
  %v1035 = vpack.c.b16 %v837, %v836
  %v1036 = vpack.c.b16 %v839, %v838
  %v1037 = vpack.c.b16 %v841, %v840
  %v1038 = vpack.c.b16 %v843, %v842
  %v1039 = vpack.c.b16 %v845, %v844
  %v1040 = vpack.c.b16 %v847, %v846
  %v1041 = vpack.c.b16 %v849, %v848
  %v1042 = vpack.c.b16 %v851, %v850
  %v1043 = vpack.c.b16 %v853, %v852
  %v1044 = vpack.c.b16 %v855, %v854
  %v1045 = vpack.c.b16 %v857, %v856
  %v1046 = vpack.c.b16 %v859, %v858
  %v1047 = vpack.c.b16 %v861, %v860
  %v1048 = vpack.c.b16 %v863, %v862
  %v1049 = vpack.c.b16 %v865, %v864
  %v1050 = vpack.c.b16 %v867, %v866
  %v1051 = vpack.c.b16 %v869, %v868
  %v1052 = vpack.c.b16 %v871, %v870
  %v1053 = vpack.c.b16 %v873, %v872
  %v1054 = vpack.c.b16 %v875, %v874
  %v1055 = vpack.c.b16 %v877, %v876
  %v1056 = vpack.c.b16 %v879, %v878
  %v1057 = vpack.c.b16 %v881, %v880
  %v1058 = vpack.c.b16 %v883, %v882
  %v1059 = vpack.c.b16 %v885, %v884
  %v1060 = vpack.c.b16 %v887, %v886
  %v1061 = vpack.c.b16 %v889, %v888
  %v1062 = vpack.c.b16 %v891, %v890
  %v1063 = vpack.c.b16 %v893, %v892
  %v1064 = vpack.c.b16 %v895, %v894
  %v1065 = vpack.c.b16 %v897, %v896
  %v1066 = vpack.c.b16 %v899, %v898
  %v1067 = vpack.c.b16 %v901, %v900
  %v1068 = vpack.c.b16 %v903, %v902
  %v1069 = vpack.c.b16 %v905, %v904
  %v1070 = vpack.c.b16 %v907, %v906
  %v1071 = vpack.c.b16 %v909, %v908
  %v1072 = vpack.c.b16 %v911, %v910
  %v1073 = vpack.c.b16 %v913, %v912
  %v1074 = vpack.c.b16 %v915, %v914
  %v1075 = vpack.c.b16 %v917, %v916
  %v1076 = vpack.c.b16 %v919, %v918
  %v1077 = vpack.c.b16 %v921, %v920
  %v1078 = vpack.c.b16 %v923, %v922
  %v1079 = vpack.c.b16 %v925, %v924
  %v1080 = vpack.c.b16 %v927, %v926
  %v1081 = vpack.c.b16 %v929, %v928
  %v1082 = vpack.c.b16 %v931, %v930
  %v1083 = vpack.c.b16 %v933, %v932
  %v1084 = vpack.c.b16 %v935, %v934
  %v1085 = vpack.c.b16 %v937, %v936
  %v1086 = vpack.c.b16 %v939, %v938
  %v1087 = vpack.c.b16 %v941, %v940
  %v1088 = vpack.c.b16 %v943, %v942
  %v1089 = vpack.c.b16 %v945, %v944
  %v1090 = vpack.c.b16 %v947, %v946
  %v1091 = vpack.c.b16 %v949, %v948
  %v1092 = vpack.c.b16 %v951, %v950
  %v1093 = vpack.c.b16 %v953, %v952
  %v1094 = vpack.c.b16 %v955, %v954
  %v1095 = vpack.c.b16 %v957, %v956
  %v1096 = vpack.c.b16 %v959, %v958
  %v1097 = vpack.c.b16 %v961, %v960
  %v1098 = vpack.c.b16 %v963, %v962
  %v1099 = vpack.c.b16 %v965, %v964
  %v1100 = vpack.c.b16 %v967, %v966
  %v1101 = vpack.c.b16 %v969, %v968
  %v1102 = vpack.c.b16 %v971, %v970
  %v1103 = vpack.c.b16 %v973, %v972
  %v1104 = vpack.c.b16 %v975, %v974
  %v1105 = vpack.c.b16 %v977, %v976
  %1234 = vmatpush.bf16.msra.mxu0 %v985
  %1235 = vmatpush.bf16.msra.mxu0 %v984
  %1236 = vmatpush.bf16.msra.mxu0 %v983
  %1237 = vmatpush.bf16.msra.mxu0 %v982
  %1238 = vmatpush.bf16.msra.mxu0 %v981
  %1239 = vmatpush.bf16.msra.mxu0 %v980
  %1240 = vmatpush.bf16.msra.mxu0 %v979
  %1241 = vmatpush.bf16.msra.mxu0 %v978
  %1242 = vmatmul.bf16.gmra.mxu0 %v402
  %v1243 = vpop.f32.mrf.mxu0
  %v1244 = vadd.f32 %v304, %v1243
  %v1245 = vpop.f32.mrf.mxu0
  %v1246 = vadd.f32 %v304, %v1245
  %1247 = vmatmul.bf16.gmra.mxu0 %v418
  %v1248 = vpop.f32.mrf.mxu0
  %v1249 = vadd.f32 %v304, %v1248
  %v1250 = vpop.f32.mrf.mxu0
  %v1251 = vadd.f32 %v304, %v1250
  %1252 = vdwg.mxu0
  %1253 = vmatpush.bf16.msra.mxu0 %v993
  %1254 = vmatpush.bf16.msra.mxu0 %v992
  %1255 = vmatpush.bf16.msra.mxu0 %v991
  %1256 = vmatpush.bf16.msra.mxu0 %v990
  %1257 = vmatpush.bf16.msra.mxu0 %v989
  %1258 = vmatpush.bf16.msra.mxu0 %v988
  %1259 = vmatpush.bf16.msra.mxu0 %v987
  %1260 = vmatpush.bf16.msra.mxu0 %v986
  %1261 = vmatmul.bf16.gmra.mxu0 %v403
  %v1262 = vpop.f32.mrf.mxu0
  %v1263 = vadd.f32 %v1244, %v1262
  %v1264 = vpop.f32.mrf.mxu0
  %v1265 = vadd.f32 %v1246, %v1264
  %1266 = vmatmul.bf16.gmra.mxu0 %v419
  %v1267 = vpop.f32.mrf.mxu0
  %v1268 = vadd.f32 %v1249, %v1267
  %v1269 = vpop.f32.mrf.mxu0
  %v1270 = vadd.f32 %v1251, %v1269
  %1271 = vdwg.mxu0
  %1272 = vmatpush.bf16.msra.mxu0 %v1001
  %1273 = vmatpush.bf16.msra.mxu0 %v1000
  %1274 = vmatpush.bf16.msra.mxu0 %v999
  %1275 = vmatpush.bf16.msra.mxu0 %v998
  %1276 = vmatpush.bf16.msra.mxu0 %v997
  %1277 = vmatpush.bf16.msra.mxu0 %v996
  %1278 = vmatpush.bf16.msra.mxu0 %v995
  %1279 = vmatpush.bf16.msra.mxu0 %v994
  %1280 = vmatmul.bf16.gmra.mxu0 %v404
  %v1281 = vpop.f32.mrf.mxu0
  %v1282 = vadd.f32 %v1263, %v1281
  %v1283 = vpop.f32.mrf.mxu0
  %v1284 = vadd.f32 %v1265, %v1283
  %1285 = vmatmul.bf16.gmra.mxu0 %v420
  %v1286 = vpop.f32.mrf.mxu0
  %v1287 = vadd.f32 %v1268, %v1286
  %v1288 = vpop.f32.mrf.mxu0
  %v1289 = vadd.f32 %v1270, %v1288
  %1290 = vdwg.mxu0
  %1291 = vmatpush.bf16.msra.mxu0 %v1009
  %1292 = vmatpush.bf16.msra.mxu0 %v1008
  %1293 = vmatpush.bf16.msra.mxu0 %v1007
  %1294 = vmatpush.bf16.msra.mxu0 %v1006
  %1295 = vmatpush.bf16.msra.mxu0 %v1005
  %1296 = vmatpush.bf16.msra.mxu0 %v1004
  %1297 = vmatpush.bf16.msra.mxu0 %v1003
  %1298 = vmatpush.bf16.msra.mxu0 %v1002
  %1299 = vmatmul.bf16.gmra.mxu0 %v405
  %v1300 = vpop.f32.mrf.mxu0
  %v1301 = vadd.f32 %v1282, %v1300
  %v1302 = vpop.f32.mrf.mxu0
  %v1303 = vadd.f32 %v1284, %v1302
  %1304 = vmatmul.bf16.gmra.mxu0 %v421
  %v1305 = vpop.f32.mrf.mxu0
  %v1306 = vadd.f32 %v1287, %v1305
  %v1307 = vpop.f32.mrf.mxu0
  %v1308 = vadd.f32 %v1289, %v1307
  %1309 = vdwg.mxu0
  %1310 = vmatpush.bf16.msra.mxu0 %v1017
  %1311 = vmatpush.bf16.msra.mxu0 %v1016
  %1312 = vmatpush.bf16.msra.mxu0 %v1015
  %1313 = vmatpush.bf16.msra.mxu0 %v1014
  %1314 = vmatpush.bf16.msra.mxu0 %v1013
  %1315 = vmatpush.bf16.msra.mxu0 %v1012
  %1316 = vmatpush.bf16.msra.mxu0 %v1011
  %1317 = vmatpush.bf16.msra.mxu0 %v1010
  %1318 = vmatmul.bf16.gmra.mxu0 %v406
  %v1319 = vpop.f32.mrf.mxu0
  %v1320 = vadd.f32 %v1301, %v1319
  %v1321 = vpop.f32.mrf.mxu0
  %v1322 = vadd.f32 %v1303, %v1321
  %1323 = vmatmul.bf16.gmra.mxu0 %v422
  %v1324 = vpop.f32.mrf.mxu0
  %v1325 = vadd.f32 %v1306, %v1324
  %v1326 = vpop.f32.mrf.mxu0
  %v1327 = vadd.f32 %v1308, %v1326
  %1328 = vdwg.mxu0
  %1329 = vmatpush.bf16.msra.mxu0 %v1025
  %1330 = vmatpush.bf16.msra.mxu0 %v1024
  %1331 = vmatpush.bf16.msra.mxu0 %v1023
  %1332 = vmatpush.bf16.msra.mxu0 %v1022
  %1333 = vmatpush.bf16.msra.mxu0 %v1021
  %1334 = vmatpush.bf16.msra.mxu0 %v1020
  %1335 = vmatpush.bf16.msra.mxu0 %v1019
  %1336 = vmatpush.bf16.msra.mxu0 %v1018
  %1337 = vmatmul.bf16.gmra.mxu0 %v407
  %v1338 = vpop.f32.mrf.mxu0
  %v1339 = vadd.f32 %v1320, %v1338
  %v1340 = vpop.f32.mrf.mxu0
  %v1341 = vadd.f32 %v1322, %v1340
  %1342 = vmatmul.bf16.gmra.mxu0 %v423
  %v1343 = vpop.f32.mrf.mxu0
  %v1344 = vadd.f32 %v1325, %v1343
  %v1345 = vpop.f32.mrf.mxu0
  %v1346 = vadd.f32 %v1327, %v1345
  %1347 = vdwg.mxu0
  %1348 = vmatpush.bf16.msra.mxu0 %v1033
  %1349 = vmatpush.bf16.msra.mxu0 %v1032
  %1350 = vmatpush.bf16.msra.mxu0 %v1031
  %1351 = vmatpush.bf16.msra.mxu0 %v1030
  %1352 = vmatpush.bf16.msra.mxu0 %v1029
  %1353 = vmatpush.bf16.msra.mxu0 %v1028
  %1354 = vmatpush.bf16.msra.mxu0 %v1027
  %1355 = vmatpush.bf16.msra.mxu0 %v1026
  %1356 = vmatmul.bf16.gmra.mxu0 %v408
  %v1357 = vpop.f32.mrf.mxu0
  %v1358 = vadd.f32 %v1339, %v1357
  %v1359 = vpop.f32.mrf.mxu0
  %v1360 = vadd.f32 %v1341, %v1359
  %1361 = vmatmul.bf16.gmra.mxu0 %v424
  %v1362 = vpop.f32.mrf.mxu0
  %v1363 = vadd.f32 %v1344, %v1362
  %v1364 = vpop.f32.mrf.mxu0
  %v1365 = vadd.f32 %v1346, %v1364
  %1366 = vdwg.mxu0
  %1367 = vmatpush.bf16.msra.mxu0 %v1041
  %1368 = vmatpush.bf16.msra.mxu0 %v1040
  %1369 = vmatpush.bf16.msra.mxu0 %v1039
  %1370 = vmatpush.bf16.msra.mxu0 %v1038
  %1371 = vmatpush.bf16.msra.mxu0 %v1037
  %1372 = vmatpush.bf16.msra.mxu0 %v1036
  %1373 = vmatpush.bf16.msra.mxu0 %v1035
  %1374 = vmatpush.bf16.msra.mxu0 %v1034
  %1375 = vmatmul.bf16.gmra.mxu0 %v409
  %v1376 = vpop.f32.mrf.mxu0
  %v1377 = vadd.f32 %v1358, %v1376
  %v1378 = vpop.f32.mrf.mxu0
  %v1379 = vadd.f32 %v1360, %v1378
  %1380 = vmatmul.bf16.gmra.mxu0 %v425
  %v1381 = vpop.f32.mrf.mxu0
  %v1382 = vadd.f32 %v1363, %v1381
  %v1383 = vpop.f32.mrf.mxu0
  %v1384 = vadd.f32 %v1365, %v1383
  %1385 = vdwg.mxu0
  %1386 = vmatpush.bf16.msra.mxu0 %v1049
  %1387 = vmatpush.bf16.msra.mxu0 %v1048
  %1388 = vmatpush.bf16.msra.mxu0 %v1047
  %1389 = vmatpush.bf16.msra.mxu0 %v1046
  %1390 = vmatpush.bf16.msra.mxu0 %v1045
  %1391 = vmatpush.bf16.msra.mxu0 %v1044
  %1392 = vmatpush.bf16.msra.mxu0 %v1043
  %1393 = vmatpush.bf16.msra.mxu0 %v1042
  %1394 = vmatmul.bf16.gmra.mxu0 %v410
  %v1395 = vpop.f32.mrf.mxu0
  %v1396 = vadd.f32 %v1377, %v1395
  %v1397 = vpop.f32.mrf.mxu0
  %v1398 = vadd.f32 %v1379, %v1397
  %1399 = vmatmul.bf16.gmra.mxu0 %v426
  %v1400 = vpop.f32.mrf.mxu0
  %v1401 = vadd.f32 %v1382, %v1400
  %v1402 = vpop.f32.mrf.mxu0
  %v1403 = vadd.f32 %v1384, %v1402
  %1404 = vdwg.mxu0
  %1405 = vmatpush.bf16.msra.mxu0 %v1057
  %1406 = vmatpush.bf16.msra.mxu0 %v1056
  %1407 = vmatpush.bf16.msra.mxu0 %v1055
  %1408 = vmatpush.bf16.msra.mxu0 %v1054
  %1409 = vmatpush.bf16.msra.mxu0 %v1053
  %1410 = vmatpush.bf16.msra.mxu0 %v1052
  %1411 = vmatpush.bf16.msra.mxu0 %v1051
  %1412 = vmatpush.bf16.msra.mxu0 %v1050
  %1413 = vmatmul.bf16.gmra.mxu0 %v411
  %v1414 = vpop.f32.mrf.mxu0
  %v1415 = vadd.f32 %v1396, %v1414
  %v1416 = vpop.f32.mrf.mxu0
  %v1417 = vadd.f32 %v1398, %v1416
  %1418 = vmatmul.bf16.gmra.mxu0 %v427
  %v1419 = vpop.f32.mrf.mxu0
  %v1420 = vadd.f32 %v1401, %v1419
  %v1421 = vpop.f32.mrf.mxu0
  %v1422 = vadd.f32 %v1403, %v1421
  %1423 = vdwg.mxu0
  %1424 = vmatpush.bf16.msra.mxu0 %v1065
  %1425 = vmatpush.bf16.msra.mxu0 %v1064
  %1426 = vmatpush.bf16.msra.mxu0 %v1063
  %1427 = vmatpush.bf16.msra.mxu0 %v1062
  %1428 = vmatpush.bf16.msra.mxu0 %v1061
  %1429 = vmatpush.bf16.msra.mxu0 %v1060
  %1430 = vmatpush.bf16.msra.mxu0 %v1059
  %1431 = vmatpush.bf16.msra.mxu0 %v1058
  %1432 = vmatmul.bf16.gmra.mxu0 %v412
  %v1433 = vpop.f32.mrf.mxu0
  %v1434 = vadd.f32 %v1415, %v1433
  %v1435 = vpop.f32.mrf.mxu0
  %v1436 = vadd.f32 %v1417, %v1435
  %1437 = vmatmul.bf16.gmra.mxu0 %v428
  %v1438 = vpop.f32.mrf.mxu0
  %v1439 = vadd.f32 %v1420, %v1438
  %v1440 = vpop.f32.mrf.mxu0
  %v1441 = vadd.f32 %v1422, %v1440
  %1442 = vdwg.mxu0
  %1443 = vmatpush.bf16.msra.mxu0 %v1073
  %1444 = vmatpush.bf16.msra.mxu0 %v1072
  %1445 = vmatpush.bf16.msra.mxu0 %v1071
  %1446 = vmatpush.bf16.msra.mxu0 %v1070
  %1447 = vmatpush.bf16.msra.mxu0 %v1069
  %1448 = vmatpush.bf16.msra.mxu0 %v1068
  %1449 = vmatpush.bf16.msra.mxu0 %v1067
  %1450 = vmatpush.bf16.msra.mxu0 %v1066
  %1451 = vmatmul.bf16.gmra.mxu0 %v413
  %v1452 = vpop.f32.mrf.mxu0
  %v1453 = vadd.f32 %v1434, %v1452
  %v1454 = vpop.f32.mrf.mxu0
  %v1455 = vadd.f32 %v1436, %v1454
  %1456 = vmatmul.bf16.gmra.mxu0 %v429
  %v1457 = vpop.f32.mrf.mxu0
  %v1458 = vadd.f32 %v1439, %v1457
  %v1459 = vpop.f32.mrf.mxu0
  %v1460 = vadd.f32 %v1441, %v1459
  %1461 = vdwg.mxu0
  %1462 = vmatpush.bf16.msra.mxu0 %v1081
  %1463 = vmatpush.bf16.msra.mxu0 %v1080
  %1464 = vmatpush.bf16.msra.mxu0 %v1079
  %1465 = vmatpush.bf16.msra.mxu0 %v1078
  %1466 = vmatpush.bf16.msra.mxu0 %v1077
  %1467 = vmatpush.bf16.msra.mxu0 %v1076
  %1468 = vmatpush.bf16.msra.mxu0 %v1075
  %1469 = vmatpush.bf16.msra.mxu0 %v1074
  %1470 = vmatmul.bf16.gmra.mxu0 %v414
  %v1471 = vpop.f32.mrf.mxu0
  %v1472 = vadd.f32 %v1453, %v1471
  %v1473 = vpop.f32.mrf.mxu0
  %v1474 = vadd.f32 %v1455, %v1473
  %1475 = vmatmul.bf16.gmra.mxu0 %v430
  %v1476 = vpop.f32.mrf.mxu0
  %v1477 = vadd.f32 %v1458, %v1476
  %v1478 = vpop.f32.mrf.mxu0
  %v1479 = vadd.f32 %v1460, %v1478
  %1480 = vdwg.mxu0
  %1481 = vmatpush.bf16.msra.mxu0 %v1089
  %1482 = vmatpush.bf16.msra.mxu0 %v1088
  %1483 = vmatpush.bf16.msra.mxu0 %v1087
  %1484 = vmatpush.bf16.msra.mxu0 %v1086
  %1485 = vmatpush.bf16.msra.mxu0 %v1085
  %1486 = vmatpush.bf16.msra.mxu0 %v1084
  %1487 = vmatpush.bf16.msra.mxu0 %v1083
  %1488 = vmatpush.bf16.msra.mxu0 %v1082
  %1489 = vmatmul.bf16.gmra.mxu0 %v415
  %v1490 = vpop.f32.mrf.mxu0
  %v1491 = vadd.f32 %v1472, %v1490
  %v1492 = vpop.f32.mrf.mxu0
  %v1493 = vadd.f32 %v1474, %v1492
  %1494 = vmatmul.bf16.gmra.mxu0 %v431
  %v1495 = vpop.f32.mrf.mxu0
  %v1496 = vadd.f32 %v1477, %v1495
  %v1497 = vpop.f32.mrf.mxu0
  %v1498 = vadd.f32 %v1479, %v1497
  %1499 = vdwg.mxu0
  %1500 = vmatpush.bf16.msra.mxu0 %v1097
  %1501 = vmatpush.bf16.msra.mxu0 %v1096
  %1502 = vmatpush.bf16.msra.mxu0 %v1095
  %1503 = vmatpush.bf16.msra.mxu0 %v1094
  %1504 = vmatpush.bf16.msra.mxu0 %v1093
  %1505 = vmatpush.bf16.msra.mxu0 %v1092
  %1506 = vmatpush.bf16.msra.mxu0 %v1091
  %1507 = vmatpush.bf16.msra.mxu0 %v1090
  %1508 = vmatmul.bf16.gmra.mxu0 %v416
  %v1509 = vpop.f32.mrf.mxu0
  %v1510 = vadd.f32 %v1491, %v1509
  %v1511 = vpop.f32.mrf.mxu0
  %v1512 = vadd.f32 %v1493, %v1511
  %1513 = vmatmul.bf16.gmra.mxu0 %v432
  %v1514 = vpop.f32.mrf.mxu0
  %v1515 = vadd.f32 %v1496, %v1514
  %v1516 = vpop.f32.mrf.mxu0
  %v1517 = vadd.f32 %v1498, %v1516
  %1518 = vdwg.mxu0
  %1519 = vmatpush.bf16.msra.mxu0 %v1105
  %1520 = vmatpush.bf16.msra.mxu0 %v1104
  %1521 = vmatpush.bf16.msra.mxu0 %v1103
  %1522 = vmatpush.bf16.msra.mxu0 %v1102
  %1523 = vmatpush.bf16.msra.mxu0 %v1101
  %1524 = vmatpush.bf16.msra.mxu0 %v1100
  %1525 = vmatpush.bf16.msra.mxu0 %v1099
  %1526 = vmatpush.bf16.msra.mxu0 %v1098
  %1527 = vmatmul.bf16.gmra.mxu0 %v417
  %v1528 = vpop.f32.mrf.mxu0
  %v1529 = vadd.f32 %v1510, %v1528
  %v1530 = vpop.f32.mrf.mxu0
  %v1531 = vadd.f32 %v1512, %v1530
  %1532 = vmatmul.bf16.gmra.mxu0 %v433
  %v1533 = vpop.f32.mrf.mxu0
  %v1534 = vadd.f32 %v1515, %v1533
  %v1535 = vpop.f32.mrf.mxu0
  %v1536 = vadd.f32 %v1517, %v1535
  %1537 = vdwg.mxu0
  %v1538 = vmax.f32 %v1529, 0.0
  %v1539 = vmax.f32 %v1531, 0.0
  %v1540 = vmax.f32 %v1534, 0.0
  %v1541 = vmax.f32 %v1536, 0.0
  %vm1542 = vcmask 523264
  %1543 = vst.msk [vmem:[%s3] sm:$0xff] %vm1542, %v1538
  %1544 = vst.msk [vmem:[%s3 + $0x8] sm:$0xff] %vm1542, %v1539
  %1545 = vst.msk [vmem:[%s3 + $0x10] sm:$0xff] %vm1542, %v1540
  %1546 = vst.msk [vmem:[%s3 + $0x18] sm:$0xff] %vm1542, %v1541
  // Predicated region
  $region14: #{autoencoder_forward.7} parent=0 // pred_check
    _
  $region15: #{autoencoder_forward.7} parent=0 // pred_check_branch
    %1548 = sbr.rel (0) target = $region17
  $region16: #{autoencoder_forward.7} parent=0 // pred_region
    _
  $region17: #{autoencoder_forward.7} parent=0 // pred_fallthru
    _
  // Predicated region
  $region18: #{autoencoder_forward.7} parent=0 // pred_check
    _
  $region19: #{autoencoder_forward.7} parent=0 // pred_check_branch
    %1550 = sbr.rel (0) target = $region21
  $region20: #{autoencoder_forward.7} parent=0 // pred_region
    _
  $region21: #{autoencoder_forward.7} parent=0 // pred_fallthru
    _

// kernel: autoencoder_forward.8
$region0: #{autoencoder_forward.8}
  #allocation0 [shape = 'u32[]', space=smem, size = 0x4, offset = 0x4, fixed_abs, tag = 'smem constant byte address 0x4 - core index']
  #allocation1 [shape = 'u32[72,128]{1,0:T(1,128)}', space=vmem, size = 0x9000, scoped, tag = 'internal scratch']
  %s0 = inlined_call_operand.vmem [shape: bf16[6,384], index: 0, kind: input, shape index: {}]
  %s1 = inlined_call_operand.vmem [shape: bf16[384,128], index: 1, kind: input, shape index: {}]
  %s2 = inlined_call_operand.vmem [shape: f32[1,128], index: 2, kind: input, shape index: {}]
  %s3 = inlined_call_operand.vmem [shape: f32[6,128], index: 3, kind: output, shape index: {}]
  %s4 = sld [smem:[#allocation0]]
  $region22: #{autoencoder_forward.8} parent=0
    _
  %s6 = ssub.s32 1, %s4
  %s7 = scalar_select 0, %s6, %s4
  // Predicated region
  $region2: #{autoencoder_forward.8} parent=0 // pred_check
    _
  $region3: #{autoencoder_forward.8} parent=0 // pred_check_branch
    %9 = sbr.rel (0) target = $region5
  $region4: #{autoencoder_forward.8} parent=0 // pred_region
    _
  $region5: #{autoencoder_forward.8} parent=0 // pred_fallthru
    _
  // Predicated region
  $region6: #{autoencoder_forward.8} parent=0 // pred_check
    _
  $region7: #{autoencoder_forward.8} parent=0 // pred_check_branch
    %11 = sbr.rel (0) target = $region9
  $region8: #{autoencoder_forward.8} parent=0 // pred_region
    _
  $region9: #{autoencoder_forward.8} parent=0 // pred_fallthru
    _
  // Predicated region
  $region10: #{autoencoder_forward.8} parent=0 // pred_check
    _
  $region11: #{autoencoder_forward.8} parent=0 // pred_check_branch
    %13 = sbr.rel (0) target = $region13
  $region12: #{autoencoder_forward.8} parent=0 // pred_region
    _
  $region13: #{autoencoder_forward.8} parent=0 // pred_fallthru
    _
  %v14 = vld [vmem:[%s0] sm:$0x77]
  %v15 = vld [vmem:[%s0 + $0x8] sm:$0x7]
  %v16 = vld [vmem:[%s1] sm:$0xf]
  %v17 = vld [vmem:[%s1 + $0x4] sm:$0xf]
  %v18 = vld [vmem:[%s1 + $0x8] sm:$0xf]
  %v19 = vld [vmem:[%s1 + $0xc] sm:$0xf]
  %v20 = vld [vmem:[%s1 + $0x10] sm:$0xf]
  %v21 = vld [vmem:[%s1 + $0x14] sm:$0xf]
  %v22 = vld [vmem:[%s1 + $0x18] sm:$0xf]
  %v23 = vld [vmem:[%s1 + $0x1c] sm:$0xf]
  %v24 = vld [vmem:[%s1 + $0x20] sm:$0xf]
  %v25 = vld [vmem:[%s1 + $0x24] sm:$0xf]
  %v26 = vld [vmem:[%s1 + $0x28] sm:$0xf]
  %v27 = vld [vmem:[%s1 + $0x2c] sm:$0xf]
  %v28 = vld [vmem:[%s1 + $0x30] sm:$0xf]
  %v29 = vld [vmem:[%s1 + $0x34] sm:$0xf]
  %v30 = vld [vmem:[%s1 + $0x38] sm:$0xf]
  %v31 = vld [vmem:[%s1 + $0x3c] sm:$0xf]
  %v32 = vld [vmem:[%s1 + $0x40] sm:$0xf]
  %v33 = vld [vmem:[%s1 + $0x44] sm:$0xf]
  %v34 = vld [vmem:[%s1 + $0x48] sm:$0xf]
  %v35 = vld [vmem:[%s1 + $0x4c] sm:$0xf]
  %v36 = vld [vmem:[%s1 + $0x50] sm:$0xf]
  %v37 = vld [vmem:[%s1 + $0x54] sm:$0xf]
  %v38 = vld [vmem:[%s1 + $0x58] sm:$0xf]
  %v39 = vld [vmem:[%s1 + $0x5c] sm:$0xf]
  %v40 = vld [vmem:[%s1 + $0x60] sm:$0xf]
  %v41 = vld [vmem:[%s1 + $0x64] sm:$0xf]
  %v42 = vld [vmem:[%s1 + $0x68] sm:$0xf]
  %v43 = vld [vmem:[%s1 + $0x6c] sm:$0xf]
  %v44 = vld [vmem:[%s1 + $0x70] sm:$0xf]
  %v45 = vld [vmem:[%s1 + $0x74] sm:$0xf]
  %v46 = vld [vmem:[%s1 + $0x78] sm:$0xf]
  %v47 = vld [vmem:[%s1 + $0x7c] sm:$0xf]
  %v48 = vld [vmem:[%s1 + $0x80] sm:$0xf]
  %v49 = vld [vmem:[%s1 + $0x84] sm:$0xf]
  %v50 = vld [vmem:[%s1 + $0x88] sm:$0xf]
  %v51 = vld [vmem:[%s1 + $0x8c] sm:$0xf]
  %v52 = vld [vmem:[%s1 + $0x90] sm:$0xf]
  %v53 = vld [vmem:[%s1 + $0x94] sm:$0xf]
  %v54 = vld [vmem:[%s1 + $0x98] sm:$0xf]
  %v55 = vld [vmem:[%s1 + $0x9c] sm:$0xf]
  %v56 = vld [vmem:[%s1 + $0xa0] sm:$0xf]
  %v57 = vld [vmem:[%s1 + $0xa4] sm:$0xf]
  %v58 = vld [vmem:[%s1 + $0xa8] sm:$0xf]
  %v59 = vld [vmem:[%s1 + $0xac] sm:$0xf]
  %v60 = vld [vmem:[%s1 + $0xb0] sm:$0xf]
  %v61 = vld [vmem:[%s1 + $0xb4] sm:$0xf]
  %v62 = vld [vmem:[%s1 + $0xb8] sm:$0xf]
  %v63 = vld [vmem:[%s1 + $0xbc] sm:$0xf]
  %v64 = vld [vmem:[%s2] sm:$0x1]
  %v66 = vperm.slane %v64, 0
  %v70 = vunpack.c.l.b16 %v14
  %v71 = vunpack.c.h.b16 %v14
  %v72 = vunpack.c.l.b16 %v15
  %v73 = vpack.c.b16 %v70, %v70
  %v74 = vpack.c.b16 %v71, %v71
  %v75 = vpack.c.b16 %v72, %v72
  %v127 = vunpack.c.l.b16 %v16
  %v128 = vunpack.c.l.b16 %v17
  %v129 = vunpack.c.l.b16 %v18
  %v130 = vunpack.c.l.b16 %v19
  %v131 = vunpack.c.l.b16 %v20
  %v132 = vunpack.c.l.b16 %v21
  %v133 = vunpack.c.l.b16 %v22
  %v134 = vunpack.c.l.b16 %v23
  %v135 = vunpack.c.l.b16 %v24
  %v136 = vunpack.c.l.b16 %v25
  %v137 = vunpack.c.l.b16 %v26
  %v138 = vunpack.c.l.b16 %v27
  %v139 = vunpack.c.l.b16 %v28
  %v140 = vunpack.c.l.b16 %v29
  %v141 = vunpack.c.l.b16 %v30
  %v142 = vunpack.c.l.b16 %v31
  %v143 = vunpack.c.l.b16 %v32
  %v144 = vunpack.c.l.b16 %v33
  %v145 = vunpack.c.l.b16 %v34
  %v146 = vunpack.c.l.b16 %v35
  %v147 = vunpack.c.l.b16 %v36
  %v148 = vunpack.c.l.b16 %v37
  %v149 = vunpack.c.l.b16 %v38
  %v150 = vunpack.c.l.b16 %v39
  %v151 = vunpack.c.l.b16 %v40
  %v152 = vunpack.c.l.b16 %v41
  %v153 = vunpack.c.l.b16 %v42
  %v154 = vunpack.c.l.b16 %v43
  %v155 = vunpack.c.l.b16 %v44
  %v156 = vunpack.c.l.b16 %v45
  %v157 = vunpack.c.l.b16 %v46
  %v158 = vunpack.c.l.b16 %v47
  %v159 = vunpack.c.l.b16 %v48
  %v160 = vunpack.c.l.b16 %v49
  %v161 = vunpack.c.l.b16 %v50
  %v162 = vunpack.c.l.b16 %v51
  %v163 = vunpack.c.l.b16 %v52
  %v164 = vunpack.c.l.b16 %v53
  %v165 = vunpack.c.l.b16 %v54
  %v166 = vunpack.c.l.b16 %v55
  %v167 = vunpack.c.l.b16 %v56
  %v168 = vunpack.c.l.b16 %v57
  %v169 = vunpack.c.l.b16 %v58
  %v170 = vunpack.c.l.b16 %v59
  %v171 = vunpack.c.l.b16 %v60
  %v172 = vunpack.c.l.b16 %v61
  %v173 = vunpack.c.l.b16 %v62
  %v174 = vunpack.c.l.b16 %v63
  %v175 = vpack.c.b16 %v128, %v127
  %v176 = vpack.c.b16 %v130, %v129
  %v177 = vpack.c.b16 %v132, %v131
  %v178 = vpack.c.b16 %v134, %v133
  %v179 = vpack.c.b16 %v136, %v135
  %v180 = vpack.c.b16 %v138, %v137
  %v181 = vpack.c.b16 %v140, %v139
  %v182 = vpack.c.b16 %v142, %v141
  %v183 = vpack.c.b16 %v144, %v143
  %v184 = vpack.c.b16 %v146, %v145
  %v185 = vpack.c.b16 %v148, %v147
  %v186 = vpack.c.b16 %v150, %v149
  %v187 = vpack.c.b16 %v152, %v151
  %v188 = vpack.c.b16 %v154, %v153
  %v189 = vpack.c.b16 %v156, %v155
  %v190 = vpack.c.b16 %v158, %v157
  %v191 = vpack.c.b16 %v160, %v159
  %v192 = vpack.c.b16 %v162, %v161
  %v193 = vpack.c.b16 %v164, %v163
  %v194 = vpack.c.b16 %v166, %v165
  %v195 = vpack.c.b16 %v168, %v167
  %v196 = vpack.c.b16 %v170, %v169
  %v197 = vpack.c.b16 %v172, %v171
  %v198 = vpack.c.b16 %v174, %v173
  %223 = vmatpush.bf16.msra.mxu0 %v182
  %224 = vmatpush.bf16.msra.mxu0 %v181
  %225 = vmatpush.bf16.msra.mxu0 %v180
  %226 = vmatpush.bf16.msra.mxu0 %v179
  %227 = vmatpush.bf16.msra.mxu0 %v178
  %228 = vmatpush.bf16.msra.mxu0 %v177
  %229 = vmatpush.bf16.msra.mxu0 %v176
  %230 = vmatpush.bf16.msra.mxu0 %v175
  %231 = vmatmul.bf16.gmra.mxu0 %v73
  %v232 = vpop.f32.mrf.mxu0
  %v233 = vadd.f32 %v66, %v232
  %v234 = vpop.f32.mrf.mxu0
  %235 = vdwg.mxu0
  %236 = vmatpush.bf16.msra.mxu0 %v190
  %237 = vmatpush.bf16.msra.mxu0 %v189
  %238 = vmatpush.bf16.msra.mxu0 %v188
  %239 = vmatpush.bf16.msra.mxu0 %v187
  %240 = vmatpush.bf16.msra.mxu0 %v186
  %241 = vmatpush.bf16.msra.mxu0 %v185
  %242 = vmatpush.bf16.msra.mxu0 %v184
  %243 = vmatpush.bf16.msra.mxu0 %v183
  %244 = vmatmul.bf16.gmra.mxu0 %v74
  %v245 = vpop.f32.mrf.mxu0
  %v246 = vadd.f32 %v233, %v245
  %v247 = vpop.f32.mrf.mxu0
  %248 = vdwg.mxu0
  %249 = vmatpush.bf16.msra.mxu0 %v198
  %250 = vmatpush.bf16.msra.mxu0 %v197
  %251 = vmatpush.bf16.msra.mxu0 %v196
  %252 = vmatpush.bf16.msra.mxu0 %v195
  %253 = vmatpush.bf16.msra.mxu0 %v194
  %254 = vmatpush.bf16.msra.mxu0 %v193
  %255 = vmatpush.bf16.msra.mxu0 %v192
  %256 = vmatpush.bf16.msra.mxu0 %v191
  %257 = vmatmul.bf16.gmra.mxu0 %v75
  %v258 = vpop.f32.mrf.mxu0
  %v259 = vadd.f32 %v246, %v258
  %v260 = vpop.f32.mrf.mxu0
  %261 = vdwg.mxu0
  %262 = vst [vmem:[%s3] sm:$0x3f] %v259
  // Predicated region
  $region14: #{autoencoder_forward.8} parent=0 // pred_check
    _
  $region15: #{autoencoder_forward.8} parent=0 // pred_check_branch
    %264 = sbr.rel (0) target = $region17
  $region16: #{autoencoder_forward.8} parent=0 // pred_region
    _
  $region17: #{autoencoder_forward.8} parent=0 // pred_fallthru
    _
  // Predicated region
  $region18: #{autoencoder_forward.8} parent=0 // pred_check
    _
  $region19: #{autoencoder_forward.8} parent=0 // pred_check_branch
    %266 = sbr.rel (0) target = $region21
  $region20: #{autoencoder_forward.8} parent=0 // pred_region
    _
  $region21: #{autoencoder_forward.8} parent=0 // pred_fallthru
    _

// kernel: tile.18
$region0: #{tile.18}
  #allocation0 [shape = 's32[1]{0}', space=sflag, size = 0x4, scoped, tag = 'scoped memory for tile.18']
  %s0 = inlined_call_operand.vmem [shape: f32[64], index: 0, kind: input, shape index: {}]
  %s1 = inlined_call_operand.vmem [shape: f32[2,64], index: 1, kind: output, shape index: {}]
  // Predicated region
  $region2: #{tile.18} parent=0 // pred_check
    _
  $region3: #{tile.18} parent=0 // pred_check_branch
    %3 = sbr.rel (0) target = $region5
  $region4: #{tile.18} parent=0 // pred_region
    _
  $region5: #{tile.18} parent=0 // pred_fallthru
    _
  %v4 = vld [vmem:[%s0] ss:$0 sm:$0xff]
  %5 = vst [vmem:[%s1] sm:$0x3] %v4

// kernel: tile.19
$region0: #{tile.19}
  %s0 = inlined_call_operand.vmem [shape: f32[2,64], index: 0, kind: input, shape index: {}]
  %s1 = inlined_call_operand.vmem [shape: f32[1,128], index: 1, kind: output, shape index: {}]
  $region1: #{tile.19} parent=0
    #allocation0 [shape = 'u8[4096]{0}', space=vmem, size = 0x1000, scoped, tag = 'scoped mem for output reshape']
    #allocation1 [shape = 'u8[4096]{0}', space=vmem, size = 0x1000, scoped, tag = 'scoped mem for input reshape']
    %s3 = ssub.s32 4, 1
    %v4 = vld [vmem:[%s0] sm:%s3]
    %5 = vst [vmem:[#allocation1] sm:%s3] %v4
    %v6 = vld [vmem:[#allocation1] sm:$0x1]
    %vm7 = vcmask 523264
    %8 = vst.msk [vmem:[#allocation0] sm:$0x1] %vm7, %v6
    %s9 = scalar_lea.vmem [#allocation1], 1
    %v10 = vld [vmem:[%s9] sm:$0x1]
    %11 = vrot.lane.b32.xlu0 %v10, 64
    %v12 = vpop.permute.xlu0 %11
    %vm13 = vcmask 1048064
    %14 = vst.msk [vmem:[#allocation0] sm:$0x1] %vm13, %v12
    %s16 = ssub.s32 2, 1
    %v17 = vld [vmem:[#allocation0] sm:%s16]
    %s19 = ssub.s32 2, 1
    %20 = vst [vmem:[%s1] sm:%s19] %v17

// kernel: autoencoder_forward.9
$region0: #{autoencoder_forward.9}
  #allocation0 [shape = 'u32[]', space=smem, size = 0x4, offset = 0x4, fixed_abs, tag = 'smem constant byte address 0x4 - core index']
  #allocation1 [shape = 'u32[72,128]{1,0:T(1,128)}', space=vmem, size = 0x9000, scoped, tag = 'internal scratch']
  %s0 = inlined_call_operand.vmem [shape: bf16[16,512], index: 0, kind: input, shape index: {}]
  %s1 = inlined_call_operand.vmem [shape: bf16[512,128], index: 1, kind: input, shape index: {}]
  %s2 = inlined_call_operand.vmem [shape: f32[1,128], index: 2, kind: input, shape index: {}]
  %s3 = inlined_call_operand.vmem [shape: f32[16,128], index: 3, kind: output, shape index: {}]
  %s4 = sld [smem:[#allocation0]]
  $region22: #{autoencoder_forward.9} parent=0
    _
  %s6 = ssub.s32 1, %s4
  %s7 = scalar_select 0, %s6, %s4
  // Predicated region
  $region2: #{autoencoder_forward.9} parent=0 // pred_check
    _
  $region3: #{autoencoder_forward.9} parent=0 // pred_check_branch
    %9 = sbr.rel (0) target = $region5
  $region4: #{autoencoder_forward.9} parent=0 // pred_region
    _
  $region5: #{autoencoder_forward.9} parent=0 // pred_fallthru
    _
  // Predicated region
  $region6: #{autoencoder_forward.9} parent=0 // pred_check
    _
  $region7: #{autoencoder_forward.9} parent=0 // pred_check_branch
    %11 = sbr.rel (0) target = $region9
  $region8: #{autoencoder_forward.9} parent=0 // pred_region
    _
  $region9: #{autoencoder_forward.9} parent=0 // pred_fallthru
    _
  // Predicated region
  $region10: #{autoencoder_forward.9} parent=0 // pred_check
    _
  $region11: #{autoencoder_forward.9} parent=0 // pred_check_branch
    %13 = sbr.rel (0) target = $region13
  $region12: #{autoencoder_forward.9} parent=0 // pred_region
    _
  $region13: #{autoencoder_forward.9} parent=0 // pred_fallthru
    _
  %v14 = vld [vmem:[%s0] sm:$0xff]
  %v15 = vld [vmem:[%s0 + $0x8] sm:$0xff]
  %v16 = vld [vmem:[%s0 + $0x10] sm:$0xff]
  %v17 = vld [vmem:[%s0 + $0x18] sm:$0xff]
  %v18 = vld [vmem:[%s1] sm:$0xf]
  %v19 = vld [vmem:[%s1 + $0x4] sm:$0xf]
  %v20 = vld [vmem:[%s1 + $0x8] sm:$0xf]
  %v21 = vld [vmem:[%s1 + $0xc] sm:$0xf]
  %v22 = vld [vmem:[%s1 + $0x10] sm:$0xf]
  %v23 = vld [vmem:[%s1 + $0x14] sm:$0xf]
  %v24 = vld [vmem:[%s1 + $0x18] sm:$0xf]
  %v25 = vld [vmem:[%s1 + $0x1c] sm:$0xf]
  %v26 = vld [vmem:[%s1 + $0x20] sm:$0xf]
  %v27 = vld [vmem:[%s1 + $0x24] sm:$0xf]
  %v28 = vld [vmem:[%s1 + $0x28] sm:$0xf]
  %v29 = vld [vmem:[%s1 + $0x2c] sm:$0xf]
  %v30 = vld [vmem:[%s1 + $0x30] sm:$0xf]
  %v31 = vld [vmem:[%s1 + $0x34] sm:$0xf]
  %v32 = vld [vmem:[%s1 + $0x38] sm:$0xf]
  %v33 = vld [vmem:[%s1 + $0x3c] sm:$0xf]
  %v34 = vld [vmem:[%s1 + $0x40] sm:$0xf]
  %v35 = vld [vmem:[%s1 + $0x44] sm:$0xf]
  %v36 = vld [vmem:[%s1 + $0x48] sm:$0xf]
  %v37 = vld [vmem:[%s1 + $0x4c] sm:$0xf]
  %v38 = vld [vmem:[%s1 + $0x50] sm:$0xf]
  %v39 = vld [vmem:[%s1 + $0x54] sm:$0xf]
  %v40 = vld [vmem:[%s1 + $0x58] sm:$0xf]
  %v41 = vld [vmem:[%s1 + $0x5c] sm:$0xf]
  %v42 = vld [vmem:[%s1 + $0x60] sm:$0xf]
  %v43 = vld [vmem:[%s1 + $0x64] sm:$0xf]
  %v44 = vld [vmem:[%s1 + $0x68] sm:$0xf]
  %v45 = vld [vmem:[%s1 + $0x6c] sm:$0xf]
  %v46 = vld [vmem:[%s1 + $0x70] sm:$0xf]
  %v47 = vld [vmem:[%s1 + $0x74] sm:$0xf]
  %v48 = vld [vmem:[%s1 + $0x78] sm:$0xf]
  %v49 = vld [vmem:[%s1 + $0x7c] sm:$0xf]
  %v50 = vld [vmem:[%s1 + $0x80] sm:$0xf]
  %v51 = vld [vmem:[%s1 + $0x84] sm:$0xf]
  %v52 = vld [vmem:[%s1 + $0x88] sm:$0xf]
  %v53 = vld [vmem:[%s1 + $0x8c] sm:$0xf]
  %v54 = vld [vmem:[%s1 + $0x90] sm:$0xf]
  %v55 = vld [vmem:[%s1 + $0x94] sm:$0xf]
  %v56 = vld [vmem:[%s1 + $0x98] sm:$0xf]
  %v57 = vld [vmem:[%s1 + $0x9c] sm:$0xf]
  %v58 = vld [vmem:[%s1 + $0xa0] sm:$0xf]
  %v59 = vld [vmem:[%s1 + $0xa4] sm:$0xf]
  %v60 = vld [vmem:[%s1 + $0xa8] sm:$0xf]
  %v61 = vld [vmem:[%s1 + $0xac] sm:$0xf]
  %v62 = vld [vmem:[%s1 + $0xb0] sm:$0xf]
  %v63 = vld [vmem:[%s1 + $0xb4] sm:$0xf]
  %v64 = vld [vmem:[%s1 + $0xb8] sm:$0xf]
  %v65 = vld [vmem:[%s1 + $0xbc] sm:$0xf]
  %v66 = vld [vmem:[%s1 + $0xc0] sm:$0xf]
  %v67 = vld [vmem:[%s1 + $0xc4] sm:$0xf]
  %v68 = vld [vmem:[%s1 + $0xc8] sm:$0xf]
  %v69 = vld [vmem:[%s1 + $0xcc] sm:$0xf]
  %v70 = vld [vmem:[%s1 + $0xd0] sm:$0xf]
  %v71 = vld [vmem:[%s1 + $0xd4] sm:$0xf]
  %v72 = vld [vmem:[%s1 + $0xd8] sm:$0xf]
  %v73 = vld [vmem:[%s1 + $0xdc] sm:$0xf]
  %v74 = vld [vmem:[%s1 + $0xe0] sm:$0xf]
  %v75 = vld [vmem:[%s1 + $0xe4] sm:$0xf]
  %v76 = vld [vmem:[%s1 + $0xe8] sm:$0xf]
  %v77 = vld [vmem:[%s1 + $0xec] sm:$0xf]
  %v78 = vld [vmem:[%s1 + $0xf0] sm:$0xf]
  %v79 = vld [vmem:[%s1 + $0xf4] sm:$0xf]
  %v80 = vld [vmem:[%s1 + $0xf8] sm:$0xf]
  %v81 = vld [vmem:[%s1 + $0xfc] sm:$0xf]
  %v82 = vld [vmem:[%s2] sm:$0x1]
  %v84 = vperm.slane %v82, 0
  %v90 = vunpack.c.l.b16 %v14
  %v91 = vunpack.c.h.b16 %v14
  %v92 = vunpack.c.l.b16 %v15
  %v93 = vunpack.c.h.b16 %v15
  %v94 = vunpack.c.l.b16 %v16
  %v95 = vunpack.c.h.b16 %v16
  %v96 = vunpack.c.l.b16 %v17
  %v97 = vunpack.c.h.b16 %v17
  %v98 = vpack.c.b16 %v94, %v90
  %v99 = vpack.c.b16 %v95, %v91
  %v100 = vpack.c.b16 %v96, %v92
  %v101 = vpack.c.b16 %v97, %v93
  %v170 = vunpack.c.l.b16 %v18
  %v171 = vunpack.c.l.b16 %v19
  %v172 = vunpack.c.l.b16 %v20
  %v173 = vunpack.c.l.b16 %v21
  %v174 = vunpack.c.l.b16 %v22
  %v175 = vunpack.c.l.b16 %v23
  %v176 = vunpack.c.l.b16 %v24
  %v177 = vunpack.c.l.b16 %v25
  %v178 = vunpack.c.l.b16 %v26
  %v179 = vunpack.c.l.b16 %v27
  %v180 = vunpack.c.l.b16 %v28
  %v181 = vunpack.c.l.b16 %v29
  %v182 = vunpack.c.l.b16 %v30
  %v183 = vunpack.c.l.b16 %v31
  %v184 = vunpack.c.l.b16 %v32
  %v185 = vunpack.c.l.b16 %v33
  %v186 = vunpack.c.l.b16 %v34
  %v187 = vunpack.c.l.b16 %v35
  %v188 = vunpack.c.l.b16 %v36
  %v189 = vunpack.c.l.b16 %v37
  %v190 = vunpack.c.l.b16 %v38
  %v191 = vunpack.c.l.b16 %v39
  %v192 = vunpack.c.l.b16 %v40
  %v193 = vunpack.c.l.b16 %v41
  %v194 = vunpack.c.l.b16 %v42
  %v195 = vunpack.c.l.b16 %v43
  %v196 = vunpack.c.l.b16 %v44
  %v197 = vunpack.c.l.b16 %v45
  %v198 = vunpack.c.l.b16 %v46
  %v199 = vunpack.c.l.b16 %v47
  %v200 = vunpack.c.l.b16 %v48
  %v201 = vunpack.c.l.b16 %v49
  %v202 = vunpack.c.l.b16 %v50
  %v203 = vunpack.c.l.b16 %v51
  %v204 = vunpack.c.l.b16 %v52
  %v205 = vunpack.c.l.b16 %v53
  %v206 = vunpack.c.l.b16 %v54
  %v207 = vunpack.c.l.b16 %v55
  %v208 = vunpack.c.l.b16 %v56
  %v209 = vunpack.c.l.b16 %v57
  %v210 = vunpack.c.l.b16 %v58
  %v211 = vunpack.c.l.b16 %v59
  %v212 = vunpack.c.l.b16 %v60
  %v213 = vunpack.c.l.b16 %v61
  %v214 = vunpack.c.l.b16 %v62
  %v215 = vunpack.c.l.b16 %v63
  %v216 = vunpack.c.l.b16 %v64
  %v217 = vunpack.c.l.b16 %v65
  %v218 = vunpack.c.l.b16 %v66
  %v219 = vunpack.c.l.b16 %v67
  %v220 = vunpack.c.l.b16 %v68
  %v221 = vunpack.c.l.b16 %v69
  %v222 = vunpack.c.l.b16 %v70
  %v223 = vunpack.c.l.b16 %v71
  %v224 = vunpack.c.l.b16 %v72
  %v225 = vunpack.c.l.b16 %v73
  %v226 = vunpack.c.l.b16 %v74
  %v227 = vunpack.c.l.b16 %v75
  %v228 = vunpack.c.l.b16 %v76
  %v229 = vunpack.c.l.b16 %v77
  %v230 = vunpack.c.l.b16 %v78
  %v231 = vunpack.c.l.b16 %v79
  %v232 = vunpack.c.l.b16 %v80
  %v233 = vunpack.c.l.b16 %v81
  %v234 = vpack.c.b16 %v171, %v170
  %v235 = vpack.c.b16 %v173, %v172
  %v236 = vpack.c.b16 %v175, %v174
  %v237 = vpack.c.b16 %v177, %v176
  %v238 = vpack.c.b16 %v179, %v178
  %v239 = vpack.c.b16 %v181, %v180
  %v240 = vpack.c.b16 %v183, %v182
  %v241 = vpack.c.b16 %v185, %v184
  %v242 = vpack.c.b16 %v187, %v186
  %v243 = vpack.c.b16 %v189, %v188
  %v244 = vpack.c.b16 %v191, %v190
  %v245 = vpack.c.b16 %v193, %v192
  %v246 = vpack.c.b16 %v195, %v194
  %v247 = vpack.c.b16 %v197, %v196
  %v248 = vpack.c.b16 %v199, %v198
  %v249 = vpack.c.b16 %v201, %v200
  %v250 = vpack.c.b16 %v203, %v202
  %v251 = vpack.c.b16 %v205, %v204
  %v252 = vpack.c.b16 %v207, %v206
  %v253 = vpack.c.b16 %v209, %v208
  %v254 = vpack.c.b16 %v211, %v210
  %v255 = vpack.c.b16 %v213, %v212
  %v256 = vpack.c.b16 %v215, %v214
  %v257 = vpack.c.b16 %v217, %v216
  %v258 = vpack.c.b16 %v219, %v218
  %v259 = vpack.c.b16 %v221, %v220
  %v260 = vpack.c.b16 %v223, %v222
  %v261 = vpack.c.b16 %v225, %v224
  %v262 = vpack.c.b16 %v227, %v226
  %v263 = vpack.c.b16 %v229, %v228
  %v264 = vpack.c.b16 %v231, %v230
  %v265 = vpack.c.b16 %v233, %v232
  %298 = vmatpush.bf16.msra.mxu0 %v241
  %299 = vmatpush.bf16.msra.mxu0 %v240
  %300 = vmatpush.bf16.msra.mxu0 %v239
  %301 = vmatpush.bf16.msra.mxu0 %v238
  %302 = vmatpush.bf16.msra.mxu0 %v237
  %303 = vmatpush.bf16.msra.mxu0 %v236
  %304 = vmatpush.bf16.msra.mxu0 %v235
  %305 = vmatpush.bf16.msra.mxu0 %v234
  %306 = vmatmul.bf16.gmra.mxu0 %v98
  %v307 = vpop.f32.mrf.mxu0
  %v308 = vadd.f32 %v84, %v307
  %v309 = vpop.f32.mrf.mxu0
  %v310 = vadd.f32 %v84, %v309
  %311 = vdwg.mxu0
  %312 = vmatpush.bf16.msra.mxu0 %v249
  %313 = vmatpush.bf16.msra.mxu0 %v248
  %314 = vmatpush.bf16.msra.mxu0 %v247
  %315 = vmatpush.bf16.msra.mxu0 %v246
  %316 = vmatpush.bf16.msra.mxu0 %v245
  %317 = vmatpush.bf16.msra.mxu0 %v244
  %318 = vmatpush.bf16.msra.mxu0 %v243
  %319 = vmatpush.bf16.msra.mxu0 %v242
  %320 = vmatmul.bf16.gmra.mxu0 %v99
  %v321 = vpop.f32.mrf.mxu0
  %v322 = vadd.f32 %v308, %v321
  %v323 = vpop.f32.mrf.mxu0
  %v324 = vadd.f32 %v310, %v323
  %325 = vdwg.mxu0
  %326 = vmatpush.bf16.msra.mxu0 %v257
  %327 = vmatpush.bf16.msra.mxu0 %v256
  %328 = vmatpush.bf16.msra.mxu0 %v255
  %329 = vmatpush.bf16.msra.mxu0 %v254
  %330 = vmatpush.bf16.msra.mxu0 %v253
  %331 = vmatpush.bf16.msra.mxu0 %v252
  %332 = vmatpush.bf16.msra.mxu0 %v251
  %333 = vmatpush.bf16.msra.mxu0 %v250
  %334 = vmatmul.bf16.gmra.mxu0 %v100
  %v335 = vpop.f32.mrf.mxu0
  %v336 = vadd.f32 %v322, %v335
  %v337 = vpop.f32.mrf.mxu0
  %v338 = vadd.f32 %v324, %v337
  %339 = vdwg.mxu0
  %340 = vmatpush.bf16.msra.mxu0 %v265
  %341 = vmatpush.bf16.msra.mxu0 %v264
  %342 = vmatpush.bf16.msra.mxu0 %v263
  %343 = vmatpush.bf16.msra.mxu0 %v262
  %344 = vmatpush.bf16.msra.mxu0 %v261
  %345 = vmatpush.bf16.msra.mxu0 %v260
  %346 = vmatpush.bf16.msra.mxu0 %v259
  %347 = vmatpush.bf16.msra.mxu0 %v258
  %348 = vmatmul.bf16.gmra.mxu0 %v101
  %v349 = vpop.f32.mrf.mxu0
  %v350 = vadd.f32 %v336, %v349
  %v351 = vpop.f32.mrf.mxu0
  %v352 = vadd.f32 %v338, %v351
  %353 = vdwg.mxu0
  %v354 = vmax.f32 %v350, 0.0
  %v355 = vmax.f32 %v352, 0.0
  %356 = vst [vmem:[%s3] sm:$0xff] %v354
  %357 = vst [vmem:[%s3 + $0x8] sm:$0xff] %v355
  // Predicated region
  $region14: #{autoencoder_forward.9} parent=0 // pred_check
    _
  $region15: #{autoencoder_forward.9} parent=0 // pred_check_branch
    %359 = sbr.rel (0) target = $region17
  $region16: #{autoencoder_forward.9} parent=0 // pred_region
    _
  $region17: #{autoencoder_forward.9} parent=0 // pred_fallthru
    _
  // Predicated region
  $region18: #{autoencoder_forward.9} parent=0 // pred_check
    _
  $region19: #{autoencoder_forward.9} parent=0 // pred_check_branch
    %361 = sbr.rel (0) target = $region21
  $region20: #{autoencoder_forward.9} parent=0 // pred_region
    _
  $region21: #{autoencoder_forward.9} parent=0 // pred_fallthru
    _

// kernel: reverse
$region0: #{reverse}
  #allocation0 [shape = 's32[1]{0}', space=sflag, size = 0x4, scoped, tag = 'scoped memory for reverse']
  %s0 = inlined_call_operand.vmem [shape: bf16[4,4,64,1024], index: 0, kind: input, shape index: {}]
  %s1 = inlined_call_operand.vmem [shape: bf16[4,4,64,1024], index: 1, kind: output, shape index: {}]
  %s2 = scalar_lea.vmem %s0, 3840
  %v3 = vld [vmem:[%s2] sm:$0xf]
  %v4 = vunpack.c.l.bf16 %v3
  %v5 = vunpack.c.h.bf16 %v3
  %s6 = scalar_lea.vmem %s0, 2816
  %v7 = vld [vmem:[%s6] sm:$0xf]
  %v8 = vunpack.c.l.bf16 %v7
  %v9 = vunpack.c.h.bf16 %v7
  %s10 = scalar_lea.vmem %s1, 1024
  %s11 = scalar_lea.vmem %s0, 1792
  %v12 = vld [vmem:[%s11] sm:$0xf]
  %v13 = vunpack.c.l.bf16 %v12
  %v14 = vunpack.c.h.bf16 %v12
  %s15 = scalar_lea.vmem %s1, 2048
  %s16 = scalar_lea.vmem %s0, 768
  %v17 = vld [vmem:[%s16] sm:$0xf]
  %v18 = vunpack.c.l.bf16 %v17
  %v19 = vunpack.c.h.bf16 %v17
  %s20 = scalar_lea.vmem %s1, 3072
  %s21 = scalar_lea.vmem %s0, 3584
  %v22 = vld [vmem:[%s21] sm:$0xf]
  %v23 = vunpack.c.l.bf16 %v22
  %v24 = vunpack.c.h.bf16 %v22
  %s25 = scalar_lea.vmem %s1, 256
  %s26 = scalar_lea.vmem %s0, 2560
  %v27 = vld [vmem:[%s26] sm:$0xf]
  %v28 = vunpack.c.l.bf16 %v27
  %v29 = vunpack.c.h.bf16 %v27
  %s30 = scalar_lea.vmem %s1, 1280
  %s31 = scalar_lea.vmem %s0, 1536
  %v32 = vld [vmem:[%s31] sm:$0xf]
  %v33 = vunpack.c.l.bf16 %v32
  %v34 = vunpack.c.h.bf16 %v32
  %s35 = scalar_lea.vmem %s1, 2304
  %s36 = scalar_lea.vmem %s0, 512
  %v37 = vld [vmem:[%s36] sm:$0xf]
  %v38 = vunpack.c.l.bf16 %v37
  %v39 = vunpack.c.h.bf16 %v37
  %s40 = scalar_lea.vmem %s1, 3328
  %s41 = scalar_lea.vmem %s0, 3328
  %v42 = vld [vmem:[%s41] sm:$0xf]
  %v43 = vunpack.c.l.bf16 %v42
  %v44 = vunpack.c.h.bf16 %v42
  %s45 = scalar_lea.vmem %s1, 512
  %s46 = scalar_lea.vmem %s0, 2304
  %v47 = vld [vmem:[%s46] sm:$0xf]
  %v48 = vunpack.c.l.bf16 %v47
  %v49 = vunpack.c.h.bf16 %v47
  %s50 = scalar_lea.vmem %s1, 1536
  %s51 = scalar_lea.vmem %s0, 1280
  %v52 = vld [vmem:[%s51] sm:$0xf]
  %v53 = vunpack.c.l.bf16 %v52
  %v54 = vunpack.c.h.bf16 %v52
  %s55 = scalar_lea.vmem %s1, 2560
  %s56 = scalar_lea.vmem %s0, 256
  %v57 = vld [vmem:[%s56] sm:$0xf]
  %v58 = vunpack.c.l.bf16 %v57
  %v59 = vunpack.c.h.bf16 %v57
  %s60 = scalar_lea.vmem %s1, 3584
  %s61 = scalar_lea.vmem %s0, 3072
  %v62 = vld [vmem:[%s61] sm:$0xf]
  %v63 = vunpack.c.l.bf16 %v62
  %v64 = vunpack.c.h.bf16 %v62
  %s65 = scalar_lea.vmem %s1, 768
  %s66 = scalar_lea.vmem %s0, 2048
  %v67 = vld [vmem:[%s66] sm:$0xf]
  %v68 = vunpack.c.l.bf16 %v67
  %v69 = vunpack.c.h.bf16 %v67
  %s70 = scalar_lea.vmem %s1, 1792
  %s71 = scalar_lea.vmem %s0, 1024
  %v72 = vld [vmem:[%s71] sm:$0xf]
  %v73 = vunpack.c.l.bf16 %v72
  %v74 = vunpack.c.h.bf16 %v72
  %s75 = scalar_lea.vmem %s1, 2816
  %v76 = vld [vmem:[%s0] sm:$0xf]
  %v77 = vunpack.c.l.bf16 %v76
  %v78 = vunpack.c.h.bf16 %v76
  %s79 = scalar_lea.vmem %s1, 3840
  %s80 = scalar_lea.vmem %s0, 3872
  %v81 = vld [vmem:[%s80] sm:$0xf]
  %v82 = vunpack.c.l.bf16 %v81
  %v83 = vunpack.c.h.bf16 %v81
  %s84 = scalar_lea.vmem %s1, 32
  %s85 = scalar_lea.vmem %s0, 2848
  %v86 = vld [vmem:[%s85] sm:$0xf]
  %v87 = vunpack.c.l.bf16 %v86
  %v88 = vunpack.c.h.bf16 %v86
  %s89 = scalar_lea.vmem %s1, 1056
  %s90 = scalar_lea.vmem %s0, 1824
  %v91 = vld [vmem:[%s90] sm:$0xf]
  %v92 = vunpack.c.l.bf16 %v91
  %v93 = vunpack.c.h.bf16 %v91
  %s94 = scalar_lea.vmem %s1, 2080
  %s95 = scalar_lea.vmem %s0, 800
  %v96 = vld [vmem:[%s95] sm:$0xf]
  %v97 = vunpack.c.l.bf16 %v96
  %v98 = vunpack.c.h.bf16 %v96
  %s99 = scalar_lea.vmem %s1, 3104
  %s100 = scalar_lea.vmem %s0, 3616
  %v101 = vld [vmem:[%s100] sm:$0xf]
  %v102 = vunpack.c.l.bf16 %v101
  %v103 = vunpack.c.h.bf16 %v101
  %s104 = scalar_lea.vmem %s1, 288
  %s105 = scalar_lea.vmem %s0, 2592
  %v106 = vld [vmem:[%s105] sm:$0xf]
  %v107 = vunpack.c.l.bf16 %v106
  %v108 = vunpack.c.h.bf16 %v106
  %s109 = scalar_lea.vmem %s1, 1312
  %s110 = scalar_lea.vmem %s0, 1568
  %v111 = vld [vmem:[%s110] sm:$0xf]
  %v112 = vunpack.c.l.bf16 %v111
  %v113 = vunpack.c.h.bf16 %v111
  %s114 = scalar_lea.vmem %s1, 2336
  %s115 = scalar_lea.vmem %s0, 544
  %v116 = vld [vmem:[%s115] sm:$0xf]
  %v117 = vunpack.c.l.bf16 %v116
  %v118 = vunpack.c.h.bf16 %v116
  %s119 = scalar_lea.vmem %s1, 3360
  %s120 = scalar_lea.vmem %s0, 3360
  %v121 = vld [vmem:[%s120] sm:$0xf]
  %v122 = vunpack.c.l.bf16 %v121
  %v123 = vunpack.c.h.bf16 %v121
  %s124 = scalar_lea.vmem %s1, 544
  %s125 = scalar_lea.vmem %s0, 2336
  %v126 = vld [vmem:[%s125] sm:$0xf]
  %v127 = vunpack.c.l.bf16 %v126
  %v128 = vunpack.c.h.bf16 %v126
  %s129 = scalar_lea.vmem %s1, 1568
  %s130 = scalar_lea.vmem %s0, 1312
  %v131 = vld [vmem:[%s130] sm:$0xf]
  %v132 = vunpack.c.l.bf16 %v131
  %v133 = vunpack.c.h.bf16 %v131
  %s134 = scalar_lea.vmem %s1, 2592
  %s135 = scalar_lea.vmem %s0, 288
  %v136 = vld [vmem:[%s135] sm:$0xf]
  %v137 = vunpack.c.l.bf16 %v136
  %v138 = vunpack.c.h.bf16 %v136
  %s139 = scalar_lea.vmem %s1, 3616
  %s140 = scalar_lea.vmem %s0, 3104
  %v141 = vld [vmem:[%s140] sm:$0xf]
  %v142 = vunpack.c.l.bf16 %v141
  %v143 = vunpack.c.h.bf16 %v141
  %s144 = scalar_lea.vmem %s1, 800
  %s145 = scalar_lea.vmem %s0, 2080
  %v146 = vld [vmem:[%s145] sm:$0xf]
  %v147 = vunpack.c.l.bf16 %v146
  %v148 = vunpack.c.h.bf16 %v146
  %s149 = scalar_lea.vmem %s1, 1824
  %s150 = scalar_lea.vmem %s0, 1056
  %v151 = vld [vmem:[%s150] sm:$0xf]
  %v152 = vunpack.c.l.bf16 %v151
  %v153 = vunpack.c.h.bf16 %v151
  %s154 = scalar_lea.vmem %s1, 2848
  %s155 = scalar_lea.vmem %s0, 32
  %v156 = vld [vmem:[%s155] sm:$0xf]
  %v157 = vunpack.c.l.bf16 %v156
  %v158 = vunpack.c.h.bf16 %v156
  %s159 = scalar_lea.vmem %s1, 3872
  %s160 = scalar_lea.vmem %s0, 3904
  %v161 = vld [vmem:[%s160] sm:$0xf]
  %v162 = vunpack.c.l.bf16 %v161
  %v163 = vunpack.c.h.bf16 %v161
  %s164 = scalar_lea.vmem %s1, 64
  %s165 = scalar_lea.vmem %s0, 2880
  %v166 = vld [vmem:[%s165] sm:$0xf]
  %v167 = vunpack.c.l.bf16 %v166
  %v168 = vunpack.c.h.bf16 %v166
  %s169 = scalar_lea.vmem %s1, 1088
  %s170 = scalar_lea.vmem %s0, 1856
  %v171 = vld [vmem:[%s170] sm:$0xf]
  %v172 = vunpack.c.l.bf16 %v171
  %v173 = vunpack.c.h.bf16 %v171
  %s174 = scalar_lea.vmem %s1, 2112
  %s175 = scalar_lea.vmem %s0, 832
  %v176 = vld [vmem:[%s175] sm:$0xf]
  %v177 = vunpack.c.l.bf16 %v176
  %v178 = vunpack.c.h.bf16 %v176
  %s179 = scalar_lea.vmem %s1, 3136
  %s180 = scalar_lea.vmem %s0, 3648
  %v181 = vld [vmem:[%s180] sm:$0xf]
  %v182 = vunpack.c.l.bf16 %v181
  %v183 = vunpack.c.h.bf16 %v181
  %s184 = scalar_lea.vmem %s1, 320
  %s185 = scalar_lea.vmem %s0, 2624
  %v186 = vld [vmem:[%s185] sm:$0xf]
  %v187 = vunpack.c.l.bf16 %v186
  %v188 = vunpack.c.h.bf16 %v186
  %s189 = scalar_lea.vmem %s1, 1344
  %s190 = scalar_lea.vmem %s0, 1600
  %v191 = vld [vmem:[%s190] sm:$0xf]
  %v192 = vunpack.c.l.bf16 %v191
  %v193 = vunpack.c.h.bf16 %v191
  %s194 = scalar_lea.vmem %s1, 2368
  %s195 = scalar_lea.vmem %s0, 576
  %v196 = vld [vmem:[%s195] sm:$0xf]
  %v197 = vunpack.c.l.bf16 %v196
  %v198 = vunpack.c.h.bf16 %v196
  %s199 = scalar_lea.vmem %s1, 3392
  %s200 = scalar_lea.vmem %s0, 3392
  %v201 = vld [vmem:[%s200] sm:$0xf]
  %v202 = vunpack.c.l.bf16 %v201
  %v203 = vunpack.c.h.bf16 %v201
  %s204 = scalar_lea.vmem %s1, 576
  %s205 = scalar_lea.vmem %s0, 2368
  %v206 = vld [vmem:[%s205] sm:$0xf]
  %v207 = vunpack.c.l.bf16 %v206
  %v208 = vunpack.c.h.bf16 %v206
  %s209 = scalar_lea.vmem %s1, 1600
  %s210 = scalar_lea.vmem %s0, 1344
  %v211 = vld [vmem:[%s210] sm:$0xf]
  %v212 = vunpack.c.l.bf16 %v211
  %v213 = vunpack.c.h.bf16 %v211
  %s214 = scalar_lea.vmem %s1, 2624
  %s215 = scalar_lea.vmem %s0, 320
  %v216 = vld [vmem:[%s215] sm:$0xf]
  %v217 = vunpack.c.l.bf16 %v216
  %v218 = vunpack.c.h.bf16 %v216
  %s219 = scalar_lea.vmem %s1, 3648
  %s220 = scalar_lea.vmem %s0, 3136
  %v221 = vld [vmem:[%s220] sm:$0xf]
  %v222 = vunpack.c.l.bf16 %v221
  %v223 = vunpack.c.h.bf16 %v221
  %s224 = scalar_lea.vmem %s1, 832
  %s225 = scalar_lea.vmem %s0, 2112
  %v226 = vld [vmem:[%s225] sm:$0xf]
  %v227 = vunpack.c.l.bf16 %v226
  %v228 = vunpack.c.h.bf16 %v226
  %s229 = scalar_lea.vmem %s1, 1856
  %s230 = scalar_lea.vmem %s0, 1088
  %v231 = vld [vmem:[%s230] sm:$0xf]
  %v232 = vunpack.c.l.bf16 %v231
  %v233 = vunpack.c.h.bf16 %v231
  %s234 = scalar_lea.vmem %s1, 2880
  %s235 = scalar_lea.vmem %s0, 64
  %v236 = vld [vmem:[%s235] sm:$0xf]
  %v237 = vunpack.c.l.bf16 %v236
  %v238 = vunpack.c.h.bf16 %v236
  %s239 = scalar_lea.vmem %s1, 3904
  %s240 = scalar_lea.vmem %s0, 3936
  %v241 = vld [vmem:[%s240] sm:$0xf]
  %v242 = vunpack.c.l.bf16 %v241
  %v243 = vunpack.c.h.bf16 %v241
  %s244 = scalar_lea.vmem %s1, 96
  %s245 = scalar_lea.vmem %s0, 2912
  %v246 = vld [vmem:[%s245] sm:$0xf]
  %v247 = vunpack.c.l.bf16 %v246
  %v248 = vunpack.c.h.bf16 %v246
  %s249 = scalar_lea.vmem %s1, 1120
  %s250 = scalar_lea.vmem %s0, 1888
  %v251 = vld [vmem:[%s250] sm:$0xf]
  %v252 = vunpack.c.l.bf16 %v251
  %v253 = vunpack.c.h.bf16 %v251
  %s254 = scalar_lea.vmem %s1, 2144
  %s255 = scalar_lea.vmem %s0, 864
  %v256 = vld [vmem:[%s255] sm:$0xf]
  %v257 = vunpack.c.l.bf16 %v256
  %v258 = vunpack.c.h.bf16 %v256
  %s259 = scalar_lea.vmem %s1, 3168
  %s260 = scalar_lea.vmem %s0, 3680
  %v261 = vld [vmem:[%s260] sm:$0xf]
  %v262 = vunpack.c.l.bf16 %v261
  %v263 = vunpack.c.h.bf16 %v261
  %s264 = scalar_lea.vmem %s1, 352
  %s265 = scalar_lea.vmem %s0, 2656
  %v266 = vld [vmem:[%s265] sm:$0xf]
  %v267 = vunpack.c.l.bf16 %v266
  %v268 = vunpack.c.h.bf16 %v266
  %s269 = scalar_lea.vmem %s1, 1376
  %s270 = scalar_lea.vmem %s0, 1632
  %v271 = vld [vmem:[%s270] sm:$0xf]
  %v272 = vunpack.c.l.bf16 %v271
  %v273 = vunpack.c.h.bf16 %v271
  %s274 = scalar_lea.vmem %s1, 2400
  %s275 = scalar_lea.vmem %s0, 608
  %v276 = vld [vmem:[%s275] sm:$0xf]
  %v277 = vunpack.c.l.bf16 %v276
  %v278 = vunpack.c.h.bf16 %v276
  %s279 = scalar_lea.vmem %s1, 3424
  %s280 = scalar_lea.vmem %s0, 3424
  %v281 = vld [vmem:[%s280] sm:$0xf]
  %v282 = vunpack.c.l.bf16 %v281
  %v283 = vunpack.c.h.bf16 %v281
  %s284 = scalar_lea.vmem %s1, 608
  %s285 = scalar_lea.vmem %s0, 2400
  %v286 = vld [vmem:[%s285] sm:$0xf]
  %v287 = vunpack.c.l.bf16 %v286
  %v288 = vunpack.c.h.bf16 %v286
  %s289 = scalar_lea.vmem %s1, 1632
  %s290 = scalar_lea.vmem %s0, 1376
  %v291 = vld [vmem:[%s290] sm:$0xf]
  %v292 = vunpack.c.l.bf16 %v291
  %v293 = vunpack.c.h.bf16 %v291
  %s294 = scalar_lea.vmem %s1, 2656
  %s295 = scalar_lea.vmem %s0, 352
  %v296 = vld [vmem:[%s295] sm:$0xf]
  %v297 = vunpack.c.l.bf16 %v296
  %v298 = vunpack.c.h.bf16 %v296
  %s299 = scalar_lea.vmem %s1, 3680
  %s300 = scalar_lea.vmem %s0, 3168
  %v301 = vld [vmem:[%s300] sm:$0xf]
  %v302 = vunpack.c.l.bf16 %v301
  %v303 = vunpack.c.h.bf16 %v301
  %s304 = scalar_lea.vmem %s1, 864
  %s305 = scalar_lea.vmem %s0, 2144
  %v306 = vld [vmem:[%s305] sm:$0xf]
  %v307 = vunpack.c.l.bf16 %v306
  %v308 = vunpack.c.h.bf16 %v306
  %s309 = scalar_lea.vmem %s1, 1888
  %s310 = scalar_lea.vmem %s0, 1120
  %v311 = vld [vmem:[%s310] sm:$0xf]
  %v312 = vunpack.c.l.bf16 %v311
  %v313 = vunpack.c.h.bf16 %v311
  %s314 = scalar_lea.vmem %s1, 2912
  %s315 = scalar_lea.vmem %s0, 96
  %v316 = vld [vmem:[%s315] sm:$0xf]
  %v317 = vunpack.c.l.bf16 %v316
  %v318 = vunpack.c.h.bf16 %v316
  %s319 = scalar_lea.vmem %s1, 3936
  %s320 = scalar_lea.vmem %s0, 3968
  %v321 = vld [vmem:[%s320] sm:$0xf]
  %v322 = vunpack.c.l.bf16 %v321
  %v323 = vunpack.c.h.bf16 %v321
  %s324 = scalar_lea.vmem %s1, 128
  %s325 = scalar_lea.vmem %s0, 2944
  %v326 = vld [vmem:[%s325] sm:$0xf]
  %v327 = vunpack.c.l.bf16 %v326
  %v328 = vunpack.c.h.bf16 %v326
  %s329 = scalar_lea.vmem %s1, 1152
  %s330 = scalar_lea.vmem %s0, 1920
  %v331 = vld [vmem:[%s330] sm:$0xf]
  %v332 = vunpack.c.l.bf16 %v331
  %v333 = vunpack.c.h.bf16 %v331
  %s334 = scalar_lea.vmem %s1, 2176
  %s335 = scalar_lea.vmem %s0, 896
  %v336 = vld [vmem:[%s335] sm:$0xf]
  %v337 = vunpack.c.l.bf16 %v336
  %v338 = vunpack.c.h.bf16 %v336
  %s339 = scalar_lea.vmem %s1, 3200
  %s340 = scalar_lea.vmem %s0, 3712
  %v341 = vld [vmem:[%s340] sm:$0xf]
  %v342 = vunpack.c.l.bf16 %v341
  %v343 = vunpack.c.h.bf16 %v341
  %s344 = scalar_lea.vmem %s1, 384
  %s345 = scalar_lea.vmem %s0, 2688
  %v346 = vld [vmem:[%s345] sm:$0xf]
  %v347 = vunpack.c.l.bf16 %v346
  %v348 = vunpack.c.h.bf16 %v346
  %s349 = scalar_lea.vmem %s1, 1408
  %s350 = scalar_lea.vmem %s0, 1664
  %v351 = vld [vmem:[%s350] sm:$0xf]
  %v352 = vunpack.c.l.bf16 %v351
  %v353 = vunpack.c.h.bf16 %v351
  %s354 = scalar_lea.vmem %s1, 2432
  %s355 = scalar_lea.vmem %s0, 640
  %v356 = vld [vmem:[%s355] sm:$0xf]
  %v357 = vunpack.c.l.bf16 %v356
  %v358 = vunpack.c.h.bf16 %v356
  %s359 = scalar_lea.vmem %s1, 3456
  %s360 = scalar_lea.vmem %s0, 3456
  %v361 = vld [vmem:[%s360] sm:$0xf]
  %v362 = vunpack.c.l.bf16 %v361
  %v363 = vunpack.c.h.bf16 %v361
  %s364 = scalar_lea.vmem %s1, 640
  %s365 = scalar_lea.vmem %s0, 2432
  %v366 = vld [vmem:[%s365] sm:$0xf]
  %v367 = vunpack.c.l.bf16 %v366
  %v368 = vunpack.c.h.bf16 %v366
  %s369 = scalar_lea.vmem %s1, 1664
  %s370 = scalar_lea.vmem %s0, 1408
  %v371 = vld [vmem:[%s370] sm:$0xf]
  %v372 = vunpack.c.l.bf16 %v371
  %v373 = vunpack.c.h.bf16 %v371
  %s374 = scalar_lea.vmem %s1, 2688
  %s375 = scalar_lea.vmem %s0, 384
  %v376 = vld [vmem:[%s375] sm:$0xf]
  %v377 = vunpack.c.l.bf16 %v376
  %v378 = vunpack.c.h.bf16 %v376
  %s379 = scalar_lea.vmem %s1, 3712
  %s380 = scalar_lea.vmem %s0, 3200
  %v381 = vld [vmem:[%s380] sm:$0xf]
  %v382 = vunpack.c.l.bf16 %v381
  %v383 = vunpack.c.h.bf16 %v381
  %s384 = scalar_lea.vmem %s1, 896
  %s385 = scalar_lea.vmem %s0, 2176
  %v386 = vld [vmem:[%s385] sm:$0xf]
  %v387 = vunpack.c.l.bf16 %v386
  %v388 = vunpack.c.h.bf16 %v386
  %s389 = scalar_lea.vmem %s1, 1920
  %s390 = scalar_lea.vmem %s0, 1152
  %v391 = vld [vmem:[%s390] sm:$0xf]
  %v392 = vunpack.c.l.bf16 %v391
  %v393 = vunpack.c.h.bf16 %v391
  %s394 = scalar_lea.vmem %s1, 2944
  %s395 = scalar_lea.vmem %s0, 128
  %v396 = vld [vmem:[%s395] sm:$0xf]
  %v397 = vunpack.c.l.bf16 %v396
  %v398 = vunpack.c.h.bf16 %v396
  %s399 = scalar_lea.vmem %s1, 3968
  %s400 = scalar_lea.vmem %s0, 4000
  %v401 = vld [vmem:[%s400] sm:$0xf]
  %v402 = vunpack.c.l.bf16 %v401
  %v403 = vunpack.c.h.bf16 %v401
  %s404 = scalar_lea.vmem %s1, 160
  %s405 = scalar_lea.vmem %s0, 2976
  %v406 = vld [vmem:[%s405] sm:$0xf]
  %v407 = vunpack.c.l.bf16 %v406
  %v408 = vunpack.c.h.bf16 %v406
  %s409 = scalar_lea.vmem %s1, 1184
  %s410 = scalar_lea.vmem %s0, 1952
  %v411 = vld [vmem:[%s410] sm:$0xf]
  %v412 = vunpack.c.l.bf16 %v411
  %v413 = vunpack.c.h.bf16 %v411
  %s414 = scalar_lea.vmem %s1, 2208
  %s415 = scalar_lea.vmem %s0, 928
  %v416 = vld [vmem:[%s415] sm:$0xf]
  %v417 = vunpack.c.l.bf16 %v416
  %v418 = vunpack.c.h.bf16 %v416
  %s419 = scalar_lea.vmem %s1, 3232
  %s420 = scalar_lea.vmem %s0, 3744
  %v421 = vld [vmem:[%s420] sm:$0xf]
  %v422 = vunpack.c.l.bf16 %v421
  %v423 = vunpack.c.h.bf16 %v421
  %s424 = scalar_lea.vmem %s1, 416
  %s425 = scalar_lea.vmem %s0, 2720
  %v426 = vld [vmem:[%s425] sm:$0xf]
  %v427 = vunpack.c.l.bf16 %v426
  %v428 = vunpack.c.h.bf16 %v426
  %s429 = scalar_lea.vmem %s1, 1440
  %s430 = scalar_lea.vmem %s0, 1696
  %v431 = vld [vmem:[%s430] sm:$0xf]
  %v432 = vunpack.c.l.bf16 %v431
  %v433 = vunpack.c.h.bf16 %v431
  %s434 = scalar_lea.vmem %s1, 2464
  %s435 = scalar_lea.vmem %s0, 672
  %v436 = vld [vmem:[%s435] sm:$0xf]
  %v437 = vunpack.c.l.bf16 %v436
  %v438 = vunpack.c.h.bf16 %v436
  %s439 = scalar_lea.vmem %s1, 3488
  %s440 = scalar_lea.vmem %s0, 3488
  %v441 = vld [vmem:[%s440] sm:$0xf]
  %v442 = vunpack.c.l.bf16 %v441
  %v443 = vunpack.c.h.bf16 %v441
  %s444 = scalar_lea.vmem %s1, 672
  %s445 = scalar_lea.vmem %s0, 2464
  %v446 = vld [vmem:[%s445] sm:$0xf]
  %v447 = vunpack.c.l.bf16 %v446
  %v448 = vunpack.c.h.bf16 %v446
  %s449 = scalar_lea.vmem %s1, 1696
  %s450 = scalar_lea.vmem %s0, 1440
  %v451 = vld [vmem:[%s450] sm:$0xf]
  %v452 = vunpack.c.l.bf16 %v451
  %v453 = vunpack.c.h.bf16 %v451
  %s454 = scalar_lea.vmem %s1, 2720
  %s455 = scalar_lea.vmem %s0, 416
  %v456 = vld [vmem:[%s455] sm:$0xf]
  %v457 = vunpack.c.l.bf16 %v456
  %v458 = vunpack.c.h.bf16 %v456
  %s459 = scalar_lea.vmem %s1, 3744
  %s460 = scalar_lea.vmem %s0, 3232
  %v461 = vld [vmem:[%s460] sm:$0xf]
  %v462 = vunpack.c.l.bf16 %v461
  %v463 = vunpack.c.h.bf16 %v461
  %s464 = scalar_lea.vmem %s1, 928
  %s465 = scalar_lea.vmem %s0, 2208
  %v466 = vld [vmem:[%s465] sm:$0xf]
  %v467 = vunpack.c.l.bf16 %v466
  %v468 = vunpack.c.h.bf16 %v466
  %s469 = scalar_lea.vmem %s1, 1952
  %s470 = scalar_lea.vmem %s0, 1184
  %v471 = vld [vmem:[%s470] sm:$0xf]
  %v472 = vunpack.c.l.bf16 %v471
  %v473 = vunpack.c.h.bf16 %v471
  %s474 = scalar_lea.vmem %s1, 2976
  %s475 = scalar_lea.vmem %s0, 160
  %v476 = vld [vmem:[%s475] sm:$0xf]
  %v477 = vunpack.c.l.bf16 %v476
  %v478 = vunpack.c.h.bf16 %v476
  %s479 = scalar_lea.vmem %s1, 4000
  %s480 = scalar_lea.vmem %s0, 4032
  %v481 = vld [vmem:[%s480] sm:$0xf]
  %v482 = vunpack.c.l.bf16 %v481
  %v483 = vunpack.c.h.bf16 %v481
  %s484 = scalar_lea.vmem %s1, 192
  %s485 = scalar_lea.vmem %s0, 3008
  %v486 = vld [vmem:[%s485] sm:$0xf]
  %v487 = vunpack.c.l.bf16 %v486
  %v488 = vunpack.c.h.bf16 %v486
  %s489 = scalar_lea.vmem %s1, 1216
  %s490 = scalar_lea.vmem %s0, 1984
  %v491 = vld [vmem:[%s490] sm:$0xf]
  %v492 = vunpack.c.l.bf16 %v491
  %v493 = vunpack.c.h.bf16 %v491
  %s494 = scalar_lea.vmem %s1, 2240
  %s495 = scalar_lea.vmem %s0, 960
  %v496 = vld [vmem:[%s495] sm:$0xf]
  %v497 = vunpack.c.l.bf16 %v496
  %v498 = vunpack.c.h.bf16 %v496
  %s499 = scalar_lea.vmem %s1, 3264
  %s500 = scalar_lea.vmem %s0, 3776
  %v501 = vld [vmem:[%s500] sm:$0xf]
  %v502 = vunpack.c.l.bf16 %v501
  %v503 = vunpack.c.h.bf16 %v501
  %s504 = scalar_lea.vmem %s1, 448
  %s505 = scalar_lea.vmem %s0, 2752
  %v506 = vld [vmem:[%s505] sm:$0xf]
  %v507 = vunpack.c.l.bf16 %v506
  %v508 = vunpack.c.h.bf16 %v506
  %s509 = scalar_lea.vmem %s1, 1472
  %s510 = scalar_lea.vmem %s0, 1728
  %v511 = vld [vmem:[%s510] sm:$0xf]
  %v512 = vunpack.c.l.bf16 %v511
  %v513 = vunpack.c.h.bf16 %v511
  %s514 = scalar_lea.vmem %s1, 2496
  %s515 = scalar_lea.vmem %s0, 704
  %v516 = vld [vmem:[%s515] sm:$0xf]
  %v517 = vunpack.c.l.bf16 %v516
  %v518 = vunpack.c.h.bf16 %v516
  %s519 = scalar_lea.vmem %s1, 3520
  %s520 = scalar_lea.vmem %s0, 3520
  %v521 = vld [vmem:[%s520] sm:$0xf]
  %v522 = vunpack.c.l.bf16 %v521
  %v523 = vunpack.c.h.bf16 %v521
  %s524 = scalar_lea.vmem %s1, 704
  %s525 = scalar_lea.vmem %s0, 2496
  %v526 = vld [vmem:[%s525] sm:$0xf]
  %v527 = vunpack.c.l.bf16 %v526
  %v528 = vunpack.c.h.bf16 %v526
  %s529 = scalar_lea.vmem %s1, 1728
  %s530 = scalar_lea.vmem %s0, 1472
  %v531 = vld [vmem:[%s530] sm:$0xf]
  %v532 = vunpack.c.l.bf16 %v531
  %v533 = vunpack.c.h.bf16 %v531
  %s534 = scalar_lea.vmem %s1, 2752
  %s535 = scalar_lea.vmem %s0, 448
  %v536 = vld [vmem:[%s535] sm:$0xf]
  %v537 = vunpack.c.l.bf16 %v536
  %v538 = vunpack.c.h.bf16 %v536
  %s539 = scalar_lea.vmem %s1, 3776
  %s540 = scalar_lea.vmem %s0, 3264
  %v541 = vld [vmem:[%s540] sm:$0xf]
  %v542 = vunpack.c.l.bf16 %v541
  %v543 = vunpack.c.h.bf16 %v541
  %s544 = scalar_lea.vmem %s1, 960
  %s545 = scalar_lea.vmem %s0, 2240
  %v546 = vld [vmem:[%s545] sm:$0xf]
  %v547 = vunpack.c.l.bf16 %v546
  %v548 = vunpack.c.h.bf16 %v546
  %s549 = scalar_lea.vmem %s1, 1984
  %s550 = scalar_lea.vmem %s0, 1216
  %v551 = vld [vmem:[%s550] sm:$0xf]
  %v552 = vunpack.c.l.bf16 %v551
  %v553 = vunpack.c.h.bf16 %v551
  %s554 = scalar_lea.vmem %s1, 3008
  %s555 = scalar_lea.vmem %s0, 192
  %v556 = vld [vmem:[%s555] sm:$0xf]
  %v557 = vunpack.c.l.bf16 %v556
  %v558 = vunpack.c.h.bf16 %v556
  %s559 = scalar_lea.vmem %s1, 4032
  %s560 = scalar_lea.vmem %s0, 4064
  %v561 = vld [vmem:[%s560] sm:$0xf]
  %v562 = vunpack.c.l.bf16 %v561
  %v563 = vunpack.c.h.bf16 %v561
  %s564 = scalar_lea.vmem %s1, 224
  %s565 = scalar_lea.vmem %s0, 3040
  %v566 = vld [vmem:[%s565] sm:$0xf]
  %v567 = vunpack.c.l.bf16 %v566
  %v568 = vunpack.c.h.bf16 %v566
  %s569 = scalar_lea.vmem %s1, 1248
  %s570 = scalar_lea.vmem %s0, 2016
  %v571 = vld [vmem:[%s570] sm:$0xf]
  %v572 = vunpack.c.l.bf16 %v571
  %v573 = vunpack.c.h.bf16 %v571
  %s574 = scalar_lea.vmem %s1, 2272
  %s575 = scalar_lea.vmem %s0, 992
  %v576 = vld [vmem:[%s575] sm:$0xf]
  %v577 = vunpack.c.l.bf16 %v576
  %v578 = vunpack.c.h.bf16 %v576
  %s579 = scalar_lea.vmem %s1, 3296
  %s580 = scalar_lea.vmem %s0, 3808
  %v581 = vld [vmem:[%s580] sm:$0xf]
  %v582 = vunpack.c.l.bf16 %v581
  %v583 = vunpack.c.h.bf16 %v581
  %s584 = scalar_lea.vmem %s1, 480
  %s585 = scalar_lea.vmem %s0, 2784
  %v586 = vld [vmem:[%s585] sm:$0xf]
  %v587 = vunpack.c.l.bf16 %v586
  %v588 = vunpack.c.h.bf16 %v586
  %s589 = scalar_lea.vmem %s1, 1504
  %s590 = scalar_lea.vmem %s0, 1760
  %v591 = vld [vmem:[%s590] sm:$0xf]
  %v592 = vunpack.c.l.bf16 %v591
  %v593 = vunpack.c.h.bf16 %v591
  %s594 = scalar_lea.vmem %s1, 2528
  %s595 = scalar_lea.vmem %s0, 736
  %v596 = vld [vmem:[%s595] sm:$0xf]
  %v597 = vunpack.c.l.bf16 %v596
  %v598 = vunpack.c.h.bf16 %v596
  %s599 = scalar_lea.vmem %s1, 3552
  %s600 = scalar_lea.vmem %s0, 3552
  %v601 = vld [vmem:[%s600] sm:$0xf]
  %v602 = vunpack.c.l.bf16 %v601
  %v603 = vunpack.c.h.bf16 %v601
  %s604 = scalar_lea.vmem %s1, 736
  %s605 = scalar_lea.vmem %s0, 2528
  %v606 = vld [vmem:[%s605] sm:$0xf]
  %v607 = vunpack.c.l.bf16 %v606
  %v608 = vunpack.c.h.bf16 %v606
  %s609 = scalar_lea.vmem %s1, 1760
  %s610 = scalar_lea.vmem %s0, 1504
  %v611 = vld [vmem:[%s610] sm:$0xf]
  %v612 = vunpack.c.l.bf16 %v611
  %v613 = vunpack.c.h.bf16 %v611
  %s614 = scalar_lea.vmem %s1, 2784
  %s615 = scalar_lea.vmem %s0, 480
  %v616 = vld [vmem:[%s615] sm:$0xf]
  %v617 = vunpack.c.l.bf16 %v616
  %v618 = vunpack.c.h.bf16 %v616
  %s619 = scalar_lea.vmem %s1, 3808
  %s620 = scalar_lea.vmem %s0, 3296
  %v621 = vld [vmem:[%s620] sm:$0xf]
  %v622 = vunpack.c.l.bf16 %v621
  %v623 = vunpack.c.h.bf16 %v621
  %s624 = scalar_lea.vmem %s1, 992
  %s625 = scalar_lea.vmem %s0, 2272
  %v626 = vld [vmem:[%s625] sm:$0xf]
  %v627 = vunpack.c.l.bf16 %v626
  %v628 = vunpack.c.h.bf16 %v626
  %s629 = scalar_lea.vmem %s1, 2016
  %s630 = scalar_lea.vmem %s0, 1248
  %v631 = vld [vmem:[%s630] sm:$0xf]
  %v632 = vunpack.c.l.bf16 %v631
  %v633 = vunpack.c.h.bf16 %v631
  %s634 = scalar_lea.vmem %s1, 3040
  %s635 = scalar_lea.vmem %s0, 224
  %v636 = vld [vmem:[%s635] sm:$0xf]
  %v637 = vunpack.c.l.bf16 %v636
  %v638 = vunpack.c.h.bf16 %v636
  %s639 = scalar_lea.vmem %s1, 4064
  %s640 = scalar_lea.vmem %s0, 3844
  %v641 = vld [vmem:[%s640] sm:$0xf]
  %v642 = vunpack.c.l.bf16 %v641
  %v643 = vunpack.c.h.bf16 %v641
  %s644 = scalar_lea.vmem %s1, 4
  %s645 = scalar_lea.vmem %s644, 4294967292
  %v646 = vpack.c.bf16 %v642, %v4
  %647 = vst [vmem:[%s645] sm:$0xff] %v646
  %s648 = scalar_lea.vmem %s0, 2820
  %v649 = vld [vmem:[%s648] sm:$0xf]
  %v650 = vunpack.c.l.bf16 %v649
  %v651 = vunpack.c.h.bf16 %v649
  %s652 = scalar_lea.vmem %s1, 1028
  %s653 = scalar_lea.vmem %s652, 4294967292
  %v654 = vpack.c.bf16 %v650, %v8
  %655 = vst [vmem:[%s653] sm:$0xff] %v654
  %s656 = scalar_lea.vmem %s0, 1796
  %v657 = vld [vmem:[%s656] sm:$0xf]
  %v658 = vunpack.c.l.bf16 %v657
  %v659 = vunpack.c.h.bf16 %v657
  %s660 = scalar_lea.vmem %s1, 2052
  %s661 = scalar_lea.vmem %s660, 4294967292
  %v662 = vpack.c.bf16 %v658, %v13
  %663 = vst [vmem:[%s661] sm:$0xff] %v662
  %s664 = scalar_lea.vmem %s0, 772
  %v665 = vld [vmem:[%s664] sm:$0xf]
  %v666 = vunpack.c.l.bf16 %v665
  %v667 = vunpack.c.h.bf16 %v665
  %s668 = scalar_lea.vmem %s1, 3076
  %s669 = scalar_lea.vmem %s668, 4294967292
  %v670 = vpack.c.bf16 %v666, %v18
  %671 = vst [vmem:[%s669] sm:$0xff] %v670
  %s672 = scalar_lea.vmem %s0, 3588
  %v673 = vld [vmem:[%s672] sm:$0xf]
  %v674 = vunpack.c.l.bf16 %v673
  %v675 = vunpack.c.h.bf16 %v673
  %s676 = scalar_lea.vmem %s1, 260
  %s677 = scalar_lea.vmem %s676, 4294967292
  %v678 = vpack.c.bf16 %v674, %v23
  %679 = vst [vmem:[%s677] sm:$0xff] %v678
  %s680 = scalar_lea.vmem %s0, 2564
  %v681 = vld [vmem:[%s680] sm:$0xf]
  %v682 = vunpack.c.l.bf16 %v681
  %v683 = vunpack.c.h.bf16 %v681
  %s684 = scalar_lea.vmem %s1, 1284
  %s685 = scalar_lea.vmem %s684, 4294967292
  %v686 = vpack.c.bf16 %v682, %v28
  %687 = vst [vmem:[%s685] sm:$0xff] %v686
  %s688 = scalar_lea.vmem %s0, 1540
  %v689 = vld [vmem:[%s688] sm:$0xf]
  %v690 = vunpack.c.l.bf16 %v689
  %v691 = vunpack.c.h.bf16 %v689
  %s692 = scalar_lea.vmem %s1, 2308
  %s693 = scalar_lea.vmem %s692, 4294967292
  %v694 = vpack.c.bf16 %v690, %v33
  %695 = vst [vmem:[%s693] sm:$0xff] %v694
  %s696 = scalar_lea.vmem %s0, 516
  %v697 = vld [vmem:[%s696] sm:$0xf]
  %v698 = vunpack.c.l.bf16 %v697
  %v699 = vunpack.c.h.bf16 %v697
  %s700 = scalar_lea.vmem %s1, 3332
  %s701 = scalar_lea.vmem %s700, 4294967292
  %v702 = vpack.c.bf16 %v698, %v38
  %703 = vst [vmem:[%s701] sm:$0xff] %v702
  %s704 = scalar_lea.vmem %s0, 3332
  %v705 = vld [vmem:[%s704] sm:$0xf]
  %v706 = vunpack.c.l.bf16 %v705
  %v707 = vunpack.c.h.bf16 %v705
  %s708 = scalar_lea.vmem %s1, 516
  %s709 = scalar_lea.vmem %s708, 4294967292
  %v710 = vpack.c.bf16 %v706, %v43
  %711 = vst [vmem:[%s709] sm:$0xff] %v710
  %s712 = scalar_lea.vmem %s0, 2308
  %v713 = vld [vmem:[%s712] sm:$0xf]
  %v714 = vunpack.c.l.bf16 %v713
  %v715 = vunpack.c.h.bf16 %v713
  %s716 = scalar_lea.vmem %s1, 1540
  %s717 = scalar_lea.vmem %s716, 4294967292
  %v718 = vpack.c.bf16 %v714, %v48
  %719 = vst [vmem:[%s717] sm:$0xff] %v718
  %s720 = scalar_lea.vmem %s0, 1284
  %v721 = vld [vmem:[%s720] sm:$0xf]
  %v722 = vunpack.c.l.bf16 %v721
  %v723 = vunpack.c.h.bf16 %v721
  %s724 = scalar_lea.vmem %s1, 2564
  %s725 = scalar_lea.vmem %s724, 4294967292
  %v726 = vpack.c.bf16 %v722, %v53
  %727 = vst [vmem:[%s725] sm:$0xff] %v726
  %s728 = scalar_lea.vmem %s0, 260
  %v729 = vld [vmem:[%s728] sm:$0xf]
  %v730 = vunpack.c.l.bf16 %v729
  %v731 = vunpack.c.h.bf16 %v729
  %s732 = scalar_lea.vmem %s1, 3588
  %s733 = scalar_lea.vmem %s732, 4294967292
  %v734 = vpack.c.bf16 %v730, %v58
  %735 = vst [vmem:[%s733] sm:$0xff] %v734
  %s736 = scalar_lea.vmem %s0, 3076
  %v737 = vld [vmem:[%s736] sm:$0xf]
  %v738 = vunpack.c.l.bf16 %v737
  %v739 = vunpack.c.h.bf16 %v737
  %s740 = scalar_lea.vmem %s1, 772
  %s741 = scalar_lea.vmem %s740, 4294967292
  %v742 = vpack.c.bf16 %v738, %v63
  %743 = vst [vmem:[%s741] sm:$0xff] %v742
  %s744 = scalar_lea.vmem %s0, 2052
  %v745 = vld [vmem:[%s744] sm:$0xf]
  %v746 = vunpack.c.l.bf16 %v745
  %v747 = vunpack.c.h.bf16 %v745
  %s748 = scalar_lea.vmem %s1, 1796
  %s749 = scalar_lea.vmem %s748, 4294967292
  %v750 = vpack.c.bf16 %v746, %v68
  %751 = vst [vmem:[%s749] sm:$0xff] %v750
  %s752 = scalar_lea.vmem %s0, 1028
  %v753 = vld [vmem:[%s752] sm:$0xf]
  %v754 = vunpack.c.l.bf16 %v753
  %v755 = vunpack.c.h.bf16 %v753
  %s756 = scalar_lea.vmem %s1, 2820
  %s757 = scalar_lea.vmem %s756, 4294967292
  %v758 = vpack.c.bf16 %v754, %v73
  %759 = vst [vmem:[%s757] sm:$0xff] %v758
  %s760 = scalar_lea.vmem %s0, 4
  %v761 = vld [vmem:[%s760] sm:$0xf]
  %v762 = vunpack.c.l.bf16 %v761
  %v763 = vunpack.c.h.bf16 %v761
  %s764 = scalar_lea.vmem %s1, 3844
  %s765 = scalar_lea.vmem %s764, 4294967292
  %v766 = vpack.c.bf16 %v762, %v77
  %767 = vst [vmem:[%s765] sm:$0xff] %v766
  %s768 = scalar_lea.vmem %s0, 3876
  %v769 = vld [vmem:[%s768] sm:$0xf]
  %v770 = vunpack.c.l.bf16 %v769
  %v771 = vunpack.c.h.bf16 %v769
  %s772 = scalar_lea.vmem %s1, 36
  %s773 = scalar_lea.vmem %s772, 4294967292
  %v774 = vpack.c.bf16 %v770, %v82
  %775 = vst [vmem:[%s773] sm:$0xff] %v774
  %s776 = scalar_lea.vmem %s0, 2852
  %v777 = vld [vmem:[%s776] sm:$0xf]
  %v778 = vunpack.c.l.bf16 %v777
  %v779 = vunpack.c.h.bf16 %v777
  %s780 = scalar_lea.vmem %s1, 1060
  %s781 = scalar_lea.vmem %s780, 4294967292
  %v782 = vpack.c.bf16 %v778, %v87
  %783 = vst [vmem:[%s781] sm:$0xff] %v782
  %s784 = scalar_lea.vmem %s0, 1828
  %v785 = vld [vmem:[%s784] sm:$0xf]
  %v786 = vunpack.c.l.bf16 %v785
  %v787 = vunpack.c.h.bf16 %v785
  %s788 = scalar_lea.vmem %s1, 2084
  %s789 = scalar_lea.vmem %s788, 4294967292
  %v790 = vpack.c.bf16 %v786, %v92
  %791 = vst [vmem:[%s789] sm:$0xff] %v790
  %s792 = scalar_lea.vmem %s0, 804
  %v793 = vld [vmem:[%s792] sm:$0xf]
  %v794 = vunpack.c.l.bf16 %v793
  %v795 = vunpack.c.h.bf16 %v793
  %s796 = scalar_lea.vmem %s1, 3108
  %s797 = scalar_lea.vmem %s796, 4294967292
  %v798 = vpack.c.bf16 %v794, %v97
  %799 = vst [vmem:[%s797] sm:$0xff] %v798
  %s800 = scalar_lea.vmem %s0, 3620
  %v801 = vld [vmem:[%s800] sm:$0xf]
  %v802 = vunpack.c.l.bf16 %v801
  %v803 = vunpack.c.h.bf16 %v801
  %s804 = scalar_lea.vmem %s1, 292
  %s805 = scalar_lea.vmem %s804, 4294967292
  %v806 = vpack.c.bf16 %v802, %v102
  %807 = vst [vmem:[%s805] sm:$0xff] %v806
  %s808 = scalar_lea.vmem %s0, 2596
  %v809 = vld [vmem:[%s808] sm:$0xf]
  %v810 = vunpack.c.l.bf16 %v809
  %v811 = vunpack.c.h.bf16 %v809
  %s812 = scalar_lea.vmem %s1, 1316
  %s813 = scalar_lea.vmem %s812, 4294967292
  %v814 = vpack.c.bf16 %v810, %v107
  %815 = vst [vmem:[%s813] sm:$0xff] %v814
  %s816 = scalar_lea.vmem %s0, 1572
  %v817 = vld [vmem:[%s816] sm:$0xf]
  %v818 = vunpack.c.l.bf16 %v817
  %v819 = vunpack.c.h.bf16 %v817
  %s820 = scalar_lea.vmem %s1, 2340
  %s821 = scalar_lea.vmem %s820, 4294967292
  %v822 = vpack.c.bf16 %v818, %v112
  %823 = vst [vmem:[%s821] sm:$0xff] %v822
  %s824 = scalar_lea.vmem %s0, 548
  %v825 = vld [vmem:[%s824] sm:$0xf]
  %v826 = vunpack.c.l.bf16 %v825
  %v827 = vunpack.c.h.bf16 %v825
  %s828 = scalar_lea.vmem %s1, 3364
  %s829 = scalar_lea.vmem %s828, 4294967292
  %v830 = vpack.c.bf16 %v826, %v117
  %831 = vst [vmem:[%s829] sm:$0xff] %v830
  %s832 = scalar_lea.vmem %s0, 3364
  %v833 = vld [vmem:[%s832] sm:$0xf]
  %v834 = vunpack.c.l.bf16 %v833
  %v835 = vunpack.c.h.bf16 %v833
  %s836 = scalar_lea.vmem %s1, 548
  %s837 = scalar_lea.vmem %s836, 4294967292
  %v838 = vpack.c.bf16 %v834, %v122
  %839 = vst [vmem:[%s837] sm:$0xff] %v838
  %s840 = scalar_lea.vmem %s0, 2340
  %v841 = vld [vmem:[%s840] sm:$0xf]
  %v842 = vunpack.c.l.bf16 %v841
  %v843 = vunpack.c.h.bf16 %v841
  %s844 = scalar_lea.vmem %s1, 1572
  %s845 = scalar_lea.vmem %s844, 4294967292
  %v846 = vpack.c.bf16 %v842, %v127
  %847 = vst [vmem:[%s845] sm:$0xff] %v846
  %s848 = scalar_lea.vmem %s0, 1316
  %v849 = vld [vmem:[%s848] sm:$0xf]
  %v850 = vunpack.c.l.bf16 %v849
  %v851 = vunpack.c.h.bf16 %v849
  %s852 = scalar_lea.vmem %s1, 2596
  %s853 = scalar_lea.vmem %s852, 4294967292
  %v854 = vpack.c.bf16 %v850, %v132
  %855 = vst [vmem:[%s853] sm:$0xff] %v854
  %s856 = scalar_lea.vmem %s0, 292
  %v857 = vld [vmem:[%s856] sm:$0xf]
  %v858 = vunpack.c.l.bf16 %v857
  %v859 = vunpack.c.h.bf16 %v857
  %s860 = scalar_lea.vmem %s1, 3620
  %s861 = scalar_lea.vmem %s860, 4294967292
  %v862 = vpack.c.bf16 %v858, %v137
  %863 = vst [vmem:[%s861] sm:$0xff] %v862
  %s864 = scalar_lea.vmem %s0, 3108
  %v865 = vld [vmem:[%s864] sm:$0xf]
  %v866 = vunpack.c.l.bf16 %v865
  %v867 = vunpack.c.h.bf16 %v865
  %s868 = scalar_lea.vmem %s1, 804
  %s869 = scalar_lea.vmem %s868, 4294967292
  %v870 = vpack.c.bf16 %v866, %v142
  %871 = vst [vmem:[%s869] sm:$0xff] %v870
  %s872 = scalar_lea.vmem %s0, 2084
  %v873 = vld [vmem:[%s872] sm:$0xf]
  %v874 = vunpack.c.l.bf16 %v873
  %v875 = vunpack.c.h.bf16 %v873
  %s876 = scalar_lea.vmem %s1, 1828
  %s877 = scalar_lea.vmem %s876, 4294967292
  %v878 = vpack.c.bf16 %v874, %v147
  %879 = vst [vmem:[%s877] sm:$0xff] %v878
  %s880 = scalar_lea.vmem %s0, 1060
  %v881 = vld [vmem:[%s880] sm:$0xf]
  %v882 = vunpack.c.l.bf16 %v881
  %v883 = vunpack.c.h.bf16 %v881
  %s884 = scalar_lea.vmem %s1, 2852
  %s885 = scalar_lea.vmem %s884, 4294967292
  %v886 = vpack.c.bf16 %v882, %v152
  %887 = vst [vmem:[%s885] sm:$0xff] %v886
  %s888 = scalar_lea.vmem %s0, 36
  %v889 = vld [vmem:[%s888] sm:$0xf]
  %v890 = vunpack.c.l.bf16 %v889
  %v891 = vunpack.c.h.bf16 %v889
  %s892 = scalar_lea.vmem %s1, 3876
  %s893 = scalar_lea.vmem %s892, 4294967292
  %v894 = vpack.c.bf16 %v890, %v157
  %895 = vst [vmem:[%s893] sm:$0xff] %v894
  %s896 = scalar_lea.vmem %s0, 3908
  %v897 = vld [vmem:[%s896] sm:$0xf]
  %v898 = vunpack.c.l.bf16 %v897
  %v899 = vunpack.c.h.bf16 %v897
  %s900 = scalar_lea.vmem %s1, 68
  %s901 = scalar_lea.vmem %s900, 4294967292
  %v902 = vpack.c.bf16 %v898, %v162
  %903 = vst [vmem:[%s901] sm:$0xff] %v902
  %s904 = scalar_lea.vmem %s0, 2884
  %v905 = vld [vmem:[%s904] sm:$0xf]
  %v906 = vunpack.c.l.bf16 %v905
  %v907 = vunpack.c.h.bf16 %v905
  %s908 = scalar_lea.vmem %s1, 1092
  %s909 = scalar_lea.vmem %s908, 4294967292
  %v910 = vpack.c.bf16 %v906, %v167
  %911 = vst [vmem:[%s909] sm:$0xff] %v910
  %s912 = scalar_lea.vmem %s0, 1860
  %v913 = vld [vmem:[%s912] sm:$0xf]
  %v914 = vunpack.c.l.bf16 %v913
  %v915 = vunpack.c.h.bf16 %v913
  %s916 = scalar_lea.vmem %s1, 2116
  %s917 = scalar_lea.vmem %s916, 4294967292
  %v918 = vpack.c.bf16 %v914, %v172
  %919 = vst [vmem:[%s917] sm:$0xff] %v918
  %s920 = scalar_lea.vmem %s0, 836
  %v921 = vld [vmem:[%s920] sm:$0xf]
  %v922 = vunpack.c.l.bf16 %v921
  %v923 = vunpack.c.h.bf16 %v921
  %s924 = scalar_lea.vmem %s1, 3140
  %s925 = scalar_lea.vmem %s924, 4294967292
  %v926 = vpack.c.bf16 %v922, %v177
  %927 = vst [vmem:[%s925] sm:$0xff] %v926
  %s928 = scalar_lea.vmem %s0, 3652
  %v929 = vld [vmem:[%s928] sm:$0xf]
  %v930 = vunpack.c.l.bf16 %v929
  %v931 = vunpack.c.h.bf16 %v929
  %s932 = scalar_lea.vmem %s1, 324
  %s933 = scalar_lea.vmem %s932, 4294967292
  %v934 = vpack.c.bf16 %v930, %v182
  %935 = vst [vmem:[%s933] sm:$0xff] %v934
  %s936 = scalar_lea.vmem %s0, 2628
  %v937 = vld [vmem:[%s936] sm:$0xf]
  %v938 = vunpack.c.l.bf16 %v937
  %v939 = vunpack.c.h.bf16 %v937
  %s940 = scalar_lea.vmem %s1, 1348
  %s941 = scalar_lea.vmem %s940, 4294967292
  %v942 = vpack.c.bf16 %v938, %v187
  %943 = vst [vmem:[%s941] sm:$0xff] %v942
  %s944 = scalar_lea.vmem %s0, 1604
  %v945 = vld [vmem:[%s944] sm:$0xf]
  %v946 = vunpack.c.l.bf16 %v945
  %v947 = vunpack.c.h.bf16 %v945
  %s948 = scalar_lea.vmem %s1, 2372
  %s949 = scalar_lea.vmem %s948, 4294967292
  %v950 = vpack.c.bf16 %v946, %v192
  %951 = vst [vmem:[%s949] sm:$0xff] %v950
  %s952 = scalar_lea.vmem %s0, 580
  %v953 = vld [vmem:[%s952] sm:$0xf]
  %v954 = vunpack.c.l.bf16 %v953
  %v955 = vunpack.c.h.bf16 %v953
  %s956 = scalar_lea.vmem %s1, 3396
  %s957 = scalar_lea.vmem %s956, 4294967292
  %v958 = vpack.c.bf16 %v954, %v197
  %959 = vst [vmem:[%s957] sm:$0xff] %v958
  %s960 = scalar_lea.vmem %s0, 3396
  %v961 = vld [vmem:[%s960] sm:$0xf]
  %v962 = vunpack.c.l.bf16 %v961
  %v963 = vunpack.c.h.bf16 %v961
  %s964 = scalar_lea.vmem %s1, 580
  %s965 = scalar_lea.vmem %s964, 4294967292
  %v966 = vpack.c.bf16 %v962, %v202
  %967 = vst [vmem:[%s965] sm:$0xff] %v966
  %s968 = scalar_lea.vmem %s0, 2372
  %v969 = vld [vmem:[%s968] sm:$0xf]
  %v970 = vunpack.c.l.bf16 %v969
  %v971 = vunpack.c.h.bf16 %v969
  %s972 = scalar_lea.vmem %s1, 1604
  %s973 = scalar_lea.vmem %s972, 4294967292
  %v974 = vpack.c.bf16 %v970, %v207
  %975 = vst [vmem:[%s973] sm:$0xff] %v974
  %s976 = scalar_lea.vmem %s0, 1348
  %v977 = vld [vmem:[%s976] sm:$0xf]
  %v978 = vunpack.c.l.bf16 %v977
  %v979 = vunpack.c.h.bf16 %v977
  %s980 = scalar_lea.vmem %s1, 2628
  %s981 = scalar_lea.vmem %s980, 4294967292
  %v982 = vpack.c.bf16 %v978, %v212
  %983 = vst [vmem:[%s981] sm:$0xff] %v982
  %s984 = scalar_lea.vmem %s0, 324
  %v985 = vld [vmem:[%s984] sm:$0xf]
  %v986 = vunpack.c.l.bf16 %v985
  %v987 = vunpack.c.h.bf16 %v985
  %s988 = scalar_lea.vmem %s1, 3652
  %s989 = scalar_lea.vmem %s988, 4294967292
  %v990 = vpack.c.bf16 %v986, %v217
  %991 = vst [vmem:[%s989] sm:$0xff] %v990
  %s992 = scalar_lea.vmem %s0, 3140
  %v993 = vld [vmem:[%s992] sm:$0xf]
  %v994 = vunpack.c.l.bf16 %v993
  %v995 = vunpack.c.h.bf16 %v993
  %s996 = scalar_lea.vmem %s1, 836
  %s997 = scalar_lea.vmem %s996, 4294967292
  %v998 = vpack.c.bf16 %v994, %v222
  %999 = vst [vmem:[%s997] sm:$0xff] %v998
  %s1000 = scalar_lea.vmem %s0, 2116
  %v1001 = vld [vmem:[%s1000] sm:$0xf]
  %v1002 = vunpack.c.l.bf16 %v1001
  %v1003 = vunpack.c.h.bf16 %v1001
  %s1004 = scalar_lea.vmem %s1, 1860
  %s1005 = scalar_lea.vmem %s1004, 4294967292
  %v1006 = vpack.c.bf16 %v1002, %v227
  %1007 = vst [vmem:[%s1005] sm:$0xff] %v1006
  %s1008 = scalar_lea.vmem %s0, 1092
  %v1009 = vld [vmem:[%s1008] sm:$0xf]
  %v1010 = vunpack.c.l.bf16 %v1009
  %v1011 = vunpack.c.h.bf16 %v1009
  %s1012 = scalar_lea.vmem %s1, 2884
  %s1013 = scalar_lea.vmem %s1012, 4294967292
  %v1014 = vpack.c.bf16 %v1010, %v232
  %1015 = vst [vmem:[%s1013] sm:$0xff] %v1014
  %s1016 = scalar_lea.vmem %s0, 68
  %v1017 = vld [vmem:[%s1016] sm:$0xf]
  %v1018 = vunpack.c.l.bf16 %v1017
  %v1019 = vunpack.c.h.bf16 %v1017
  %s1020 = scalar_lea.vmem %s1, 3908
  %s1021 = scalar_lea.vmem %s1020, 4294967292
  %v1022 = vpack.c.bf16 %v1018, %v237
  %1023 = vst [vmem:[%s1021] sm:$0xff] %v1022
  %s1024 = scalar_lea.vmem %s0, 3940
  %v1025 = vld [vmem:[%s1024] sm:$0xf]
  %v1026 = vunpack.c.l.bf16 %v1025
  %v1027 = vunpack.c.h.bf16 %v1025
  %s1028 = scalar_lea.vmem %s1, 100
  %s1029 = scalar_lea.vmem %s1028, 4294967292
  %v1030 = vpack.c.bf16 %v1026, %v242
  %1031 = vst [vmem:[%s1029] sm:$0xff] %v1030
  %s1032 = scalar_lea.vmem %s0, 2916
  %v1033 = vld [vmem:[%s1032] sm:$0xf]
  %v1034 = vunpack.c.l.bf16 %v1033
  %v1035 = vunpack.c.h.bf16 %v1033
  %s1036 = scalar_lea.vmem %s1, 1124
  %s1037 = scalar_lea.vmem %s1036, 4294967292
  %v1038 = vpack.c.bf16 %v1034, %v247
  %1039 = vst [vmem:[%s1037] sm:$0xff] %v1038
  %s1040 = scalar_lea.vmem %s0, 1892
  %v1041 = vld [vmem:[%s1040] sm:$0xf]
  %v1042 = vunpack.c.l.bf16 %v1041
  %v1043 = vunpack.c.h.bf16 %v1041
  %s1044 = scalar_lea.vmem %s1, 2148
  %s1045 = scalar_lea.vmem %s1044, 4294967292
  %v1046 = vpack.c.bf16 %v1042, %v252
  %1047 = vst [vmem:[%s1045] sm:$0xff] %v1046
  %s1048 = scalar_lea.vmem %s0, 868
  %v1049 = vld [vmem:[%s1048] sm:$0xf]
  %v1050 = vunpack.c.l.bf16 %v1049
  %v1051 = vunpack.c.h.bf16 %v1049
  %s1052 = scalar_lea.vmem %s1, 3172
  %s1053 = scalar_lea.vmem %s1052, 4294967292
  %v1054 = vpack.c.bf16 %v1050, %v257
  %1055 = vst [vmem:[%s1053] sm:$0xff] %v1054
  %s1056 = scalar_lea.vmem %s0, 3684
  %v1057 = vld [vmem:[%s1056] sm:$0xf]
  %v1058 = vunpack.c.l.bf16 %v1057
  %v1059 = vunpack.c.h.bf16 %v1057
  %s1060 = scalar_lea.vmem %s1, 356
  %s1061 = scalar_lea.vmem %s1060, 4294967292
  %v1062 = vpack.c.bf16 %v1058, %v262
  %1063 = vst [vmem:[%s1061] sm:$0xff] %v1062
  %s1064 = scalar_lea.vmem %s0, 2660
  %v1065 = vld [vmem:[%s1064] sm:$0xf]
  %v1066 = vunpack.c.l.bf16 %v1065
  %v1067 = vunpack.c.h.bf16 %v1065
  %s1068 = scalar_lea.vmem %s1, 1380
  %s1069 = scalar_lea.vmem %s1068, 4294967292
  %v1070 = vpack.c.bf16 %v1066, %v267
  %1071 = vst [vmem:[%s1069] sm:$0xff] %v1070
  %s1072 = scalar_lea.vmem %s0, 1636
  %v1073 = vld [vmem:[%s1072] sm:$0xf]
  %v1074 = vunpack.c.l.bf16 %v1073
  %v1075 = vunpack.c.h.bf16 %v1073
  %s1076 = scalar_lea.vmem %s1, 2404
  %s1077 = scalar_lea.vmem %s1076, 4294967292
  %v1078 = vpack.c.bf16 %v1074, %v272
  %1079 = vst [vmem:[%s1077] sm:$0xff] %v1078
  %s1080 = scalar_lea.vmem %s0, 612
  %v1081 = vld [vmem:[%s1080] sm:$0xf]
  %v1082 = vunpack.c.l.bf16 %v1081
  %v1083 = vunpack.c.h.bf16 %v1081
  %s1084 = scalar_lea.vmem %s1, 3428
  %s1085 = scalar_lea.vmem %s1084, 4294967292
  %v1086 = vpack.c.bf16 %v1082, %v277
  %1087 = vst [vmem:[%s1085] sm:$0xff] %v1086
  %s1088 = scalar_lea.vmem %s0, 3428
  %v1089 = vld [vmem:[%s1088] sm:$0xf]
  %v1090 = vunpack.c.l.bf16 %v1089
  %v1091 = vunpack.c.h.bf16 %v1089
  %s1092 = scalar_lea.vmem %s1, 612
  %s1093 = scalar_lea.vmem %s1092, 4294967292
  %v1094 = vpack.c.bf16 %v1090, %v282
  %1095 = vst [vmem:[%s1093] sm:$0xff] %v1094
  %s1096 = scalar_lea.vmem %s0, 2404
  %v1097 = vld [vmem:[%s1096] sm:$0xf]
  %v1098 = vunpack.c.l.bf16 %v1097
  %v1099 = vunpack.c.h.bf16 %v1097
  %s1100 = scalar_lea.vmem %s1, 1636
  %s1101 = scalar_lea.vmem %s1100, 4294967292
  %v1102 = vpack.c.bf16 %v1098, %v287
  %1103 = vst [vmem:[%s1101] sm:$0xff] %v1102
  %s1104 = scalar_lea.vmem %s0, 1380
  %v1105 = vld [vmem:[%s1104] sm:$0xf]
  %v1106 = vunpack.c.l.bf16 %v1105
  %v1107 = vunpack.c.h.bf16 %v1105
  %s1108 = scalar_lea.vmem %s1, 2660
  %s1109 = scalar_lea.vmem %s1108, 4294967292
  %v1110 = vpack.c.bf16 %v1106, %v292
  %1111 = vst [vmem:[%s1109] sm:$0xff] %v1110
  %s1112 = scalar_lea.vmem %s0, 356
  %v1113 = vld [vmem:[%s1112] sm:$0xf]
  %v1114 = vunpack.c.l.bf16 %v1113
  %v1115 = vunpack.c.h.bf16 %v1113
  %s1116 = scalar_lea.vmem %s1, 3684
  %s1117 = scalar_lea.vmem %s1116, 4294967292
  %v1118 = vpack.c.bf16 %v1114, %v297
  %1119 = vst [vmem:[%s1117] sm:$0xff] %v1118
  %s1120 = scalar_lea.vmem %s0, 3172
  %v1121 = vld [vmem:[%s1120] sm:$0xf]
  %v1122 = vunpack.c.l.bf16 %v1121
  %v1123 = vunpack.c.h.bf16 %v1121
  %s1124 = scalar_lea.vmem %s1, 868
  %s1125 = scalar_lea.vmem %s1124, 4294967292
  %v1126 = vpack.c.bf16 %v1122, %v302
  %1127 = vst [vmem:[%s1125] sm:$0xff] %v1126
  %s1128 = scalar_lea.vmem %s0, 2148
  %v1129 = vld [vmem:[%s1128] sm:$0xf]
  %v1130 = vunpack.c.l.bf16 %v1129
  %v1131 = vunpack.c.h.bf16 %v1129
  %s1132 = scalar_lea.vmem %s1, 1892
  %s1133 = scalar_lea.vmem %s1132, 4294967292
  %v1134 = vpack.c.bf16 %v1130, %v307
  %1135 = vst [vmem:[%s1133] sm:$0xff] %v1134
  %s1136 = scalar_lea.vmem %s0, 1124
  %v1137 = vld [vmem:[%s1136] sm:$0xf]
  %v1138 = vunpack.c.l.bf16 %v1137
  %v1139 = vunpack.c.h.bf16 %v1137
  %s1140 = scalar_lea.vmem %s1, 2916
  %s1141 = scalar_lea.vmem %s1140, 4294967292
  %v1142 = vpack.c.bf16 %v1138, %v312
  %1143 = vst [vmem:[%s1141] sm:$0xff] %v1142
  %s1144 = scalar_lea.vmem %s0, 100
  %v1145 = vld [vmem:[%s1144] sm:$0xf]
  %v1146 = vunpack.c.l.bf16 %v1145
  %v1147 = vunpack.c.h.bf16 %v1145
  %s1148 = scalar_lea.vmem %s1, 3940
  %s1149 = scalar_lea.vmem %s1148, 4294967292
  %v1150 = vpack.c.bf16 %v1146, %v317
  %1151 = vst [vmem:[%s1149] sm:$0xff] %v1150
  %s1152 = scalar_lea.vmem %s0, 3972
  %v1153 = vld [vmem:[%s1152] sm:$0xf]
  %v1154 = vunpack.c.l.bf16 %v1153
  %v1155 = vunpack.c.h.bf16 %v1153
  %s1156 = scalar_lea.vmem %s1, 132
  %s1157 = scalar_lea.vmem %s1156, 4294967292
  %v1158 = vpack.c.bf16 %v1154, %v322
  %1159 = vst [vmem:[%s1157] sm:$0xff] %v1158
  %s1160 = scalar_lea.vmem %s0, 2948
  %v1161 = vld [vmem:[%s1160] sm:$0xf]
  %v1162 = vunpack.c.l.bf16 %v1161
  %v1163 = vunpack.c.h.bf16 %v1161
  %s1164 = scalar_lea.vmem %s1, 1156
  %s1165 = scalar_lea.vmem %s1164, 4294967292
  %v1166 = vpack.c.bf16 %v1162, %v327
  %1167 = vst [vmem:[%s1165] sm:$0xff] %v1166
  %s1168 = scalar_lea.vmem %s0, 1924
  %v1169 = vld [vmem:[%s1168] sm:$0xf]
  %v1170 = vunpack.c.l.bf16 %v1169
  %v1171 = vunpack.c.h.bf16 %v1169
  %s1172 = scalar_lea.vmem %s1, 2180
  %s1173 = scalar_lea.vmem %s1172, 4294967292
  %v1174 = vpack.c.bf16 %v1170, %v332
  %1175 = vst [vmem:[%s1173] sm:$0xff] %v1174
  %s1176 = scalar_lea.vmem %s0, 900
  %v1177 = vld [vmem:[%s1176] sm:$0xf]
  %v1178 = vunpack.c.l.bf16 %v1177
  %v1179 = vunpack.c.h.bf16 %v1177
  %s1180 = scalar_lea.vmem %s1, 3204
  %s1181 = scalar_lea.vmem %s1180, 4294967292
  %v1182 = vpack.c.bf16 %v1178, %v337
  %1183 = vst [vmem:[%s1181] sm:$0xff] %v1182
  %s1184 = scalar_lea.vmem %s0, 3716
  %v1185 = vld [vmem:[%s1184] sm:$0xf]
  %v1186 = vunpack.c.l.bf16 %v1185
  %v1187 = vunpack.c.h.bf16 %v1185
  %s1188 = scalar_lea.vmem %s1, 388
  %s1189 = scalar_lea.vmem %s1188, 4294967292
  %v1190 = vpack.c.bf16 %v1186, %v342
  %1191 = vst [vmem:[%s1189] sm:$0xff] %v1190
  %s1192 = scalar_lea.vmem %s0, 2692
  %v1193 = vld [vmem:[%s1192] sm:$0xf]
  %v1194 = vunpack.c.l.bf16 %v1193
  %v1195 = vunpack.c.h.bf16 %v1193
  %s1196 = scalar_lea.vmem %s1, 1412
  %s1197 = scalar_lea.vmem %s1196, 4294967292
  %v1198 = vpack.c.bf16 %v1194, %v347
  %1199 = vst [vmem:[%s1197] sm:$0xff] %v1198
  %s1200 = scalar_lea.vmem %s0, 1668
  %v1201 = vld [vmem:[%s1200] sm:$0xf]
  %v1202 = vunpack.c.l.bf16 %v1201
  %v1203 = vunpack.c.h.bf16 %v1201
  %s1204 = scalar_lea.vmem %s1, 2436
  %s1205 = scalar_lea.vmem %s1204, 4294967292
  %v1206 = vpack.c.bf16 %v1202, %v352
  %1207 = vst [vmem:[%s1205] sm:$0xff] %v1206
  %s1208 = scalar_lea.vmem %s0, 644
  %v1209 = vld [vmem:[%s1208] sm:$0xf]
  %v1210 = vunpack.c.l.bf16 %v1209
  %v1211 = vunpack.c.h.bf16 %v1209
  %s1212 = scalar_lea.vmem %s1, 3460
  %s1213 = scalar_lea.vmem %s1212, 4294967292
  %v1214 = vpack.c.bf16 %v1210, %v357
  %1215 = vst [vmem:[%s1213] sm:$0xff] %v1214
  %s1216 = scalar_lea.vmem %s0, 3460
  %v1217 = vld [vmem:[%s1216] sm:$0xf]
  %v1218 = vunpack.c.l.bf16 %v1217
  %v1219 = vunpack.c.h.bf16 %v1217
  %s1220 = scalar_lea.vmem %s1, 644
  %s1221 = scalar_lea.vmem %s1220, 4294967292
  %v1222 = vpack.c.bf16 %v1218, %v362
  %1223 = vst [vmem:[%s1221] sm:$0xff] %v1222
  %s1224 = scalar_lea.vmem %s0, 2436
  %v1225 = vld [vmem:[%s1224] sm:$0xf]
  %v1226 = vunpack.c.l.bf16 %v1225
  %v1227 = vunpack.c.h.bf16 %v1225
  %s1228 = scalar_lea.vmem %s1, 1668
  %s1229 = scalar_lea.vmem %s1228, 4294967292
  %v1230 = vpack.c.bf16 %v1226, %v367
  %1231 = vst [vmem:[%s1229] sm:$0xff] %v1230
  %s1232 = scalar_lea.vmem %s0, 1412
  %v1233 = vld [vmem:[%s1232] sm:$0xf]
  %v1234 = vunpack.c.l.bf16 %v1233
  %v1235 = vunpack.c.h.bf16 %v1233
  %s1236 = scalar_lea.vmem %s1, 2692
  %s1237 = scalar_lea.vmem %s1236, 4294967292
  %v1238 = vpack.c.bf16 %v1234, %v372
  %1239 = vst [vmem:[%s1237] sm:$0xff] %v1238
  %s1240 = scalar_lea.vmem %s0, 388
  %v1241 = vld [vmem:[%s1240] sm:$0xf]
  %v1242 = vunpack.c.l.bf16 %v1241
  %v1243 = vunpack.c.h.bf16 %v1241
  %s1244 = scalar_lea.vmem %s1, 3716
  %s1245 = scalar_lea.vmem %s1244, 4294967292
  %v1246 = vpack.c.bf16 %v1242, %v377
  %1247 = vst [vmem:[%s1245] sm:$0xff] %v1246
  %s1248 = scalar_lea.vmem %s0, 3204
  %v1249 = vld [vmem:[%s1248] sm:$0xf]
  %v1250 = vunpack.c.l.bf16 %v1249
  %v1251 = vunpack.c.h.bf16 %v1249
  %s1252 = scalar_lea.vmem %s1, 900
  %s1253 = scalar_lea.vmem %s1252, 4294967292
  %v1254 = vpack.c.bf16 %v1250, %v382
  %1255 = vst [vmem:[%s1253] sm:$0xff] %v1254
  %s1256 = scalar_lea.vmem %s0, 2180
  %v1257 = vld [vmem:[%s1256] sm:$0xf]
  %v1258 = vunpack.c.l.bf16 %v1257
  %v1259 = vunpack.c.h.bf16 %v1257
  %s1260 = scalar_lea.vmem %s1, 1924
  %s1261 = scalar_lea.vmem %s1260, 4294967292
  %v1262 = vpack.c.bf16 %v1258, %v387
  %1263 = vst [vmem:[%s1261] sm:$0xff] %v1262
  %s1264 = scalar_lea.vmem %s0, 1156
  %v1265 = vld [vmem:[%s1264] sm:$0xf]
  %v1266 = vunpack.c.l.bf16 %v1265
  %v1267 = vunpack.c.h.bf16 %v1265
  %s1268 = scalar_lea.vmem %s1, 2948
  %s1269 = scalar_lea.vmem %s1268, 4294967292
  %v1270 = vpack.c.bf16 %v1266, %v392
  %1271 = vst [vmem:[%s1269] sm:$0xff] %v1270
  %s1272 = scalar_lea.vmem %s0, 132
  %v1273 = vld [vmem:[%s1272] sm:$0xf]
  %v1274 = vunpack.c.l.bf16 %v1273
  %v1275 = vunpack.c.h.bf16 %v1273
  %s1276 = scalar_lea.vmem %s1, 3972
  %s1277 = scalar_lea.vmem %s1276, 4294967292
  %v1278 = vpack.c.bf16 %v1274, %v397
  %1279 = vst [vmem:[%s1277] sm:$0xff] %v1278
  %s1280 = scalar_lea.vmem %s0, 4004
  %v1281 = vld [vmem:[%s1280] sm:$0xf]
  %v1282 = vunpack.c.l.bf16 %v1281
  %v1283 = vunpack.c.h.bf16 %v1281
  %s1284 = scalar_lea.vmem %s1, 164
  %s1285 = scalar_lea.vmem %s1284, 4294967292
  %v1286 = vpack.c.bf16 %v1282, %v402
  %1287 = vst [vmem:[%s1285] sm:$0xff] %v1286
  %s1288 = scalar_lea.vmem %s0, 2980
  %v1289 = vld [vmem:[%s1288] sm:$0xf]
  %v1290 = vunpack.c.l.bf16 %v1289
  %v1291 = vunpack.c.h.bf16 %v1289
  %s1292 = scalar_lea.vmem %s1, 1188
  %s1293 = scalar_lea.vmem %s1292, 4294967292
  %v1294 = vpack.c.bf16 %v1290, %v407
  %1295 = vst [vmem:[%s1293] sm:$0xff] %v1294
  %s1296 = scalar_lea.vmem %s0, 1956
  %v1297 = vld [vmem:[%s1296] sm:$0xf]
  %v1298 = vunpack.c.l.bf16 %v1297
  %v1299 = vunpack.c.h.bf16 %v1297
  %s1300 = scalar_lea.vmem %s1, 2212
  %s1301 = scalar_lea.vmem %s1300, 4294967292
  %v1302 = vpack.c.bf16 %v1298, %v412
  %1303 = vst [vmem:[%s1301] sm:$0xff] %v1302
  %s1304 = scalar_lea.vmem %s0, 932
  %v1305 = vld [vmem:[%s1304] sm:$0xf]
  %v1306 = vunpack.c.l.bf16 %v1305
  %v1307 = vunpack.c.h.bf16 %v1305
  %s1308 = scalar_lea.vmem %s1, 3236
  %s1309 = scalar_lea.vmem %s1308, 4294967292
  %v1310 = vpack.c.bf16 %v1306, %v417
  %1311 = vst [vmem:[%s1309] sm:$0xff] %v1310
  %s1312 = scalar_lea.vmem %s0, 3748
  %v1313 = vld [vmem:[%s1312] sm:$0xf]
  %v1314 = vunpack.c.l.bf16 %v1313
  %v1315 = vunpack.c.h.bf16 %v1313
  %s1316 = scalar_lea.vmem %s1, 420
  %s1317 = scalar_lea.vmem %s1316, 4294967292
  %v1318 = vpack.c.bf16 %v1314, %v422
  %1319 = vst [vmem:[%s1317] sm:$0xff] %v1318
  %s1320 = scalar_lea.vmem %s0, 2724
  %v1321 = vld [vmem:[%s1320] sm:$0xf]
  %v1322 = vunpack.c.l.bf16 %v1321
  %v1323 = vunpack.c.h.bf16 %v1321
  %s1324 = scalar_lea.vmem %s1, 1444
  %s1325 = scalar_lea.vmem %s1324, 4294967292
  %v1326 = vpack.c.bf16 %v1322, %v427
  %1327 = vst [vmem:[%s1325] sm:$0xff] %v1326
  %s1328 = scalar_lea.vmem %s0, 1700
  %v1329 = vld [vmem:[%s1328] sm:$0xf]
  %v1330 = vunpack.c.l.bf16 %v1329
  %v1331 = vunpack.c.h.bf16 %v1329
  %s1332 = scalar_lea.vmem %s1, 2468
  %s1333 = scalar_lea.vmem %s1332, 4294967292
  %v1334 = vpack.c.bf16 %v1330, %v432
  %1335 = vst [vmem:[%s1333] sm:$0xff] %v1334
  %s1336 = scalar_lea.vmem %s0, 676
  %v1337 = vld [vmem:[%s1336] sm:$0xf]
  %v1338 = vunpack.c.l.bf16 %v1337
  %v1339 = vunpack.c.h.bf16 %v1337
  %s1340 = scalar_lea.vmem %s1, 3492
  %s1341 = scalar_lea.vmem %s1340, 4294967292
  %v1342 = vpack.c.bf16 %v1338, %v437
  %1343 = vst [vmem:[%s1341] sm:$0xff] %v1342
  %s1344 = scalar_lea.vmem %s0, 3492
  %v1345 = vld [vmem:[%s1344] sm:$0xf]
  %v1346 = vunpack.c.l.bf16 %v1345
  %v1347 = vunpack.c.h.bf16 %v1345
  %s1348 = scalar_lea.vmem %s1, 676
  %s1349 = scalar_lea.vmem %s1348, 4294967292
  %v1350 = vpack.c.bf16 %v1346, %v442
  %1351 = vst [vmem:[%s1349] sm:$0xff] %v1350
  %s1352 = scalar_lea.vmem %s0, 2468
  %v1353 = vld [vmem:[%s1352] sm:$0xf]
  %v1354 = vunpack.c.l.bf16 %v1353
  %v1355 = vunpack.c.h.bf16 %v1353
  %s1356 = scalar_lea.vmem %s1, 1700
  %s1357 = scalar_lea.vmem %s1356, 4294967292
  %v1358 = vpack.c.bf16 %v1354, %v447
  %1359 = vst [vmem:[%s1357] sm:$0xff] %v1358
  %s1360 = scalar_lea.vmem %s0, 1444
  %v1361 = vld [vmem:[%s1360] sm:$0xf]
  %v1362 = vunpack.c.l.bf16 %v1361
  %v1363 = vunpack.c.h.bf16 %v1361
  %s1364 = scalar_lea.vmem %s1, 2724
  %s1365 = scalar_lea.vmem %s1364, 4294967292
  %v1366 = vpack.c.bf16 %v1362, %v452
  %1367 = vst [vmem:[%s1365] sm:$0xff] %v1366
  %s1368 = scalar_lea.vmem %s0, 420
  %v1369 = vld [vmem:[%s1368] sm:$0xf]
  %v1370 = vunpack.c.l.bf16 %v1369
  %v1371 = vunpack.c.h.bf16 %v1369
  %s1372 = scalar_lea.vmem %s1, 3748
  %s1373 = scalar_lea.vmem %s1372, 4294967292
  %v1374 = vpack.c.bf16 %v1370, %v457
  %1375 = vst [vmem:[%s1373] sm:$0xff] %v1374
  %s1376 = scalar_lea.vmem %s0, 3236
  %v1377 = vld [vmem:[%s1376] sm:$0xf]
  %v1378 = vunpack.c.l.bf16 %v1377
  %v1379 = vunpack.c.h.bf16 %v1377
  %s1380 = scalar_lea.vmem %s1, 932
  %s1381 = scalar_lea.vmem %s1380, 4294967292
  %v1382 = vpack.c.bf16 %v1378, %v462
  %1383 = vst [vmem:[%s1381] sm:$0xff] %v1382
  %s1384 = scalar_lea.vmem %s0, 2212
  %v1385 = vld [vmem:[%s1384] sm:$0xf]
  %v1386 = vunpack.c.l.bf16 %v1385
  %v1387 = vunpack.c.h.bf16 %v1385
  %s1388 = scalar_lea.vmem %s1, 1956
  %s1389 = scalar_lea.vmem %s1388, 4294967292
  %v1390 = vpack.c.bf16 %v1386, %v467
  %1391 = vst [vmem:[%s1389] sm:$0xff] %v1390
  %s1392 = scalar_lea.vmem %s0, 1188
  %v1393 = vld [vmem:[%s1392] sm:$0xf]
  %v1394 = vunpack.c.l.bf16 %v1393
  %v1395 = vunpack.c.h.bf16 %v1393
  %s1396 = scalar_lea.vmem %s1, 2980
  %s1397 = scalar_lea.vmem %s1396, 4294967292
  %v1398 = vpack.c.bf16 %v1394, %v472
  %1399 = vst [vmem:[%s1397] sm:$0xff] %v1398
  %s1400 = scalar_lea.vmem %s0, 164
  %v1401 = vld [vmem:[%s1400] sm:$0xf]
  %v1402 = vunpack.c.l.bf16 %v1401
  %v1403 = vunpack.c.h.bf16 %v1401
  %s1404 = scalar_lea.vmem %s1, 4004
  %s1405 = scalar_lea.vmem %s1404, 4294967292
  %v1406 = vpack.c.bf16 %v1402, %v477
  %1407 = vst [vmem:[%s1405] sm:$0xff] %v1406
  %s1408 = scalar_lea.vmem %s0, 4036
  %v1409 = vld [vmem:[%s1408] sm:$0xf]
  %v1410 = vunpack.c.l.bf16 %v1409
  %v1411 = vunpack.c.h.bf16 %v1409
  %s1412 = scalar_lea.vmem %s1, 196
  %s1413 = scalar_lea.vmem %s1412, 4294967292
  %v1414 = vpack.c.bf16 %v1410, %v482
  %1415 = vst [vmem:[%s1413] sm:$0xff] %v1414
  %s1416 = scalar_lea.vmem %s0, 3012
  %v1417 = vld [vmem:[%s1416] sm:$0xf]
  %v1418 = vunpack.c.l.bf16 %v1417
  %v1419 = vunpack.c.h.bf16 %v1417
  %s1420 = scalar_lea.vmem %s1, 1220
  %s1421 = scalar_lea.vmem %s1420, 4294967292
  %v1422 = vpack.c.bf16 %v1418, %v487
  %1423 = vst [vmem:[%s1421] sm:$0xff] %v1422
  %s1424 = scalar_lea.vmem %s0, 1988
  %v1425 = vld [vmem:[%s1424] sm:$0xf]
  %v1426 = vunpack.c.l.bf16 %v1425
  %v1427 = vunpack.c.h.bf16 %v1425
  %s1428 = scalar_lea.vmem %s1, 2244
  %s1429 = scalar_lea.vmem %s1428, 4294967292
  %v1430 = vpack.c.bf16 %v1426, %v492
  %1431 = vst [vmem:[%s1429] sm:$0xff] %v1430
  %s1432 = scalar_lea.vmem %s0, 964
  %v1433 = vld [vmem:[%s1432] sm:$0xf]
  %v1434 = vunpack.c.l.bf16 %v1433
  %v1435 = vunpack.c.h.bf16 %v1433
  %s1436 = scalar_lea.vmem %s1, 3268
  %s1437 = scalar_lea.vmem %s1436, 4294967292
  %v1438 = vpack.c.bf16 %v1434, %v497
  %1439 = vst [vmem:[%s1437] sm:$0xff] %v1438
  %s1440 = scalar_lea.vmem %s0, 3780
  %v1441 = vld [vmem:[%s1440] sm:$0xf]
  %v1442 = vunpack.c.l.bf16 %v1441
  %v1443 = vunpack.c.h.bf16 %v1441
  %s1444 = scalar_lea.vmem %s1, 452
  %s1445 = scalar_lea.vmem %s1444, 4294967292
  %v1446 = vpack.c.bf16 %v1442, %v502
  %1447 = vst [vmem:[%s1445] sm:$0xff] %v1446
  %s1448 = scalar_lea.vmem %s0, 2756
  %v1449 = vld [vmem:[%s1448] sm:$0xf]
  %v1450 = vunpack.c.l.bf16 %v1449
  %v1451 = vunpack.c.h.bf16 %v1449
  %s1452 = scalar_lea.vmem %s1, 1476
  %s1453 = scalar_lea.vmem %s1452, 4294967292
  %v1454 = vpack.c.bf16 %v1450, %v507
  %1455 = vst [vmem:[%s1453] sm:$0xff] %v1454
  %s1456 = scalar_lea.vmem %s0, 1732
  %v1457 = vld [vmem:[%s1456] sm:$0xf]
  %v1458 = vunpack.c.l.bf16 %v1457
  %v1459 = vunpack.c.h.bf16 %v1457
  %s1460 = scalar_lea.vmem %s1, 2500
  %s1461 = scalar_lea.vmem %s1460, 4294967292
  %v1462 = vpack.c.bf16 %v1458, %v512
  %1463 = vst [vmem:[%s1461] sm:$0xff] %v1462
  %s1464 = scalar_lea.vmem %s0, 708
  %v1465 = vld [vmem:[%s1464] sm:$0xf]
  %v1466 = vunpack.c.l.bf16 %v1465
  %v1467 = vunpack.c.h.bf16 %v1465
  %s1468 = scalar_lea.vmem %s1, 3524
  %s1469 = scalar_lea.vmem %s1468, 4294967292
  %v1470 = vpack.c.bf16 %v1466, %v517
  %1471 = vst [vmem:[%s1469] sm:$0xff] %v1470
  %s1472 = scalar_lea.vmem %s0, 3524
  %v1473 = vld [vmem:[%s1472] sm:$0xf]
  %v1474 = vunpack.c.l.bf16 %v1473
  %v1475 = vunpack.c.h.bf16 %v1473
  %s1476 = scalar_lea.vmem %s1, 708
  %s1477 = scalar_lea.vmem %s1476, 4294967292
  %v1478 = vpack.c.bf16 %v1474, %v522
  %1479 = vst [vmem:[%s1477] sm:$0xff] %v1478
  %s1480 = scalar_lea.vmem %s0, 2500
  %v1481 = vld [vmem:[%s1480] sm:$0xf]
  %v1482 = vunpack.c.l.bf16 %v1481
  %v1483 = vunpack.c.h.bf16 %v1481
  %s1484 = scalar_lea.vmem %s1, 1732
  %s1485 = scalar_lea.vmem %s1484, 4294967292
  %v1486 = vpack.c.bf16 %v1482, %v527
  %1487 = vst [vmem:[%s1485] sm:$0xff] %v1486
  %s1488 = scalar_lea.vmem %s0, 1476
  %v1489 = vld [vmem:[%s1488] sm:$0xf]
  %v1490 = vunpack.c.l.bf16 %v1489
  %v1491 = vunpack.c.h.bf16 %v1489
  %s1492 = scalar_lea.vmem %s1, 2756
  %s1493 = scalar_lea.vmem %s1492, 4294967292
  %v1494 = vpack.c.bf16 %v1490, %v532
  %1495 = vst [vmem:[%s1493] sm:$0xff] %v1494
  %s1496 = scalar_lea.vmem %s0, 452
  %v1497 = vld [vmem:[%s1496] sm:$0xf]
  %v1498 = vunpack.c.l.bf16 %v1497
  %v1499 = vunpack.c.h.bf16 %v1497
  %s1500 = scalar_lea.vmem %s1, 3780
  %s1501 = scalar_lea.vmem %s1500, 4294967292
  %v1502 = vpack.c.bf16 %v1498, %v537
  %1503 = vst [vmem:[%s1501] sm:$0xff] %v1502
  %s1504 = scalar_lea.vmem %s0, 3268
  %v1505 = vld [vmem:[%s1504] sm:$0xf]
  %v1506 = vunpack.c.l.bf16 %v1505
  %v1507 = vunpack.c.h.bf16 %v1505
  %s1508 = scalar_lea.vmem %s1, 964
  %s1509 = scalar_lea.vmem %s1508, 4294967292
  %v1510 = vpack.c.bf16 %v1506, %v542
  %1511 = vst [vmem:[%s1509] sm:$0xff] %v1510
  %s1512 = scalar_lea.vmem %s0, 2244
  %v1513 = vld [vmem:[%s1512] sm:$0xf]
  %v1514 = vunpack.c.l.bf16 %v1513
  %v1515 = vunpack.c.h.bf16 %v1513
  %s1516 = scalar_lea.vmem %s1, 1988
  %s1517 = scalar_lea.vmem %s1516, 4294967292
  %v1518 = vpack.c.bf16 %v1514, %v547
  %1519 = vst [vmem:[%s1517] sm:$0xff] %v1518
  %s1520 = scalar_lea.vmem %s0, 1220
  %v1521 = vld [vmem:[%s1520] sm:$0xf]
  %v1522 = vunpack.c.l.bf16 %v1521
  %v1523 = vunpack.c.h.bf16 %v1521
  %s1524 = scalar_lea.vmem %s1, 3012
  %s1525 = scalar_lea.vmem %s1524, 4294967292
  %v1526 = vpack.c.bf16 %v1522, %v552
  %1527 = vst [vmem:[%s1525] sm:$0xff] %v1526
  %s1528 = scalar_lea.vmem %s0, 196
  %v1529 = vld [vmem:[%s1528] sm:$0xf]
  %v1530 = vunpack.c.l.bf16 %v1529
  %v1531 = vunpack.c.h.bf16 %v1529
  %s1532 = scalar_lea.vmem %s1, 4036
  %s1533 = scalar_lea.vmem %s1532, 4294967292
  %v1534 = vpack.c.bf16 %v1530, %v557
  %1535 = vst [vmem:[%s1533] sm:$0xff] %v1534
  %s1536 = scalar_lea.vmem %s0, 4068
  %v1537 = vld [vmem:[%s1536] sm:$0xf]
  %v1538 = vunpack.c.l.bf16 %v1537
  %v1539 = vunpack.c.h.bf16 %v1537
  %s1540 = scalar_lea.vmem %s1, 228
  %s1541 = scalar_lea.vmem %s1540, 4294967292
  %v1542 = vpack.c.bf16 %v1538, %v562
  %1543 = vst [vmem:[%s1541] sm:$0xff] %v1542
  %s1544 = scalar_lea.vmem %s0, 3044
  %v1545 = vld [vmem:[%s1544] sm:$0xf]
  %v1546 = vunpack.c.l.bf16 %v1545
  %v1547 = vunpack.c.h.bf16 %v1545
  %s1548 = scalar_lea.vmem %s1, 1252
  %s1549 = scalar_lea.vmem %s1548, 4294967292
  %v1550 = vpack.c.bf16 %v1546, %v567
  %1551 = vst [vmem:[%s1549] sm:$0xff] %v1550
  %s1552 = scalar_lea.vmem %s0, 2020
  %v1553 = vld [vmem:[%s1552] sm:$0xf]
  %v1554 = vunpack.c.l.bf16 %v1553
  %v1555 = vunpack.c.h.bf16 %v1553
  %s1556 = scalar_lea.vmem %s1, 2276
  %s1557 = scalar_lea.vmem %s1556, 4294967292
  %v1558 = vpack.c.bf16 %v1554, %v572
  %1559 = vst [vmem:[%s1557] sm:$0xff] %v1558
  %s1560 = scalar_lea.vmem %s0, 996
  %v1561 = vld [vmem:[%s1560] sm:$0xf]
  %v1562 = vunpack.c.l.bf16 %v1561
  %v1563 = vunpack.c.h.bf16 %v1561
  %s1564 = scalar_lea.vmem %s1, 3300
  %s1565 = scalar_lea.vmem %s1564, 4294967292
  %v1566 = vpack.c.bf16 %v1562, %v577
  %1567 = vst [vmem:[%s1565] sm:$0xff] %v1566
  %s1568 = scalar_lea.vmem %s0, 3812
  %v1569 = vld [vmem:[%s1568] sm:$0xf]
  %v1570 = vunpack.c.l.bf16 %v1569
  %v1571 = vunpack.c.h.bf16 %v1569
  %s1572 = scalar_lea.vmem %s1, 484
  %s1573 = scalar_lea.vmem %s1572, 4294967292
  %v1574 = vpack.c.bf16 %v1570, %v582
  %1575 = vst [vmem:[%s1573] sm:$0xff] %v1574
  %s1576 = scalar_lea.vmem %s0, 2788
  %v1577 = vld [vmem:[%s1576] sm:$0xf]
  %v1578 = vunpack.c.l.bf16 %v1577
  %v1579 = vunpack.c.h.bf16 %v1577
  %s1580 = scalar_lea.vmem %s1, 1508
  %s1581 = scalar_lea.vmem %s1580, 4294967292
  %v1582 = vpack.c.bf16 %v1578, %v587
  %1583 = vst [vmem:[%s1581] sm:$0xff] %v1582
  %s1584 = scalar_lea.vmem %s0, 1764
  %v1585 = vld [vmem:[%s1584] sm:$0xf]
  %v1586 = vunpack.c.l.bf16 %v1585
  %v1587 = vunpack.c.h.bf16 %v1585
  %s1588 = scalar_lea.vmem %s1, 2532
  %s1589 = scalar_lea.vmem %s1588, 4294967292
  %v1590 = vpack.c.bf16 %v1586, %v592
  %1591 = vst [vmem:[%s1589] sm:$0xff] %v1590
  %s1592 = scalar_lea.vmem %s0, 740
  %v1593 = vld [vmem:[%s1592] sm:$0xf]
  %v1594 = vunpack.c.l.bf16 %v1593
  %v1595 = vunpack.c.h.bf16 %v1593
  %s1596 = scalar_lea.vmem %s1, 3556
  %s1597 = scalar_lea.vmem %s1596, 4294967292
  %v1598 = vpack.c.bf16 %v1594, %v597
  %1599 = vst [vmem:[%s1597] sm:$0xff] %v1598
  %s1600 = scalar_lea.vmem %s0, 3556
  %v1601 = vld [vmem:[%s1600] sm:$0xf]
  %v1602 = vunpack.c.l.bf16 %v1601
  %v1603 = vunpack.c.h.bf16 %v1601
  %s1604 = scalar_lea.vmem %s1, 740
  %s1605 = scalar_lea.vmem %s1604, 4294967292
  %v1606 = vpack.c.bf16 %v1602, %v602
  %1607 = vst [vmem:[%s1605] sm:$0xff] %v1606
  %s1608 = scalar_lea.vmem %s0, 2532
  %v1609 = vld [vmem:[%s1608] sm:$0xf]
  %v1610 = vunpack.c.l.bf16 %v1609
  %v1611 = vunpack.c.h.bf16 %v1609
  %s1612 = scalar_lea.vmem %s1, 1764
  %s1613 = scalar_lea.vmem %s1612, 4294967292
  %v1614 = vpack.c.bf16 %v1610, %v607
  %1615 = vst [vmem:[%s1613] sm:$0xff] %v1614
  %s1616 = scalar_lea.vmem %s0, 1508
  %v1617 = vld [vmem:[%s1616] sm:$0xf]
  %v1618 = vunpack.c.l.bf16 %v1617
  %v1619 = vunpack.c.h.bf16 %v1617
  %s1620 = scalar_lea.vmem %s1, 2788
  %s1621 = scalar_lea.vmem %s1620, 4294967292
  %v1622 = vpack.c.bf16 %v1618, %v612
  %1623 = vst [vmem:[%s1621] sm:$0xff] %v1622
  %s1624 = scalar_lea.vmem %s0, 484
  %v1625 = vld [vmem:[%s1624] sm:$0xf]
  %v1626 = vunpack.c.l.bf16 %v1625
  %v1627 = vunpack.c.h.bf16 %v1625
  %s1628 = scalar_lea.vmem %s1, 3812
  %s1629 = scalar_lea.vmem %s1628, 4294967292
  %v1630 = vpack.c.bf16 %v1626, %v617
  %1631 = vst [vmem:[%s1629] sm:$0xff] %v1630
  %s1632 = scalar_lea.vmem %s0, 3300
  %v1633 = vld [vmem:[%s1632] sm:$0xf]
  %v1634 = vunpack.c.l.bf16 %v1633
  %v1635 = vunpack.c.h.bf16 %v1633
  %s1636 = scalar_lea.vmem %s1, 996
  %s1637 = scalar_lea.vmem %s1636, 4294967292
  %v1638 = vpack.c.bf16 %v1634, %v622
  %1639 = vst [vmem:[%s1637] sm:$0xff] %v1638
  %s1640 = scalar_lea.vmem %s0, 2276
  %v1641 = vld [vmem:[%s1640] sm:$0xf]
  %v1642 = vunpack.c.l.bf16 %v1641
  %v1643 = vunpack.c.h.bf16 %v1641
  %s1644 = scalar_lea.vmem %s1, 2020
  %s1645 = scalar_lea.vmem %s1644, 4294967292
  %v1646 = vpack.c.bf16 %v1642, %v627
  %1647 = vst [vmem:[%s1645] sm:$0xff] %v1646
  %s1648 = scalar_lea.vmem %s0, 1252
  %v1649 = vld [vmem:[%s1648] sm:$0xf]
  %v1650 = vunpack.c.l.bf16 %v1649
  %v1651 = vunpack.c.h.bf16 %v1649
  %s1652 = scalar_lea.vmem %s1, 3044
  %s1653 = scalar_lea.vmem %s1652, 4294967292
  %v1654 = vpack.c.bf16 %v1650, %v632
  %1655 = vst [vmem:[%s1653] sm:$0xff] %v1654
  %s1656 = scalar_lea.vmem %s0, 228
  %v1657 = vld [vmem:[%s1656] sm:$0xf]
  %v1658 = vunpack.c.l.bf16 %v1657
  %v1659 = vunpack.c.h.bf16 %v1657
  %s1660 = scalar_lea.vmem %s1, 4068
  %s1661 = scalar_lea.vmem %s1660, 4294967292
  %v1662 = vpack.c.bf16 %v1658, %v637
  %1663 = vst [vmem:[%s1661] sm:$0xff] %v1662
  %s1664 = scalar_lea.vmem %s0, 3848
  %v1665 = vld [vmem:[%s1664] sm:$0xf]
  %v1666 = vunpack.c.l.bf16 %v1665
  %v1667 = vunpack.c.h.bf16 %v1665
  %s1668 = scalar_lea.vmem %s1, 8
  %s1669 = scalar_lea.vmem %s0, 2824
  %v1670 = vld [vmem:[%s1669] sm:$0xf]
  %v1671 = vunpack.c.l.bf16 %v1670
  %v1672 = vunpack.c.h.bf16 %v1670
  %s1673 = scalar_lea.vmem %s1, 1032
  %s1674 = scalar_lea.vmem %s0, 1800
  %v1675 = vld [vmem:[%s1674] sm:$0xf]
  %v1676 = vunpack.c.l.bf16 %v1675
  %v1677 = vunpack.c.h.bf16 %v1675
  %s1678 = scalar_lea.vmem %s1, 2056
  %s1679 = scalar_lea.vmem %s0, 776
  %v1680 = vld [vmem:[%s1679] sm:$0xf]
  %v1681 = vunpack.c.l.bf16 %v1680
  %v1682 = vunpack.c.h.bf16 %v1680
  %s1683 = scalar_lea.vmem %s1, 3080
  %s1684 = scalar_lea.vmem %s0, 3592
  %v1685 = vld [vmem:[%s1684] sm:$0xf]
  %v1686 = vunpack.c.l.bf16 %v1685
  %v1687 = vunpack.c.h.bf16 %v1685
  %s1688 = scalar_lea.vmem %s1, 264
  %s1689 = scalar_lea.vmem %s0, 2568
  %v1690 = vld [vmem:[%s1689] sm:$0xf]
  %v1691 = vunpack.c.l.bf16 %v1690
  %v1692 = vunpack.c.h.bf16 %v1690
  %s1693 = scalar_lea.vmem %s1, 1288
  %s1694 = scalar_lea.vmem %s0, 1544
  %v1695 = vld [vmem:[%s1694] sm:$0xf]
  %v1696 = vunpack.c.l.bf16 %v1695
  %v1697 = vunpack.c.h.bf16 %v1695
  %s1698 = scalar_lea.vmem %s1, 2312
  %s1699 = scalar_lea.vmem %s0, 520
  %v1700 = vld [vmem:[%s1699] sm:$0xf]
  %v1701 = vunpack.c.l.bf16 %v1700
  %v1702 = vunpack.c.h.bf16 %v1700
  %s1703 = scalar_lea.vmem %s1, 3336
  %s1704 = scalar_lea.vmem %s0, 3336
  %v1705 = vld [vmem:[%s1704] sm:$0xf]
  %v1706 = vunpack.c.l.bf16 %v1705
  %v1707 = vunpack.c.h.bf16 %v1705
  %s1708 = scalar_lea.vmem %s1, 520
  %s1709 = scalar_lea.vmem %s0, 2312
  %v1710 = vld [vmem:[%s1709] sm:$0xf]
  %v1711 = vunpack.c.l.bf16 %v1710
  %v1712 = vunpack.c.h.bf16 %v1710
  %s1713 = scalar_lea.vmem %s1, 1544
  %s1714 = scalar_lea.vmem %s0, 1288
  %v1715 = vld [vmem:[%s1714] sm:$0xf]
  %v1716 = vunpack.c.l.bf16 %v1715
  %v1717 = vunpack.c.h.bf16 %v1715
  %s1718 = scalar_lea.vmem %s1, 2568
  %s1719 = scalar_lea.vmem %s0, 264
  %v1720 = vld [vmem:[%s1719] sm:$0xf]
  %v1721 = vunpack.c.l.bf16 %v1720
  %v1722 = vunpack.c.h.bf16 %v1720
  %s1723 = scalar_lea.vmem %s1, 3592
  %s1724 = scalar_lea.vmem %s0, 3080
  %v1725 = vld [vmem:[%s1724] sm:$0xf]
  %v1726 = vunpack.c.l.bf16 %v1725
  %v1727 = vunpack.c.h.bf16 %v1725
  %s1728 = scalar_lea.vmem %s1, 776
  %s1729 = scalar_lea.vmem %s0, 2056
  %v1730 = vld [vmem:[%s1729] sm:$0xf]
  %v1731 = vunpack.c.l.bf16 %v1730
  %v1732 = vunpack.c.h.bf16 %v1730
  %s1733 = scalar_lea.vmem %s1, 1800
  %s1734 = scalar_lea.vmem %s0, 1032
  %v1735 = vld [vmem:[%s1734] sm:$0xf]
  %v1736 = vunpack.c.l.bf16 %v1735
  %v1737 = vunpack.c.h.bf16 %v1735
  %s1738 = scalar_lea.vmem %s1, 2824
  %s1739 = scalar_lea.vmem %s0, 8
  %v1740 = vld [vmem:[%s1739] sm:$0xf]
  %v1741 = vunpack.c.l.bf16 %v1740
  %v1742 = vunpack.c.h.bf16 %v1740
  %s1743 = scalar_lea.vmem %s1, 3848
  %s1744 = scalar_lea.vmem %s0, 3880
  %v1745 = vld [vmem:[%s1744] sm:$0xf]
  %v1746 = vunpack.c.l.bf16 %v1745
  %v1747 = vunpack.c.h.bf16 %v1745
  %s1748 = scalar_lea.vmem %s1, 40
  %s1749 = scalar_lea.vmem %s0, 2856
  %v1750 = vld [vmem:[%s1749] sm:$0xf]
  %v1751 = vunpack.c.l.bf16 %v1750
  %v1752 = vunpack.c.h.bf16 %v1750
  %s1753 = scalar_lea.vmem %s1, 1064
  %s1754 = scalar_lea.vmem %s0, 1832
  %v1755 = vld [vmem:[%s1754] sm:$0xf]
  %v1756 = vunpack.c.l.bf16 %v1755
  %v1757 = vunpack.c.h.bf16 %v1755
  %s1758 = scalar_lea.vmem %s1, 2088
  %s1759 = scalar_lea.vmem %s0, 808
  %v1760 = vld [vmem:[%s1759] sm:$0xf]
  %v1761 = vunpack.c.l.bf16 %v1760
  %v1762 = vunpack.c.h.bf16 %v1760
  %s1763 = scalar_lea.vmem %s1, 3112
  %s1764 = scalar_lea.vmem %s0, 3624
  %v1765 = vld [vmem:[%s1764] sm:$0xf]
  %v1766 = vunpack.c.l.bf16 %v1765
  %v1767 = vunpack.c.h.bf16 %v1765
  %s1768 = scalar_lea.vmem %s1, 296
  %s1769 = scalar_lea.vmem %s0, 2600
  %v1770 = vld [vmem:[%s1769] sm:$0xf]
  %v1771 = vunpack.c.l.bf16 %v1770
  %v1772 = vunpack.c.h.bf16 %v1770
  %s1773 = scalar_lea.vmem %s1, 1320
  %s1774 = scalar_lea.vmem %s0, 1576
  %v1775 = vld [vmem:[%s1774] sm:$0xf]
  %v1776 = vunpack.c.l.bf16 %v1775
  %v1777 = vunpack.c.h.bf16 %v1775
  %s1778 = scalar_lea.vmem %s1, 2344
  %s1779 = scalar_lea.vmem %s0, 552
  %v1780 = vld [vmem:[%s1779] sm:$0xf]
  %v1781 = vunpack.c.l.bf16 %v1780
  %v1782 = vunpack.c.h.bf16 %v1780
  %s1783 = scalar_lea.vmem %s1, 3368
  %s1784 = scalar_lea.vmem %s0, 3368
  %v1785 = vld [vmem:[%s1784] sm:$0xf]
  %v1786 = vunpack.c.l.bf16 %v1785
  %v1787 = vunpack.c.h.bf16 %v1785
  %s1788 = scalar_lea.vmem %s1, 552
  %s1789 = scalar_lea.vmem %s0, 2344
  %v1790 = vld [vmem:[%s1789] sm:$0xf]
  %v1791 = vunpack.c.l.bf16 %v1790
  %v1792 = vunpack.c.h.bf16 %v1790
  %s1793 = scalar_lea.vmem %s1, 1576
  %s1794 = scalar_lea.vmem %s0, 1320
  %v1795 = vld [vmem:[%s1794] sm:$0xf]
  %v1796 = vunpack.c.l.bf16 %v1795
  %v1797 = vunpack.c.h.bf16 %v1795
  %s1798 = scalar_lea.vmem %s1, 2600
  %s1799 = scalar_lea.vmem %s0, 296
  %v1800 = vld [vmem:[%s1799] sm:$0xf]
  %v1801 = vunpack.c.l.bf16 %v1800
  %v1802 = vunpack.c.h.bf16 %v1800
  %s1803 = scalar_lea.vmem %s1, 3624
  %s1804 = scalar_lea.vmem %s0, 3112
  %v1805 = vld [vmem:[%s1804] sm:$0xf]
  %v1806 = vunpack.c.l.bf16 %v1805
  %v1807 = vunpack.c.h.bf16 %v1805
  %s1808 = scalar_lea.vmem %s1, 808
  %s1809 = scalar_lea.vmem %s0, 2088
  %v1810 = vld [vmem:[%s1809] sm:$0xf]
  %v1811 = vunpack.c.l.bf16 %v1810
  %v1812 = vunpack.c.h.bf16 %v1810
  %s1813 = scalar_lea.vmem %s1, 1832
  %s1814 = scalar_lea.vmem %s0, 1064
  %v1815 = vld [vmem:[%s1814] sm:$0xf]
  %v1816 = vunpack.c.l.bf16 %v1815
  %v1817 = vunpack.c.h.bf16 %v1815
  %s1818 = scalar_lea.vmem %s1, 2856
  %s1819 = scalar_lea.vmem %s0, 40
  %v1820 = vld [vmem:[%s1819] sm:$0xf]
  %v1821 = vunpack.c.l.bf16 %v1820
  %v1822 = vunpack.c.h.bf16 %v1820
  %s1823 = scalar_lea.vmem %s1, 3880
  %s1824 = scalar_lea.vmem %s0, 3912
  %v1825 = vld [vmem:[%s1824] sm:$0xf]
  %v1826 = vunpack.c.l.bf16 %v1825
  %v1827 = vunpack.c.h.bf16 %v1825
  %s1828 = scalar_lea.vmem %s1, 72
  %s1829 = scalar_lea.vmem %s0, 2888
  %v1830 = vld [vmem:[%s1829] sm:$0xf]
  %v1831 = vunpack.c.l.bf16 %v1830
  %v1832 = vunpack.c.h.bf16 %v1830
  %s1833 = scalar_lea.vmem %s1, 1096
  %s1834 = scalar_lea.vmem %s0, 1864
  %v1835 = vld [vmem:[%s1834] sm:$0xf]
  %v1836 = vunpack.c.l.bf16 %v1835
  %v1837 = vunpack.c.h.bf16 %v1835
  %s1838 = scalar_lea.vmem %s1, 2120
  %s1839 = scalar_lea.vmem %s0, 840
  %v1840 = vld [vmem:[%s1839] sm:$0xf]
  %v1841 = vunpack.c.l.bf16 %v1840
  %v1842 = vunpack.c.h.bf16 %v1840
  %s1843 = scalar_lea.vmem %s1, 3144
  %s1844 = scalar_lea.vmem %s0, 3656
  %v1845 = vld [vmem:[%s1844] sm:$0xf]
  %v1846 = vunpack.c.l.bf16 %v1845
  %v1847 = vunpack.c.h.bf16 %v1845
  %s1848 = scalar_lea.vmem %s1, 328
  %s1849 = scalar_lea.vmem %s0, 2632
  %v1850 = vld [vmem:[%s1849] sm:$0xf]
  %v1851 = vunpack.c.l.bf16 %v1850
  %v1852 = vunpack.c.h.bf16 %v1850
  %s1853 = scalar_lea.vmem %s1, 1352
  %s1854 = scalar_lea.vmem %s0, 1608
  %v1855 = vld [vmem:[%s1854] sm:$0xf]
  %v1856 = vunpack.c.l.bf16 %v1855
  %v1857 = vunpack.c.h.bf16 %v1855
  %s1858 = scalar_lea.vmem %s1, 2376
  %s1859 = scalar_lea.vmem %s0, 584
  %v1860 = vld [vmem:[%s1859] sm:$0xf]
  %v1861 = vunpack.c.l.bf16 %v1860
  %v1862 = vunpack.c.h.bf16 %v1860
  %s1863 = scalar_lea.vmem %s1, 3400
  %s1864 = scalar_lea.vmem %s0, 3400
  %v1865 = vld [vmem:[%s1864] sm:$0xf]
  %v1866 = vunpack.c.l.bf16 %v1865
  %v1867 = vunpack.c.h.bf16 %v1865
  %s1868 = scalar_lea.vmem %s1, 584
  %s1869 = scalar_lea.vmem %s0, 2376
  %v1870 = vld [vmem:[%s1869] sm:$0xf]
  %v1871 = vunpack.c.l.bf16 %v1870
  %v1872 = vunpack.c.h.bf16 %v1870
  %s1873 = scalar_lea.vmem %s1, 1608
  %s1874 = scalar_lea.vmem %s0, 1352
  %v1875 = vld [vmem:[%s1874] sm:$0xf]
  %v1876 = vunpack.c.l.bf16 %v1875
  %v1877 = vunpack.c.h.bf16 %v1875
  %s1878 = scalar_lea.vmem %s1, 2632
  %s1879 = scalar_lea.vmem %s0, 328
  %v1880 = vld [vmem:[%s1879] sm:$0xf]
  %v1881 = vunpack.c.l.bf16 %v1880
  %v1882 = vunpack.c.h.bf16 %v1880
  %s1883 = scalar_lea.vmem %s1, 3656
  %s1884 = scalar_lea.vmem %s0, 3144
  %v1885 = vld [vmem:[%s1884] sm:$0xf]
  %v1886 = vunpack.c.l.bf16 %v1885
  %v1887 = vunpack.c.h.bf16 %v1885
  %s1888 = scalar_lea.vmem %s1, 840
  %s1889 = scalar_lea.vmem %s0, 2120
  %v1890 = vld [vmem:[%s1889] sm:$0xf]
  %v1891 = vunpack.c.l.bf16 %v1890
  %v1892 = vunpack.c.h.bf16 %v1890
  %s1893 = scalar_lea.vmem %s1, 1864
  %s1894 = scalar_lea.vmem %s0, 1096
  %v1895 = vld [vmem:[%s1894] sm:$0xf]
  %v1896 = vunpack.c.l.bf16 %v1895
  %v1897 = vunpack.c.h.bf16 %v1895
  %s1898 = scalar_lea.vmem %s1, 2888
  %s1899 = scalar_lea.vmem %s0, 72
  %v1900 = vld [vmem:[%s1899] sm:$0xf]
  %v1901 = vunpack.c.l.bf16 %v1900
  %v1902 = vunpack.c.h.bf16 %v1900
  %s1903 = scalar_lea.vmem %s1, 3912
  %s1904 = scalar_lea.vmem %s0, 3944
  %v1905 = vld [vmem:[%s1904] sm:$0xf]
  %v1906 = vunpack.c.l.bf16 %v1905
  %v1907 = vunpack.c.h.bf16 %v1905
  %s1908 = scalar_lea.vmem %s1, 104
  %s1909 = scalar_lea.vmem %s0, 2920
  %v1910 = vld [vmem:[%s1909] sm:$0xf]
  %v1911 = vunpack.c.l.bf16 %v1910
  %v1912 = vunpack.c.h.bf16 %v1910
  %s1913 = scalar_lea.vmem %s1, 1128
  %s1914 = scalar_lea.vmem %s0, 1896
  %v1915 = vld [vmem:[%s1914] sm:$0xf]
  %v1916 = vunpack.c.l.bf16 %v1915
  %v1917 = vunpack.c.h.bf16 %v1915
  %s1918 = scalar_lea.vmem %s1, 2152
  %s1919 = scalar_lea.vmem %s0, 872
  %v1920 = vld [vmem:[%s1919] sm:$0xf]
  %v1921 = vunpack.c.l.bf16 %v1920
  %v1922 = vunpack.c.h.bf16 %v1920
  %s1923 = scalar_lea.vmem %s1, 3176
  %s1924 = scalar_lea.vmem %s0, 3688
  %v1925 = vld [vmem:[%s1924] sm:$0xf]
  %v1926 = vunpack.c.l.bf16 %v1925
  %v1927 = vunpack.c.h.bf16 %v1925
  %s1928 = scalar_lea.vmem %s1, 360
  %s1929 = scalar_lea.vmem %s0, 2664
  %v1930 = vld [vmem:[%s1929] sm:$0xf]
  %v1931 = vunpack.c.l.bf16 %v1930
  %v1932 = vunpack.c.h.bf16 %v1930
  %s1933 = scalar_lea.vmem %s1, 1384
  %s1934 = scalar_lea.vmem %s0, 1640
  %v1935 = vld [vmem:[%s1934] sm:$0xf]
  %v1936 = vunpack.c.l.bf16 %v1935
  %v1937 = vunpack.c.h.bf16 %v1935
  %s1938 = scalar_lea.vmem %s1, 2408
  %s1939 = scalar_lea.vmem %s0, 616
  %v1940 = vld [vmem:[%s1939] sm:$0xf]
  %v1941 = vunpack.c.l.bf16 %v1940
  %v1942 = vunpack.c.h.bf16 %v1940
  %s1943 = scalar_lea.vmem %s1, 3432
  %s1944 = scalar_lea.vmem %s0, 3432
  %v1945 = vld [vmem:[%s1944] sm:$0xf]
  %v1946 = vunpack.c.l.bf16 %v1945
  %v1947 = vunpack.c.h.bf16 %v1945
  %s1948 = scalar_lea.vmem %s1, 616
  %s1949 = scalar_lea.vmem %s0, 2408
  %v1950 = vld [vmem:[%s1949] sm:$0xf]
  %v1951 = vunpack.c.l.bf16 %v1950
  %v1952 = vunpack.c.h.bf16 %v1950
  %s1953 = scalar_lea.vmem %s1, 1640
  %s1954 = scalar_lea.vmem %s0, 1384
  %v1955 = vld [vmem:[%s1954] sm:$0xf]
  %v1956 = vunpack.c.l.bf16 %v1955
  %v1957 = vunpack.c.h.bf16 %v1955
  %s1958 = scalar_lea.vmem %s1, 2664
  %s1959 = scalar_lea.vmem %s0, 360
  %v1960 = vld [vmem:[%s1959] sm:$0xf]
  %v1961 = vunpack.c.l.bf16 %v1960
  %v1962 = vunpack.c.h.bf16 %v1960
  %s1963 = scalar_lea.vmem %s1, 3688
  %s1964 = scalar_lea.vmem %s0, 3176
  %v1965 = vld [vmem:[%s1964] sm:$0xf]
  %v1966 = vunpack.c.l.bf16 %v1965
  %v1967 = vunpack.c.h.bf16 %v1965
  %s1968 = scalar_lea.vmem %s1, 872
  %s1969 = scalar_lea.vmem %s0, 2152
  %v1970 = vld [vmem:[%s1969] sm:$0xf]
  %v1971 = vunpack.c.l.bf16 %v1970
  %v1972 = vunpack.c.h.bf16 %v1970
  %s1973 = scalar_lea.vmem %s1, 1896
  %s1974 = scalar_lea.vmem %s0, 1128
  %v1975 = vld [vmem:[%s1974] sm:$0xf]
  %v1976 = vunpack.c.l.bf16 %v1975
  %v1977 = vunpack.c.h.bf16 %v1975
  %s1978 = scalar_lea.vmem %s1, 2920
  %s1979 = scalar_lea.vmem %s0, 104
  %v1980 = vld [vmem:[%s1979] sm:$0xf]
  %v1981 = vunpack.c.l.bf16 %v1980
  %v1982 = vunpack.c.h.bf16 %v1980
  %s1983 = scalar_lea.vmem %s1, 3944
  %s1984 = scalar_lea.vmem %s0, 3976
  %v1985 = vld [vmem:[%s1984] sm:$0xf]
  %v1986 = vunpack.c.l.bf16 %v1985
  %v1987 = vunpack.c.h.bf16 %v1985
  %s1988 = scalar_lea.vmem %s1, 136
  %s1989 = scalar_lea.vmem %s0, 2952
  %v1990 = vld [vmem:[%s1989] sm:$0xf]
  %v1991 = vunpack.c.l.bf16 %v1990
  %v1992 = vunpack.c.h.bf16 %v1990
  %s1993 = scalar_lea.vmem %s1, 1160
  %s1994 = scalar_lea.vmem %s0, 1928
  %v1995 = vld [vmem:[%s1994] sm:$0xf]
  %v1996 = vunpack.c.l.bf16 %v1995
  %v1997 = vunpack.c.h.bf16 %v1995
  %s1998 = scalar_lea.vmem %s1, 2184
  %s1999 = scalar_lea.vmem %s0, 904
  %v2000 = vld [vmem:[%s1999] sm:$0xf]
  %v2001 = vunpack.c.l.bf16 %v2000
  %v2002 = vunpack.c.h.bf16 %v2000
  %s2003 = scalar_lea.vmem %s1, 3208
  %s2004 = scalar_lea.vmem %s0, 3720
  %v2005 = vld [vmem:[%s2004] sm:$0xf]
  %v2006 = vunpack.c.l.bf16 %v2005
  %v2007 = vunpack.c.h.bf16 %v2005
  %s2008 = scalar_lea.vmem %s1, 392
  %s2009 = scalar_lea.vmem %s0, 2696
  %v2010 = vld [vmem:[%s2009] sm:$0xf]
  %v2011 = vunpack.c.l.bf16 %v2010
  %v2012 = vunpack.c.h.bf16 %v2010
  %s2013 = scalar_lea.vmem %s1, 1416
  %s2014 = scalar_lea.vmem %s0, 1672
  %v2015 = vld [vmem:[%s2014] sm:$0xf]
  %v2016 = vunpack.c.l.bf16 %v2015
  %v2017 = vunpack.c.h.bf16 %v2015
  %s2018 = scalar_lea.vmem %s1, 2440
  %s2019 = scalar_lea.vmem %s0, 648
  %v2020 = vld [vmem:[%s2019] sm:$0xf]
  %v2021 = vunpack.c.l.bf16 %v2020
  %v2022 = vunpack.c.h.bf16 %v2020
  %s2023 = scalar_lea.vmem %s1, 3464
  %s2024 = scalar_lea.vmem %s0, 3464
  %v2025 = vld [vmem:[%s2024] sm:$0xf]
  %v2026 = vunpack.c.l.bf16 %v2025
  %v2027 = vunpack.c.h.bf16 %v2025
  %s2028 = scalar_lea.vmem %s1, 648
  %s2029 = scalar_lea.vmem %s0, 2440
  %v2030 = vld [vmem:[%s2029] sm:$0xf]
  %v2031 = vunpack.c.l.bf16 %v2030
  %v2032 = vunpack.c.h.bf16 %v2030
  %s2033 = scalar_lea.vmem %s1, 1672
  %s2034 = scalar_lea.vmem %s0, 1416
  %v2035 = vld [vmem:[%s2034] sm:$0xf]
  %v2036 = vunpack.c.l.bf16 %v2035
  %v2037 = vunpack.c.h.bf16 %v2035
  %s2038 = scalar_lea.vmem %s1, 2696
  %s2039 = scalar_lea.vmem %s0, 392
  %v2040 = vld [vmem:[%s2039] sm:$0xf]
  %v2041 = vunpack.c.l.bf16 %v2040
  %v2042 = vunpack.c.h.bf16 %v2040
  %s2043 = scalar_lea.vmem %s1, 3720
  %s2044 = scalar_lea.vmem %s0, 3208
  %v2045 = vld [vmem:[%s2044] sm:$0xf]
  %v2046 = vunpack.c.l.bf16 %v2045
  %v2047 = vunpack.c.h.bf16 %v2045
  %s2048 = scalar_lea.vmem %s1, 904
  %s2049 = scalar_lea.vmem %s0, 2184
  %v2050 = vld [vmem:[%s2049] sm:$0xf]
  %v2051 = vunpack.c.l.bf16 %v2050
  %v2052 = vunpack.c.h.bf16 %v2050
  %s2053 = scalar_lea.vmem %s1, 1928
  %s2054 = scalar_lea.vmem %s0, 1160
  %v2055 = vld [vmem:[%s2054] sm:$0xf]
  %v2056 = vunpack.c.l.bf16 %v2055
  %v2057 = vunpack.c.h.bf16 %v2055
  %s2058 = scalar_lea.vmem %s1, 2952
  %s2059 = scalar_lea.vmem %s0, 136
  %v2060 = vld [vmem:[%s2059] sm:$0xf]
  %v2061 = vunpack.c.l.bf16 %v2060
  %v2062 = vunpack.c.h.bf16 %v2060
  %s2063 = scalar_lea.vmem %s1, 3976
  %s2064 = scalar_lea.vmem %s0, 4008
  %v2065 = vld [vmem:[%s2064] sm:$0xf]
  %v2066 = vunpack.c.l.bf16 %v2065
  %v2067 = vunpack.c.h.bf16 %v2065
  %s2068 = scalar_lea.vmem %s1, 168
  %s2069 = scalar_lea.vmem %s0, 2984
  %v2070 = vld [vmem:[%s2069] sm:$0xf]
  %v2071 = vunpack.c.l.bf16 %v2070
  %v2072 = vunpack.c.h.bf16 %v2070
  %s2073 = scalar_lea.vmem %s1, 1192
  %s2074 = scalar_lea.vmem %s0, 1960
  %v2075 = vld [vmem:[%s2074] sm:$0xf]
  %v2076 = vunpack.c.l.bf16 %v2075
  %v2077 = vunpack.c.h.bf16 %v2075
  %s2078 = scalar_lea.vmem %s1, 2216
  %s2079 = scalar_lea.vmem %s0, 936
  %v2080 = vld [vmem:[%s2079] sm:$0xf]
  %v2081 = vunpack.c.l.bf16 %v2080
  %v2082 = vunpack.c.h.bf16 %v2080
  %s2083 = scalar_lea.vmem %s1, 3240
  %s2084 = scalar_lea.vmem %s0, 3752
  %v2085 = vld [vmem:[%s2084] sm:$0xf]
  %v2086 = vunpack.c.l.bf16 %v2085
  %v2087 = vunpack.c.h.bf16 %v2085
  %s2088 = scalar_lea.vmem %s1, 424
  %s2089 = scalar_lea.vmem %s0, 2728
  %v2090 = vld [vmem:[%s2089] sm:$0xf]
  %v2091 = vunpack.c.l.bf16 %v2090
  %v2092 = vunpack.c.h.bf16 %v2090
  %s2093 = scalar_lea.vmem %s1, 1448
  %s2094 = scalar_lea.vmem %s0, 1704
  %v2095 = vld [vmem:[%s2094] sm:$0xf]
  %v2096 = vunpack.c.l.bf16 %v2095
  %v2097 = vunpack.c.h.bf16 %v2095
  %s2098 = scalar_lea.vmem %s1, 2472
  %s2099 = scalar_lea.vmem %s0, 680
  %v2100 = vld [vmem:[%s2099] sm:$0xf]
  %v2101 = vunpack.c.l.bf16 %v2100
  %v2102 = vunpack.c.h.bf16 %v2100
  %s2103 = scalar_lea.vmem %s1, 3496
  %s2104 = scalar_lea.vmem %s0, 3496
  %v2105 = vld [vmem:[%s2104] sm:$0xf]
  %v2106 = vunpack.c.l.bf16 %v2105
  %v2107 = vunpack.c.h.bf16 %v2105
  %s2108 = scalar_lea.vmem %s1, 680
  %s2109 = scalar_lea.vmem %s0, 2472
  %v2110 = vld [vmem:[%s2109] sm:$0xf]
  %v2111 = vunpack.c.l.bf16 %v2110
  %v2112 = vunpack.c.h.bf16 %v2110
  %s2113 = scalar_lea.vmem %s1, 1704
  %s2114 = scalar_lea.vmem %s0, 1448
  %v2115 = vld [vmem:[%s2114] sm:$0xf]
  %v2116 = vunpack.c.l.bf16 %v2115
  %v2117 = vunpack.c.h.bf16 %v2115
  %s2118 = scalar_lea.vmem %s1, 2728
  %s2119 = scalar_lea.vmem %s0, 424
  %v2120 = vld [vmem:[%s2119] sm:$0xf]
  %v2121 = vunpack.c.l.bf16 %v2120
  %v2122 = vunpack.c.h.bf16 %v2120
  %s2123 = scalar_lea.vmem %s1, 3752
  %s2124 = scalar_lea.vmem %s0, 3240
  %v2125 = vld [vmem:[%s2124] sm:$0xf]
  %v2126 = vunpack.c.l.bf16 %v2125
  %v2127 = vunpack.c.h.bf16 %v2125
  %s2128 = scalar_lea.vmem %s1, 936
  %s2129 = scalar_lea.vmem %s0, 2216
  %v2130 = vld [vmem:[%s2129] sm:$0xf]
  %v2131 = vunpack.c.l.bf16 %v2130
  %v2132 = vunpack.c.h.bf16 %v2130
  %s2133 = scalar_lea.vmem %s1, 1960
  %s2134 = scalar_lea.vmem %s0, 1192
  %v2135 = vld [vmem:[%s2134] sm:$0xf]
  %v2136 = vunpack.c.l.bf16 %v2135
  %v2137 = vunpack.c.h.bf16 %v2135
  %s2138 = scalar_lea.vmem %s1, 2984
  %s2139 = scalar_lea.vmem %s0, 168
  %v2140 = vld [vmem:[%s2139] sm:$0xf]
  %v2141 = vunpack.c.l.bf16 %v2140
  %v2142 = vunpack.c.h.bf16 %v2140
  %s2143 = scalar_lea.vmem %s1, 4008
  %s2144 = scalar_lea.vmem %s0, 4040
  %v2145 = vld [vmem:[%s2144] sm:$0xf]
  %v2146 = vunpack.c.l.bf16 %v2145
  %v2147 = vunpack.c.h.bf16 %v2145
  %s2148 = scalar_lea.vmem %s1, 200
  %s2149 = scalar_lea.vmem %s0, 3016
  %v2150 = vld [vmem:[%s2149] sm:$0xf]
  %v2151 = vunpack.c.l.bf16 %v2150
  %v2152 = vunpack.c.h.bf16 %v2150
  %s2153 = scalar_lea.vmem %s1, 1224
  %s2154 = scalar_lea.vmem %s0, 1992
  %v2155 = vld [vmem:[%s2154] sm:$0xf]
  %v2156 = vunpack.c.l.bf16 %v2155
  %v2157 = vunpack.c.h.bf16 %v2155
  %s2158 = scalar_lea.vmem %s1, 2248
  %s2159 = scalar_lea.vmem %s0, 968
  %v2160 = vld [vmem:[%s2159] sm:$0xf]
  %v2161 = vunpack.c.l.bf16 %v2160
  %v2162 = vunpack.c.h.bf16 %v2160
  %s2163 = scalar_lea.vmem %s1, 3272
  %s2164 = scalar_lea.vmem %s0, 3784
  %v2165 = vld [vmem:[%s2164] sm:$0xf]
  %v2166 = vunpack.c.l.bf16 %v2165
  %v2167 = vunpack.c.h.bf16 %v2165
  %s2168 = scalar_lea.vmem %s1, 456
  %s2169 = scalar_lea.vmem %s0, 2760
  %v2170 = vld [vmem:[%s2169] sm:$0xf]
  %v2171 = vunpack.c.l.bf16 %v2170
  %v2172 = vunpack.c.h.bf16 %v2170
  %s2173 = scalar_lea.vmem %s1, 1480
  %s2174 = scalar_lea.vmem %s0, 1736
  %v2175 = vld [vmem:[%s2174] sm:$0xf]
  %v2176 = vunpack.c.l.bf16 %v2175
  %v2177 = vunpack.c.h.bf16 %v2175
  %s2178 = scalar_lea.vmem %s1, 2504
  %s2179 = scalar_lea.vmem %s0, 712
  %v2180 = vld [vmem:[%s2179] sm:$0xf]
  %v2181 = vunpack.c.l.bf16 %v2180
  %v2182 = vunpack.c.h.bf16 %v2180
  %s2183 = scalar_lea.vmem %s1, 3528
  %s2184 = scalar_lea.vmem %s0, 3528
  %v2185 = vld [vmem:[%s2184] sm:$0xf]
  %v2186 = vunpack.c.l.bf16 %v2185
  %v2187 = vunpack.c.h.bf16 %v2185
  %s2188 = scalar_lea.vmem %s1, 712
  %s2189 = scalar_lea.vmem %s0, 2504
  %v2190 = vld [vmem:[%s2189] sm:$0xf]
  %v2191 = vunpack.c.l.bf16 %v2190
  %v2192 = vunpack.c.h.bf16 %v2190
  %s2193 = scalar_lea.vmem %s1, 1736
  %s2194 = scalar_lea.vmem %s0, 1480
  %v2195 = vld [vmem:[%s2194] sm:$0xf]
  %v2196 = vunpack.c.l.bf16 %v2195
  %v2197 = vunpack.c.h.bf16 %v2195
  %s2198 = scalar_lea.vmem %s1, 2760
  %s2199 = scalar_lea.vmem %s0, 456
  %v2200 = vld [vmem:[%s2199] sm:$0xf]
  %v2201 = vunpack.c.l.bf16 %v2200
  %v2202 = vunpack.c.h.bf16 %v2200
  %s2203 = scalar_lea.vmem %s1, 3784
  %s2204 = scalar_lea.vmem %s0, 3272
  %v2205 = vld [vmem:[%s2204] sm:$0xf]
  %v2206 = vunpack.c.l.bf16 %v2205
  %v2207 = vunpack.c.h.bf16 %v2205
  %s2208 = scalar_lea.vmem %s1, 968
  %s2209 = scalar_lea.vmem %s0, 2248
  %v2210 = vld [vmem:[%s2209] sm:$0xf]
  %v2211 = vunpack.c.l.bf16 %v2210
  %v2212 = vunpack.c.h.bf16 %v2210
  %s2213 = scalar_lea.vmem %s1, 1992
  %s2214 = scalar_lea.vmem %s0, 1224
  %v2215 = vld [vmem:[%s2214] sm:$0xf]
  %v2216 = vunpack.c.l.bf16 %v2215
  %v2217 = vunpack.c.h.bf16 %v2215
  %s2218 = scalar_lea.vmem %s1, 3016
  %s2219 = scalar_lea.vmem %s0, 200
  %v2220 = vld [vmem:[%s2219] sm:$0xf]
  %v2221 = vunpack.c.l.bf16 %v2220
  %v2222 = vunpack.c.h.bf16 %v2220
  %s2223 = scalar_lea.vmem %s1, 4040
  %s2224 = scalar_lea.vmem %s0, 4072
  %v2225 = vld [vmem:[%s2224] sm:$0xf]
  %v2226 = vunpack.c.l.bf16 %v2225
  %v2227 = vunpack.c.h.bf16 %v2225
  %s2228 = scalar_lea.vmem %s1, 232
  %s2229 = scalar_lea.vmem %s0, 3048
  %v2230 = vld [vmem:[%s2229] sm:$0xf]
  %v2231 = vunpack.c.l.bf16 %v2230
  %v2232 = vunpack.c.h.bf16 %v2230
  %s2233 = scalar_lea.vmem %s1, 1256
  %s2234 = scalar_lea.vmem %s0, 2024
  %v2235 = vld [vmem:[%s2234] sm:$0xf]
  %v2236 = vunpack.c.l.bf16 %v2235
  %v2237 = vunpack.c.h.bf16 %v2235
  %s2238 = scalar_lea.vmem %s1, 2280
  %s2239 = scalar_lea.vmem %s0, 1000
  %v2240 = vld [vmem:[%s2239] sm:$0xf]
  %v2241 = vunpack.c.l.bf16 %v2240
  %v2242 = vunpack.c.h.bf16 %v2240
  %s2243 = scalar_lea.vmem %s1, 3304
  %s2244 = scalar_lea.vmem %s0, 3816
  %v2245 = vld [vmem:[%s2244] sm:$0xf]
  %v2246 = vunpack.c.l.bf16 %v2245
  %v2247 = vunpack.c.h.bf16 %v2245
  %s2248 = scalar_lea.vmem %s1, 488
  %s2249 = scalar_lea.vmem %s0, 2792
  %v2250 = vld [vmem:[%s2249] sm:$0xf]
  %v2251 = vunpack.c.l.bf16 %v2250
  %v2252 = vunpack.c.h.bf16 %v2250
  %s2253 = scalar_lea.vmem %s1, 1512
  %s2254 = scalar_lea.vmem %s0, 1768
  %v2255 = vld [vmem:[%s2254] sm:$0xf]
  %v2256 = vunpack.c.l.bf16 %v2255
  %v2257 = vunpack.c.h.bf16 %v2255
  %s2258 = scalar_lea.vmem %s1, 2536
  %s2259 = scalar_lea.vmem %s0, 744
  %v2260 = vld [vmem:[%s2259] sm:$0xf]
  %v2261 = vunpack.c.l.bf16 %v2260
  %v2262 = vunpack.c.h.bf16 %v2260
  %s2263 = scalar_lea.vmem %s1, 3560
  %s2264 = scalar_lea.vmem %s0, 3560
  %v2265 = vld [vmem:[%s2264] sm:$0xf]
  %v2266 = vunpack.c.l.bf16 %v2265
  %v2267 = vunpack.c.h.bf16 %v2265
  %s2268 = scalar_lea.vmem %s1, 744
  %s2269 = scalar_lea.vmem %s0, 2536
  %v2270 = vld [vmem:[%s2269] sm:$0xf]
  %v2271 = vunpack.c.l.bf16 %v2270
  %v2272 = vunpack.c.h.bf16 %v2270
  %s2273 = scalar_lea.vmem %s1, 1768
  %s2274 = scalar_lea.vmem %s0, 1512
  %v2275 = vld [vmem:[%s2274] sm:$0xf]
  %v2276 = vunpack.c.l.bf16 %v2275
  %v2277 = vunpack.c.h.bf16 %v2275
  %s2278 = scalar_lea.vmem %s1, 2792
  %s2279 = scalar_lea.vmem %s0, 488
  %v2280 = vld [vmem:[%s2279] sm:$0xf]
  %v2281 = vunpack.c.l.bf16 %v2280
  %v2282 = vunpack.c.h.bf16 %v2280
  %s2283 = scalar_lea.vmem %s1, 3816
  %s2284 = scalar_lea.vmem %s0, 3304
  %v2285 = vld [vmem:[%s2284] sm:$0xf]
  %v2286 = vunpack.c.l.bf16 %v2285
  %v2287 = vunpack.c.h.bf16 %v2285
  %s2288 = scalar_lea.vmem %s1, 1000
  %s2289 = scalar_lea.vmem %s0, 2280
  %v2290 = vld [vmem:[%s2289] sm:$0xf]
  %v2291 = vunpack.c.l.bf16 %v2290
  %v2292 = vunpack.c.h.bf16 %v2290
  %s2293 = scalar_lea.vmem %s1, 2024
  %s2294 = scalar_lea.vmem %s0, 1256
  %v2295 = vld [vmem:[%s2294] sm:$0xf]
  %v2296 = vunpack.c.l.bf16 %v2295
  %v2297 = vunpack.c.h.bf16 %v2295
  %s2298 = scalar_lea.vmem %s1, 3048
  %s2299 = scalar_lea.vmem %s0, 232
  %v2300 = vld [vmem:[%s2299] sm:$0xf]
  %v2301 = vunpack.c.l.bf16 %v2300
  %v2302 = vunpack.c.h.bf16 %v2300
  %s2303 = scalar_lea.vmem %s1, 4072
  %s2304 = scalar_lea.vmem %s0, 3852
  %v2305 = vld [vmem:[%s2304] sm:$0xf]
  %v2306 = vunpack.c.l.bf16 %v2305
  %v2307 = vunpack.c.h.bf16 %v2305
  %s2308 = scalar_lea.vmem %s1, 12
  %s2309 = scalar_lea.vmem %s2308, 4294967292
  %v2310 = vpack.c.bf16 %v2306, %v1666
  %2311 = vst [vmem:[%s2309] sm:$0xff] %v2310
  %s2312 = scalar_lea.vmem %s0, 2828
  %v2313 = vld [vmem:[%s2312] sm:$0xf]
  %v2314 = vunpack.c.l.bf16 %v2313
  %v2315 = vunpack.c.h.bf16 %v2313
  %s2316 = scalar_lea.vmem %s1, 1036
  %s2317 = scalar_lea.vmem %s2316, 4294967292
  %v2318 = vpack.c.bf16 %v2314, %v1671
  %2319 = vst [vmem:[%s2317] sm:$0xff] %v2318
  %s2320 = scalar_lea.vmem %s0, 1804
  %v2321 = vld [vmem:[%s2320] sm:$0xf]
  %v2322 = vunpack.c.l.bf16 %v2321
  %v2323 = vunpack.c.h.bf16 %v2321
  %s2324 = scalar_lea.vmem %s1, 2060
  %s2325 = scalar_lea.vmem %s2324, 4294967292
  %v2326 = vpack.c.bf16 %v2322, %v1676
  %2327 = vst [vmem:[%s2325] sm:$0xff] %v2326
  %s2328 = scalar_lea.vmem %s0, 780
  %v2329 = vld [vmem:[%s2328] sm:$0xf]
  %v2330 = vunpack.c.l.bf16 %v2329
  %v2331 = vunpack.c.h.bf16 %v2329
  %s2332 = scalar_lea.vmem %s1, 3084
  %s2333 = scalar_lea.vmem %s2332, 4294967292
  %v2334 = vpack.c.bf16 %v2330, %v1681
  %2335 = vst [vmem:[%s2333] sm:$0xff] %v2334
  %s2336 = scalar_lea.vmem %s0, 3596
  %v2337 = vld [vmem:[%s2336] sm:$0xf]
  %v2338 = vunpack.c.l.bf16 %v2337
  %v2339 = vunpack.c.h.bf16 %v2337
  %s2340 = scalar_lea.vmem %s1, 268
  %s2341 = scalar_lea.vmem %s2340, 4294967292
  %v2342 = vpack.c.bf16 %v2338, %v1686
  %2343 = vst [vmem:[%s2341] sm:$0xff] %v2342
  %s2344 = scalar_lea.vmem %s0, 2572
  %v2345 = vld [vmem:[%s2344] sm:$0xf]
  %v2346 = vunpack.c.l.bf16 %v2345
  %v2347 = vunpack.c.h.bf16 %v2345
  %s2348 = scalar_lea.vmem %s1, 1292
  %s2349 = scalar_lea.vmem %s2348, 4294967292
  %v2350 = vpack.c.bf16 %v2346, %v1691
  %2351 = vst [vmem:[%s2349] sm:$0xff] %v2350
  %s2352 = scalar_lea.vmem %s0, 1548
  %v2353 = vld [vmem:[%s2352] sm:$0xf]
  %v2354 = vunpack.c.l.bf16 %v2353
  %v2355 = vunpack.c.h.bf16 %v2353
  %s2356 = scalar_lea.vmem %s1, 2316
  %s2357 = scalar_lea.vmem %s2356, 4294967292
  %v2358 = vpack.c.bf16 %v2354, %v1696
  %2359 = vst [vmem:[%s2357] sm:$0xff] %v2358
  %s2360 = scalar_lea.vmem %s0, 524
  %v2361 = vld [vmem:[%s2360] sm:$0xf]
  %v2362 = vunpack.c.l.bf16 %v2361
  %v2363 = vunpack.c.h.bf16 %v2361
  %s2364 = scalar_lea.vmem %s1, 3340
  %s2365 = scalar_lea.vmem %s2364, 4294967292
  %v2366 = vpack.c.bf16 %v2362, %v1701
  %2367 = vst [vmem:[%s2365] sm:$0xff] %v2366
  %s2368 = scalar_lea.vmem %s0, 3340
  %v2369 = vld [vmem:[%s2368] sm:$0xf]
  %v2370 = vunpack.c.l.bf16 %v2369
  %v2371 = vunpack.c.h.bf16 %v2369
  %s2372 = scalar_lea.vmem %s1, 524
  %s2373 = scalar_lea.vmem %s2372, 4294967292
  %v2374 = vpack.c.bf16 %v2370, %v1706
  %2375 = vst [vmem:[%s2373] sm:$0xff] %v2374
  %s2376 = scalar_lea.vmem %s0, 2316
  %v2377 = vld [vmem:[%s2376] sm:$0xf]
  %v2378 = vunpack.c.l.bf16 %v2377
  %v2379 = vunpack.c.h.bf16 %v2377
  %s2380 = scalar_lea.vmem %s1, 1548
  %s2381 = scalar_lea.vmem %s2380, 4294967292
  %v2382 = vpack.c.bf16 %v2378, %v1711
  %2383 = vst [vmem:[%s2381] sm:$0xff] %v2382
  %s2384 = scalar_lea.vmem %s0, 1292
  %v2385 = vld [vmem:[%s2384] sm:$0xf]
  %v2386 = vunpack.c.l.bf16 %v2385
  %v2387 = vunpack.c.h.bf16 %v2385
  %s2388 = scalar_lea.vmem %s1, 2572
  %s2389 = scalar_lea.vmem %s2388, 4294967292
  %v2390 = vpack.c.bf16 %v2386, %v1716
  %2391 = vst [vmem:[%s2389] sm:$0xff] %v2390
  %s2392 = scalar_lea.vmem %s0, 268
  %v2393 = vld [vmem:[%s2392] sm:$0xf]
  %v2394 = vunpack.c.l.bf16 %v2393
  %v2395 = vunpack.c.h.bf16 %v2393
  %s2396 = scalar_lea.vmem %s1, 3596
  %s2397 = scalar_lea.vmem %s2396, 4294967292
  %v2398 = vpack.c.bf16 %v2394, %v1721
  %2399 = vst [vmem:[%s2397] sm:$0xff] %v2398
  %s2400 = scalar_lea.vmem %s0, 3084
  %v2401 = vld [vmem:[%s2400] sm:$0xf]
  %v2402 = vunpack.c.l.bf16 %v2401
  %v2403 = vunpack.c.h.bf16 %v2401
  %s2404 = scalar_lea.vmem %s1, 780
  %s2405 = scalar_lea.vmem %s2404, 4294967292
  %v2406 = vpack.c.bf16 %v2402, %v1726
  %2407 = vst [vmem:[%s2405] sm:$0xff] %v2406
  %s2408 = scalar_lea.vmem %s0, 2060
  %v2409 = vld [vmem:[%s2408] sm:$0xf]
  %v2410 = vunpack.c.l.bf16 %v2409
  %v2411 = vunpack.c.h.bf16 %v2409
  %s2412 = scalar_lea.vmem %s1, 1804
  %s2413 = scalar_lea.vmem %s2412, 4294967292
  %v2414 = vpack.c.bf16 %v2410, %v1731
  %2415 = vst [vmem:[%s2413] sm:$0xff] %v2414
  %s2416 = scalar_lea.vmem %s0, 1036
  %v2417 = vld [vmem:[%s2416] sm:$0xf]
  %v2418 = vunpack.c.l.bf16 %v2417
  %v2419 = vunpack.c.h.bf16 %v2417
  %s2420 = scalar_lea.vmem %s1, 2828
  %s2421 = scalar_lea.vmem %s2420, 4294967292
  %v2422 = vpack.c.bf16 %v2418, %v1736
  %2423 = vst [vmem:[%s2421] sm:$0xff] %v2422
  %s2424 = scalar_lea.vmem %s0, 12
  %v2425 = vld [vmem:[%s2424] sm:$0xf]
  %v2426 = vunpack.c.l.bf16 %v2425
  %v2427 = vunpack.c.h.bf16 %v2425
  %s2428 = scalar_lea.vmem %s1, 3852
  %s2429 = scalar_lea.vmem %s2428, 4294967292
  %v2430 = vpack.c.bf16 %v2426, %v1741
  %2431 = vst [vmem:[%s2429] sm:$0xff] %v2430
  %s2432 = scalar_lea.vmem %s0, 3884
  %v2433 = vld [vmem:[%s2432] sm:$0xf]
  %v2434 = vunpack.c.l.bf16 %v2433
  %v2435 = vunpack.c.h.bf16 %v2433
  %s2436 = scalar_lea.vmem %s1, 44
  %s2437 = scalar_lea.vmem %s2436, 4294967292
  %v2438 = vpack.c.bf16 %v2434, %v1746
  %2439 = vst [vmem:[%s2437] sm:$0xff] %v2438
  %s2440 = scalar_lea.vmem %s0, 2860
  %v2441 = vld [vmem:[%s2440] sm:$0xf]
  %v2442 = vunpack.c.l.bf16 %v2441
  %v2443 = vunpack.c.h.bf16 %v2441
  %s2444 = scalar_lea.vmem %s1, 1068
  %s2445 = scalar_lea.vmem %s2444, 4294967292
  %v2446 = vpack.c.bf16 %v2442, %v1751
  %2447 = vst [vmem:[%s2445] sm:$0xff] %v2446
  %s2448 = scalar_lea.vmem %s0, 1836
  %v2449 = vld [vmem:[%s2448] sm:$0xf]
  %v2450 = vunpack.c.l.bf16 %v2449
  %v2451 = vunpack.c.h.bf16 %v2449
  %s2452 = scalar_lea.vmem %s1, 2092
  %s2453 = scalar_lea.vmem %s2452, 4294967292
  %v2454 = vpack.c.bf16 %v2450, %v1756
  %2455 = vst [vmem:[%s2453] sm:$0xff] %v2454
  %s2456 = scalar_lea.vmem %s0, 812
  %v2457 = vld [vmem:[%s2456] sm:$0xf]
  %v2458 = vunpack.c.l.bf16 %v2457
  %v2459 = vunpack.c.h.bf16 %v2457
  %s2460 = scalar_lea.vmem %s1, 3116
  %s2461 = scalar_lea.vmem %s2460, 4294967292
  %v2462 = vpack.c.bf16 %v2458, %v1761
  %2463 = vst [vmem:[%s2461] sm:$0xff] %v2462
  %s2464 = scalar_lea.vmem %s0, 3628
  %v2465 = vld [vmem:[%s2464] sm:$0xf]
  %v2466 = vunpack.c.l.bf16 %v2465
  %v2467 = vunpack.c.h.bf16 %v2465
  %s2468 = scalar_lea.vmem %s1, 300
  %s2469 = scalar_lea.vmem %s2468, 4294967292
  %v2470 = vpack.c.bf16 %v2466, %v1766
  %2471 = vst [vmem:[%s2469] sm:$0xff] %v2470
  %s2472 = scalar_lea.vmem %s0, 2604
  %v2473 = vld [vmem:[%s2472] sm:$0xf]
  %v2474 = vunpack.c.l.bf16 %v2473
  %v2475 = vunpack.c.h.bf16 %v2473
  %s2476 = scalar_lea.vmem %s1, 1324
  %s2477 = scalar_lea.vmem %s2476, 4294967292
  %v2478 = vpack.c.bf16 %v2474, %v1771
  %2479 = vst [vmem:[%s2477] sm:$0xff] %v2478
  %s2480 = scalar_lea.vmem %s0, 1580
  %v2481 = vld [vmem:[%s2480] sm:$0xf]
  %v2482 = vunpack.c.l.bf16 %v2481
  %v2483 = vunpack.c.h.bf16 %v2481
  %s2484 = scalar_lea.vmem %s1, 2348
  %s2485 = scalar_lea.vmem %s2484, 4294967292
  %v2486 = vpack.c.bf16 %v2482, %v1776
  %2487 = vst [vmem:[%s2485] sm:$0xff] %v2486
  %s2488 = scalar_lea.vmem %s0, 556
  %v2489 = vld [vmem:[%s2488] sm:$0xf]
  %v2490 = vunpack.c.l.bf16 %v2489
  %v2491 = vunpack.c.h.bf16 %v2489
  %s2492 = scalar_lea.vmem %s1, 3372
  %s2493 = scalar_lea.vmem %s2492, 4294967292
  %v2494 = vpack.c.bf16 %v2490, %v1781
  %2495 = vst [vmem:[%s2493] sm:$0xff] %v2494
  %s2496 = scalar_lea.vmem %s0, 3372
  %v2497 = vld [vmem:[%s2496] sm:$0xf]
  %v2498 = vunpack.c.l.bf16 %v2497
  %v2499 = vunpack.c.h.bf16 %v2497
  %s2500 = scalar_lea.vmem %s1, 556
  %s2501 = scalar_lea.vmem %s2500, 4294967292
  %v2502 = vpack.c.bf16 %v2498, %v1786
  %2503 = vst [vmem:[%s2501] sm:$0xff] %v2502
  %s2504 = scalar_lea.vmem %s0, 2348
  %v2505 = vld [vmem:[%s2504] sm:$0xf]
  %v2506 = vunpack.c.l.bf16 %v2505
  %v2507 = vunpack.c.h.bf16 %v2505
  %s2508 = scalar_lea.vmem %s1, 1580
  %s2509 = scalar_lea.vmem %s2508, 4294967292
  %v2510 = vpack.c.bf16 %v2506, %v1791
  %2511 = vst [vmem:[%s2509] sm:$0xff] %v2510
  %s2512 = scalar_lea.vmem %s0, 1324
  %v2513 = vld [vmem:[%s2512] sm:$0xf]
  %v2514 = vunpack.c.l.bf16 %v2513
  %v2515 = vunpack.c.h.bf16 %v2513
  %s2516 = scalar_lea.vmem %s1, 2604
  %s2517 = scalar_lea.vmem %s2516, 4294967292
  %v2518 = vpack.c.bf16 %v2514, %v1796
  %2519 = vst [vmem:[%s2517] sm:$0xff] %v2518
  %s2520 = scalar_lea.vmem %s0, 300
  %v2521 = vld [vmem:[%s2520] sm:$0xf]
  %v2522 = vunpack.c.l.bf16 %v2521
  %v2523 = vunpack.c.h.bf16 %v2521
  %s2524 = scalar_lea.vmem %s1, 3628
  %s2525 = scalar_lea.vmem %s2524, 4294967292
  %v2526 = vpack.c.bf16 %v2522, %v1801
  %2527 = vst [vmem:[%s2525] sm:$0xff] %v2526
  %s2528 = scalar_lea.vmem %s0, 3116
  %v2529 = vld [vmem:[%s2528] sm:$0xf]
  %v2530 = vunpack.c.l.bf16 %v2529
  %v2531 = vunpack.c.h.bf16 %v2529
  %s2532 = scalar_lea.vmem %s1, 812
  %s2533 = scalar_lea.vmem %s2532, 4294967292
  %v2534 = vpack.c.bf16 %v2530, %v1806
  %2535 = vst [vmem:[%s2533] sm:$0xff] %v2534
  %s2536 = scalar_lea.vmem %s0, 2092
  %v2537 = vld [vmem:[%s2536] sm:$0xf]
  %v2538 = vunpack.c.l.bf16 %v2537
  %v2539 = vunpack.c.h.bf16 %v2537
  %s2540 = scalar_lea.vmem %s1, 1836
  %s2541 = scalar_lea.vmem %s2540, 4294967292
  %v2542 = vpack.c.bf16 %v2538, %v1811
  %2543 = vst [vmem:[%s2541] sm:$0xff] %v2542
  %s2544 = scalar_lea.vmem %s0, 1068
  %v2545 = vld [vmem:[%s2544] sm:$0xf]
  %v2546 = vunpack.c.l.bf16 %v2545
  %v2547 = vunpack.c.h.bf16 %v2545
  %s2548 = scalar_lea.vmem %s1, 2860
  %s2549 = scalar_lea.vmem %s2548, 4294967292
  %v2550 = vpack.c.bf16 %v2546, %v1816
  %2551 = vst [vmem:[%s2549] sm:$0xff] %v2550
  %s2552 = scalar_lea.vmem %s0, 44
  %v2553 = vld [vmem:[%s2552] sm:$0xf]
  %v2554 = vunpack.c.l.bf16 %v2553
  %v2555 = vunpack.c.h.bf16 %v2553
  %s2556 = scalar_lea.vmem %s1, 3884
  %s2557 = scalar_lea.vmem %s2556, 4294967292
  %v2558 = vpack.c.bf16 %v2554, %v1821
  %2559 = vst [vmem:[%s2557] sm:$0xff] %v2558
  %s2560 = scalar_lea.vmem %s0, 3916
  %v2561 = vld [vmem:[%s2560] sm:$0xf]
  %v2562 = vunpack.c.l.bf16 %v2561
  %v2563 = vunpack.c.h.bf16 %v2561
  %s2564 = scalar_lea.vmem %s1, 76
  %s2565 = scalar_lea.vmem %s2564, 4294967292
  %v2566 = vpack.c.bf16 %v2562, %v1826
  %2567 = vst [vmem:[%s2565] sm:$0xff] %v2566
  %s2568 = scalar_lea.vmem %s0, 2892
  %v2569 = vld [vmem:[%s2568] sm:$0xf]
  %v2570 = vunpack.c.l.bf16 %v2569
  %v2571 = vunpack.c.h.bf16 %v2569
  %s2572 = scalar_lea.vmem %s1, 1100
  %s2573 = scalar_lea.vmem %s2572, 4294967292
  %v2574 = vpack.c.bf16 %v2570, %v1831
  %2575 = vst [vmem:[%s2573] sm:$0xff] %v2574
  %s2576 = scalar_lea.vmem %s0, 1868
  %v2577 = vld [vmem:[%s2576] sm:$0xf]
  %v2578 = vunpack.c.l.bf16 %v2577
  %v2579 = vunpack.c.h.bf16 %v2577
  %s2580 = scalar_lea.vmem %s1, 2124
  %s2581 = scalar_lea.vmem %s2580, 4294967292
  %v2582 = vpack.c.bf16 %v2578, %v1836
  %2583 = vst [vmem:[%s2581] sm:$0xff] %v2582
  %s2584 = scalar_lea.vmem %s0, 844
  %v2585 = vld [vmem:[%s2584] sm:$0xf]
  %v2586 = vunpack.c.l.bf16 %v2585
  %v2587 = vunpack.c.h.bf16 %v2585
  %s2588 = scalar_lea.vmem %s1, 3148
  %s2589 = scalar_lea.vmem %s2588, 4294967292
  %v2590 = vpack.c.bf16 %v2586, %v1841
  %2591 = vst [vmem:[%s2589] sm:$0xff] %v2590
  %s2592 = scalar_lea.vmem %s0, 3660
  %v2593 = vld [vmem:[%s2592] sm:$0xf]
  %v2594 = vunpack.c.l.bf16 %v2593
  %v2595 = vunpack.c.h.bf16 %v2593
  %s2596 = scalar_lea.vmem %s1, 332
  %s2597 = scalar_lea.vmem %s2596, 4294967292
  %v2598 = vpack.c.bf16 %v2594, %v1846
  %2599 = vst [vmem:[%s2597] sm:$0xff] %v2598
  %s2600 = scalar_lea.vmem %s0, 2636
  %v2601 = vld [vmem:[%s2600] sm:$0xf]
  %v2602 = vunpack.c.l.bf16 %v2601
  %v2603 = vunpack.c.h.bf16 %v2601
  %s2604 = scalar_lea.vmem %s1, 1356
  %s2605 = scalar_lea.vmem %s2604, 4294967292
  %v2606 = vpack.c.bf16 %v2602, %v1851
  %2607 = vst [vmem:[%s2605] sm:$0xff] %v2606
  %s2608 = scalar_lea.vmem %s0, 1612
  %v2609 = vld [vmem:[%s2608] sm:$0xf]
  %v2610 = vunpack.c.l.bf16 %v2609
  %v2611 = vunpack.c.h.bf16 %v2609
  %s2612 = scalar_lea.vmem %s1, 2380
  %s2613 = scalar_lea.vmem %s2612, 4294967292
  %v2614 = vpack.c.bf16 %v2610, %v1856
  %2615 = vst [vmem:[%s2613] sm:$0xff] %v2614
  %s2616 = scalar_lea.vmem %s0, 588
  %v2617 = vld [vmem:[%s2616] sm:$0xf]
  %v2618 = vunpack.c.l.bf16 %v2617
  %v2619 = vunpack.c.h.bf16 %v2617
  %s2620 = scalar_lea.vmem %s1, 3404
  %s2621 = scalar_lea.vmem %s2620, 4294967292
  %v2622 = vpack.c.bf16 %v2618, %v1861
  %2623 = vst [vmem:[%s2621] sm:$0xff] %v2622
  %s2624 = scalar_lea.vmem %s0, 3404
  %v2625 = vld [vmem:[%s2624] sm:$0xf]
  %v2626 = vunpack.c.l.bf16 %v2625
  %v2627 = vunpack.c.h.bf16 %v2625
  %s2628 = scalar_lea.vmem %s1, 588
  %s2629 = scalar_lea.vmem %s2628, 4294967292
  %v2630 = vpack.c.bf16 %v2626, %v1866
  %2631 = vst [vmem:[%s2629] sm:$0xff] %v2630
  %s2632 = scalar_lea.vmem %s0, 2380
  %v2633 = vld [vmem:[%s2632] sm:$0xf]
  %v2634 = vunpack.c.l.bf16 %v2633
  %v2635 = vunpack.c.h.bf16 %v2633
  %s2636 = scalar_lea.vmem %s1, 1612
  %s2637 = scalar_lea.vmem %s2636, 4294967292
  %v2638 = vpack.c.bf16 %v2634, %v1871
  %2639 = vst [vmem:[%s2637] sm:$0xff] %v2638
  %s2640 = scalar_lea.vmem %s0, 1356
  %v2641 = vld [vmem:[%s2640] sm:$0xf]
  %v2642 = vunpack.c.l.bf16 %v2641
  %v2643 = vunpack.c.h.bf16 %v2641
  %s2644 = scalar_lea.vmem %s1, 2636
  %s2645 = scalar_lea.vmem %s2644, 4294967292
  %v2646 = vpack.c.bf16 %v2642, %v1876
  %2647 = vst [vmem:[%s2645] sm:$0xff] %v2646
  %s2648 = scalar_lea.vmem %s0, 332
  %v2649 = vld [vmem:[%s2648] sm:$0xf]
  %v2650 = vunpack.c.l.bf16 %v2649
  %v2651 = vunpack.c.h.bf16 %v2649
  %s2652 = scalar_lea.vmem %s1, 3660
  %s2653 = scalar_lea.vmem %s2652, 4294967292
  %v2654 = vpack.c.bf16 %v2650, %v1881
  %2655 = vst [vmem:[%s2653] sm:$0xff] %v2654
  %s2656 = scalar_lea.vmem %s0, 3148
  %v2657 = vld [vmem:[%s2656] sm:$0xf]
  %v2658 = vunpack.c.l.bf16 %v2657
  %v2659 = vunpack.c.h.bf16 %v2657
  %s2660 = scalar_lea.vmem %s1, 844
  %s2661 = scalar_lea.vmem %s2660, 4294967292
  %v2662 = vpack.c.bf16 %v2658, %v1886
  %2663 = vst [vmem:[%s2661] sm:$0xff] %v2662
  %s2664 = scalar_lea.vmem %s0, 2124
  %v2665 = vld [vmem:[%s2664] sm:$0xf]
  %v2666 = vunpack.c.l.bf16 %v2665
  %v2667 = vunpack.c.h.bf16 %v2665
  %s2668 = scalar_lea.vmem %s1, 1868
  %s2669 = scalar_lea.vmem %s2668, 4294967292
  %v2670 = vpack.c.bf16 %v2666, %v1891
  %2671 = vst [vmem:[%s2669] sm:$0xff] %v2670
  %s2672 = scalar_lea.vmem %s0, 1100
  %v2673 = vld [vmem:[%s2672] sm:$0xf]
  %v2674 = vunpack.c.l.bf16 %v2673
  %v2675 = vunpack.c.h.bf16 %v2673
  %s2676 = scalar_lea.vmem %s1, 2892
  %s2677 = scalar_lea.vmem %s2676, 4294967292
  %v2678 = vpack.c.bf16 %v2674, %v1896
  %2679 = vst [vmem:[%s2677] sm:$0xff] %v2678
  %s2680 = scalar_lea.vmem %s0, 76
  %v2681 = vld [vmem:[%s2680] sm:$0xf]
  %v2682 = vunpack.c.l.bf16 %v2681
  %v2683 = vunpack.c.h.bf16 %v2681
  %s2684 = scalar_lea.vmem %s1, 3916
  %s2685 = scalar_lea.vmem %s2684, 4294967292
  %v2686 = vpack.c.bf16 %v2682, %v1901
  %2687 = vst [vmem:[%s2685] sm:$0xff] %v2686
  %s2688 = scalar_lea.vmem %s0, 3948
  %v2689 = vld [vmem:[%s2688] sm:$0xf]
  %v2690 = vunpack.c.l.bf16 %v2689
  %v2691 = vunpack.c.h.bf16 %v2689
  %s2692 = scalar_lea.vmem %s1, 108
  %s2693 = scalar_lea.vmem %s2692, 4294967292
  %v2694 = vpack.c.bf16 %v2690, %v1906
  %2695 = vst [vmem:[%s2693] sm:$0xff] %v2694
  %s2696 = scalar_lea.vmem %s0, 2924
  %v2697 = vld [vmem:[%s2696] sm:$0xf]
  %v2698 = vunpack.c.l.bf16 %v2697
  %v2699 = vunpack.c.h.bf16 %v2697
  %s2700 = scalar_lea.vmem %s1, 1132
  %s2701 = scalar_lea.vmem %s2700, 4294967292
  %v2702 = vpack.c.bf16 %v2698, %v1911
  %2703 = vst [vmem:[%s2701] sm:$0xff] %v2702
  %s2704 = scalar_lea.vmem %s0, 1900
  %v2705 = vld [vmem:[%s2704] sm:$0xf]
  %v2706 = vunpack.c.l.bf16 %v2705
  %v2707 = vunpack.c.h.bf16 %v2705
  %s2708 = scalar_lea.vmem %s1, 2156
  %s2709 = scalar_lea.vmem %s2708, 4294967292
  %v2710 = vpack.c.bf16 %v2706, %v1916
  %2711 = vst [vmem:[%s2709] sm:$0xff] %v2710
  %s2712 = scalar_lea.vmem %s0, 876
  %v2713 = vld [vmem:[%s2712] sm:$0xf]
  %v2714 = vunpack.c.l.bf16 %v2713
  %v2715 = vunpack.c.h.bf16 %v2713
  %s2716 = scalar_lea.vmem %s1, 3180
  %s2717 = scalar_lea.vmem %s2716, 4294967292
  %v2718 = vpack.c.bf16 %v2714, %v1921
  %2719 = vst [vmem:[%s2717] sm:$0xff] %v2718
  %s2720 = scalar_lea.vmem %s0, 3692
  %v2721 = vld [vmem:[%s2720] sm:$0xf]
  %v2722 = vunpack.c.l.bf16 %v2721
  %v2723 = vunpack.c.h.bf16 %v2721
  %s2724 = scalar_lea.vmem %s1, 364
  %s2725 = scalar_lea.vmem %s2724, 4294967292
  %v2726 = vpack.c.bf16 %v2722, %v1926
  %2727 = vst [vmem:[%s2725] sm:$0xff] %v2726
  %s2728 = scalar_lea.vmem %s0, 2668
  %v2729 = vld [vmem:[%s2728] sm:$0xf]
  %v2730 = vunpack.c.l.bf16 %v2729
  %v2731 = vunpack.c.h.bf16 %v2729
  %s2732 = scalar_lea.vmem %s1, 1388
  %s2733 = scalar_lea.vmem %s2732, 4294967292
  %v2734 = vpack.c.bf16 %v2730, %v1931
  %2735 = vst [vmem:[%s2733] sm:$0xff] %v2734
  %s2736 = scalar_lea.vmem %s0, 1644
  %v2737 = vld [vmem:[%s2736] sm:$0xf]
  %v2738 = vunpack.c.l.bf16 %v2737
  %v2739 = vunpack.c.h.bf16 %v2737
  %s2740 = scalar_lea.vmem %s1, 2412
  %s2741 = scalar_lea.vmem %s2740, 4294967292
  %v2742 = vpack.c.bf16 %v2738, %v1936
  %2743 = vst [vmem:[%s2741] sm:$0xff] %v2742
  %s2744 = scalar_lea.vmem %s0, 620
  %v2745 = vld [vmem:[%s2744] sm:$0xf]
  %v2746 = vunpack.c.l.bf16 %v2745
  %v2747 = vunpack.c.h.bf16 %v2745
  %s2748 = scalar_lea.vmem %s1, 3436
  %s2749 = scalar_lea.vmem %s2748, 4294967292
  %v2750 = vpack.c.bf16 %v2746, %v1941
  %2751 = vst [vmem:[%s2749] sm:$0xff] %v2750
  %s2752 = scalar_lea.vmem %s0, 3436
  %v2753 = vld [vmem:[%s2752] sm:$0xf]
  %v2754 = vunpack.c.l.bf16 %v2753
  %v2755 = vunpack.c.h.bf16 %v2753
  %s2756 = scalar_lea.vmem %s1, 620
  %s2757 = scalar_lea.vmem %s2756, 4294967292
  %v2758 = vpack.c.bf16 %v2754, %v1946
  %2759 = vst [vmem:[%s2757] sm:$0xff] %v2758
  %s2760 = scalar_lea.vmem %s0, 2412
  %v2761 = vld [vmem:[%s2760] sm:$0xf]
  %v2762 = vunpack.c.l.bf16 %v2761
  %v2763 = vunpack.c.h.bf16 %v2761
  %s2764 = scalar_lea.vmem %s1, 1644
  %s2765 = scalar_lea.vmem %s2764, 4294967292
  %v2766 = vpack.c.bf16 %v2762, %v1951
  %2767 = vst [vmem:[%s2765] sm:$0xff] %v2766
  %s2768 = scalar_lea.vmem %s0, 1388
  %v2769 = vld [vmem:[%s2768] sm:$0xf]
  %v2770 = vunpack.c.l.bf16 %v2769
  %v2771 = vunpack.c.h.bf16 %v2769
  %s2772 = scalar_lea.vmem %s1, 2668
  %s2773 = scalar_lea.vmem %s2772, 4294967292
  %v2774 = vpack.c.bf16 %v2770, %v1956
  %2775 = vst [vmem:[%s2773] sm:$0xff] %v2774
  %s2776 = scalar_lea.vmem %s0, 364
  %v2777 = vld [vmem:[%s2776] sm:$0xf]
  %v2778 = vunpack.c.l.bf16 %v2777
  %v2779 = vunpack.c.h.bf16 %v2777
  %s2780 = scalar_lea.vmem %s1, 3692
  %s2781 = scalar_lea.vmem %s2780, 4294967292
  %v2782 = vpack.c.bf16 %v2778, %v1961
  %2783 = vst [vmem:[%s2781] sm:$0xff] %v2782
  %s2784 = scalar_lea.vmem %s0, 3180
  %v2785 = vld [vmem:[%s2784] sm:$0xf]
  %v2786 = vunpack.c.l.bf16 %v2785
  %v2787 = vunpack.c.h.bf16 %v2785
  %s2788 = scalar_lea.vmem %s1, 876
  %s2789 = scalar_lea.vmem %s2788, 4294967292
  %v2790 = vpack.c.bf16 %v2786, %v1966
  %2791 = vst [vmem:[%s2789] sm:$0xff] %v2790
  %s2792 = scalar_lea.vmem %s0, 2156
  %v2793 = vld [vmem:[%s2792] sm:$0xf]
  %v2794 = vunpack.c.l.bf16 %v2793
  %v2795 = vunpack.c.h.bf16 %v2793
  %s2796 = scalar_lea.vmem %s1, 1900
  %s2797 = scalar_lea.vmem %s2796, 4294967292
  %v2798 = vpack.c.bf16 %v2794, %v1971
  %2799 = vst [vmem:[%s2797] sm:$0xff] %v2798
  %s2800 = scalar_lea.vmem %s0, 1132
  %v2801 = vld [vmem:[%s2800] sm:$0xf]
  %v2802 = vunpack.c.l.bf16 %v2801
  %v2803 = vunpack.c.h.bf16 %v2801
  %s2804 = scalar_lea.vmem %s1, 2924
  %s2805 = scalar_lea.vmem %s2804, 4294967292
  %v2806 = vpack.c.bf16 %v2802, %v1976
  %2807 = vst [vmem:[%s2805] sm:$0xff] %v2806
  %s2808 = scalar_lea.vmem %s0, 108
  %v2809 = vld [vmem:[%s2808] sm:$0xf]
  %v2810 = vunpack.c.l.bf16 %v2809
  %v2811 = vunpack.c.h.bf16 %v2809
  %s2812 = scalar_lea.vmem %s1, 3948
  %s2813 = scalar_lea.vmem %s2812, 4294967292
  %v2814 = vpack.c.bf16 %v2810, %v1981
  %2815 = vst [vmem:[%s2813] sm:$0xff] %v2814
  %s2816 = scalar_lea.vmem %s0, 3980
  %v2817 = vld [vmem:[%s2816] sm:$0xf]
  %v2818 = vunpack.c.l.bf16 %v2817
  %v2819 = vunpack.c.h.bf16 %v2817
  %s2820 = scalar_lea.vmem %s1, 140
  %s2821 = scalar_lea.vmem %s2820, 4294967292
  %v2822 = vpack.c.bf16 %v2818, %v1986
  %2823 = vst [vmem:[%s2821] sm:$0xff] %v2822
  %s2824 = scalar_lea.vmem %s0, 2956
  %v2825 = vld [vmem:[%s2824] sm:$0xf]
  %v2826 = vunpack.c.l.bf16 %v2825
  %v2827 = vunpack.c.h.bf16 %v2825
  %s2828 = scalar_lea.vmem %s1, 1164
  %s2829 = scalar_lea.vmem %s2828, 4294967292
  %v2830 = vpack.c.bf16 %v2826, %v1991
  %2831 = vst [vmem:[%s2829] sm:$0xff] %v2830
  %s2832 = scalar_lea.vmem %s0, 1932
  %v2833 = vld [vmem:[%s2832] sm:$0xf]
  %v2834 = vunpack.c.l.bf16 %v2833
  %v2835 = vunpack.c.h.bf16 %v2833
  %s2836 = scalar_lea.vmem %s1, 2188
  %s2837 = scalar_lea.vmem %s2836, 4294967292
  %v2838 = vpack.c.bf16 %v2834, %v1996
  %2839 = vst [vmem:[%s2837] sm:$0xff] %v2838
  %s2840 = scalar_lea.vmem %s0, 908
  %v2841 = vld [vmem:[%s2840] sm:$0xf]
  %v2842 = vunpack.c.l.bf16 %v2841
  %v2843 = vunpack.c.h.bf16 %v2841
  %s2844 = scalar_lea.vmem %s1, 3212
  %s2845 = scalar_lea.vmem %s2844, 4294967292
  %v2846 = vpack.c.bf16 %v2842, %v2001
  %2847 = vst [vmem:[%s2845] sm:$0xff] %v2846
  %s2848 = scalar_lea.vmem %s0, 3724
  %v2849 = vld [vmem:[%s2848] sm:$0xf]
  %v2850 = vunpack.c.l.bf16 %v2849
  %v2851 = vunpack.c.h.bf16 %v2849
  %s2852 = scalar_lea.vmem %s1, 396
  %s2853 = scalar_lea.vmem %s2852, 4294967292
  %v2854 = vpack.c.bf16 %v2850, %v2006
  %2855 = vst [vmem:[%s2853] sm:$0xff] %v2854
  %s2856 = scalar_lea.vmem %s0, 2700
  %v2857 = vld [vmem:[%s2856] sm:$0xf]
  %v2858 = vunpack.c.l.bf16 %v2857
  %v2859 = vunpack.c.h.bf16 %v2857
  %s2860 = scalar_lea.vmem %s1, 1420
  %s2861 = scalar_lea.vmem %s2860, 4294967292
  %v2862 = vpack.c.bf16 %v2858, %v2011
  %2863 = vst [vmem:[%s2861] sm:$0xff] %v2862
  %s2864 = scalar_lea.vmem %s0, 1676
  %v2865 = vld [vmem:[%s2864] sm:$0xf]
  %v2866 = vunpack.c.l.bf16 %v2865
  %v2867 = vunpack.c.h.bf16 %v2865
  %s2868 = scalar_lea.vmem %s1, 2444
  %s2869 = scalar_lea.vmem %s2868, 4294967292
  %v2870 = vpack.c.bf16 %v2866, %v2016
  %2871 = vst [vmem:[%s2869] sm:$0xff] %v2870
  %s2872 = scalar_lea.vmem %s0, 652
  %v2873 = vld [vmem:[%s2872] sm:$0xf]
  %v2874 = vunpack.c.l.bf16 %v2873
  %v2875 = vunpack.c.h.bf16 %v2873
  %s2876 = scalar_lea.vmem %s1, 3468
  %s2877 = scalar_lea.vmem %s2876, 4294967292
  %v2878 = vpack.c.bf16 %v2874, %v2021
  %2879 = vst [vmem:[%s2877] sm:$0xff] %v2878
  %s2880 = scalar_lea.vmem %s0, 3468
  %v2881 = vld [vmem:[%s2880] sm:$0xf]
  %v2882 = vunpack.c.l.bf16 %v2881
  %v2883 = vunpack.c.h.bf16 %v2881
  %s2884 = scalar_lea.vmem %s1, 652
  %s2885 = scalar_lea.vmem %s2884, 4294967292
  %v2886 = vpack.c.bf16 %v2882, %v2026
  %2887 = vst [vmem:[%s2885] sm:$0xff] %v2886
  %s2888 = scalar_lea.vmem %s0, 2444
  %v2889 = vld [vmem:[%s2888] sm:$0xf]
  %v2890 = vunpack.c.l.bf16 %v2889
  %v2891 = vunpack.c.h.bf16 %v2889
  %s2892 = scalar_lea.vmem %s1, 1676
  %s2893 = scalar_lea.vmem %s2892, 4294967292
  %v2894 = vpack.c.bf16 %v2890, %v2031
  %2895 = vst [vmem:[%s2893] sm:$0xff] %v2894
  %s2896 = scalar_lea.vmem %s0, 1420
  %v2897 = vld [vmem:[%s2896] sm:$0xf]
  %v2898 = vunpack.c.l.bf16 %v2897
  %v2899 = vunpack.c.h.bf16 %v2897
  %s2900 = scalar_lea.vmem %s1, 2700
  %s2901 = scalar_lea.vmem %s2900, 4294967292
  %v2902 = vpack.c.bf16 %v2898, %v2036
  %2903 = vst [vmem:[%s2901] sm:$0xff] %v2902
  %s2904 = scalar_lea.vmem %s0, 396
  %v2905 = vld [vmem:[%s2904] sm:$0xf]
  %v2906 = vunpack.c.l.bf16 %v2905
  %v2907 = vunpack.c.h.bf16 %v2905
  %s2908 = scalar_lea.vmem %s1, 3724
  %s2909 = scalar_lea.vmem %s2908, 4294967292
  %v2910 = vpack.c.bf16 %v2906, %v2041
  %2911 = vst [vmem:[%s2909] sm:$0xff] %v2910
  %s2912 = scalar_lea.vmem %s0, 3212
  %v2913 = vld [vmem:[%s2912] sm:$0xf]
  %v2914 = vunpack.c.l.bf16 %v2913
  %v2915 = vunpack.c.h.bf16 %v2913
  %s2916 = scalar_lea.vmem %s1, 908
  %s2917 = scalar_lea.vmem %s2916, 4294967292
  %v2918 = vpack.c.bf16 %v2914, %v2046
  %2919 = vst [vmem:[%s2917] sm:$0xff] %v2918
  %s2920 = scalar_lea.vmem %s0, 2188
  %v2921 = vld [vmem:[%s2920] sm:$0xf]
  %v2922 = vunpack.c.l.bf16 %v2921
  %v2923 = vunpack.c.h.bf16 %v2921
  %s2924 = scalar_lea.vmem %s1, 1932
  %s2925 = scalar_lea.vmem %s2924, 4294967292
  %v2926 = vpack.c.bf16 %v2922, %v2051
  %2927 = vst [vmem:[%s2925] sm:$0xff] %v2926
  %s2928 = scalar_lea.vmem %s0, 1164
  %v2929 = vld [vmem:[%s2928] sm:$0xf]
  %v2930 = vunpack.c.l.bf16 %v2929
  %v2931 = vunpack.c.h.bf16 %v2929
  %s2932 = scalar_lea.vmem %s1, 2956
  %s2933 = scalar_lea.vmem %s2932, 4294967292
  %v2934 = vpack.c.bf16 %v2930, %v2056
  %2935 = vst [vmem:[%s2933] sm:$0xff] %v2934
  %s2936 = scalar_lea.vmem %s0, 140
  %v2937 = vld [vmem:[%s2936] sm:$0xf]
  %v2938 = vunpack.c.l.bf16 %v2937
  %v2939 = vunpack.c.h.bf16 %v2937
  %s2940 = scalar_lea.vmem %s1, 3980
  %s2941 = scalar_lea.vmem %s2940, 4294967292
  %v2942 = vpack.c.bf16 %v2938, %v2061
  %2943 = vst [vmem:[%s2941] sm:$0xff] %v2942
  %s2944 = scalar_lea.vmem %s0, 4012
  %v2945 = vld [vmem:[%s2944] sm:$0xf]
  %v2946 = vunpack.c.l.bf16 %v2945
  %v2947 = vunpack.c.h.bf16 %v2945
  %s2948 = scalar_lea.vmem %s1, 172
  %s2949 = scalar_lea.vmem %s2948, 4294967292
  %v2950 = vpack.c.bf16 %v2946, %v2066
  %2951 = vst [vmem:[%s2949] sm:$0xff] %v2950
  %s2952 = scalar_lea.vmem %s0, 2988
  %v2953 = vld [vmem:[%s2952] sm:$0xf]
  %v2954 = vunpack.c.l.bf16 %v2953
  %v2955 = vunpack.c.h.bf16 %v2953
  %s2956 = scalar_lea.vmem %s1, 1196
  %s2957 = scalar_lea.vmem %s2956, 4294967292
  %v2958 = vpack.c.bf16 %v2954, %v2071
  %2959 = vst [vmem:[%s2957] sm:$0xff] %v2958
  %s2960 = scalar_lea.vmem %s0, 1964
  %v2961 = vld [vmem:[%s2960] sm:$0xf]
  %v2962 = vunpack.c.l.bf16 %v2961
  %v2963 = vunpack.c.h.bf16 %v2961
  %s2964 = scalar_lea.vmem %s1, 2220
  %s2965 = scalar_lea.vmem %s2964, 4294967292
  %v2966 = vpack.c.bf16 %v2962, %v2076
  %2967 = vst [vmem:[%s2965] sm:$0xff] %v2966
  %s2968 = scalar_lea.vmem %s0, 940
  %v2969 = vld [vmem:[%s2968] sm:$0xf]
  %v2970 = vunpack.c.l.bf16 %v2969
  %v2971 = vunpack.c.h.bf16 %v2969
  %s2972 = scalar_lea.vmem %s1, 3244
  %s2973 = scalar_lea.vmem %s2972, 4294967292
  %v2974 = vpack.c.bf16 %v2970, %v2081
  %2975 = vst [vmem:[%s2973] sm:$0xff] %v2974
  %s2976 = scalar_lea.vmem %s0, 3756
  %v2977 = vld [vmem:[%s2976] sm:$0xf]
  %v2978 = vunpack.c.l.bf16 %v2977
  %v2979 = vunpack.c.h.bf16 %v2977
  %s2980 = scalar_lea.vmem %s1, 428
  %s2981 = scalar_lea.vmem %s2980, 4294967292
  %v2982 = vpack.c.bf16 %v2978, %v2086
  %2983 = vst [vmem:[%s2981] sm:$0xff] %v2982
  %s2984 = scalar_lea.vmem %s0, 2732
  %v2985 = vld [vmem:[%s2984] sm:$0xf]
  %v2986 = vunpack.c.l.bf16 %v2985
  %v2987 = vunpack.c.h.bf16 %v2985
  %s2988 = scalar_lea.vmem %s1, 1452
  %s2989 = scalar_lea.vmem %s2988, 4294967292
  %v2990 = vpack.c.bf16 %v2986, %v2091
  %2991 = vst [vmem:[%s2989] sm:$0xff] %v2990
  %s2992 = scalar_lea.vmem %s0, 1708
  %v2993 = vld [vmem:[%s2992] sm:$0xf]
  %v2994 = vunpack.c.l.bf16 %v2993
  %v2995 = vunpack.c.h.bf16 %v2993
  %s2996 = scalar_lea.vmem %s1, 2476
  %s2997 = scalar_lea.vmem %s2996, 4294967292
  %v2998 = vpack.c.bf16 %v2994, %v2096
  %2999 = vst [vmem:[%s2997] sm:$0xff] %v2998
  %s3000 = scalar_lea.vmem %s0, 684
  %v3001 = vld [vmem:[%s3000] sm:$0xf]
  %v3002 = vunpack.c.l.bf16 %v3001
  %v3003 = vunpack.c.h.bf16 %v3001
  %s3004 = scalar_lea.vmem %s1, 3500
  %s3005 = scalar_lea.vmem %s3004, 4294967292
  %v3006 = vpack.c.bf16 %v3002, %v2101
  %3007 = vst [vmem:[%s3005] sm:$0xff] %v3006
  %s3008 = scalar_lea.vmem %s0, 3500
  %v3009 = vld [vmem:[%s3008] sm:$0xf]
  %v3010 = vunpack.c.l.bf16 %v3009
  %v3011 = vunpack.c.h.bf16 %v3009
  %s3012 = scalar_lea.vmem %s1, 684
  %s3013 = scalar_lea.vmem %s3012, 4294967292
  %v3014 = vpack.c.bf16 %v3010, %v2106
  %3015 = vst [vmem:[%s3013] sm:$0xff] %v3014
  %s3016 = scalar_lea.vmem %s0, 2476
  %v3017 = vld [vmem:[%s3016] sm:$0xf]
  %v3018 = vunpack.c.l.bf16 %v3017
  %v3019 = vunpack.c.h.bf16 %v3017
  %s3020 = scalar_lea.vmem %s1, 1708
  %s3021 = scalar_lea.vmem %s3020, 4294967292
  %v3022 = vpack.c.bf16 %v3018, %v2111
  %3023 = vst [vmem:[%s3021] sm:$0xff] %v3022
  %s3024 = scalar_lea.vmem %s0, 1452
  %v3025 = vld [vmem:[%s3024] sm:$0xf]
  %v3026 = vunpack.c.l.bf16 %v3025
  %v3027 = vunpack.c.h.bf16 %v3025
  %s3028 = scalar_lea.vmem %s1, 2732
  %s3029 = scalar_lea.vmem %s3028, 4294967292
  %v3030 = vpack.c.bf16 %v3026, %v2116
  %3031 = vst [vmem:[%s3029] sm:$0xff] %v3030
  %s3032 = scalar_lea.vmem %s0, 428
  %v3033 = vld [vmem:[%s3032] sm:$0xf]
  %v3034 = vunpack.c.l.bf16 %v3033
  %v3035 = vunpack.c.h.bf16 %v3033
  %s3036 = scalar_lea.vmem %s1, 3756
  %s3037 = scalar_lea.vmem %s3036, 4294967292
  %v3038 = vpack.c.bf16 %v3034, %v2121
  %3039 = vst [vmem:[%s3037] sm:$0xff] %v3038
  %s3040 = scalar_lea.vmem %s0, 3244
  %v3041 = vld [vmem:[%s3040] sm:$0xf]
  %v3042 = vunpack.c.l.bf16 %v3041
  %v3043 = vunpack.c.h.bf16 %v3041
  %s3044 = scalar_lea.vmem %s1, 940
  %s3045 = scalar_lea.vmem %s3044, 4294967292
  %v3046 = vpack.c.bf16 %v3042, %v2126
  %3047 = vst [vmem:[%s3045] sm:$0xff] %v3046
  %s3048 = scalar_lea.vmem %s0, 2220
  %v3049 = vld [vmem:[%s3048] sm:$0xf]
  %v3050 = vunpack.c.l.bf16 %v3049
  %v3051 = vunpack.c.h.bf16 %v3049
  %s3052 = scalar_lea.vmem %s1, 1964
  %s3053 = scalar_lea.vmem %s3052, 4294967292
  %v3054 = vpack.c.bf16 %v3050, %v2131
  %3055 = vst [vmem:[%s3053] sm:$0xff] %v3054
  %s3056 = scalar_lea.vmem %s0, 1196
  %v3057 = vld [vmem:[%s3056] sm:$0xf]
  %v3058 = vunpack.c.l.bf16 %v3057
  %v3059 = vunpack.c.h.bf16 %v3057
  %s3060 = scalar_lea.vmem %s1, 2988
  %s3061 = scalar_lea.vmem %s3060, 4294967292
  %v3062 = vpack.c.bf16 %v3058, %v2136
  %3063 = vst [vmem:[%s3061] sm:$0xff] %v3062
  %s3064 = scalar_lea.vmem %s0, 172
  %v3065 = vld [vmem:[%s3064] sm:$0xf]
  %v3066 = vunpack.c.l.bf16 %v3065
  %v3067 = vunpack.c.h.bf16 %v3065
  %s3068 = scalar_lea.vmem %s1, 4012
  %s3069 = scalar_lea.vmem %s3068, 4294967292
  %v3070 = vpack.c.bf16 %v3066, %v2141
  %3071 = vst [vmem:[%s3069] sm:$0xff] %v3070
  %s3072 = scalar_lea.vmem %s0, 4044
  %v3073 = vld [vmem:[%s3072] sm:$0xf]
  %v3074 = vunpack.c.l.bf16 %v3073
  %v3075 = vunpack.c.h.bf16 %v3073
  %s3076 = scalar_lea.vmem %s1, 204
  %s3077 = scalar_lea.vmem %s3076, 4294967292
  %v3078 = vpack.c.bf16 %v3074, %v2146
  %3079 = vst [vmem:[%s3077] sm:$0xff] %v3078
  %s3080 = scalar_lea.vmem %s0, 3020
  %v3081 = vld [vmem:[%s3080] sm:$0xf]
  %v3082 = vunpack.c.l.bf16 %v3081
  %v3083 = vunpack.c.h.bf16 %v3081
  %s3084 = scalar_lea.vmem %s1, 1228
  %s3085 = scalar_lea.vmem %s3084, 4294967292
  %v3086 = vpack.c.bf16 %v3082, %v2151
  %3087 = vst [vmem:[%s3085] sm:$0xff] %v3086
  %s3088 = scalar_lea.vmem %s0, 1996
  %v3089 = vld [vmem:[%s3088] sm:$0xf]
  %v3090 = vunpack.c.l.bf16 %v3089
  %v3091 = vunpack.c.h.bf16 %v3089
  %s3092 = scalar_lea.vmem %s1, 2252
  %s3093 = scalar_lea.vmem %s3092, 4294967292
  %v3094 = vpack.c.bf16 %v3090, %v2156
  %3095 = vst [vmem:[%s3093] sm:$0xff] %v3094
  %s3096 = scalar_lea.vmem %s0, 972
  %v3097 = vld [vmem:[%s3096] sm:$0xf]
  %v3098 = vunpack.c.l.bf16 %v3097
  %v3099 = vunpack.c.h.bf16 %v3097
  %s3100 = scalar_lea.vmem %s1, 3276
  %s3101 = scalar_lea.vmem %s3100, 4294967292
  %v3102 = vpack.c.bf16 %v3098, %v2161
  %3103 = vst [vmem:[%s3101] sm:$0xff] %v3102
  %s3104 = scalar_lea.vmem %s0, 3788
  %v3105 = vld [vmem:[%s3104] sm:$0xf]
  %v3106 = vunpack.c.l.bf16 %v3105
  %v3107 = vunpack.c.h.bf16 %v3105
  %s3108 = scalar_lea.vmem %s1, 460
  %s3109 = scalar_lea.vmem %s3108, 4294967292
  %v3110 = vpack.c.bf16 %v3106, %v2166
  %3111 = vst [vmem:[%s3109] sm:$0xff] %v3110
  %s3112 = scalar_lea.vmem %s0, 2764
  %v3113 = vld [vmem:[%s3112] sm:$0xf]
  %v3114 = vunpack.c.l.bf16 %v3113
  %v3115 = vunpack.c.h.bf16 %v3113
  %s3116 = scalar_lea.vmem %s1, 1484
  %s3117 = scalar_lea.vmem %s3116, 4294967292
  %v3118 = vpack.c.bf16 %v3114, %v2171
  %3119 = vst [vmem:[%s3117] sm:$0xff] %v3118
  %s3120 = scalar_lea.vmem %s0, 1740
  %v3121 = vld [vmem:[%s3120] sm:$0xf]
  %v3122 = vunpack.c.l.bf16 %v3121
  %v3123 = vunpack.c.h.bf16 %v3121
  %s3124 = scalar_lea.vmem %s1, 2508
  %s3125 = scalar_lea.vmem %s3124, 4294967292
  %v3126 = vpack.c.bf16 %v3122, %v2176
  %3127 = vst [vmem:[%s3125] sm:$0xff] %v3126
  %s3128 = scalar_lea.vmem %s0, 716
  %v3129 = vld [vmem:[%s3128] sm:$0xf]
  %v3130 = vunpack.c.l.bf16 %v3129
  %v3131 = vunpack.c.h.bf16 %v3129
  %s3132 = scalar_lea.vmem %s1, 3532
  %s3133 = scalar_lea.vmem %s3132, 4294967292
  %v3134 = vpack.c.bf16 %v3130, %v2181
  %3135 = vst [vmem:[%s3133] sm:$0xff] %v3134
  %s3136 = scalar_lea.vmem %s0, 3532
  %v3137 = vld [vmem:[%s3136] sm:$0xf]
  %v3138 = vunpack.c.l.bf16 %v3137
  %v3139 = vunpack.c.h.bf16 %v3137
  %s3140 = scalar_lea.vmem %s1, 716
  %s3141 = scalar_lea.vmem %s3140, 4294967292
  %v3142 = vpack.c.bf16 %v3138, %v2186
  %3143 = vst [vmem:[%s3141] sm:$0xff] %v3142
  %s3144 = scalar_lea.vmem %s0, 2508
  %v3145 = vld [vmem:[%s3144] sm:$0xf]
  %v3146 = vunpack.c.l.bf16 %v3145
  %v3147 = vunpack.c.h.bf16 %v3145
  %s3148 = scalar_lea.vmem %s1, 1740
  %s3149 = scalar_lea.vmem %s3148, 4294967292
  %v3150 = vpack.c.bf16 %v3146, %v2191
  %3151 = vst [vmem:[%s3149] sm:$0xff] %v3150
  %s3152 = scalar_lea.vmem %s0, 1484
  %v3153 = vld [vmem:[%s3152] sm:$0xf]
  %v3154 = vunpack.c.l.bf16 %v3153
  %v3155 = vunpack.c.h.bf16 %v3153
  %s3156 = scalar_lea.vmem %s1, 2764
  %s3157 = scalar_lea.vmem %s3156, 4294967292
  %v3158 = vpack.c.bf16 %v3154, %v2196
  %3159 = vst [vmem:[%s3157] sm:$0xff] %v3158
  %s3160 = scalar_lea.vmem %s0, 460
  %v3161 = vld [vmem:[%s3160] sm:$0xf]
  %v3162 = vunpack.c.l.bf16 %v3161
  %v3163 = vunpack.c.h.bf16 %v3161
  %s3164 = scalar_lea.vmem %s1, 3788
  %s3165 = scalar_lea.vmem %s3164, 4294967292
  %v3166 = vpack.c.bf16 %v3162, %v2201
  %3167 = vst [vmem:[%s3165] sm:$0xff] %v3166
  %s3168 = scalar_lea.vmem %s0, 3276
  %v3169 = vld [vmem:[%s3168] sm:$0xf]
  %v3170 = vunpack.c.l.bf16 %v3169
  %v3171 = vunpack.c.h.bf16 %v3169
  %s3172 = scalar_lea.vmem %s1, 972
  %s3173 = scalar_lea.vmem %s3172, 4294967292
  %v3174 = vpack.c.bf16 %v3170, %v2206
  %3175 = vst [vmem:[%s3173] sm:$0xff] %v3174
  %s3176 = scalar_lea.vmem %s0, 2252
  %v3177 = vld [vmem:[%s3176] sm:$0xf]
  %v3178 = vunpack.c.l.bf16 %v3177
  %v3179 = vunpack.c.h.bf16 %v3177
  %s3180 = scalar_lea.vmem %s1, 1996
  %s3181 = scalar_lea.vmem %s3180, 4294967292
  %v3182 = vpack.c.bf16 %v3178, %v2211
  %3183 = vst [vmem:[%s3181] sm:$0xff] %v3182
  %s3184 = scalar_lea.vmem %s0, 1228
  %v3185 = vld [vmem:[%s3184] sm:$0xf]
  %v3186 = vunpack.c.l.bf16 %v3185
  %v3187 = vunpack.c.h.bf16 %v3185
  %s3188 = scalar_lea.vmem %s1, 3020
  %s3189 = scalar_lea.vmem %s3188, 4294967292
  %v3190 = vpack.c.bf16 %v3186, %v2216
  %3191 = vst [vmem:[%s3189] sm:$0xff] %v3190
  %s3192 = scalar_lea.vmem %s0, 204
  %v3193 = vld [vmem:[%s3192] sm:$0xf]
  %v3194 = vunpack.c.l.bf16 %v3193
  %v3195 = vunpack.c.h.bf16 %v3193
  %s3196 = scalar_lea.vmem %s1, 4044
  %s3197 = scalar_lea.vmem %s3196, 4294967292
  %v3198 = vpack.c.bf16 %v3194, %v2221
  %3199 = vst [vmem:[%s3197] sm:$0xff] %v3198
  %s3200 = scalar_lea.vmem %s0, 4076
  %v3201 = vld [vmem:[%s3200] sm:$0xf]
  %v3202 = vunpack.c.l.bf16 %v3201
  %v3203 = vunpack.c.h.bf16 %v3201
  %s3204 = scalar_lea.vmem %s1, 236
  %s3205 = scalar_lea.vmem %s3204, 4294967292
  %v3206 = vpack.c.bf16 %v3202, %v2226
  %3207 = vst [vmem:[%s3205] sm:$0xff] %v3206
  %s3208 = scalar_lea.vmem %s0, 3052
  %v3209 = vld [vmem:[%s3208] sm:$0xf]
  %v3210 = vunpack.c.l.bf16 %v3209
  %v3211 = vunpack.c.h.bf16 %v3209
  %s3212 = scalar_lea.vmem %s1, 1260
  %s3213 = scalar_lea.vmem %s3212, 4294967292
  %v3214 = vpack.c.bf16 %v3210, %v2231
  %3215 = vst [vmem:[%s3213] sm:$0xff] %v3214
  %s3216 = scalar_lea.vmem %s0, 2028
  %v3217 = vld [vmem:[%s3216] sm:$0xf]
  %v3218 = vunpack.c.l.bf16 %v3217
  %v3219 = vunpack.c.h.bf16 %v3217
  %s3220 = scalar_lea.vmem %s1, 2284
  %s3221 = scalar_lea.vmem %s3220, 4294967292
  %v3222 = vpack.c.bf16 %v3218, %v2236
  %3223 = vst [vmem:[%s3221] sm:$0xff] %v3222
  %s3224 = scalar_lea.vmem %s0, 1004
  %v3225 = vld [vmem:[%s3224] sm:$0xf]
  %v3226 = vunpack.c.l.bf16 %v3225
  %v3227 = vunpack.c.h.bf16 %v3225
  %s3228 = scalar_lea.vmem %s1, 3308
  %s3229 = scalar_lea.vmem %s3228, 4294967292
  %v3230 = vpack.c.bf16 %v3226, %v2241
  %3231 = vst [vmem:[%s3229] sm:$0xff] %v3230
  %s3232 = scalar_lea.vmem %s0, 3820
  %v3233 = vld [vmem:[%s3232] sm:$0xf]
  %v3234 = vunpack.c.l.bf16 %v3233
  %v3235 = vunpack.c.h.bf16 %v3233
  %s3236 = scalar_lea.vmem %s1, 492
  %s3237 = scalar_lea.vmem %s3236, 4294967292
  %v3238 = vpack.c.bf16 %v3234, %v2246
  %3239 = vst [vmem:[%s3237] sm:$0xff] %v3238
  %s3240 = scalar_lea.vmem %s0, 2796
  %v3241 = vld [vmem:[%s3240] sm:$0xf]
  %v3242 = vunpack.c.l.bf16 %v3241
  %v3243 = vunpack.c.h.bf16 %v3241
  %s3244 = scalar_lea.vmem %s1, 1516
  %s3245 = scalar_lea.vmem %s3244, 4294967292
  %v3246 = vpack.c.bf16 %v3242, %v2251
  %3247 = vst [vmem:[%s3245] sm:$0xff] %v3246
  %s3248 = scalar_lea.vmem %s0, 1772
  %v3249 = vld [vmem:[%s3248] sm:$0xf]
  %v3250 = vunpack.c.l.bf16 %v3249
  %v3251 = vunpack.c.h.bf16 %v3249
  %s3252 = scalar_lea.vmem %s1, 2540
  %s3253 = scalar_lea.vmem %s3252, 4294967292
  %v3254 = vpack.c.bf16 %v3250, %v2256
  %3255 = vst [vmem:[%s3253] sm:$0xff] %v3254
  %s3256 = scalar_lea.vmem %s0, 748
  %v3257 = vld [vmem:[%s3256] sm:$0xf]
  %v3258 = vunpack.c.l.bf16 %v3257
  %v3259 = vunpack.c.h.bf16 %v3257
  %s3260 = scalar_lea.vmem %s1, 3564
  %s3261 = scalar_lea.vmem %s3260, 4294967292
  %v3262 = vpack.c.bf16 %v3258, %v2261
  %3263 = vst [vmem:[%s3261] sm:$0xff] %v3262
  %s3264 = scalar_lea.vmem %s0, 3564
  %v3265 = vld [vmem:[%s3264] sm:$0xf]
  %v3266 = vunpack.c.l.bf16 %v3265
  %v3267 = vunpack.c.h.bf16 %v3265
  %s3268 = scalar_lea.vmem %s1, 748
  %s3269 = scalar_lea.vmem %s3268, 4294967292
  %v3270 = vpack.c.bf16 %v3266, %v2266
  %3271 = vst [vmem:[%s3269] sm:$0xff] %v3270
  %s3272 = scalar_lea.vmem %s0, 2540
  %v3273 = vld [vmem:[%s3272] sm:$0xf]
  %v3274 = vunpack.c.l.bf16 %v3273
  %v3275 = vunpack.c.h.bf16 %v3273
  %s3276 = scalar_lea.vmem %s1, 1772
  %s3277 = scalar_lea.vmem %s3276, 4294967292
  %v3278 = vpack.c.bf16 %v3274, %v2271
  %3279 = vst [vmem:[%s3277] sm:$0xff] %v3278
  %s3280 = scalar_lea.vmem %s0, 1516
  %v3281 = vld [vmem:[%s3280] sm:$0xf]
  %v3282 = vunpack.c.l.bf16 %v3281
  %v3283 = vunpack.c.h.bf16 %v3281
  %s3284 = scalar_lea.vmem %s1, 2796
  %s3285 = scalar_lea.vmem %s3284, 4294967292
  %v3286 = vpack.c.bf16 %v3282, %v2276
  %3287 = vst [vmem:[%s3285] sm:$0xff] %v3286
  %s3288 = scalar_lea.vmem %s0, 492
  %v3289 = vld [vmem:[%s3288] sm:$0xf]
  %v3290 = vunpack.c.l.bf16 %v3289
  %v3291 = vunpack.c.h.bf16 %v3289
  %s3292 = scalar_lea.vmem %s1, 3820
  %s3293 = scalar_lea.vmem %s3292, 4294967292
  %v3294 = vpack.c.bf16 %v3290, %v2281
  %3295 = vst [vmem:[%s3293] sm:$0xff] %v3294
  %s3296 = scalar_lea.vmem %s0, 3308
  %v3297 = vld [vmem:[%s3296] sm:$0xf]
  %v3298 = vunpack.c.l.bf16 %v3297
  %v3299 = vunpack.c.h.bf16 %v3297
  %s3300 = scalar_lea.vmem %s1, 1004
  %s3301 = scalar_lea.vmem %s3300, 4294967292
  %v3302 = vpack.c.bf16 %v3298, %v2286
  %3303 = vst [vmem:[%s3301] sm:$0xff] %v3302
  %s3304 = scalar_lea.vmem %s0, 2284
  %v3305 = vld [vmem:[%s3304] sm:$0xf]
  %v3306 = vunpack.c.l.bf16 %v3305
  %v3307 = vunpack.c.h.bf16 %v3305
  %s3308 = scalar_lea.vmem %s1, 2028
  %s3309 = scalar_lea.vmem %s3308, 4294967292
  %v3310 = vpack.c.bf16 %v3306, %v2291
  %3311 = vst [vmem:[%s3309] sm:$0xff] %v3310
  %s3312 = scalar_lea.vmem %s0, 1260
  %v3313 = vld [vmem:[%s3312] sm:$0xf]
  %v3314 = vunpack.c.l.bf16 %v3313
  %v3315 = vunpack.c.h.bf16 %v3313
  %s3316 = scalar_lea.vmem %s1, 3052
  %s3317 = scalar_lea.vmem %s3316, 4294967292
  %v3318 = vpack.c.bf16 %v3314, %v2296
  %3319 = vst [vmem:[%s3317] sm:$0xff] %v3318
  %s3320 = scalar_lea.vmem %s0, 236
  %v3321 = vld [vmem:[%s3320] sm:$0xf]
  %v3322 = vunpack.c.l.bf16 %v3321
  %v3323 = vunpack.c.h.bf16 %v3321
  %s3324 = scalar_lea.vmem %s1, 4076
  %s3325 = scalar_lea.vmem %s3324, 4294967292
  %v3326 = vpack.c.bf16 %v3322, %v2301
  %3327 = vst [vmem:[%s3325] sm:$0xff] %v3326
  %s3328 = scalar_lea.vmem %s0, 3856
  %v3329 = vld [vmem:[%s3328] sm:$0xf]
  %v3330 = vunpack.c.l.bf16 %v3329
  %v3331 = vunpack.c.h.bf16 %v3329
  %s3332 = scalar_lea.vmem %s1, 16
  %s3333 = scalar_lea.vmem %s0, 2832
  %v3334 = vld [vmem:[%s3333] sm:$0xf]
  %v3335 = vunpack.c.l.bf16 %v3334
  %v3336 = vunpack.c.h.bf16 %v3334
  %s3337 = scalar_lea.vmem %s1, 1040
  %s3338 = scalar_lea.vmem %s0, 1808
  %v3339 = vld [vmem:[%s3338] sm:$0xf]
  %v3340 = vunpack.c.l.bf16 %v3339
  %v3341 = vunpack.c.h.bf16 %v3339
  %s3342 = scalar_lea.vmem %s1, 2064
  %s3343 = scalar_lea.vmem %s0, 784
  %v3344 = vld [vmem:[%s3343] sm:$0xf]
  %v3345 = vunpack.c.l.bf16 %v3344
  %v3346 = vunpack.c.h.bf16 %v3344
  %s3347 = scalar_lea.vmem %s1, 3088
  %s3348 = scalar_lea.vmem %s0, 3600
  %v3349 = vld [vmem:[%s3348] sm:$0xf]
  %v3350 = vunpack.c.l.bf16 %v3349
  %v3351 = vunpack.c.h.bf16 %v3349
  %s3352 = scalar_lea.vmem %s1, 272
  %s3353 = scalar_lea.vmem %s0, 2576
  %v3354 = vld [vmem:[%s3353] sm:$0xf]
  %v3355 = vunpack.c.l.bf16 %v3354
  %v3356 = vunpack.c.h.bf16 %v3354
  %s3357 = scalar_lea.vmem %s1, 1296
  %s3358 = scalar_lea.vmem %s0, 1552
  %v3359 = vld [vmem:[%s3358] sm:$0xf]
  %v3360 = vunpack.c.l.bf16 %v3359
  %v3361 = vunpack.c.h.bf16 %v3359
  %s3362 = scalar_lea.vmem %s1, 2320
  %s3363 = scalar_lea.vmem %s0, 528
  %v3364 = vld [vmem:[%s3363] sm:$0xf]
  %v3365 = vunpack.c.l.bf16 %v3364
  %v3366 = vunpack.c.h.bf16 %v3364
  %s3367 = scalar_lea.vmem %s1, 3344
  %s3368 = scalar_lea.vmem %s0, 3344
  %v3369 = vld [vmem:[%s3368] sm:$0xf]
  %v3370 = vunpack.c.l.bf16 %v3369
  %v3371 = vunpack.c.h.bf16 %v3369
  %s3372 = scalar_lea.vmem %s1, 528
  %s3373 = scalar_lea.vmem %s0, 2320
  %v3374 = vld [vmem:[%s3373] sm:$0xf]
  %v3375 = vunpack.c.l.bf16 %v3374
  %v3376 = vunpack.c.h.bf16 %v3374
  %s3377 = scalar_lea.vmem %s1, 1552
  %s3378 = scalar_lea.vmem %s0, 1296
  %v3379 = vld [vmem:[%s3378] sm:$0xf]
  %v3380 = vunpack.c.l.bf16 %v3379
  %v3381 = vunpack.c.h.bf16 %v3379
  %s3382 = scalar_lea.vmem %s1, 2576
  %s3383 = scalar_lea.vmem %s0, 272
  %v3384 = vld [vmem:[%s3383] sm:$0xf]
  %v3385 = vunpack.c.l.bf16 %v3384
  %v3386 = vunpack.c.h.bf16 %v3384
  %s3387 = scalar_lea.vmem %s1, 3600
  %s3388 = scalar_lea.vmem %s0, 3088
  %v3389 = vld [vmem:[%s3388] sm:$0xf]
  %v3390 = vunpack.c.l.bf16 %v3389
  %v3391 = vunpack.c.h.bf16 %v3389
  %s3392 = scalar_lea.vmem %s1, 784
  %s3393 = scalar_lea.vmem %s0, 2064
  %v3394 = vld [vmem:[%s3393] sm:$0xf]
  %v3395 = vunpack.c.l.bf16 %v3394
  %v3396 = vunpack.c.h.bf16 %v3394
  %s3397 = scalar_lea.vmem %s1, 1808
  %s3398 = scalar_lea.vmem %s0, 1040
  %v3399 = vld [vmem:[%s3398] sm:$0xf]
  %v3400 = vunpack.c.l.bf16 %v3399
  %v3401 = vunpack.c.h.bf16 %v3399
  %s3402 = scalar_lea.vmem %s1, 2832
  %s3403 = scalar_lea.vmem %s0, 16
  %v3404 = vld [vmem:[%s3403] sm:$0xf]
  %v3405 = vunpack.c.l.bf16 %v3404
  %v3406 = vunpack.c.h.bf16 %v3404
  %s3407 = scalar_lea.vmem %s1, 3856
  %s3408 = scalar_lea.vmem %s0, 3888
  %v3409 = vld [vmem:[%s3408] sm:$0xf]
  %v3410 = vunpack.c.l.bf16 %v3409
  %v3411 = vunpack.c.h.bf16 %v3409
  %s3412 = scalar_lea.vmem %s1, 48
  %s3413 = scalar_lea.vmem %s0, 2864
  %v3414 = vld [vmem:[%s3413] sm:$0xf]
  %v3415 = vunpack.c.l.bf16 %v3414
  %v3416 = vunpack.c.h.bf16 %v3414
  %s3417 = scalar_lea.vmem %s1, 1072
  %s3418 = scalar_lea.vmem %s0, 1840
  %v3419 = vld [vmem:[%s3418] sm:$0xf]
  %v3420 = vunpack.c.l.bf16 %v3419
  %v3421 = vunpack.c.h.bf16 %v3419
  %s3422 = scalar_lea.vmem %s1, 2096
  %s3423 = scalar_lea.vmem %s0, 816
  %v3424 = vld [vmem:[%s3423] sm:$0xf]
  %v3425 = vunpack.c.l.bf16 %v3424
  %v3426 = vunpack.c.h.bf16 %v3424
  %s3427 = scalar_lea.vmem %s1, 3120
  %s3428 = scalar_lea.vmem %s0, 3632
  %v3429 = vld [vmem:[%s3428] sm:$0xf]
  %v3430 = vunpack.c.l.bf16 %v3429
  %v3431 = vunpack.c.h.bf16 %v3429
  %s3432 = scalar_lea.vmem %s1, 304
  %s3433 = scalar_lea.vmem %s0, 2608
  %v3434 = vld [vmem:[%s3433] sm:$0xf]
  %v3435 = vunpack.c.l.bf16 %v3434
  %v3436 = vunpack.c.h.bf16 %v3434
  %s3437 = scalar_lea.vmem %s1, 1328
  %s3438 = scalar_lea.vmem %s0, 1584
  %v3439 = vld [vmem:[%s3438] sm:$0xf]
  %v3440 = vunpack.c.l.bf16 %v3439
  %v3441 = vunpack.c.h.bf16 %v3439
  %s3442 = scalar_lea.vmem %s1, 2352
  %s3443 = scalar_lea.vmem %s0, 560
  %v3444 = vld [vmem:[%s3443] sm:$0xf]
  %v3445 = vunpack.c.l.bf16 %v3444
  %v3446 = vunpack.c.h.bf16 %v3444
  %s3447 = scalar_lea.vmem %s1, 3376
  %s3448 = scalar_lea.vmem %s0, 3376
  %v3449 = vld [vmem:[%s3448] sm:$0xf]
  %v3450 = vunpack.c.l.bf16 %v3449
  %v3451 = vunpack.c.h.bf16 %v3449
  %s3452 = scalar_lea.vmem %s1, 560
  %s3453 = scalar_lea.vmem %s0, 2352
  %v3454 = vld [vmem:[%s3453] sm:$0xf]
  %v3455 = vunpack.c.l.bf16 %v3454
  %v3456 = vunpack.c.h.bf16 %v3454
  %s3457 = scalar_lea.vmem %s1, 1584
  %s3458 = scalar_lea.vmem %s0, 1328
  %v3459 = vld [vmem:[%s3458] sm:$0xf]
  %v3460 = vunpack.c.l.bf16 %v3459
  %v3461 = vunpack.c.h.bf16 %v3459
  %s3462 = scalar_lea.vmem %s1, 2608
  %s3463 = scalar_lea.vmem %s0, 304
  %v3464 = vld [vmem:[%s3463] sm:$0xf]
  %v3465 = vunpack.c.l.bf16 %v3464
  %v3466 = vunpack.c.h.bf16 %v3464
  %s3467 = scalar_lea.vmem %s1, 3632
  %s3468 = scalar_lea.vmem %s0, 3120
  %v3469 = vld [vmem:[%s3468] sm:$0xf]
  %v3470 = vunpack.c.l.bf16 %v3469
  %v3471 = vunpack.c.h.bf16 %v3469
  %s3472 = scalar_lea.vmem %s1, 816
  %s3473 = scalar_lea.vmem %s0, 2096
  %v3474 = vld [vmem:[%s3473] sm:$0xf]
  %v3475 = vunpack.c.l.bf16 %v3474
  %v3476 = vunpack.c.h.bf16 %v3474
  %s3477 = scalar_lea.vmem %s1, 1840
  %s3478 = scalar_lea.vmem %s0, 1072
  %v3479 = vld [vmem:[%s3478] sm:$0xf]
  %v3480 = vunpack.c.l.bf16 %v3479
  %v3481 = vunpack.c.h.bf16 %v3479
  %s3482 = scalar_lea.vmem %s1, 2864
  %s3483 = scalar_lea.vmem %s0, 48
  %v3484 = vld [vmem:[%s3483] sm:$0xf]
  %v3485 = vunpack.c.l.bf16 %v3484
  %v3486 = vunpack.c.h.bf16 %v3484
  %s3487 = scalar_lea.vmem %s1, 3888
  %s3488 = scalar_lea.vmem %s0, 3920
  %v3489 = vld [vmem:[%s3488] sm:$0xf]
  %v3490 = vunpack.c.l.bf16 %v3489
  %v3491 = vunpack.c.h.bf16 %v3489
  %s3492 = scalar_lea.vmem %s1, 80
  %s3493 = scalar_lea.vmem %s0, 2896
  %v3494 = vld [vmem:[%s3493] sm:$0xf]
  %v3495 = vunpack.c.l.bf16 %v3494
  %v3496 = vunpack.c.h.bf16 %v3494
  %s3497 = scalar_lea.vmem %s1, 1104
  %s3498 = scalar_lea.vmem %s0, 1872
  %v3499 = vld [vmem:[%s3498] sm:$0xf]
  %v3500 = vunpack.c.l.bf16 %v3499
  %v3501 = vunpack.c.h.bf16 %v3499
  %s3502 = scalar_lea.vmem %s1, 2128
  %s3503 = scalar_lea.vmem %s0, 848
  %v3504 = vld [vmem:[%s3503] sm:$0xf]
  %v3505 = vunpack.c.l.bf16 %v3504
  %v3506 = vunpack.c.h.bf16 %v3504
  %s3507 = scalar_lea.vmem %s1, 3152
  %s3508 = scalar_lea.vmem %s0, 3664
  %v3509 = vld [vmem:[%s3508] sm:$0xf]
  %v3510 = vunpack.c.l.bf16 %v3509
  %v3511 = vunpack.c.h.bf16 %v3509
  %s3512 = scalar_lea.vmem %s1, 336
  %s3513 = scalar_lea.vmem %s0, 2640
  %v3514 = vld [vmem:[%s3513] sm:$0xf]
  %v3515 = vunpack.c.l.bf16 %v3514
  %v3516 = vunpack.c.h.bf16 %v3514
  %s3517 = scalar_lea.vmem %s1, 1360
  %s3518 = scalar_lea.vmem %s0, 1616
  %v3519 = vld [vmem:[%s3518] sm:$0xf]
  %v3520 = vunpack.c.l.bf16 %v3519
  %v3521 = vunpack.c.h.bf16 %v3519
  %s3522 = scalar_lea.vmem %s1, 2384
  %s3523 = scalar_lea.vmem %s0, 592
  %v3524 = vld [vmem:[%s3523] sm:$0xf]
  %v3525 = vunpack.c.l.bf16 %v3524
  %v3526 = vunpack.c.h.bf16 %v3524
  %s3527 = scalar_lea.vmem %s1, 3408
  %s3528 = scalar_lea.vmem %s0, 3408
  %v3529 = vld [vmem:[%s3528] sm:$0xf]
  %v3530 = vunpack.c.l.bf16 %v3529
  %v3531 = vunpack.c.h.bf16 %v3529
  %s3532 = scalar_lea.vmem %s1, 592
  %s3533 = scalar_lea.vmem %s0, 2384
  %v3534 = vld [vmem:[%s3533] sm:$0xf]
  %v3535 = vunpack.c.l.bf16 %v3534
  %v3536 = vunpack.c.h.bf16 %v3534
  %s3537 = scalar_lea.vmem %s1, 1616
  %s3538 = scalar_lea.vmem %s0, 1360
  %v3539 = vld [vmem:[%s3538] sm:$0xf]
  %v3540 = vunpack.c.l.bf16 %v3539
  %v3541 = vunpack.c.h.bf16 %v3539
  %s3542 = scalar_lea.vmem %s1, 2640
  %s3543 = scalar_lea.vmem %s0, 336
  %v3544 = vld [vmem:[%s3543] sm:$0xf]
  %v3545 = vunpack.c.l.bf16 %v3544
  %v3546 = vunpack.c.h.bf16 %v3544
  %s3547 = scalar_lea.vmem %s1, 3664
  %s3548 = scalar_lea.vmem %s0, 3152
  %v3549 = vld [vmem:[%s3548] sm:$0xf]
  %v3550 = vunpack.c.l.bf16 %v3549
  %v3551 = vunpack.c.h.bf16 %v3549
  %s3552 = scalar_lea.vmem %s1, 848
  %s3553 = scalar_lea.vmem %s0, 2128
  %v3554 = vld [vmem:[%s3553] sm:$0xf]
  %v3555 = vunpack.c.l.bf16 %v3554
  %v3556 = vunpack.c.h.bf16 %v3554
  %s3557 = scalar_lea.vmem %s1, 1872
  %s3558 = scalar_lea.vmem %s0, 1104
  %v3559 = vld [vmem:[%s3558] sm:$0xf]
  %v3560 = vunpack.c.l.bf16 %v3559
  %v3561 = vunpack.c.h.bf16 %v3559
  %s3562 = scalar_lea.vmem %s1, 2896
  %s3563 = scalar_lea.vmem %s0, 80
  %v3564 = vld [vmem:[%s3563] sm:$0xf]
  %v3565 = vunpack.c.l.bf16 %v3564
  %v3566 = vunpack.c.h.bf16 %v3564
  %s3567 = scalar_lea.vmem %s1, 3920
  %s3568 = scalar_lea.vmem %s0, 3952
  %v3569 = vld [vmem:[%s3568] sm:$0xf]
  %v3570 = vunpack.c.l.bf16 %v3569
  %v3571 = vunpack.c.h.bf16 %v3569
  %s3572 = scalar_lea.vmem %s1, 112
  %s3573 = scalar_lea.vmem %s0, 2928
  %v3574 = vld [vmem:[%s3573] sm:$0xf]
  %v3575 = vunpack.c.l.bf16 %v3574
  %v3576 = vunpack.c.h.bf16 %v3574
  %s3577 = scalar_lea.vmem %s1, 1136
  %s3578 = scalar_lea.vmem %s0, 1904
  %v3579 = vld [vmem:[%s3578] sm:$0xf]
  %v3580 = vunpack.c.l.bf16 %v3579
  %v3581 = vunpack.c.h.bf16 %v3579
  %s3582 = scalar_lea.vmem %s1, 2160
  %s3583 = scalar_lea.vmem %s0, 880
  %v3584 = vld [vmem:[%s3583] sm:$0xf]
  %v3585 = vunpack.c.l.bf16 %v3584
  %v3586 = vunpack.c.h.bf16 %v3584
  %s3587 = scalar_lea.vmem %s1, 3184
  %s3588 = scalar_lea.vmem %s0, 3696
  %v3589 = vld [vmem:[%s3588] sm:$0xf]
  %v3590 = vunpack.c.l.bf16 %v3589
  %v3591 = vunpack.c.h.bf16 %v3589
  %s3592 = scalar_lea.vmem %s1, 368
  %s3593 = scalar_lea.vmem %s0, 2672
  %v3594 = vld [vmem:[%s3593] sm:$0xf]
  %v3595 = vunpack.c.l.bf16 %v3594
  %v3596 = vunpack.c.h.bf16 %v3594
  %s3597 = scalar_lea.vmem %s1, 1392
  %s3598 = scalar_lea.vmem %s0, 1648
  %v3599 = vld [vmem:[%s3598] sm:$0xf]
  %v3600 = vunpack.c.l.bf16 %v3599
  %v3601 = vunpack.c.h.bf16 %v3599
  %s3602 = scalar_lea.vmem %s1, 2416
  %s3603 = scalar_lea.vmem %s0, 624
  %v3604 = vld [vmem:[%s3603] sm:$0xf]
  %v3605 = vunpack.c.l.bf16 %v3604
  %v3606 = vunpack.c.h.bf16 %v3604
  %s3607 = scalar_lea.vmem %s1, 3440
  %s3608 = scalar_lea.vmem %s0, 3440
  %v3609 = vld [vmem:[%s3608] sm:$0xf]
  %v3610 = vunpack.c.l.bf16 %v3609
  %v3611 = vunpack.c.h.bf16 %v3609
  %s3612 = scalar_lea.vmem %s1, 624
  %s3613 = scalar_lea.vmem %s0, 2416
  %v3614 = vld [vmem:[%s3613] sm:$0xf]
  %v3615 = vunpack.c.l.bf16 %v3614
  %v3616 = vunpack.c.h.bf16 %v3614
  %s3617 = scalar_lea.vmem %s1, 1648
  %s3618 = scalar_lea.vmem %s0, 1392
  %v3619 = vld [vmem:[%s3618] sm:$0xf]
  %v3620 = vunpack.c.l.bf16 %v3619
  %v3621 = vunpack.c.h.bf16 %v3619
  %s3622 = scalar_lea.vmem %s1, 2672
  %s3623 = scalar_lea.vmem %s0, 368
  %v3624 = vld [vmem:[%s3623] sm:$0xf]
  %v3625 = vunpack.c.l.bf16 %v3624
  %v3626 = vunpack.c.h.bf16 %v3624
  %s3627 = scalar_lea.vmem %s1, 3696
  %s3628 = scalar_lea.vmem %s0, 3184
  %v3629 = vld [vmem:[%s3628] sm:$0xf]
  %v3630 = vunpack.c.l.bf16 %v3629
  %v3631 = vunpack.c.h.bf16 %v3629
  %s3632 = scalar_lea.vmem %s1, 880
  %s3633 = scalar_lea.vmem %s0, 2160
  %v3634 = vld [vmem:[%s3633] sm:$0xf]
  %v3635 = vunpack.c.l.bf16 %v3634
  %v3636 = vunpack.c.h.bf16 %v3634
  %s3637 = scalar_lea.vmem %s1, 1904
  %s3638 = scalar_lea.vmem %s0, 1136
  %v3639 = vld [vmem:[%s3638] sm:$0xf]
  %v3640 = vunpack.c.l.bf16 %v3639
  %v3641 = vunpack.c.h.bf16 %v3639
  %s3642 = scalar_lea.vmem %s1, 2928
  %s3643 = scalar_lea.vmem %s0, 112
  %v3644 = vld [vmem:[%s3643] sm:$0xf]
  %v3645 = vunpack.c.l.bf16 %v3644
  %v3646 = vunpack.c.h.bf16 %v3644
  %s3647 = scalar_lea.vmem %s1, 3952
  %s3648 = scalar_lea.vmem %s0, 3984
  %v3649 = vld [vmem:[%s3648] sm:$0xf]
  %v3650 = vunpack.c.l.bf16 %v3649
  %v3651 = vunpack.c.h.bf16 %v3649
  %s3652 = scalar_lea.vmem %s1, 144
  %s3653 = scalar_lea.vmem %s0, 2960
  %v3654 = vld [vmem:[%s3653] sm:$0xf]
  %v3655 = vunpack.c.l.bf16 %v3654
  %v3656 = vunpack.c.h.bf16 %v3654
  %s3657 = scalar_lea.vmem %s1, 1168
  %s3658 = scalar_lea.vmem %s0, 1936
  %v3659 = vld [vmem:[%s3658] sm:$0xf]
  %v3660 = vunpack.c.l.bf16 %v3659
  %v3661 = vunpack.c.h.bf16 %v3659
  %s3662 = scalar_lea.vmem %s1, 2192
  %s3663 = scalar_lea.vmem %s0, 912
  %v3664 = vld [vmem:[%s3663] sm:$0xf]
  %v3665 = vunpack.c.l.bf16 %v3664
  %v3666 = vunpack.c.h.bf16 %v3664
  %s3667 = scalar_lea.vmem %s1, 3216
  %s3668 = scalar_lea.vmem %s0, 3728
  %v3669 = vld [vmem:[%s3668] sm:$0xf]
  %v3670 = vunpack.c.l.bf16 %v3669
  %v3671 = vunpack.c.h.bf16 %v3669
  %s3672 = scalar_lea.vmem %s1, 400
  %s3673 = scalar_lea.vmem %s0, 2704
  %v3674 = vld [vmem:[%s3673] sm:$0xf]
  %v3675 = vunpack.c.l.bf16 %v3674
  %v3676 = vunpack.c.h.bf16 %v3674
  %s3677 = scalar_lea.vmem %s1, 1424
  %s3678 = scalar_lea.vmem %s0, 1680
  %v3679 = vld [vmem:[%s3678] sm:$0xf]
  %v3680 = vunpack.c.l.bf16 %v3679
  %v3681 = vunpack.c.h.bf16 %v3679
  %s3682 = scalar_lea.vmem %s1, 2448
  %s3683 = scalar_lea.vmem %s0, 656
  %v3684 = vld [vmem:[%s3683] sm:$0xf]
  %v3685 = vunpack.c.l.bf16 %v3684
  %v3686 = vunpack.c.h.bf16 %v3684
  %s3687 = scalar_lea.vmem %s1, 3472
  %s3688 = scalar_lea.vmem %s0, 3472
  %v3689 = vld [vmem:[%s3688] sm:$0xf]
  %v3690 = vunpack.c.l.bf16 %v3689
  %v3691 = vunpack.c.h.bf16 %v3689
  %s3692 = scalar_lea.vmem %s1, 656
  %s3693 = scalar_lea.vmem %s0, 2448
  %v3694 = vld [vmem:[%s3693] sm:$0xf]
  %v3695 = vunpack.c.l.bf16 %v3694
  %v3696 = vunpack.c.h.bf16 %v3694
  %s3697 = scalar_lea.vmem %s1, 1680
  %s3698 = scalar_lea.vmem %s0, 1424
  %v3699 = vld [vmem:[%s3698] sm:$0xf]
  %v3700 = vunpack.c.l.bf16 %v3699
  %v3701 = vunpack.c.h.bf16 %v3699
  %s3702 = scalar_lea.vmem %s1, 2704
  %s3703 = scalar_lea.vmem %s0, 400
  %v3704 = vld [vmem:[%s3703] sm:$0xf]
  %v3705 = vunpack.c.l.bf16 %v3704
  %v3706 = vunpack.c.h.bf16 %v3704
  %s3707 = scalar_lea.vmem %s1, 3728
  %s3708 = scalar_lea.vmem %s0, 3216
  %v3709 = vld [vmem:[%s3708] sm:$0xf]
  %v3710 = vunpack.c.l.bf16 %v3709
  %v3711 = vunpack.c.h.bf16 %v3709
  %s3712 = scalar_lea.vmem %s1, 912
  %s3713 = scalar_lea.vmem %s0, 2192
  %v3714 = vld [vmem:[%s3713] sm:$0xf]
  %v3715 = vunpack.c.l.bf16 %v3714
  %v3716 = vunpack.c.h.bf16 %v3714
  %s3717 = scalar_lea.vmem %s1, 1936
  %s3718 = scalar_lea.vmem %s0, 1168
  %v3719 = vld [vmem:[%s3718] sm:$0xf]
  %v3720 = vunpack.c.l.bf16 %v3719
  %v3721 = vunpack.c.h.bf16 %v3719
  %s3722 = scalar_lea.vmem %s1, 2960
  %s3723 = scalar_lea.vmem %s0, 144
  %v3724 = vld [vmem:[%s3723] sm:$0xf]
  %v3725 = vunpack.c.l.bf16 %v3724
  %v3726 = vunpack.c.h.bf16 %v3724
  %s3727 = scalar_lea.vmem %s1, 3984
  %s3728 = scalar_lea.vmem %s0, 4016
  %v3729 = vld [vmem:[%s3728] sm:$0xf]
  %v3730 = vunpack.c.l.bf16 %v3729
  %v3731 = vunpack.c.h.bf16 %v3729
  %s3732 = scalar_lea.vmem %s1, 176
  %s3733 = scalar_lea.vmem %s0, 2992
  %v3734 = vld [vmem:[%s3733] sm:$0xf]
  %v3735 = vunpack.c.l.bf16 %v3734
  %v3736 = vunpack.c.h.bf16 %v3734
  %s3737 = scalar_lea.vmem %s1, 1200
  %s3738 = scalar_lea.vmem %s0, 1968
  %v3739 = vld [vmem:[%s3738] sm:$0xf]
  %v3740 = vunpack.c.l.bf16 %v3739
  %v3741 = vunpack.c.h.bf16 %v3739
  %s3742 = scalar_lea.vmem %s1, 2224
  %s3743 = scalar_lea.vmem %s0, 944
  %v3744 = vld [vmem:[%s3743] sm:$0xf]
  %v3745 = vunpack.c.l.bf16 %v3744
  %v3746 = vunpack.c.h.bf16 %v3744
  %s3747 = scalar_lea.vmem %s1, 3248
  %s3748 = scalar_lea.vmem %s0, 3760
  %v3749 = vld [vmem:[%s3748] sm:$0xf]
  %v3750 = vunpack.c.l.bf16 %v3749
  %v3751 = vunpack.c.h.bf16 %v3749
  %s3752 = scalar_lea.vmem %s1, 432
  %s3753 = scalar_lea.vmem %s0, 2736
  %v3754 = vld [vmem:[%s3753] sm:$0xf]
  %v3755 = vunpack.c.l.bf16 %v3754
  %v3756 = vunpack.c.h.bf16 %v3754
  %s3757 = scalar_lea.vmem %s1, 1456
  %s3758 = scalar_lea.vmem %s0, 1712
  %v3759 = vld [vmem:[%s3758] sm:$0xf]
  %v3760 = vunpack.c.l.bf16 %v3759
  %v3761 = vunpack.c.h.bf16 %v3759
  %s3762 = scalar_lea.vmem %s1, 2480
  %s3763 = scalar_lea.vmem %s0, 688
  %v3764 = vld [vmem:[%s3763] sm:$0xf]
  %v3765 = vunpack.c.l.bf16 %v3764
  %v3766 = vunpack.c.h.bf16 %v3764
  %s3767 = scalar_lea.vmem %s1, 3504
  %s3768 = scalar_lea.vmem %s0, 3504
  %v3769 = vld [vmem:[%s3768] sm:$0xf]
  %v3770 = vunpack.c.l.bf16 %v3769
  %v3771 = vunpack.c.h.bf16 %v3769
  %s3772 = scalar_lea.vmem %s1, 688
  %s3773 = scalar_lea.vmem %s0, 2480
  %v3774 = vld [vmem:[%s3773] sm:$0xf]
  %v3775 = vunpack.c.l.bf16 %v3774
  %v3776 = vunpack.c.h.bf16 %v3774
  %s3777 = scalar_lea.vmem %s1, 1712
  %s3778 = scalar_lea.vmem %s0, 1456
  %v3779 = vld [vmem:[%s3778] sm:$0xf]
  %v3780 = vunpack.c.l.bf16 %v3779
  %v3781 = vunpack.c.h.bf16 %v3779
  %s3782 = scalar_lea.vmem %s1, 2736
  %s3783 = scalar_lea.vmem %s0, 432
  %v3784 = vld [vmem:[%s3783] sm:$0xf]
  %v3785 = vunpack.c.l.bf16 %v3784
  %v3786 = vunpack.c.h.bf16 %v3784
  %s3787 = scalar_lea.vmem %s1, 3760
  %s3788 = scalar_lea.vmem %s0, 3248
  %v3789 = vld [vmem:[%s3788] sm:$0xf]
  %v3790 = vunpack.c.l.bf16 %v3789
  %v3791 = vunpack.c.h.bf16 %v3789
  %s3792 = scalar_lea.vmem %s1, 944
  %s3793 = scalar_lea.vmem %s0, 2224
  %v3794 = vld [vmem:[%s3793] sm:$0xf]
  %v3795 = vunpack.c.l.bf16 %v3794
  %v3796 = vunpack.c.h.bf16 %v3794
  %s3797 = scalar_lea.vmem %s1, 1968
  %s3798 = scalar_lea.vmem %s0, 1200
  %v3799 = vld [vmem:[%s3798] sm:$0xf]
  %v3800 = vunpack.c.l.bf16 %v3799
  %v3801 = vunpack.c.h.bf16 %v3799
  %s3802 = scalar_lea.vmem %s1, 2992
  %s3803 = scalar_lea.vmem %s0, 176
  %v3804 = vld [vmem:[%s3803] sm:$0xf]
  %v3805 = vunpack.c.l.bf16 %v3804
  %v3806 = vunpack.c.h.bf16 %v3804
  %s3807 = scalar_lea.vmem %s1, 4016
  %s3808 = scalar_lea.vmem %s0, 4048
  %v3809 = vld [vmem:[%s3808] sm:$0xf]
  %v3810 = vunpack.c.l.bf16 %v3809
  %v3811 = vunpack.c.h.bf16 %v3809
  %s3812 = scalar_lea.vmem %s1, 208
  %s3813 = scalar_lea.vmem %s0, 3024
  %v3814 = vld [vmem:[%s3813] sm:$0xf]
  %v3815 = vunpack.c.l.bf16 %v3814
  %v3816 = vunpack.c.h.bf16 %v3814
  %s3817 = scalar_lea.vmem %s1, 1232
  %s3818 = scalar_lea.vmem %s0, 2000
  %v3819 = vld [vmem:[%s3818] sm:$0xf]
  %v3820 = vunpack.c.l.bf16 %v3819
  %v3821 = vunpack.c.h.bf16 %v3819
  %s3822 = scalar_lea.vmem %s1, 2256
  %s3823 = scalar_lea.vmem %s0, 976
  %v3824 = vld [vmem:[%s3823] sm:$0xf]
  %v3825 = vunpack.c.l.bf16 %v3824
  %v3826 = vunpack.c.h.bf16 %v3824
  %s3827 = scalar_lea.vmem %s1, 3280
  %s3828 = scalar_lea.vmem %s0, 3792
  %v3829 = vld [vmem:[%s3828] sm:$0xf]
  %v3830 = vunpack.c.l.bf16 %v3829
  %v3831 = vunpack.c.h.bf16 %v3829
  %s3832 = scalar_lea.vmem %s1, 464
  %s3833 = scalar_lea.vmem %s0, 2768
  %v3834 = vld [vmem:[%s3833] sm:$0xf]
  %v3835 = vunpack.c.l.bf16 %v3834
  %v3836 = vunpack.c.h.bf16 %v3834
  %s3837 = scalar_lea.vmem %s1, 1488
  %s3838 = scalar_lea.vmem %s0, 1744
  %v3839 = vld [vmem:[%s3838] sm:$0xf]
  %v3840 = vunpack.c.l.bf16 %v3839
  %v3841 = vunpack.c.h.bf16 %v3839
  %s3842 = scalar_lea.vmem %s1, 2512
  %s3843 = scalar_lea.vmem %s0, 720
  %v3844 = vld [vmem:[%s3843] sm:$0xf]
  %v3845 = vunpack.c.l.bf16 %v3844
  %v3846 = vunpack.c.h.bf16 %v3844
  %s3847 = scalar_lea.vmem %s1, 3536
  %s3848 = scalar_lea.vmem %s0, 3536
  %v3849 = vld [vmem:[%s3848] sm:$0xf]
  %v3850 = vunpack.c.l.bf16 %v3849
  %v3851 = vunpack.c.h.bf16 %v3849
  %s3852 = scalar_lea.vmem %s1, 720
  %s3853 = scalar_lea.vmem %s0, 2512
  %v3854 = vld [vmem:[%s3853] sm:$0xf]
  %v3855 = vunpack.c.l.bf16 %v3854
  %v3856 = vunpack.c.h.bf16 %v3854
  %s3857 = scalar_lea.vmem %s1, 1744
  %s3858 = scalar_lea.vmem %s0, 1488
  %v3859 = vld [vmem:[%s3858] sm:$0xf]
  %v3860 = vunpack.c.l.bf16 %v3859
  %v3861 = vunpack.c.h.bf16 %v3859
  %s3862 = scalar_lea.vmem %s1, 2768
  %s3863 = scalar_lea.vmem %s0, 464
  %v3864 = vld [vmem:[%s3863] sm:$0xf]
  %v3865 = vunpack.c.l.bf16 %v3864
  %v3866 = vunpack.c.h.bf16 %v3864
  %s3867 = scalar_lea.vmem %s1, 3792
  %s3868 = scalar_lea.vmem %s0, 3280
  %v3869 = vld [vmem:[%s3868] sm:$0xf]
  %v3870 = vunpack.c.l.bf16 %v3869
  %v3871 = vunpack.c.h.bf16 %v3869
  %s3872 = scalar_lea.vmem %s1, 976
  %s3873 = scalar_lea.vmem %s0, 2256
  %v3874 = vld [vmem:[%s3873] sm:$0xf]
  %v3875 = vunpack.c.l.bf16 %v3874
  %v3876 = vunpack.c.h.bf16 %v3874
  %s3877 = scalar_lea.vmem %s1, 2000
  %s3878 = scalar_lea.vmem %s0, 1232
  %v3879 = vld [vmem:[%s3878] sm:$0xf]
  %v3880 = vunpack.c.l.bf16 %v3879
  %v3881 = vunpack.c.h.bf16 %v3879
  %s3882 = scalar_lea.vmem %s1, 3024
  %s3883 = scalar_lea.vmem %s0, 208
  %v3884 = vld [vmem:[%s3883] sm:$0xf]
  %v3885 = vunpack.c.l.bf16 %v3884
  %v3886 = vunpack.c.h.bf16 %v3884
  %s3887 = scalar_lea.vmem %s1, 4048
  %s3888 = scalar_lea.vmem %s0, 4080
  %v3889 = vld [vmem:[%s3888] sm:$0xf]
  %v3890 = vunpack.c.l.bf16 %v3889
  %v3891 = vunpack.c.h.bf16 %v3889
  %s3892 = scalar_lea.vmem %s1, 240
  %s3893 = scalar_lea.vmem %s0, 3056
  %v3894 = vld [vmem:[%s3893] sm:$0xf]
  %v3895 = vunpack.c.l.bf16 %v3894
  %v3896 = vunpack.c.h.bf16 %v3894
  %s3897 = scalar_lea.vmem %s1, 1264
  %s3898 = scalar_lea.vmem %s0, 2032
  %v3899 = vld [vmem:[%s3898] sm:$0xf]
  %v3900 = vunpack.c.l.bf16 %v3899
  %v3901 = vunpack.c.h.bf16 %v3899
  %s3902 = scalar_lea.vmem %s1, 2288
  %s3903 = scalar_lea.vmem %s0, 1008
  %v3904 = vld [vmem:[%s3903] sm:$0xf]
  %v3905 = vunpack.c.l.bf16 %v3904
  %v3906 = vunpack.c.h.bf16 %v3904
  %s3907 = scalar_lea.vmem %s1, 3312
  %s3908 = scalar_lea.vmem %s0, 3824
  %v3909 = vld [vmem:[%s3908] sm:$0xf]
  %v3910 = vunpack.c.l.bf16 %v3909
  %v3911 = vunpack.c.h.bf16 %v3909
  %s3912 = scalar_lea.vmem %s1, 496
  %s3913 = scalar_lea.vmem %s0, 2800
  %v3914 = vld [vmem:[%s3913] sm:$0xf]
  %v3915 = vunpack.c.l.bf16 %v3914
  %v3916 = vunpack.c.h.bf16 %v3914
  %s3917 = scalar_lea.vmem %s1, 1520
  %s3918 = scalar_lea.vmem %s0, 1776
  %v3919 = vld [vmem:[%s3918] sm:$0xf]
  %v3920 = vunpack.c.l.bf16 %v3919
  %v3921 = vunpack.c.h.bf16 %v3919
  %s3922 = scalar_lea.vmem %s1, 2544
  %s3923 = scalar_lea.vmem %s0, 752
  %v3924 = vld [vmem:[%s3923] sm:$0xf]
  %v3925 = vunpack.c.l.bf16 %v3924
  %v3926 = vunpack.c.h.bf16 %v3924
  %s3927 = scalar_lea.vmem %s1, 3568
  %s3928 = scalar_lea.vmem %s0, 3568
  %v3929 = vld [vmem:[%s3928] sm:$0xf]
  %v3930 = vunpack.c.l.bf16 %v3929
  %v3931 = vunpack.c.h.bf16 %v3929
  %s3932 = scalar_lea.vmem %s1, 752
  %s3933 = scalar_lea.vmem %s0, 2544
  %v3934 = vld [vmem:[%s3933] sm:$0xf]
  %v3935 = vunpack.c.l.bf16 %v3934
  %v3936 = vunpack.c.h.bf16 %v3934
  %s3937 = scalar_lea.vmem %s1, 1776
  %s3938 = scalar_lea.vmem %s0, 1520
  %v3939 = vld [vmem:[%s3938] sm:$0xf]
  %v3940 = vunpack.c.l.bf16 %v3939
  %v3941 = vunpack.c.h.bf16 %v3939
  %s3942 = scalar_lea.vmem %s1, 2800
  %s3943 = scalar_lea.vmem %s0, 496
  %v3944 = vld [vmem:[%s3943] sm:$0xf]
  %v3945 = vunpack.c.l.bf16 %v3944
  %v3946 = vunpack.c.h.bf16 %v3944
  %s3947 = scalar_lea.vmem %s1, 3824
  %s3948 = scalar_lea.vmem %s0, 3312
  %v3949 = vld [vmem:[%s3948] sm:$0xf]
  %v3950 = vunpack.c.l.bf16 %v3949
  %v3951 = vunpack.c.h.bf16 %v3949
  %s3952 = scalar_lea.vmem %s1, 1008
  %s3953 = scalar_lea.vmem %s0, 2288
  %v3954 = vld [vmem:[%s3953] sm:$0xf]
  %v3955 = vunpack.c.l.bf16 %v3954
  %v3956 = vunpack.c.h.bf16 %v3954
  %s3957 = scalar_lea.vmem %s1, 2032
  %s3958 = scalar_lea.vmem %s0, 1264
  %v3959 = vld [vmem:[%s3958] sm:$0xf]
  %v3960 = vunpack.c.l.bf16 %v3959
  %v3961 = vunpack.c.h.bf16 %v3959
  %s3962 = scalar_lea.vmem %s1, 3056
  %s3963 = scalar_lea.vmem %s0, 240
  %v3964 = vld [vmem:[%s3963] sm:$0xf]
  %v3965 = vunpack.c.l.bf16 %v3964
  %v3966 = vunpack.c.h.bf16 %v3964
  %s3967 = scalar_lea.vmem %s1, 4080
  %s3968 = scalar_lea.vmem %s0, 3860
  %v3969 = vld [vmem:[%s3968] sm:$0xf]
  %v3970 = vunpack.c.l.bf16 %v3969
  %v3971 = vunpack.c.h.bf16 %v3969
  %s3972 = scalar_lea.vmem %s1, 20
  %s3973 = scalar_lea.vmem %s3972, 4294967292
  %v3974 = vpack.c.bf16 %v3970, %v3330
  %3975 = vst [vmem:[%s3973] sm:$0xff] %v3974
  %s3976 = scalar_lea.vmem %s0, 2836
  %v3977 = vld [vmem:[%s3976] sm:$0xf]
  %v3978 = vunpack.c.l.bf16 %v3977
  %v3979 = vunpack.c.h.bf16 %v3977
  %s3980 = scalar_lea.vmem %s1, 1044
  %s3981 = scalar_lea.vmem %s3980, 4294967292
  %v3982 = vpack.c.bf16 %v3978, %v3335
  %3983 = vst [vmem:[%s3981] sm:$0xff] %v3982
  %s3984 = scalar_lea.vmem %s0, 1812
  %v3985 = vld [vmem:[%s3984] sm:$0xf]
  %v3986 = vunpack.c.l.bf16 %v3985
  %v3987 = vunpack.c.h.bf16 %v3985
  %s3988 = scalar_lea.vmem %s1, 2068
  %s3989 = scalar_lea.vmem %s3988, 4294967292
  %v3990 = vpack.c.bf16 %v3986, %v3340
  %3991 = vst [vmem:[%s3989] sm:$0xff] %v3990
  %s3992 = scalar_lea.vmem %s0, 788
  %v3993 = vld [vmem:[%s3992] sm:$0xf]
  %v3994 = vunpack.c.l.bf16 %v3993
  %v3995 = vunpack.c.h.bf16 %v3993
  %s3996 = scalar_lea.vmem %s1, 3092
  %s3997 = scalar_lea.vmem %s3996, 4294967292
  %v3998 = vpack.c.bf16 %v3994, %v3345
  %3999 = vst [vmem:[%s3997] sm:$0xff] %v3998
  %s4000 = scalar_lea.vmem %s0, 3604
  %v4001 = vld [vmem:[%s4000] sm:$0xf]
  %v4002 = vunpack.c.l.bf16 %v4001
  %v4003 = vunpack.c.h.bf16 %v4001
  %s4004 = scalar_lea.vmem %s1, 276
  %s4005 = scalar_lea.vmem %s4004, 4294967292
  %v4006 = vpack.c.bf16 %v4002, %v3350
  %4007 = vst [vmem:[%s4005] sm:$0xff] %v4006
  %s4008 = scalar_lea.vmem %s0, 2580
  %v4009 = vld [vmem:[%s4008] sm:$0xf]
  %v4010 = vunpack.c.l.bf16 %v4009
  %v4011 = vunpack.c.h.bf16 %v4009
  %s4012 = scalar_lea.vmem %s1, 1300
  %s4013 = scalar_lea.vmem %s4012, 4294967292
  %v4014 = vpack.c.bf16 %v4010, %v3355
  %4015 = vst [vmem:[%s4013] sm:$0xff] %v4014
  %s4016 = scalar_lea.vmem %s0, 1556
  %v4017 = vld [vmem:[%s4016] sm:$0xf]
  %v4018 = vunpack.c.l.bf16 %v4017
  %v4019 = vunpack.c.h.bf16 %v4017
  %s4020 = scalar_lea.vmem %s1, 2324
  %s4021 = scalar_lea.vmem %s4020, 4294967292
  %v4022 = vpack.c.bf16 %v4018, %v3360
  %4023 = vst [vmem:[%s4021] sm:$0xff] %v4022
  %s4024 = scalar_lea.vmem %s0, 532
  %v4025 = vld [vmem:[%s4024] sm:$0xf]
  %v4026 = vunpack.c.l.bf16 %v4025
  %v4027 = vunpack.c.h.bf16 %v4025
  %s4028 = scalar_lea.vmem %s1, 3348
  %s4029 = scalar_lea.vmem %s4028, 4294967292
  %v4030 = vpack.c.bf16 %v4026, %v3365
  %4031 = vst [vmem:[%s4029] sm:$0xff] %v4030
  %s4032 = scalar_lea.vmem %s0, 3348
  %v4033 = vld [vmem:[%s4032] sm:$0xf]
  %v4034 = vunpack.c.l.bf16 %v4033
  %v4035 = vunpack.c.h.bf16 %v4033
  %s4036 = scalar_lea.vmem %s1, 532
  %s4037 = scalar_lea.vmem %s4036, 4294967292
  %v4038 = vpack.c.bf16 %v4034, %v3370
  %4039 = vst [vmem:[%s4037] sm:$0xff] %v4038
  %s4040 = scalar_lea.vmem %s0, 2324
  %v4041 = vld [vmem:[%s4040] sm:$0xf]
  %v4042 = vunpack.c.l.bf16 %v4041
  %v4043 = vunpack.c.h.bf16 %v4041
  %s4044 = scalar_lea.vmem %s1, 1556
  %s4045 = scalar_lea.vmem %s4044, 4294967292
  %v4046 = vpack.c.bf16 %v4042, %v3375
  %4047 = vst [vmem:[%s4045] sm:$0xff] %v4046
  %s4048 = scalar_lea.vmem %s0, 1300
  %v4049 = vld [vmem:[%s4048] sm:$0xf]
  %v4050 = vunpack.c.l.bf16 %v4049
  %v4051 = vunpack.c.h.bf16 %v4049
  %s4052 = scalar_lea.vmem %s1, 2580
  %s4053 = scalar_lea.vmem %s4052, 4294967292
  %v4054 = vpack.c.bf16 %v4050, %v3380
  %4055 = vst [vmem:[%s4053] sm:$0xff] %v4054
  %s4056 = scalar_lea.vmem %s0, 276
  %v4057 = vld [vmem:[%s4056] sm:$0xf]
  %v4058 = vunpack.c.l.bf16 %v4057
  %v4059 = vunpack.c.h.bf16 %v4057
  %s4060 = scalar_lea.vmem %s1, 3604
  %s4061 = scalar_lea.vmem %s4060, 4294967292
  %v4062 = vpack.c.bf16 %v4058, %v3385
  %4063 = vst [vmem:[%s4061] sm:$0xff] %v4062
  %s4064 = scalar_lea.vmem %s0, 3092
  %v4065 = vld [vmem:[%s4064] sm:$0xf]
  %v4066 = vunpack.c.l.bf16 %v4065
  %v4067 = vunpack.c.h.bf16 %v4065
  %s4068 = scalar_lea.vmem %s1, 788
  %s4069 = scalar_lea.vmem %s4068, 4294967292
  %v4070 = vpack.c.bf16 %v4066, %v3390
  %4071 = vst [vmem:[%s4069] sm:$0xff] %v4070
  %s4072 = scalar_lea.vmem %s0, 2068
  %v4073 = vld [vmem:[%s4072] sm:$0xf]
  %v4074 = vunpack.c.l.bf16 %v4073
  %v4075 = vunpack.c.h.bf16 %v4073
  %s4076 = scalar_lea.vmem %s1, 1812
  %s4077 = scalar_lea.vmem %s4076, 4294967292
  %v4078 = vpack.c.bf16 %v4074, %v3395
  %4079 = vst [vmem:[%s4077] sm:$0xff] %v4078
  %s4080 = scalar_lea.vmem %s0, 1044
  %v4081 = vld [vmem:[%s4080] sm:$0xf]
  %v4082 = vunpack.c.l.bf16 %v4081
  %v4083 = vunpack.c.h.bf16 %v4081
  %s4084 = scalar_lea.vmem %s1, 2836
  %s4085 = scalar_lea.vmem %s4084, 4294967292
  %v4086 = vpack.c.bf16 %v4082, %v3400
  %4087 = vst [vmem:[%s4085] sm:$0xff] %v4086
  %s4088 = scalar_lea.vmem %s0, 20
  %v4089 = vld [vmem:[%s4088] sm:$0xf]
  %v4090 = vunpack.c.l.bf16 %v4089
  %v4091 = vunpack.c.h.bf16 %v4089
  %s4092 = scalar_lea.vmem %s1, 3860
  %s4093 = scalar_lea.vmem %s4092, 4294967292
  %v4094 = vpack.c.bf16 %v4090, %v3405
  %4095 = vst [vmem:[%s4093] sm:$0xff] %v4094
  %s4096 = scalar_lea.vmem %s0, 3892
  %v4097 = vld [vmem:[%s4096] sm:$0xf]
  %v4098 = vunpack.c.l.bf16 %v4097
  %v4099 = vunpack.c.h.bf16 %v4097
  %s4100 = scalar_lea.vmem %s1, 52
  %s4101 = scalar_lea.vmem %s4100, 4294967292
  %v4102 = vpack.c.bf16 %v4098, %v3410
  %4103 = vst [vmem:[%s4101] sm:$0xff] %v4102
  %s4104 = scalar_lea.vmem %s0, 2868
  %v4105 = vld [vmem:[%s4104] sm:$0xf]
  %v4106 = vunpack.c.l.bf16 %v4105
  %v4107 = vunpack.c.h.bf16 %v4105
  %s4108 = scalar_lea.vmem %s1, 1076
  %s4109 = scalar_lea.vmem %s4108, 4294967292
  %v4110 = vpack.c.bf16 %v4106, %v3415
  %4111 = vst [vmem:[%s4109] sm:$0xff] %v4110
  %s4112 = scalar_lea.vmem %s0, 1844
  %v4113 = vld [vmem:[%s4112] sm:$0xf]
  %v4114 = vunpack.c.l.bf16 %v4113
  %v4115 = vunpack.c.h.bf16 %v4113
  %s4116 = scalar_lea.vmem %s1, 2100
  %s4117 = scalar_lea.vmem %s4116, 4294967292
  %v4118 = vpack.c.bf16 %v4114, %v3420
  %4119 = vst [vmem:[%s4117] sm:$0xff] %v4118
  %s4120 = scalar_lea.vmem %s0, 820
  %v4121 = vld [vmem:[%s4120] sm:$0xf]
  %v4122 = vunpack.c.l.bf16 %v4121
  %v4123 = vunpack.c.h.bf16 %v4121
  %s4124 = scalar_lea.vmem %s1, 3124
  %s4125 = scalar_lea.vmem %s4124, 4294967292
  %v4126 = vpack.c.bf16 %v4122, %v3425
  %4127 = vst [vmem:[%s4125] sm:$0xff] %v4126
  %s4128 = scalar_lea.vmem %s0, 3636
  %v4129 = vld [vmem:[%s4128] sm:$0xf]
  %v4130 = vunpack.c.l.bf16 %v4129
  %v4131 = vunpack.c.h.bf16 %v4129
  %s4132 = scalar_lea.vmem %s1, 308
  %s4133 = scalar_lea.vmem %s4132, 4294967292
  %v4134 = vpack.c.bf16 %v4130, %v3430
  %4135 = vst [vmem:[%s4133] sm:$0xff] %v4134
  %s4136 = scalar_lea.vmem %s0, 2612
  %v4137 = vld [vmem:[%s4136] sm:$0xf]
  %v4138 = vunpack.c.l.bf16 %v4137
  %v4139 = vunpack.c.h.bf16 %v4137
  %s4140 = scalar_lea.vmem %s1, 1332
  %s4141 = scalar_lea.vmem %s4140, 4294967292
  %v4142 = vpack.c.bf16 %v4138, %v3435
  %4143 = vst [vmem:[%s4141] sm:$0xff] %v4142
  %s4144 = scalar_lea.vmem %s0, 1588
  %v4145 = vld [vmem:[%s4144] sm:$0xf]
  %v4146 = vunpack.c.l.bf16 %v4145
  %v4147 = vunpack.c.h.bf16 %v4145
  %s4148 = scalar_lea.vmem %s1, 2356
  %s4149 = scalar_lea.vmem %s4148, 4294967292
  %v4150 = vpack.c.bf16 %v4146, %v3440
  %4151 = vst [vmem:[%s4149] sm:$0xff] %v4150
  %s4152 = scalar_lea.vmem %s0, 564
  %v4153 = vld [vmem:[%s4152] sm:$0xf]
  %v4154 = vunpack.c.l.bf16 %v4153
  %v4155 = vunpack.c.h.bf16 %v4153
  %s4156 = scalar_lea.vmem %s1, 3380
  %s4157 = scalar_lea.vmem %s4156, 4294967292
  %v4158 = vpack.c.bf16 %v4154, %v3445
  %4159 = vst [vmem:[%s4157] sm:$0xff] %v4158
  %s4160 = scalar_lea.vmem %s0, 3380
  %v4161 = vld [vmem:[%s4160] sm:$0xf]
  %v4162 = vunpack.c.l.bf16 %v4161
  %v4163 = vunpack.c.h.bf16 %v4161
  %s4164 = scalar_lea.vmem %s1, 564
  %s4165 = scalar_lea.vmem %s4164, 4294967292
  %v4166 = vpack.c.bf16 %v4162, %v3450
  %4167 = vst [vmem:[%s4165] sm:$0xff] %v4166
  %s4168 = scalar_lea.vmem %s0, 2356
  %v4169 = vld [vmem:[%s4168] sm:$0xf]
  %v4170 = vunpack.c.l.bf16 %v4169
  %v4171 = vunpack.c.h.bf16 %v4169
  %s4172 = scalar_lea.vmem %s1, 1588
  %s4173 = scalar_lea.vmem %s4172, 4294967292
  %v4174 = vpack.c.bf16 %v4170, %v3455
  %4175 = vst [vmem:[%s4173] sm:$0xff] %v4174
  %s4176 = scalar_lea.vmem %s0, 1332
  %v4177 = vld [vmem:[%s4176] sm:$0xf]
  %v4178 = vunpack.c.l.bf16 %v4177
  %v4179 = vunpack.c.h.bf16 %v4177
  %s4180 = scalar_lea.vmem %s1, 2612
  %s4181 = scalar_lea.vmem %s4180, 4294967292
  %v4182 = vpack.c.bf16 %v4178, %v3460
  %4183 = vst [vmem:[%s4181] sm:$0xff] %v4182
  %s4184 = scalar_lea.vmem %s0, 308
  %v4185 = vld [vmem:[%s4184] sm:$0xf]
  %v4186 = vunpack.c.l.bf16 %v4185
  %v4187 = vunpack.c.h.bf16 %v4185
  %s4188 = scalar_lea.vmem %s1, 3636
  %s4189 = scalar_lea.vmem %s4188, 4294967292
  %v4190 = vpack.c.bf16 %v4186, %v3465
  %4191 = vst [vmem:[%s4189] sm:$0xff] %v4190
  %s4192 = scalar_lea.vmem %s0, 3124
  %v4193 = vld [vmem:[%s4192] sm:$0xf]
  %v4194 = vunpack.c.l.bf16 %v4193
  %v4195 = vunpack.c.h.bf16 %v4193
  %s4196 = scalar_lea.vmem %s1, 820
  %s4197 = scalar_lea.vmem %s4196, 4294967292
  %v4198 = vpack.c.bf16 %v4194, %v3470
  %4199 = vst [vmem:[%s4197] sm:$0xff] %v4198
  %s4200 = scalar_lea.vmem %s0, 2100
  %v4201 = vld [vmem:[%s4200] sm:$0xf]
  %v4202 = vunpack.c.l.bf16 %v4201
  %v4203 = vunpack.c.h.bf16 %v4201
  %s4204 = scalar_lea.vmem %s1, 1844
  %s4205 = scalar_lea.vmem %s4204, 4294967292
  %v4206 = vpack.c.bf16 %v4202, %v3475
  %4207 = vst [vmem:[%s4205] sm:$0xff] %v4206
  %s4208 = scalar_lea.vmem %s0, 1076
  %v4209 = vld [vmem:[%s4208] sm:$0xf]
  %v4210 = vunpack.c.l.bf16 %v4209
  %v4211 = vunpack.c.h.bf16 %v4209
  %s4212 = scalar_lea.vmem %s1, 2868
  %s4213 = scalar_lea.vmem %s4212, 4294967292
  %v4214 = vpack.c.bf16 %v4210, %v3480
  %4215 = vst [vmem:[%s4213] sm:$0xff] %v4214
  %s4216 = scalar_lea.vmem %s0, 52
  %v4217 = vld [vmem:[%s4216] sm:$0xf]
  %v4218 = vunpack.c.l.bf16 %v4217
  %v4219 = vunpack.c.h.bf16 %v4217
  %s4220 = scalar_lea.vmem %s1, 3892
  %s4221 = scalar_lea.vmem %s4220, 4294967292
  %v4222 = vpack.c.bf16 %v4218, %v3485
  %4223 = vst [vmem:[%s4221] sm:$0xff] %v4222
  %s4224 = scalar_lea.vmem %s0, 3924
  %v4225 = vld [vmem:[%s4224] sm:$0xf]
  %v4226 = vunpack.c.l.bf16 %v4225
  %v4227 = vunpack.c.h.bf16 %v4225
  %s4228 = scalar_lea.vmem %s1, 84
  %s4229 = scalar_lea.vmem %s4228, 4294967292
  %v4230 = vpack.c.bf16 %v4226, %v3490
  %4231 = vst [vmem:[%s4229] sm:$0xff] %v4230
  %s4232 = scalar_lea.vmem %s0, 2900
  %v4233 = vld [vmem:[%s4232] sm:$0xf]
  %v4234 = vunpack.c.l.bf16 %v4233
  %v4235 = vunpack.c.h.bf16 %v4233
  %s4236 = scalar_lea.vmem %s1, 1108
  %s4237 = scalar_lea.vmem %s4236, 4294967292
  %v4238 = vpack.c.bf16 %v4234, %v3495
  %4239 = vst [vmem:[%s4237] sm:$0xff] %v4238
  %s4240 = scalar_lea.vmem %s0, 1876
  %v4241 = vld [vmem:[%s4240] sm:$0xf]
  %v4242 = vunpack.c.l.bf16 %v4241
  %v4243 = vunpack.c.h.bf16 %v4241
  %s4244 = scalar_lea.vmem %s1, 2132
  %s4245 = scalar_lea.vmem %s4244, 4294967292
  %v4246 = vpack.c.bf16 %v4242, %v3500
  %4247 = vst [vmem:[%s4245] sm:$0xff] %v4246
  %s4248 = scalar_lea.vmem %s0, 852
  %v4249 = vld [vmem:[%s4248] sm:$0xf]
  %v4250 = vunpack.c.l.bf16 %v4249
  %v4251 = vunpack.c.h.bf16 %v4249
  %s4252 = scalar_lea.vmem %s1, 3156
  %s4253 = scalar_lea.vmem %s4252, 4294967292
  %v4254 = vpack.c.bf16 %v4250, %v3505
  %4255 = vst [vmem:[%s4253] sm:$0xff] %v4254
  %s4256 = scalar_lea.vmem %s0, 3668
  %v4257 = vld [vmem:[%s4256] sm:$0xf]
  %v4258 = vunpack.c.l.bf16 %v4257
  %v4259 = vunpack.c.h.bf16 %v4257
  %s4260 = scalar_lea.vmem %s1, 340
  %s4261 = scalar_lea.vmem %s4260, 4294967292
  %v4262 = vpack.c.bf16 %v4258, %v3510
  %4263 = vst [vmem:[%s4261] sm:$0xff] %v4262
  %s4264 = scalar_lea.vmem %s0, 2644
  %v4265 = vld [vmem:[%s4264] sm:$0xf]
  %v4266 = vunpack.c.l.bf16 %v4265
  %v4267 = vunpack.c.h.bf16 %v4265
  %s4268 = scalar_lea.vmem %s1, 1364
  %s4269 = scalar_lea.vmem %s4268, 4294967292
  %v4270 = vpack.c.bf16 %v4266, %v3515
  %4271 = vst [vmem:[%s4269] sm:$0xff] %v4270
  %s4272 = scalar_lea.vmem %s0, 1620
  %v4273 = vld [vmem:[%s4272] sm:$0xf]
  %v4274 = vunpack.c.l.bf16 %v4273
  %v4275 = vunpack.c.h.bf16 %v4273
  %s4276 = scalar_lea.vmem %s1, 2388
  %s4277 = scalar_lea.vmem %s4276, 4294967292
  %v4278 = vpack.c.bf16 %v4274, %v3520
  %4279 = vst [vmem:[%s4277] sm:$0xff] %v4278
  %s4280 = scalar_lea.vmem %s0, 596
  %v4281 = vld [vmem:[%s4280] sm:$0xf]
  %v4282 = vunpack.c.l.bf16 %v4281
  %v4283 = vunpack.c.h.bf16 %v4281
  %s4284 = scalar_lea.vmem %s1, 3412
  %s4285 = scalar_lea.vmem %s4284, 4294967292
  %v4286 = vpack.c.bf16 %v4282, %v3525
  %4287 = vst [vmem:[%s4285] sm:$0xff] %v4286
  %s4288 = scalar_lea.vmem %s0, 3412
  %v4289 = vld [vmem:[%s4288] sm:$0xf]
  %v4290 = vunpack.c.l.bf16 %v4289
  %v4291 = vunpack.c.h.bf16 %v4289
  %s4292 = scalar_lea.vmem %s1, 596
  %s4293 = scalar_lea.vmem %s4292, 4294967292
  %v4294 = vpack.c.bf16 %v4290, %v3530
  %4295 = vst [vmem:[%s4293] sm:$0xff] %v4294
  %s4296 = scalar_lea.vmem %s0, 2388
  %v4297 = vld [vmem:[%s4296] sm:$0xf]
  %v4298 = vunpack.c.l.bf16 %v4297
  %v4299 = vunpack.c.h.bf16 %v4297
  %s4300 = scalar_lea.vmem %s1, 1620
  %s4301 = scalar_lea.vmem %s4300, 4294967292
  %v4302 = vpack.c.bf16 %v4298, %v3535
  %4303 = vst [vmem:[%s4301] sm:$0xff] %v4302
  %s4304 = scalar_lea.vmem %s0, 1364
  %v4305 = vld [vmem:[%s4304] sm:$0xf]
  %v4306 = vunpack.c.l.bf16 %v4305
  %v4307 = vunpack.c.h.bf16 %v4305
  %s4308 = scalar_lea.vmem %s1, 2644
  %s4309 = scalar_lea.vmem %s4308, 4294967292
  %v4310 = vpack.c.bf16 %v4306, %v3540
  %4311 = vst [vmem:[%s4309] sm:$0xff] %v4310
  %s4312 = scalar_lea.vmem %s0, 340
  %v4313 = vld [vmem:[%s4312] sm:$0xf]
  %v4314 = vunpack.c.l.bf16 %v4313
  %v4315 = vunpack.c.h.bf16 %v4313
  %s4316 = scalar_lea.vmem %s1, 3668
  %s4317 = scalar_lea.vmem %s4316, 4294967292
  %v4318 = vpack.c.bf16 %v4314, %v3545
  %4319 = vst [vmem:[%s4317] sm:$0xff] %v4318
  %s4320 = scalar_lea.vmem %s0, 3156
  %v4321 = vld [vmem:[%s4320] sm:$0xf]
  %v4322 = vunpack.c.l.bf16 %v4321
  %v4323 = vunpack.c.h.bf16 %v4321
  %s4324 = scalar_lea.vmem %s1, 852
  %s4325 = scalar_lea.vmem %s4324, 4294967292
  %v4326 = vpack.c.bf16 %v4322, %v3550
  %4327 = vst [vmem:[%s4325] sm:$0xff] %v4326
  %s4328 = scalar_lea.vmem %s0, 2132
  %v4329 = vld [vmem:[%s4328] sm:$0xf]
  %v4330 = vunpack.c.l.bf16 %v4329
  %v4331 = vunpack.c.h.bf16 %v4329
  %s4332 = scalar_lea.vmem %s1, 1876
  %s4333 = scalar_lea.vmem %s4332, 4294967292
  %v4334 = vpack.c.bf16 %v4330, %v3555
  %4335 = vst [vmem:[%s4333] sm:$0xff] %v4334
  %s4336 = scalar_lea.vmem %s0, 1108
  %v4337 = vld [vmem:[%s4336] sm:$0xf]
  %v4338 = vunpack.c.l.bf16 %v4337
  %v4339 = vunpack.c.h.bf16 %v4337
  %s4340 = scalar_lea.vmem %s1, 2900
  %s4341 = scalar_lea.vmem %s4340, 4294967292
  %v4342 = vpack.c.bf16 %v4338, %v3560
  %4343 = vst [vmem:[%s4341] sm:$0xff] %v4342
  %s4344 = scalar_lea.vmem %s0, 84
  %v4345 = vld [vmem:[%s4344] sm:$0xf]
  %v4346 = vunpack.c.l.bf16 %v4345
  %v4347 = vunpack.c.h.bf16 %v4345
  %s4348 = scalar_lea.vmem %s1, 3924
  %s4349 = scalar_lea.vmem %s4348, 4294967292
  %v4350 = vpack.c.bf16 %v4346, %v3565
  %4351 = vst [vmem:[%s4349] sm:$0xff] %v4350
  %s4352 = scalar_lea.vmem %s0, 3956
  %v4353 = vld [vmem:[%s4352] sm:$0xf]
  %v4354 = vunpack.c.l.bf16 %v4353
  %v4355 = vunpack.c.h.bf16 %v4353
  %s4356 = scalar_lea.vmem %s1, 116
  %s4357 = scalar_lea.vmem %s4356, 4294967292
  %v4358 = vpack.c.bf16 %v4354, %v3570
  %4359 = vst [vmem:[%s4357] sm:$0xff] %v4358
  %s4360 = scalar_lea.vmem %s0, 2932
  %v4361 = vld [vmem:[%s4360] sm:$0xf]
  %v4362 = vunpack.c.l.bf16 %v4361
  %v4363 = vunpack.c.h.bf16 %v4361
  %s4364 = scalar_lea.vmem %s1, 1140
  %s4365 = scalar_lea.vmem %s4364, 4294967292
  %v4366 = vpack.c.bf16 %v4362, %v3575
  %4367 = vst [vmem:[%s4365] sm:$0xff] %v4366
  %s4368 = scalar_lea.vmem %s0, 1908
  %v4369 = vld [vmem:[%s4368] sm:$0xf]
  %v4370 = vunpack.c.l.bf16 %v4369
  %v4371 = vunpack.c.h.bf16 %v4369
  %s4372 = scalar_lea.vmem %s1, 2164
  %s4373 = scalar_lea.vmem %s4372, 4294967292
  %v4374 = vpack.c.bf16 %v4370, %v3580
  %4375 = vst [vmem:[%s4373] sm:$0xff] %v4374
  %s4376 = scalar_lea.vmem %s0, 884
  %v4377 = vld [vmem:[%s4376] sm:$0xf]
  %v4378 = vunpack.c.l.bf16 %v4377
  %v4379 = vunpack.c.h.bf16 %v4377
  %s4380 = scalar_lea.vmem %s1, 3188
  %s4381 = scalar_lea.vmem %s4380, 4294967292
  %v4382 = vpack.c.bf16 %v4378, %v3585
  %4383 = vst [vmem:[%s4381] sm:$0xff] %v4382
  %s4384 = scalar_lea.vmem %s0, 3700
  %v4385 = vld [vmem:[%s4384] sm:$0xf]
  %v4386 = vunpack.c.l.bf16 %v4385
  %v4387 = vunpack.c.h.bf16 %v4385
  %s4388 = scalar_lea.vmem %s1, 372
  %s4389 = scalar_lea.vmem %s4388, 4294967292
  %v4390 = vpack.c.bf16 %v4386, %v3590
  %4391 = vst [vmem:[%s4389] sm:$0xff] %v4390
  %s4392 = scalar_lea.vmem %s0, 2676
  %v4393 = vld [vmem:[%s4392] sm:$0xf]
  %v4394 = vunpack.c.l.bf16 %v4393
  %v4395 = vunpack.c.h.bf16 %v4393
  %s4396 = scalar_lea.vmem %s1, 1396
  %s4397 = scalar_lea.vmem %s4396, 4294967292
  %v4398 = vpack.c.bf16 %v4394, %v3595
  %4399 = vst [vmem:[%s4397] sm:$0xff] %v4398
  %s4400 = scalar_lea.vmem %s0, 1652
  %v4401 = vld [vmem:[%s4400] sm:$0xf]
  %v4402 = vunpack.c.l.bf16 %v4401
  %v4403 = vunpack.c.h.bf16 %v4401
  %s4404 = scalar_lea.vmem %s1, 2420
  %s4405 = scalar_lea.vmem %s4404, 4294967292
  %v4406 = vpack.c.bf16 %v4402, %v3600
  %4407 = vst [vmem:[%s4405] sm:$0xff] %v4406
  %s4408 = scalar_lea.vmem %s0, 628
  %v4409 = vld [vmem:[%s4408] sm:$0xf]
  %v4410 = vunpack.c.l.bf16 %v4409
  %v4411 = vunpack.c.h.bf16 %v4409
  %s4412 = scalar_lea.vmem %s1, 3444
  %s4413 = scalar_lea.vmem %s4412, 4294967292
  %v4414 = vpack.c.bf16 %v4410, %v3605
  %4415 = vst [vmem:[%s4413] sm:$0xff] %v4414
  %s4416 = scalar_lea.vmem %s0, 3444
  %v4417 = vld [vmem:[%s4416] sm:$0xf]
  %v4418 = vunpack.c.l.bf16 %v4417
  %v4419 = vunpack.c.h.bf16 %v4417
  %s4420 = scalar_lea.vmem %s1, 628
  %s4421 = scalar_lea.vmem %s4420, 4294967292
  %v4422 = vpack.c.bf16 %v4418, %v3610
  %4423 = vst [vmem:[%s4421] sm:$0xff] %v4422
  %s4424 = scalar_lea.vmem %s0, 2420
  %v4425 = vld [vmem:[%s4424] sm:$0xf]
  %v4426 = vunpack.c.l.bf16 %v4425
  %v4427 = vunpack.c.h.bf16 %v4425
  %s4428 = scalar_lea.vmem %s1, 1652
  %s4429 = scalar_lea.vmem %s4428, 4294967292
  %v4430 = vpack.c.bf16 %v4426, %v3615
  %4431 = vst [vmem:[%s4429] sm:$0xff] %v4430
  %s4432 = scalar_lea.vmem %s0, 1396
  %v4433 = vld [vmem:[%s4432] sm:$0xf]
  %v4434 = vunpack.c.l.bf16 %v4433
  %v4435 = vunpack.c.h.bf16 %v4433
  %s4436 = scalar_lea.vmem %s1, 2676
  %s4437 = scalar_lea.vmem %s4436, 4294967292
  %v4438 = vpack.c.bf16 %v4434, %v3620
  %4439 = vst [vmem:[%s4437] sm:$0xff] %v4438
  %s4440 = scalar_lea.vmem %s0, 372
  %v4441 = vld [vmem:[%s4440] sm:$0xf]
  %v4442 = vunpack.c.l.bf16 %v4441
  %v4443 = vunpack.c.h.bf16 %v4441
  %s4444 = scalar_lea.vmem %s1, 3700
  %s4445 = scalar_lea.vmem %s4444, 4294967292
  %v4446 = vpack.c.bf16 %v4442, %v3625
  %4447 = vst [vmem:[%s4445] sm:$0xff] %v4446
  %s4448 = scalar_lea.vmem %s0, 3188
  %v4449 = vld [vmem:[%s4448] sm:$0xf]
  %v4450 = vunpack.c.l.bf16 %v4449
  %v4451 = vunpack.c.h.bf16 %v4449
  %s4452 = scalar_lea.vmem %s1, 884
  %s4453 = scalar_lea.vmem %s4452, 4294967292
  %v4454 = vpack.c.bf16 %v4450, %v3630
  %4455 = vst [vmem:[%s4453] sm:$0xff] %v4454
  %s4456 = scalar_lea.vmem %s0, 2164
  %v4457 = vld [vmem:[%s4456] sm:$0xf]
  %v4458 = vunpack.c.l.bf16 %v4457
  %v4459 = vunpack.c.h.bf16 %v4457
  %s4460 = scalar_lea.vmem %s1, 1908
  %s4461 = scalar_lea.vmem %s4460, 4294967292
  %v4462 = vpack.c.bf16 %v4458, %v3635
  %4463 = vst [vmem:[%s4461] sm:$0xff] %v4462
  %s4464 = scalar_lea.vmem %s0, 1140
  %v4465 = vld [vmem:[%s4464] sm:$0xf]
  %v4466 = vunpack.c.l.bf16 %v4465
  %v4467 = vunpack.c.h.bf16 %v4465
  %s4468 = scalar_lea.vmem %s1, 2932
  %s4469 = scalar_lea.vmem %s4468, 4294967292
  %v4470 = vpack.c.bf16 %v4466, %v3640
  %4471 = vst [vmem:[%s4469] sm:$0xff] %v4470
  %s4472 = scalar_lea.vmem %s0, 116
  %v4473 = vld [vmem:[%s4472] sm:$0xf]
  %v4474 = vunpack.c.l.bf16 %v4473
  %v4475 = vunpack.c.h.bf16 %v4473
  %s4476 = scalar_lea.vmem %s1, 3956
  %s4477 = scalar_lea.vmem %s4476, 4294967292
  %v4478 = vpack.c.bf16 %v4474, %v3645
  %4479 = vst [vmem:[%s4477] sm:$0xff] %v4478
  %s4480 = scalar_lea.vmem %s0, 3988
  %v4481 = vld [vmem:[%s4480] sm:$0xf]
  %v4482 = vunpack.c.l.bf16 %v4481
  %v4483 = vunpack.c.h.bf16 %v4481
  %s4484 = scalar_lea.vmem %s1, 148
  %s4485 = scalar_lea.vmem %s4484, 4294967292
  %v4486 = vpack.c.bf16 %v4482, %v3650
  %4487 = vst [vmem:[%s4485] sm:$0xff] %v4486
  %s4488 = scalar_lea.vmem %s0, 2964
  %v4489 = vld [vmem:[%s4488] sm:$0xf]
  %v4490 = vunpack.c.l.bf16 %v4489
  %v4491 = vunpack.c.h.bf16 %v4489
  %s4492 = scalar_lea.vmem %s1, 1172
  %s4493 = scalar_lea.vmem %s4492, 4294967292
  %v4494 = vpack.c.bf16 %v4490, %v3655
  %4495 = vst [vmem:[%s4493] sm:$0xff] %v4494
  %s4496 = scalar_lea.vmem %s0, 1940
  %v4497 = vld [vmem:[%s4496] sm:$0xf]
  %v4498 = vunpack.c.l.bf16 %v4497
  %v4499 = vunpack.c.h.bf16 %v4497
  %s4500 = scalar_lea.vmem %s1, 2196
  %s4501 = scalar_lea.vmem %s4500, 4294967292
  %v4502 = vpack.c.bf16 %v4498, %v3660
  %4503 = vst [vmem:[%s4501] sm:$0xff] %v4502
  %s4504 = scalar_lea.vmem %s0, 916
  %v4505 = vld [vmem:[%s4504] sm:$0xf]
  %v4506 = vunpack.c.l.bf16 %v4505
  %v4507 = vunpack.c.h.bf16 %v4505
  %s4508 = scalar_lea.vmem %s1, 3220
  %s4509 = scalar_lea.vmem %s4508, 4294967292
  %v4510 = vpack.c.bf16 %v4506, %v3665
  %4511 = vst [vmem:[%s4509] sm:$0xff] %v4510
  %s4512 = scalar_lea.vmem %s0, 3732
  %v4513 = vld [vmem:[%s4512] sm:$0xf]
  %v4514 = vunpack.c.l.bf16 %v4513
  %v4515 = vunpack.c.h.bf16 %v4513
  %s4516 = scalar_lea.vmem %s1, 404
  %s4517 = scalar_lea.vmem %s4516, 4294967292
  %v4518 = vpack.c.bf16 %v4514, %v3670
  %4519 = vst [vmem:[%s4517] sm:$0xff] %v4518
  %s4520 = scalar_lea.vmem %s0, 2708
  %v4521 = vld [vmem:[%s4520] sm:$0xf]
  %v4522 = vunpack.c.l.bf16 %v4521
  %v4523 = vunpack.c.h.bf16 %v4521
  %s4524 = scalar_lea.vmem %s1, 1428
  %s4525 = scalar_lea.vmem %s4524, 4294967292
  %v4526 = vpack.c.bf16 %v4522, %v3675
  %4527 = vst [vmem:[%s4525] sm:$0xff] %v4526
  %s4528 = scalar_lea.vmem %s0, 1684
  %v4529 = vld [vmem:[%s4528] sm:$0xf]
  %v4530 = vunpack.c.l.bf16 %v4529
  %v4531 = vunpack.c.h.bf16 %v4529
  %s4532 = scalar_lea.vmem %s1, 2452
  %s4533 = scalar_lea.vmem %s4532, 4294967292
  %v4534 = vpack.c.bf16 %v4530, %v3680
  %4535 = vst [vmem:[%s4533] sm:$0xff] %v4534
  %s4536 = scalar_lea.vmem %s0, 660
  %v4537 = vld [vmem:[%s4536] sm:$0xf]
  %v4538 = vunpack.c.l.bf16 %v4537
  %v4539 = vunpack.c.h.bf16 %v4537
  %s4540 = scalar_lea.vmem %s1, 3476
  %s4541 = scalar_lea.vmem %s4540, 4294967292
  %v4542 = vpack.c.bf16 %v4538, %v3685
  %4543 = vst [vmem:[%s4541] sm:$0xff] %v4542
  %s4544 = scalar_lea.vmem %s0, 3476
  %v4545 = vld [vmem:[%s4544] sm:$0xf]
  %v4546 = vunpack.c.l.bf16 %v4545
  %v4547 = vunpack.c.h.bf16 %v4545
  %s4548 = scalar_lea.vmem %s1, 660
  %s4549 = scalar_lea.vmem %s4548, 4294967292
  %v4550 = vpack.c.bf16 %v4546, %v3690
  %4551 = vst [vmem:[%s4549] sm:$0xff] %v4550
  %s4552 = scalar_lea.vmem %s0, 2452
  %v4553 = vld [vmem:[%s4552] sm:$0xf]
  %v4554 = vunpack.c.l.bf16 %v4553
  %v4555 = vunpack.c.h.bf16 %v4553
  %s4556 = scalar_lea.vmem %s1, 1684
  %s4557 = scalar_lea.vmem %s4556, 4294967292
  %v4558 = vpack.c.bf16 %v4554, %v3695
  %4559 = vst [vmem:[%s4557] sm:$0xff] %v4558
  %s4560 = scalar_lea.vmem %s0, 1428
  %v4561 = vld [vmem:[%s4560] sm:$0xf]
  %v4562 = vunpack.c.l.bf16 %v4561
  %v4563 = vunpack.c.h.bf16 %v4561
  %s4564 = scalar_lea.vmem %s1, 2708
  %s4565 = scalar_lea.vmem %s4564, 4294967292
  %v4566 = vpack.c.bf16 %v4562, %v3700
  %4567 = vst [vmem:[%s4565] sm:$0xff] %v4566
  %s4568 = scalar_lea.vmem %s0, 404
  %v4569 = vld [vmem:[%s4568] sm:$0xf]
  %v4570 = vunpack.c.l.bf16 %v4569
  %v4571 = vunpack.c.h.bf16 %v4569
  %s4572 = scalar_lea.vmem %s1, 3732
  %s4573 = scalar_lea.vmem %s4572, 4294967292
  %v4574 = vpack.c.bf16 %v4570, %v3705
  %4575 = vst [vmem:[%s4573] sm:$0xff] %v4574
  %s4576 = scalar_lea.vmem %s0, 3220
  %v4577 = vld [vmem:[%s4576] sm:$0xf]
  %v4578 = vunpack.c.l.bf16 %v4577
  %v4579 = vunpack.c.h.bf16 %v4577
  %s4580 = scalar_lea.vmem %s1, 916
  %s4581 = scalar_lea.vmem %s4580, 4294967292
  %v4582 = vpack.c.bf16 %v4578, %v3710
  %4583 = vst [vmem:[%s4581] sm:$0xff] %v4582
  %s4584 = scalar_lea.vmem %s0, 2196
  %v4585 = vld [vmem:[%s4584] sm:$0xf]
  %v4586 = vunpack.c.l.bf16 %v4585
  %v4587 = vunpack.c.h.bf16 %v4585
  %s4588 = scalar_lea.vmem %s1, 1940
  %s4589 = scalar_lea.vmem %s4588, 4294967292
  %v4590 = vpack.c.bf16 %v4586, %v3715
  %4591 = vst [vmem:[%s4589] sm:$0xff] %v4590
  %s4592 = scalar_lea.vmem %s0, 1172
  %v4593 = vld [vmem:[%s4592] sm:$0xf]
  %v4594 = vunpack.c.l.bf16 %v4593
  %v4595 = vunpack.c.h.bf16 %v4593
  %s4596 = scalar_lea.vmem %s1, 2964
  %s4597 = scalar_lea.vmem %s4596, 4294967292
  %v4598 = vpack.c.bf16 %v4594, %v3720
  %4599 = vst [vmem:[%s4597] sm:$0xff] %v4598
  %s4600 = scalar_lea.vmem %s0, 148
  %v4601 = vld [vmem:[%s4600] sm:$0xf]
  %v4602 = vunpack.c.l.bf16 %v4601
  %v4603 = vunpack.c.h.bf16 %v4601
  %s4604 = scalar_lea.vmem %s1, 3988
  %s4605 = scalar_lea.vmem %s4604, 4294967292
  %v4606 = vpack.c.bf16 %v4602, %v3725
  %4607 = vst [vmem:[%s4605] sm:$0xff] %v4606
  %s4608 = scalar_lea.vmem %s0, 4020
  %v4609 = vld [vmem:[%s4608] sm:$0xf]
  %v4610 = vunpack.c.l.bf16 %v4609
  %v4611 = vunpack.c.h.bf16 %v4609
  %s4612 = scalar_lea.vmem %s1, 180
  %s4613 = scalar_lea.vmem %s4612, 4294967292
  %v4614 = vpack.c.bf16 %v4610, %v3730
  %4615 = vst [vmem:[%s4613] sm:$0xff] %v4614
  %s4616 = scalar_lea.vmem %s0, 2996
  %v4617 = vld [vmem:[%s4616] sm:$0xf]
  %v4618 = vunpack.c.l.bf16 %v4617
  %v4619 = vunpack.c.h.bf16 %v4617
  %s4620 = scalar_lea.vmem %s1, 1204
  %s4621 = scalar_lea.vmem %s4620, 4294967292
  %v4622 = vpack.c.bf16 %v4618, %v3735
  %4623 = vst [vmem:[%s4621] sm:$0xff] %v4622
  %s4624 = scalar_lea.vmem %s0, 1972
  %v4625 = vld [vmem:[%s4624] sm:$0xf]
  %v4626 = vunpack.c.l.bf16 %v4625
  %v4627 = vunpack.c.h.bf16 %v4625
  %s4628 = scalar_lea.vmem %s1, 2228
  %s4629 = scalar_lea.vmem %s4628, 4294967292
  %v4630 = vpack.c.bf16 %v4626, %v3740
  %4631 = vst [vmem:[%s4629] sm:$0xff] %v4630
  %s4632 = scalar_lea.vmem %s0, 948
  %v4633 = vld [vmem:[%s4632] sm:$0xf]
  %v4634 = vunpack.c.l.bf16 %v4633
  %v4635 = vunpack.c.h.bf16 %v4633
  %s4636 = scalar_lea.vmem %s1, 3252
  %s4637 = scalar_lea.vmem %s4636, 4294967292
  %v4638 = vpack.c.bf16 %v4634, %v3745
  %4639 = vst [vmem:[%s4637] sm:$0xff] %v4638
  %s4640 = scalar_lea.vmem %s0, 3764
  %v4641 = vld [vmem:[%s4640] sm:$0xf]
  %v4642 = vunpack.c.l.bf16 %v4641
  %v4643 = vunpack.c.h.bf16 %v4641
  %s4644 = scalar_lea.vmem %s1, 436
  %s4645 = scalar_lea.vmem %s4644, 4294967292
  %v4646 = vpack.c.bf16 %v4642, %v3750
  %4647 = vst [vmem:[%s4645] sm:$0xff] %v4646
  %s4648 = scalar_lea.vmem %s0, 2740
  %v4649 = vld [vmem:[%s4648] sm:$0xf]
  %v4650 = vunpack.c.l.bf16 %v4649
  %v4651 = vunpack.c.h.bf16 %v4649
  %s4652 = scalar_lea.vmem %s1, 1460
  %s4653 = scalar_lea.vmem %s4652, 4294967292
  %v4654 = vpack.c.bf16 %v4650, %v3755
  %4655 = vst [vmem:[%s4653] sm:$0xff] %v4654
  %s4656 = scalar_lea.vmem %s0, 1716
  %v4657 = vld [vmem:[%s4656] sm:$0xf]
  %v4658 = vunpack.c.l.bf16 %v4657
  %v4659 = vunpack.c.h.bf16 %v4657
  %s4660 = scalar_lea.vmem %s1, 2484
  %s4661 = scalar_lea.vmem %s4660, 4294967292
  %v4662 = vpack.c.bf16 %v4658, %v3760
  %4663 = vst [vmem:[%s4661] sm:$0xff] %v4662
  %s4664 = scalar_lea.vmem %s0, 692
  %v4665 = vld [vmem:[%s4664] sm:$0xf]
  %v4666 = vunpack.c.l.bf16 %v4665
  %v4667 = vunpack.c.h.bf16 %v4665
  %s4668 = scalar_lea.vmem %s1, 3508
  %s4669 = scalar_lea.vmem %s4668, 4294967292
  %v4670 = vpack.c.bf16 %v4666, %v3765
  %4671 = vst [vmem:[%s4669] sm:$0xff] %v4670
  %s4672 = scalar_lea.vmem %s0, 3508
  %v4673 = vld [vmem:[%s4672] sm:$0xf]
  %v4674 = vunpack.c.l.bf16 %v4673
  %v4675 = vunpack.c.h.bf16 %v4673
  %s4676 = scalar_lea.vmem %s1, 692
  %s4677 = scalar_lea.vmem %s4676, 4294967292
  %v4678 = vpack.c.bf16 %v4674, %v3770
  %4679 = vst [vmem:[%s4677] sm:$0xff] %v4678
  %s4680 = scalar_lea.vmem %s0, 2484
  %v4681 = vld [vmem:[%s4680] sm:$0xf]
  %v4682 = vunpack.c.l.bf16 %v4681
  %v4683 = vunpack.c.h.bf16 %v4681
  %s4684 = scalar_lea.vmem %s1, 1716
  %s4685 = scalar_lea.vmem %s4684, 4294967292
  %v4686 = vpack.c.bf16 %v4682, %v3775
  %4687 = vst [vmem:[%s4685] sm:$0xff] %v4686
  %s4688 = scalar_lea.vmem %s0, 1460
  %v4689 = vld [vmem:[%s4688] sm:$0xf]
  %v4690 = vunpack.c.l.bf16 %v4689
  %v4691 = vunpack.c.h.bf16 %v4689
  %s4692 = scalar_lea.vmem %s1, 2740
  %s4693 = scalar_lea.vmem %s4692, 4294967292
  %v4694 = vpack.c.bf16 %v4690, %v3780
  %4695 = vst [vmem:[%s4693] sm:$0xff] %v4694
  %s4696 = scalar_lea.vmem %s0, 436
  %v4697 = vld [vmem:[%s4696] sm:$0xf]
  %v4698 = vunpack.c.l.bf16 %v4697
  %v4699 = vunpack.c.h.bf16 %v4697
  %s4700 = scalar_lea.vmem %s1, 3764
  %s4701 = scalar_lea.vmem %s4700, 4294967292
  %v4702 = vpack.c.bf16 %v4698, %v3785
  %4703 = vst [vmem:[%s4701] sm:$0xff] %v4702
  %s4704 = scalar_lea.vmem %s0, 3252
  %v4705 = vld [vmem:[%s4704] sm:$0xf]
  %v4706 = vunpack.c.l.bf16 %v4705
  %v4707 = vunpack.c.h.bf16 %v4705
  %s4708 = scalar_lea.vmem %s1, 948
  %s4709 = scalar_lea.vmem %s4708, 4294967292
  %v4710 = vpack.c.bf16 %v4706, %v3790
  %4711 = vst [vmem:[%s4709] sm:$0xff] %v4710
  %s4712 = scalar_lea.vmem %s0, 2228
  %v4713 = vld [vmem:[%s4712] sm:$0xf]
  %v4714 = vunpack.c.l.bf16 %v4713
  %v4715 = vunpack.c.h.bf16 %v4713
  %s4716 = scalar_lea.vmem %s1, 1972
  %s4717 = scalar_lea.vmem %s4716, 4294967292
  %v4718 = vpack.c.bf16 %v4714, %v3795
  %4719 = vst [vmem:[%s4717] sm:$0xff] %v4718
  %s4720 = scalar_lea.vmem %s0, 1204
  %v4721 = vld [vmem:[%s4720] sm:$0xf]
  %v4722 = vunpack.c.l.bf16 %v4721
  %v4723 = vunpack.c.h.bf16 %v4721
  %s4724 = scalar_lea.vmem %s1, 2996
  %s4725 = scalar_lea.vmem %s4724, 4294967292
  %v4726 = vpack.c.bf16 %v4722, %v3800
  %4727 = vst [vmem:[%s4725] sm:$0xff] %v4726
  %s4728 = scalar_lea.vmem %s0, 180
  %v4729 = vld [vmem:[%s4728] sm:$0xf]
  %v4730 = vunpack.c.l.bf16 %v4729
  %v4731 = vunpack.c.h.bf16 %v4729
  %s4732 = scalar_lea.vmem %s1, 4020
  %s4733 = scalar_lea.vmem %s4732, 4294967292
  %v4734 = vpack.c.bf16 %v4730, %v3805
  %4735 = vst [vmem:[%s4733] sm:$0xff] %v4734
  %s4736 = scalar_lea.vmem %s0, 4052
  %v4737 = vld [vmem:[%s4736] sm:$0xf]
  %v4738 = vunpack.c.l.bf16 %v4737
  %v4739 = vunpack.c.h.bf16 %v4737
  %s4740 = scalar_lea.vmem %s1, 212
  %s4741 = scalar_lea.vmem %s4740, 4294967292
  %v4742 = vpack.c.bf16 %v4738, %v3810
  %4743 = vst [vmem:[%s4741] sm:$0xff] %v4742
  %s4744 = scalar_lea.vmem %s0, 3028
  %v4745 = vld [vmem:[%s4744] sm:$0xf]
  %v4746 = vunpack.c.l.bf16 %v4745
  %v4747 = vunpack.c.h.bf16 %v4745
  %s4748 = scalar_lea.vmem %s1, 1236
  %s4749 = scalar_lea.vmem %s4748, 4294967292
  %v4750 = vpack.c.bf16 %v4746, %v3815
  %4751 = vst [vmem:[%s4749] sm:$0xff] %v4750
  %s4752 = scalar_lea.vmem %s0, 2004
  %v4753 = vld [vmem:[%s4752] sm:$0xf]
  %v4754 = vunpack.c.l.bf16 %v4753
  %v4755 = vunpack.c.h.bf16 %v4753
  %s4756 = scalar_lea.vmem %s1, 2260
  %s4757 = scalar_lea.vmem %s4756, 4294967292
  %v4758 = vpack.c.bf16 %v4754, %v3820
  %4759 = vst [vmem:[%s4757] sm:$0xff] %v4758
  %s4760 = scalar_lea.vmem %s0, 980
  %v4761 = vld [vmem:[%s4760] sm:$0xf]
  %v4762 = vunpack.c.l.bf16 %v4761
  %v4763 = vunpack.c.h.bf16 %v4761
  %s4764 = scalar_lea.vmem %s1, 3284
  %s4765 = scalar_lea.vmem %s4764, 4294967292
  %v4766 = vpack.c.bf16 %v4762, %v3825
  %4767 = vst [vmem:[%s4765] sm:$0xff] %v4766
  %s4768 = scalar_lea.vmem %s0, 3796
  %v4769 = vld [vmem:[%s4768] sm:$0xf]
  %v4770 = vunpack.c.l.bf16 %v4769
  %v4771 = vunpack.c.h.bf16 %v4769
  %s4772 = scalar_lea.vmem %s1, 468
  %s4773 = scalar_lea.vmem %s4772, 4294967292
  %v4774 = vpack.c.bf16 %v4770, %v3830
  %4775 = vst [vmem:[%s4773] sm:$0xff] %v4774
  %s4776 = scalar_lea.vmem %s0, 2772
  %v4777 = vld [vmem:[%s4776] sm:$0xf]
  %v4778 = vunpack.c.l.bf16 %v4777
  %v4779 = vunpack.c.h.bf16 %v4777
  %s4780 = scalar_lea.vmem %s1, 1492
  %s4781 = scalar_lea.vmem %s4780, 4294967292
  %v4782 = vpack.c.bf16 %v4778, %v3835
  %4783 = vst [vmem:[%s4781] sm:$0xff] %v4782
  %s4784 = scalar_lea.vmem %s0, 1748
  %v4785 = vld [vmem:[%s4784] sm:$0xf]
  %v4786 = vunpack.c.l.bf16 %v4785
  %v4787 = vunpack.c.h.bf16 %v4785
  %s4788 = scalar_lea.vmem %s1, 2516
  %s4789 = scalar_lea.vmem %s4788, 4294967292
  %v4790 = vpack.c.bf16 %v4786, %v3840
  %4791 = vst [vmem:[%s4789] sm:$0xff] %v4790
  %s4792 = scalar_lea.vmem %s0, 724
  %v4793 = vld [vmem:[%s4792] sm:$0xf]
  %v4794 = vunpack.c.l.bf16 %v4793
  %v4795 = vunpack.c.h.bf16 %v4793
  %s4796 = scalar_lea.vmem %s1, 3540
  %s4797 = scalar_lea.vmem %s4796, 4294967292
  %v4798 = vpack.c.bf16 %v4794, %v3845
  %4799 = vst [vmem:[%s4797] sm:$0xff] %v4798
  %s4800 = scalar_lea.vmem %s0, 3540
  %v4801 = vld [vmem:[%s4800] sm:$0xf]
  %v4802 = vunpack.c.l.bf16 %v4801
  %v4803 = vunpack.c.h.bf16 %v4801
  %s4804 = scalar_lea.vmem %s1, 724
  %s4805 = scalar_lea.vmem %s4804, 4294967292
  %v4806 = vpack.c.bf16 %v4802, %v3850
  %4807 = vst [vmem:[%s4805] sm:$0xff] %v4806
  %s4808 = scalar_lea.vmem %s0, 2516
  %v4809 = vld [vmem:[%s4808] sm:$0xf]
  %v4810 = vunpack.c.l.bf16 %v4809
  %v4811 = vunpack.c.h.bf16 %v4809
  %s4812 = scalar_lea.vmem %s1, 1748
  %s4813 = scalar_lea.vmem %s4812, 4294967292
  %v4814 = vpack.c.bf16 %v4810, %v3855
  %4815 = vst [vmem:[%s4813] sm:$0xff] %v4814
  %s4816 = scalar_lea.vmem %s0, 1492
  %v4817 = vld [vmem:[%s4816] sm:$0xf]
  %v4818 = vunpack.c.l.bf16 %v4817
  %v4819 = vunpack.c.h.bf16 %v4817
  %s4820 = scalar_lea.vmem %s1, 2772
  %s4821 = scalar_lea.vmem %s4820, 4294967292
  %v4822 = vpack.c.bf16 %v4818, %v3860
  %4823 = vst [vmem:[%s4821] sm:$0xff] %v4822
  %s4824 = scalar_lea.vmem %s0, 468
  %v4825 = vld [vmem:[%s4824] sm:$0xf]
  %v4826 = vunpack.c.l.bf16 %v4825
  %v4827 = vunpack.c.h.bf16 %v4825
  %s4828 = scalar_lea.vmem %s1, 3796
  %s4829 = scalar_lea.vmem %s4828, 4294967292
  %v4830 = vpack.c.bf16 %v4826, %v3865
  %4831 = vst [vmem:[%s4829] sm:$0xff] %v4830
  %s4832 = scalar_lea.vmem %s0, 3284
  %v4833 = vld [vmem:[%s4832] sm:$0xf]
  %v4834 = vunpack.c.l.bf16 %v4833
  %v4835 = vunpack.c.h.bf16 %v4833
  %s4836 = scalar_lea.vmem %s1, 980
  %s4837 = scalar_lea.vmem %s4836, 4294967292
  %v4838 = vpack.c.bf16 %v4834, %v3870
  %4839 = vst [vmem:[%s4837] sm:$0xff] %v4838
  %s4840 = scalar_lea.vmem %s0, 2260
  %v4841 = vld [vmem:[%s4840] sm:$0xf]
  %v4842 = vunpack.c.l.bf16 %v4841
  %v4843 = vunpack.c.h.bf16 %v4841
  %s4844 = scalar_lea.vmem %s1, 2004
  %s4845 = scalar_lea.vmem %s4844, 4294967292
  %v4846 = vpack.c.bf16 %v4842, %v3875
  %4847 = vst [vmem:[%s4845] sm:$0xff] %v4846
  %s4848 = scalar_lea.vmem %s0, 1236
  %v4849 = vld [vmem:[%s4848] sm:$0xf]
  %v4850 = vunpack.c.l.bf16 %v4849
  %v4851 = vunpack.c.h.bf16 %v4849
  %s4852 = scalar_lea.vmem %s1, 3028
  %s4853 = scalar_lea.vmem %s4852, 4294967292
  %v4854 = vpack.c.bf16 %v4850, %v3880
  %4855 = vst [vmem:[%s4853] sm:$0xff] %v4854
  %s4856 = scalar_lea.vmem %s0, 212
  %v4857 = vld [vmem:[%s4856] sm:$0xf]
  %v4858 = vunpack.c.l.bf16 %v4857
  %v4859 = vunpack.c.h.bf16 %v4857
  %s4860 = scalar_lea.vmem %s1, 4052
  %s4861 = scalar_lea.vmem %s4860, 4294967292
  %v4862 = vpack.c.bf16 %v4858, %v3885
  %4863 = vst [vmem:[%s4861] sm:$0xff] %v4862
  %s4864 = scalar_lea.vmem %s0, 4084
  %v4865 = vld [vmem:[%s4864] sm:$0xf]
  %v4866 = vunpack.c.l.bf16 %v4865
  %v4867 = vunpack.c.h.bf16 %v4865
  %s4868 = scalar_lea.vmem %s1, 244
  %s4869 = scalar_lea.vmem %s4868, 4294967292
  %v4870 = vpack.c.bf16 %v4866, %v3890
  %4871 = vst [vmem:[%s4869] sm:$0xff] %v4870
  %s4872 = scalar_lea.vmem %s0, 3060
  %v4873 = vld [vmem:[%s4872] sm:$0xf]
  %v4874 = vunpack.c.l.bf16 %v4873
  %v4875 = vunpack.c.h.bf16 %v4873
  %s4876 = scalar_lea.vmem %s1, 1268
  %s4877 = scalar_lea.vmem %s4876, 4294967292
  %v4878 = vpack.c.bf16 %v4874, %v3895
  %4879 = vst [vmem:[%s4877] sm:$0xff] %v4878
  %s4880 = scalar_lea.vmem %s0, 2036
  %v4881 = vld [vmem:[%s4880] sm:$0xf]
  %v4882 = vunpack.c.l.bf16 %v4881
  %v4883 = vunpack.c.h.bf16 %v4881
  %s4884 = scalar_lea.vmem %s1, 2292
  %s4885 = scalar_lea.vmem %s4884, 4294967292
  %v4886 = vpack.c.bf16 %v4882, %v3900
  %4887 = vst [vmem:[%s4885] sm:$0xff] %v4886
  %s4888 = scalar_lea.vmem %s0, 1012
  %v4889 = vld [vmem:[%s4888] sm:$0xf]
  %v4890 = vunpack.c.l.bf16 %v4889
  %v4891 = vunpack.c.h.bf16 %v4889
  %s4892 = scalar_lea.vmem %s1, 3316
  %s4893 = scalar_lea.vmem %s4892, 4294967292
  %v4894 = vpack.c.bf16 %v4890, %v3905
  %4895 = vst [vmem:[%s4893] sm:$0xff] %v4894
  %s4896 = scalar_lea.vmem %s0, 3828
  %v4897 = vld [vmem:[%s4896] sm:$0xf]
  %v4898 = vunpack.c.l.bf16 %v4897
  %v4899 = vunpack.c.h.bf16 %v4897
  %s4900 = scalar_lea.vmem %s1, 500
  %s4901 = scalar_lea.vmem %s4900, 4294967292
  %v4902 = vpack.c.bf16 %v4898, %v3910
  %4903 = vst [vmem:[%s4901] sm:$0xff] %v4902
  %s4904 = scalar_lea.vmem %s0, 2804
  %v4905 = vld [vmem:[%s4904] sm:$0xf]
  %v4906 = vunpack.c.l.bf16 %v4905
  %v4907 = vunpack.c.h.bf16 %v4905
  %s4908 = scalar_lea.vmem %s1, 1524
  %s4909 = scalar_lea.vmem %s4908, 4294967292
  %v4910 = vpack.c.bf16 %v4906, %v3915
  %4911 = vst [vmem:[%s4909] sm:$0xff] %v4910
  %s4912 = scalar_lea.vmem %s0, 1780
  %v4913 = vld [vmem:[%s4912] sm:$0xf]
  %v4914 = vunpack.c.l.bf16 %v4913
  %v4915 = vunpack.c.h.bf16 %v4913
  %s4916 = scalar_lea.vmem %s1, 2548
  %s4917 = scalar_lea.vmem %s4916, 4294967292
  %v4918 = vpack.c.bf16 %v4914, %v3920
  %4919 = vst [vmem:[%s4917] sm:$0xff] %v4918
  %s4920 = scalar_lea.vmem %s0, 756
  %v4921 = vld [vmem:[%s4920] sm:$0xf]
  %v4922 = vunpack.c.l.bf16 %v4921
  %v4923 = vunpack.c.h.bf16 %v4921
  %s4924 = scalar_lea.vmem %s1, 3572
  %s4925 = scalar_lea.vmem %s4924, 4294967292
  %v4926 = vpack.c.bf16 %v4922, %v3925
  %4927 = vst [vmem:[%s4925] sm:$0xff] %v4926
  %s4928 = scalar_lea.vmem %s0, 3572
  %v4929 = vld [vmem:[%s4928] sm:$0xf]
  %v4930 = vunpack.c.l.bf16 %v4929
  %v4931 = vunpack.c.h.bf16 %v4929
  %s4932 = scalar_lea.vmem %s1, 756
  %s4933 = scalar_lea.vmem %s4932, 4294967292
  %v4934 = vpack.c.bf16 %v4930, %v3930
  %4935 = vst [vmem:[%s4933] sm:$0xff] %v4934
  %s4936 = scalar_lea.vmem %s0, 2548
  %v4937 = vld [vmem:[%s4936] sm:$0xf]
  %v4938 = vunpack.c.l.bf16 %v4937
  %v4939 = vunpack.c.h.bf16 %v4937
  %s4940 = scalar_lea.vmem %s1, 1780
  %s4941 = scalar_lea.vmem %s4940, 4294967292
  %v4942 = vpack.c.bf16 %v4938, %v3935
  %4943 = vst [vmem:[%s4941] sm:$0xff] %v4942
  %s4944 = scalar_lea.vmem %s0, 1524
  %v4945 = vld [vmem:[%s4944] sm:$0xf]
  %v4946 = vunpack.c.l.bf16 %v4945
  %v4947 = vunpack.c.h.bf16 %v4945
  %s4948 = scalar_lea.vmem %s1, 2804
  %s4949 = scalar_lea.vmem %s4948, 4294967292
  %v4950 = vpack.c.bf16 %v4946, %v3940
  %4951 = vst [vmem:[%s4949] sm:$0xff] %v4950
  %s4952 = scalar_lea.vmem %s0, 500
  %v4953 = vld [vmem:[%s4952] sm:$0xf]
  %v4954 = vunpack.c.l.bf16 %v4953
  %v4955 = vunpack.c.h.bf16 %v4953
  %s4956 = scalar_lea.vmem %s1, 3828
  %s4957 = scalar_lea.vmem %s4956, 4294967292
  %v4958 = vpack.c.bf16 %v4954, %v3945
  %4959 = vst [vmem:[%s4957] sm:$0xff] %v4958
  %s4960 = scalar_lea.vmem %s0, 3316
  %v4961 = vld [vmem:[%s4960] sm:$0xf]
  %v4962 = vunpack.c.l.bf16 %v4961
  %v4963 = vunpack.c.h.bf16 %v4961
  %s4964 = scalar_lea.vmem %s1, 1012
  %s4965 = scalar_lea.vmem %s4964, 4294967292
  %v4966 = vpack.c.bf16 %v4962, %v3950
  %4967 = vst [vmem:[%s4965] sm:$0xff] %v4966
  %s4968 = scalar_lea.vmem %s0, 2292
  %v4969 = vld [vmem:[%s4968] sm:$0xf]
  %v4970 = vunpack.c.l.bf16 %v4969
  %v4971 = vunpack.c.h.bf16 %v4969
  %s4972 = scalar_lea.vmem %s1, 2036
  %s4973 = scalar_lea.vmem %s4972, 4294967292
  %v4974 = vpack.c.bf16 %v4970, %v3955
  %4975 = vst [vmem:[%s4973] sm:$0xff] %v4974
  %s4976 = scalar_lea.vmem %s0, 1268
  %v4977 = vld [vmem:[%s4976] sm:$0xf]
  %v4978 = vunpack.c.l.bf16 %v4977
  %v4979 = vunpack.c.h.bf16 %v4977
  %s4980 = scalar_lea.vmem %s1, 3060
  %s4981 = scalar_lea.vmem %s4980, 4294967292
  %v4982 = vpack.c.bf16 %v4978, %v3960
  %4983 = vst [vmem:[%s4981] sm:$0xff] %v4982
  %s4984 = scalar_lea.vmem %s0, 244
  %v4985 = vld [vmem:[%s4984] sm:$0xf]
  %v4986 = vunpack.c.l.bf16 %v4985
  %v4987 = vunpack.c.h.bf16 %v4985
  %s4988 = scalar_lea.vmem %s1, 4084
  %s4989 = scalar_lea.vmem %s4988, 4294967292
  %v4990 = vpack.c.bf16 %v4986, %v3965
  %4991 = vst [vmem:[%s4989] sm:$0xff] %v4990
  %s4992 = scalar_lea.vmem %s0, 3864
  %v4993 = vld [vmem:[%s4992] sm:$0xf]
  %v4994 = vunpack.c.l.bf16 %v4993
  %v4995 = vunpack.c.h.bf16 %v4993
  %s4996 = scalar_lea.vmem %s1, 24
  %s4997 = scalar_lea.vmem %s0, 2840
  %v4998 = vld [vmem:[%s4997] sm:$0xf]
  %v4999 = vunpack.c.l.bf16 %v4998
  %v5000 = vunpack.c.h.bf16 %v4998
  %s5001 = scalar_lea.vmem %s1, 1048
  %s5002 = scalar_lea.vmem %s0, 1816
  %v5003 = vld [vmem:[%s5002] sm:$0xf]
  %v5004 = vunpack.c.l.bf16 %v5003
  %v5005 = vunpack.c.h.bf16 %v5003
  %s5006 = scalar_lea.vmem %s1, 2072
  %s5007 = scalar_lea.vmem %s0, 792
  %v5008 = vld [vmem:[%s5007] sm:$0xf]
  %v5009 = vunpack.c.l.bf16 %v5008
  %v5010 = vunpack.c.h.bf16 %v5008
  %s5011 = scalar_lea.vmem %s1, 3096
  %s5012 = scalar_lea.vmem %s0, 3608
  %v5013 = vld [vmem:[%s5012] sm:$0xf]
  %v5014 = vunpack.c.l.bf16 %v5013
  %v5015 = vunpack.c.h.bf16 %v5013
  %s5016 = scalar_lea.vmem %s1, 280
  %s5017 = scalar_lea.vmem %s0, 2584
  %v5018 = vld [vmem:[%s5017] sm:$0xf]
  %v5019 = vunpack.c.l.bf16 %v5018
  %v5020 = vunpack.c.h.bf16 %v5018
  %s5021 = scalar_lea.vmem %s1, 1304
  %s5022 = scalar_lea.vmem %s0, 1560
  %v5023 = vld [vmem:[%s5022] sm:$0xf]
  %v5024 = vunpack.c.l.bf16 %v5023
  %v5025 = vunpack.c.h.bf16 %v5023
  %s5026 = scalar_lea.vmem %s1, 2328
  %s5027 = scalar_lea.vmem %s0, 536
  %v5028 = vld [vmem:[%s5027] sm:$0xf]
  %v5029 = vunpack.c.l.bf16 %v5028
  %v5030 = vunpack.c.h.bf16 %v5028
  %s5031 = scalar_lea.vmem %s1, 3352
  %s5032 = scalar_lea.vmem %s0, 3352
  %v5033 = vld [vmem:[%s5032] sm:$0xf]
  %v5034 = vunpack.c.l.bf16 %v5033
  %v5035 = vunpack.c.h.bf16 %v5033
  %s5036 = scalar_lea.vmem %s1, 536
  %s5037 = scalar_lea.vmem %s0, 2328
  %v5038 = vld [vmem:[%s5037] sm:$0xf]
  %v5039 = vunpack.c.l.bf16 %v5038
  %v5040 = vunpack.c.h.bf16 %v5038
  %s5041 = scalar_lea.vmem %s1, 1560
  %s5042 = scalar_lea.vmem %s0, 1304
  %v5043 = vld [vmem:[%s5042] sm:$0xf]
  %v5044 = vunpack.c.l.bf16 %v5043
  %v5045 = vunpack.c.h.bf16 %v5043
  %s5046 = scalar_lea.vmem %s1, 2584
  %s5047 = scalar_lea.vmem %s0, 280
  %v5048 = vld [vmem:[%s5047] sm:$0xf]
  %v5049 = vunpack.c.l.bf16 %v5048
  %v5050 = vunpack.c.h.bf16 %v5048
  %s5051 = scalar_lea.vmem %s1, 3608
  %s5052 = scalar_lea.vmem %s0, 3096
  %v5053 = vld [vmem:[%s5052] sm:$0xf]
  %v5054 = vunpack.c.l.bf16 %v5053
  %v5055 = vunpack.c.h.bf16 %v5053
  %s5056 = scalar_lea.vmem %s1, 792
  %s5057 = scalar_lea.vmem %s0, 2072
  %v5058 = vld [vmem:[%s5057] sm:$0xf]
  %v5059 = vunpack.c.l.bf16 %v5058
  %v5060 = vunpack.c.h.bf16 %v5058
  %s5061 = scalar_lea.vmem %s1, 1816
  %s5062 = scalar_lea.vmem %s0, 1048
  %v5063 = vld [vmem:[%s5062] sm:$0xf]
  %v5064 = vunpack.c.l.bf16 %v5063
  %v5065 = vunpack.c.h.bf16 %v5063
  %s5066 = scalar_lea.vmem %s1, 2840
  %s5067 = scalar_lea.vmem %s0, 24
  %v5068 = vld [vmem:[%s5067] sm:$0xf]
  %v5069 = vunpack.c.l.bf16 %v5068
  %v5070 = vunpack.c.h.bf16 %v5068
  %s5071 = scalar_lea.vmem %s1, 3864
  %s5072 = scalar_lea.vmem %s0, 3896
  %v5073 = vld [vmem:[%s5072] sm:$0xf]
  %v5074 = vunpack.c.l.bf16 %v5073
  %v5075 = vunpack.c.h.bf16 %v5073
  %s5076 = scalar_lea.vmem %s1, 56
  %s5077 = scalar_lea.vmem %s0, 2872
  %v5078 = vld [vmem:[%s5077] sm:$0xf]
  %v5079 = vunpack.c.l.bf16 %v5078
  %v5080 = vunpack.c.h.bf16 %v5078
  %s5081 = scalar_lea.vmem %s1, 1080
  %s5082 = scalar_lea.vmem %s0, 1848
  %v5083 = vld [vmem:[%s5082] sm:$0xf]
  %v5084 = vunpack.c.l.bf16 %v5083
  %v5085 = vunpack.c.h.bf16 %v5083
  %s5086 = scalar_lea.vmem %s1, 2104
  %s5087 = scalar_lea.vmem %s0, 824
  %v5088 = vld [vmem:[%s5087] sm:$0xf]
  %v5089 = vunpack.c.l.bf16 %v5088
  %v5090 = vunpack.c.h.bf16 %v5088
  %s5091 = scalar_lea.vmem %s1, 3128
  %s5092 = scalar_lea.vmem %s0, 3640
  %v5093 = vld [vmem:[%s5092] sm:$0xf]
  %v5094 = vunpack.c.l.bf16 %v5093
  %v5095 = vunpack.c.h.bf16 %v5093
  %s5096 = scalar_lea.vmem %s1, 312
  %s5097 = scalar_lea.vmem %s0, 2616
  %v5098 = vld [vmem:[%s5097] sm:$0xf]
  %v5099 = vunpack.c.l.bf16 %v5098
  %v5100 = vunpack.c.h.bf16 %v5098
  %s5101 = scalar_lea.vmem %s1, 1336
  %s5102 = scalar_lea.vmem %s0, 1592
  %v5103 = vld [vmem:[%s5102] sm:$0xf]
  %v5104 = vunpack.c.l.bf16 %v5103
  %v5105 = vunpack.c.h.bf16 %v5103
  %s5106 = scalar_lea.vmem %s1, 2360
  %s5107 = scalar_lea.vmem %s0, 568
  %v5108 = vld [vmem:[%s5107] sm:$0xf]
  %v5109 = vunpack.c.l.bf16 %v5108
  %v5110 = vunpack.c.h.bf16 %v5108
  %s5111 = scalar_lea.vmem %s1, 3384
  %s5112 = scalar_lea.vmem %s0, 3384
  %v5113 = vld [vmem:[%s5112] sm:$0xf]
  %v5114 = vunpack.c.l.bf16 %v5113
  %v5115 = vunpack.c.h.bf16 %v5113
  %s5116 = scalar_lea.vmem %s1, 568
  %s5117 = scalar_lea.vmem %s0, 2360
  %v5118 = vld [vmem:[%s5117] sm:$0xf]
  %v5119 = vunpack.c.l.bf16 %v5118
  %v5120 = vunpack.c.h.bf16 %v5118
  %s5121 = scalar_lea.vmem %s1, 1592
  %s5122 = scalar_lea.vmem %s0, 1336
  %v5123 = vld [vmem:[%s5122] sm:$0xf]
  %v5124 = vunpack.c.l.bf16 %v5123
  %v5125 = vunpack.c.h.bf16 %v5123
  %s5126 = scalar_lea.vmem %s1, 2616
  %s5127 = scalar_lea.vmem %s0, 312
  %v5128 = vld [vmem:[%s5127] sm:$0xf]
  %v5129 = vunpack.c.l.bf16 %v5128
  %v5130 = vunpack.c.h.bf16 %v5128
  %s5131 = scalar_lea.vmem %s1, 3640
  %s5132 = scalar_lea.vmem %s0, 3128
  %v5133 = vld [vmem:[%s5132] sm:$0xf]
  %v5134 = vunpack.c.l.bf16 %v5133
  %v5135 = vunpack.c.h.bf16 %v5133
  %s5136 = scalar_lea.vmem %s1, 824
  %s5137 = scalar_lea.vmem %s0, 2104
  %v5138 = vld [vmem:[%s5137] sm:$0xf]
  %v5139 = vunpack.c.l.bf16 %v5138
  %v5140 = vunpack.c.h.bf16 %v5138
  %s5141 = scalar_lea.vmem %s1, 1848
  %s5142 = scalar_lea.vmem %s0, 1080
  %v5143 = vld [vmem:[%s5142] sm:$0xf]
  %v5144 = vunpack.c.l.bf16 %v5143
  %v5145 = vunpack.c.h.bf16 %v5143
  %s5146 = scalar_lea.vmem %s1, 2872
  %s5147 = scalar_lea.vmem %s0, 56
  %v5148 = vld [vmem:[%s5147] sm:$0xf]
  %v5149 = vunpack.c.l.bf16 %v5148
  %v5150 = vunpack.c.h.bf16 %v5148
  %s5151 = scalar_lea.vmem %s1, 3896
  %s5152 = scalar_lea.vmem %s0, 3928
  %v5153 = vld [vmem:[%s5152] sm:$0xf]
  %v5154 = vunpack.c.l.bf16 %v5153
  %v5155 = vunpack.c.h.bf16 %v5153
  %s5156 = scalar_lea.vmem %s1, 88
  %s5157 = scalar_lea.vmem %s0, 2904
  %v5158 = vld [vmem:[%s5157] sm:$0xf]
  %v5159 = vunpack.c.l.bf16 %v5158
  %v5160 = vunpack.c.h.bf16 %v5158
  %s5161 = scalar_lea.vmem %s1, 1112
  %s5162 = scalar_lea.vmem %s0, 1880
  %v5163 = vld [vmem:[%s5162] sm:$0xf]
  %v5164 = vunpack.c.l.bf16 %v5163
  %v5165 = vunpack.c.h.bf16 %v5163
  %s5166 = scalar_lea.vmem %s1, 2136
  %s5167 = scalar_lea.vmem %s0, 856
  %v5168 = vld [vmem:[%s5167] sm:$0xf]
  %v5169 = vunpack.c.l.bf16 %v5168
  %v5170 = vunpack.c.h.bf16 %v5168
  %s5171 = scalar_lea.vmem %s1, 3160
  %s5172 = scalar_lea.vmem %s0, 3672
  %v5173 = vld [vmem:[%s5172] sm:$0xf]
  %v5174 = vunpack.c.l.bf16 %v5173
  %v5175 = vunpack.c.h.bf16 %v5173
  %s5176 = scalar_lea.vmem %s1, 344
  %s5177 = scalar_lea.vmem %s0, 2648
  %v5178 = vld [vmem:[%s5177] sm:$0xf]
  %v5179 = vunpack.c.l.bf16 %v5178
  %v5180 = vunpack.c.h.bf16 %v5178
  %s5181 = scalar_lea.vmem %s1, 1368
  %s5182 = scalar_lea.vmem %s0, 1624
  %v5183 = vld [vmem:[%s5182] sm:$0xf]
  %v5184 = vunpack.c.l.bf16 %v5183
  %v5185 = vunpack.c.h.bf16 %v5183
  %s5186 = scalar_lea.vmem %s1, 2392
  %s5187 = scalar_lea.vmem %s0, 600
  %v5188 = vld [vmem:[%s5187] sm:$0xf]
  %v5189 = vunpack.c.l.bf16 %v5188
  %v5190 = vunpack.c.h.bf16 %v5188
  %s5191 = scalar_lea.vmem %s1, 3416
  %s5192 = scalar_lea.vmem %s0, 3416
  %v5193 = vld [vmem:[%s5192] sm:$0xf]
  %v5194 = vunpack.c.l.bf16 %v5193
  %v5195 = vunpack.c.h.bf16 %v5193
  %s5196 = scalar_lea.vmem %s1, 600
  %s5197 = scalar_lea.vmem %s0, 2392
  %v5198 = vld [vmem:[%s5197] sm:$0xf]
  %v5199 = vunpack.c.l.bf16 %v5198
  %v5200 = vunpack.c.h.bf16 %v5198
  %s5201 = scalar_lea.vmem %s1, 1624
  %s5202 = scalar_lea.vmem %s0, 1368
  %v5203 = vld [vmem:[%s5202] sm:$0xf]
  %v5204 = vunpack.c.l.bf16 %v5203
  %v5205 = vunpack.c.h.bf16 %v5203
  %s5206 = scalar_lea.vmem %s1, 2648
  %s5207 = scalar_lea.vmem %s0, 344
  %v5208 = vld [vmem:[%s5207] sm:$0xf]
  %v5209 = vunpack.c.l.bf16 %v5208
  %v5210 = vunpack.c.h.bf16 %v5208
  %s5211 = scalar_lea.vmem %s1, 3672
  %s5212 = scalar_lea.vmem %s0, 3160
  %v5213 = vld [vmem:[%s5212] sm:$0xf]
  %v5214 = vunpack.c.l.bf16 %v5213
  %v5215 = vunpack.c.h.bf16 %v5213
  %s5216 = scalar_lea.vmem %s1, 856
  %s5217 = scalar_lea.vmem %s0, 2136
  %v5218 = vld [vmem:[%s5217] sm:$0xf]
  %v5219 = vunpack.c.l.bf16 %v5218
  %v5220 = vunpack.c.h.bf16 %v5218
  %s5221 = scalar_lea.vmem %s1, 1880
  %s5222 = scalar_lea.vmem %s0, 1112
  %v5223 = vld [vmem:[%s5222] sm:$0xf]
  %v5224 = vunpack.c.l.bf16 %v5223
  %v5225 = vunpack.c.h.bf16 %v5223
  %s5226 = scalar_lea.vmem %s1, 2904
  %s5227 = scalar_lea.vmem %s0, 88
  %v5228 = vld [vmem:[%s5227] sm:$0xf]
  %v5229 = vunpack.c.l.bf16 %v5228
  %v5230 = vunpack.c.h.bf16 %v5228
  %s5231 = scalar_lea.vmem %s1, 3928
  %s5232 = scalar_lea.vmem %s0, 3960
  %v5233 = vld [vmem:[%s5232] sm:$0xf]
  %v5234 = vunpack.c.l.bf16 %v5233
  %v5235 = vunpack.c.h.bf16 %v5233
  %s5236 = scalar_lea.vmem %s1, 120
  %s5237 = scalar_lea.vmem %s0, 2936
  %v5238 = vld [vmem:[%s5237] sm:$0xf]
  %v5239 = vunpack.c.l.bf16 %v5238
  %v5240 = vunpack.c.h.bf16 %v5238
  %s5241 = scalar_lea.vmem %s1, 1144
  %s5242 = scalar_lea.vmem %s0, 1912
  %v5243 = vld [vmem:[%s5242] sm:$0xf]
  %v5244 = vunpack.c.l.bf16 %v5243
  %v5245 = vunpack.c.h.bf16 %v5243
  %s5246 = scalar_lea.vmem %s1, 2168
  %s5247 = scalar_lea.vmem %s0, 888
  %v5248 = vld [vmem:[%s5247] sm:$0xf]
  %v5249 = vunpack.c.l.bf16 %v5248
  %v5250 = vunpack.c.h.bf16 %v5248
  %s5251 = scalar_lea.vmem %s1, 3192
  %s5252 = scalar_lea.vmem %s0, 3704
  %v5253 = vld [vmem:[%s5252] sm:$0xf]
  %v5254 = vunpack.c.l.bf16 %v5253
  %v5255 = vunpack.c.h.bf16 %v5253
  %s5256 = scalar_lea.vmem %s1, 376
  %s5257 = scalar_lea.vmem %s0, 2680
  %v5258 = vld [vmem:[%s5257] sm:$0xf]
  %v5259 = vunpack.c.l.bf16 %v5258
  %v5260 = vunpack.c.h.bf16 %v5258
  %s5261 = scalar_lea.vmem %s1, 1400
  %s5262 = scalar_lea.vmem %s0, 1656
  %v5263 = vld [vmem:[%s5262] sm:$0xf]
  %v5264 = vunpack.c.l.bf16 %v5263
  %v5265 = vunpack.c.h.bf16 %v5263
  %s5266 = scalar_lea.vmem %s1, 2424
  %s5267 = scalar_lea.vmem %s0, 632
  %v5268 = vld [vmem:[%s5267] sm:$0xf]
  %v5269 = vunpack.c.l.bf16 %v5268
  %v5270 = vunpack.c.h.bf16 %v5268
  %s5271 = scalar_lea.vmem %s1, 3448
  %s5272 = scalar_lea.vmem %s0, 3448
  %v5273 = vld [vmem:[%s5272] sm:$0xf]
  %v5274 = vunpack.c.l.bf16 %v5273
  %v5275 = vunpack.c.h.bf16 %v5273
  %s5276 = scalar_lea.vmem %s1, 632
  %s5277 = scalar_lea.vmem %s0, 2424
  %v5278 = vld [vmem:[%s5277] sm:$0xf]
  %v5279 = vunpack.c.l.bf16 %v5278
  %v5280 = vunpack.c.h.bf16 %v5278
  %s5281 = scalar_lea.vmem %s1, 1656
  %s5282 = scalar_lea.vmem %s0, 1400
  %v5283 = vld [vmem:[%s5282] sm:$0xf]
  %v5284 = vunpack.c.l.bf16 %v5283
  %v5285 = vunpack.c.h.bf16 %v5283
  %s5286 = scalar_lea.vmem %s1, 2680
  %s5287 = scalar_lea.vmem %s0, 376
  %v5288 = vld [vmem:[%s5287] sm:$0xf]
  %v5289 = vunpack.c.l.bf16 %v5288
  %v5290 = vunpack.c.h.bf16 %v5288
  %s5291 = scalar_lea.vmem %s1, 3704
  %s5292 = scalar_lea.vmem %s0, 3192
  %v5293 = vld [vmem:[%s5292] sm:$0xf]
  %v5294 = vunpack.c.l.bf16 %v5293
  %v5295 = vunpack.c.h.bf16 %v5293
  %s5296 = scalar_lea.vmem %s1, 888
  %s5297 = scalar_lea.vmem %s0, 2168
  %v5298 = vld [vmem:[%s5297] sm:$0xf]
  %v5299 = vunpack.c.l.bf16 %v5298
  %v5300 = vunpack.c.h.bf16 %v5298
  %s5301 = scalar_lea.vmem %s1, 1912
  %s5302 = scalar_lea.vmem %s0, 1144
  %v5303 = vld [vmem:[%s5302] sm:$0xf]
  %v5304 = vunpack.c.l.bf16 %v5303
  %v5305 = vunpack.c.h.bf16 %v5303
  %s5306 = scalar_lea.vmem %s1, 2936
  %s5307 = scalar_lea.vmem %s0, 120
  %v5308 = vld [vmem:[%s5307] sm:$0xf]
  %v5309 = vunpack.c.l.bf16 %v5308
  %v5310 = vunpack.c.h.bf16 %v5308
  %s5311 = scalar_lea.vmem %s1, 3960
  %s5312 = scalar_lea.vmem %s0, 3992
  %v5313 = vld [vmem:[%s5312] sm:$0xf]
  %v5314 = vunpack.c.l.bf16 %v5313
  %v5315 = vunpack.c.h.bf16 %v5313
  %s5316 = scalar_lea.vmem %s1, 152
  %s5317 = scalar_lea.vmem %s0, 2968
  %v5318 = vld [vmem:[%s5317] sm:$0xf]
  %v5319 = vunpack.c.l.bf16 %v5318
  %v5320 = vunpack.c.h.bf16 %v5318
  %s5321 = scalar_lea.vmem %s1, 1176
  %s5322 = scalar_lea.vmem %s0, 1944
  %v5323 = vld [vmem:[%s5322] sm:$0xf]
  %v5324 = vunpack.c.l.bf16 %v5323
  %v5325 = vunpack.c.h.bf16 %v5323
  %s5326 = scalar_lea.vmem %s1, 2200
  %s5327 = scalar_lea.vmem %s0, 920
  %v5328 = vld [vmem:[%s5327] sm:$0xf]
  %v5329 = vunpack.c.l.bf16 %v5328
  %v5330 = vunpack.c.h.bf16 %v5328
  %s5331 = scalar_lea.vmem %s1, 3224
  %s5332 = scalar_lea.vmem %s0, 3736
  %v5333 = vld [vmem:[%s5332] sm:$0xf]
  %v5334 = vunpack.c.l.bf16 %v5333
  %v5335 = vunpack.c.h.bf16 %v5333
  %s5336 = scalar_lea.vmem %s1, 408
  %s5337 = scalar_lea.vmem %s0, 2712
  %v5338 = vld [vmem:[%s5337] sm:$0xf]
  %v5339 = vunpack.c.l.bf16 %v5338
  %v5340 = vunpack.c.h.bf16 %v5338
  %s5341 = scalar_lea.vmem %s1, 1432
  %s5342 = scalar_lea.vmem %s0, 1688
  %v5343 = vld [vmem:[%s5342] sm:$0xf]
  %v5344 = vunpack.c.l.bf16 %v5343
  %v5345 = vunpack.c.h.bf16 %v5343
  %s5346 = scalar_lea.vmem %s1, 2456
  %s5347 = scalar_lea.vmem %s0, 664
  %v5348 = vld [vmem:[%s5347] sm:$0xf]
  %v5349 = vunpack.c.l.bf16 %v5348
  %v5350 = vunpack.c.h.bf16 %v5348
  %s5351 = scalar_lea.vmem %s1, 3480
  %s5352 = scalar_lea.vmem %s0, 3480
  %v5353 = vld [vmem:[%s5352] sm:$0xf]
  %v5354 = vunpack.c.l.bf16 %v5353
  %v5355 = vunpack.c.h.bf16 %v5353
  %s5356 = scalar_lea.vmem %s1, 664
  %s5357 = scalar_lea.vmem %s0, 2456
  %v5358 = vld [vmem:[%s5357] sm:$0xf]
  %v5359 = vunpack.c.l.bf16 %v5358
  %v5360 = vunpack.c.h.bf16 %v5358
  %s5361 = scalar_lea.vmem %s1, 1688
  %s5362 = scalar_lea.vmem %s0, 1432
  %v5363 = vld [vmem:[%s5362] sm:$0xf]
  %v5364 = vunpack.c.l.bf16 %v5363
  %v5365 = vunpack.c.h.bf16 %v5363
  %s5366 = scalar_lea.vmem %s1, 2712
  %s5367 = scalar_lea.vmem %s0, 408
  %v5368 = vld [vmem:[%s5367] sm:$0xf]
  %v5369 = vunpack.c.l.bf16 %v5368
  %v5370 = vunpack.c.h.bf16 %v5368
  %s5371 = scalar_lea.vmem %s1, 3736
  %s5372 = scalar_lea.vmem %s0, 3224
  %v5373 = vld [vmem:[%s5372] sm:$0xf]
  %v5374 = vunpack.c.l.bf16 %v5373
  %v5375 = vunpack.c.h.bf16 %v5373
  %s5376 = scalar_lea.vmem %s1, 920
  %s5377 = scalar_lea.vmem %s0, 2200
  %v5378 = vld [vmem:[%s5377] sm:$0xf]
  %v5379 = vunpack.c.l.bf16 %v5378
  %v5380 = vunpack.c.h.bf16 %v5378
  %s5381 = scalar_lea.vmem %s1, 1944
  %s5382 = scalar_lea.vmem %s0, 1176
  %v5383 = vld [vmem:[%s5382] sm:$0xf]
  %v5384 = vunpack.c.l.bf16 %v5383
  %v5385 = vunpack.c.h.bf16 %v5383
  %s5386 = scalar_lea.vmem %s1, 2968
  %s5387 = scalar_lea.vmem %s0, 152
  %v5388 = vld [vmem:[%s5387] sm:$0xf]
  %v5389 = vunpack.c.l.bf16 %v5388
  %v5390 = vunpack.c.h.bf16 %v5388
  %s5391 = scalar_lea.vmem %s1, 3992
  %s5392 = scalar_lea.vmem %s0, 4024
  %v5393 = vld [vmem:[%s5392] sm:$0xf]
  %v5394 = vunpack.c.l.bf16 %v5393
  %v5395 = vunpack.c.h.bf16 %v5393
  %s5396 = scalar_lea.vmem %s1, 184
  %s5397 = scalar_lea.vmem %s0, 3000
  %v5398 = vld [vmem:[%s5397] sm:$0xf]
  %v5399 = vunpack.c.l.bf16 %v5398
  %v5400 = vunpack.c.h.bf16 %v5398
  %s5401 = scalar_lea.vmem %s1, 1208
  %s5402 = scalar_lea.vmem %s0, 1976
  %v5403 = vld [vmem:[%s5402] sm:$0xf]
  %v5404 = vunpack.c.l.bf16 %v5403
  %v5405 = vunpack.c.h.bf16 %v5403
  %s5406 = scalar_lea.vmem %s1, 2232
  %s5407 = scalar_lea.vmem %s0, 952
  %v5408 = vld [vmem:[%s5407] sm:$0xf]
  %v5409 = vunpack.c.l.bf16 %v5408
  %v5410 = vunpack.c.h.bf16 %v5408
  %s5411 = scalar_lea.vmem %s1, 3256
  %s5412 = scalar_lea.vmem %s0, 3768
  %v5413 = vld [vmem:[%s5412] sm:$0xf]
  %v5414 = vunpack.c.l.bf16 %v5413
  %v5415 = vunpack.c.h.bf16 %v5413
  %s5416 = scalar_lea.vmem %s1, 440
  %s5417 = scalar_lea.vmem %s0, 2744
  %v5418 = vld [vmem:[%s5417] sm:$0xf]
  %v5419 = vunpack.c.l.bf16 %v5418
  %v5420 = vunpack.c.h.bf16 %v5418
  %s5421 = scalar_lea.vmem %s1, 1464
  %s5422 = scalar_lea.vmem %s0, 1720
  %v5423 = vld [vmem:[%s5422] sm:$0xf]
  %v5424 = vunpack.c.l.bf16 %v5423
  %v5425 = vunpack.c.h.bf16 %v5423
  %s5426 = scalar_lea.vmem %s1, 2488
  %s5427 = scalar_lea.vmem %s0, 696
  %v5428 = vld [vmem:[%s5427] sm:$0xf]
  %v5429 = vunpack.c.l.bf16 %v5428
  %v5430 = vunpack.c.h.bf16 %v5428
  %s5431 = scalar_lea.vmem %s1, 3512
  %s5432 = scalar_lea.vmem %s0, 3512
  %v5433 = vld [vmem:[%s5432] sm:$0xf]
  %v5434 = vunpack.c.l.bf16 %v5433
  %v5435 = vunpack.c.h.bf16 %v5433
  %s5436 = scalar_lea.vmem %s1, 696
  %s5437 = scalar_lea.vmem %s0, 2488
  %v5438 = vld [vmem:[%s5437] sm:$0xf]
  %v5439 = vunpack.c.l.bf16 %v5438
  %v5440 = vunpack.c.h.bf16 %v5438
  %s5441 = scalar_lea.vmem %s1, 1720
  %s5442 = scalar_lea.vmem %s0, 1464
  %v5443 = vld [vmem:[%s5442] sm:$0xf]
  %v5444 = vunpack.c.l.bf16 %v5443
  %v5445 = vunpack.c.h.bf16 %v5443
  %s5446 = scalar_lea.vmem %s1, 2744
  %s5447 = scalar_lea.vmem %s0, 440
  %v5448 = vld [vmem:[%s5447] sm:$0xf]
  %v5449 = vunpack.c.l.bf16 %v5448
  %v5450 = vunpack.c.h.bf16 %v5448
  %s5451 = scalar_lea.vmem %s1, 3768
  %s5452 = scalar_lea.vmem %s0, 3256
  %v5453 = vld [vmem:[%s5452] sm:$0xf]
  %v5454 = vunpack.c.l.bf16 %v5453
  %v5455 = vunpack.c.h.bf16 %v5453
  %s5456 = scalar_lea.vmem %s1, 952
  %s5457 = scalar_lea.vmem %s0, 2232
  %v5458 = vld [vmem:[%s5457] sm:$0xf]
  %v5459 = vunpack.c.l.bf16 %v5458
  %v5460 = vunpack.c.h.bf16 %v5458
  %s5461 = scalar_lea.vmem %s1, 1976
  %s5462 = scalar_lea.vmem %s0, 1208
  %v5463 = vld [vmem:[%s5462] sm:$0xf]
  %v5464 = vunpack.c.l.bf16 %v5463
  %v5465 = vunpack.c.h.bf16 %v5463
  %s5466 = scalar_lea.vmem %s1, 3000
  %s5467 = scalar_lea.vmem %s0, 184
  %v5468 = vld [vmem:[%s5467] sm:$0xf]
  %v5469 = vunpack.c.l.bf16 %v5468
  %v5470 = vunpack.c.h.bf16 %v5468
  %s5471 = scalar_lea.vmem %s1, 4024
  %s5472 = scalar_lea.vmem %s0, 4056
  %v5473 = vld [vmem:[%s5472] sm:$0xf]
  %v5474 = vunpack.c.l.bf16 %v5473
  %v5475 = vunpack.c.h.bf16 %v5473
  %s5476 = scalar_lea.vmem %s1, 216
  %s5477 = scalar_lea.vmem %s0, 3032
  %v5478 = vld [vmem:[%s5477] sm:$0xf]
  %v5479 = vunpack.c.l.bf16 %v5478
  %v5480 = vunpack.c.h.bf16 %v5478
  %s5481 = scalar_lea.vmem %s1, 1240
  %s5482 = scalar_lea.vmem %s0, 2008
  %v5483 = vld [vmem:[%s5482] sm:$0xf]
  %v5484 = vunpack.c.l.bf16 %v5483
  %v5485 = vunpack.c.h.bf16 %v5483
  %s5486 = scalar_lea.vmem %s1, 2264
  %s5487 = scalar_lea.vmem %s0, 984
  %v5488 = vld [vmem:[%s5487] sm:$0xf]
  %v5489 = vunpack.c.l.bf16 %v5488
  %v5490 = vunpack.c.h.bf16 %v5488
  %s5491 = scalar_lea.vmem %s1, 3288
  %s5492 = scalar_lea.vmem %s0, 3800
  %v5493 = vld [vmem:[%s5492] sm:$0xf]
  %v5494 = vunpack.c.l.bf16 %v5493
  %v5495 = vunpack.c.h.bf16 %v5493
  %s5496 = scalar_lea.vmem %s1, 472
  %s5497 = scalar_lea.vmem %s0, 2776
  %v5498 = vld [vmem:[%s5497] sm:$0xf]
  %v5499 = vunpack.c.l.bf16 %v5498
  %v5500 = vunpack.c.h.bf16 %v5498
  %s5501 = scalar_lea.vmem %s1, 1496
  %s5502 = scalar_lea.vmem %s0, 1752
  %v5503 = vld [vmem:[%s5502] sm:$0xf]
  %v5504 = vunpack.c.l.bf16 %v5503
  %v5505 = vunpack.c.h.bf16 %v5503
  %s5506 = scalar_lea.vmem %s1, 2520
  %s5507 = scalar_lea.vmem %s0, 728
  %v5508 = vld [vmem:[%s5507] sm:$0xf]
  %v5509 = vunpack.c.l.bf16 %v5508
  %v5510 = vunpack.c.h.bf16 %v5508
  %s5511 = scalar_lea.vmem %s1, 3544
  %s5512 = scalar_lea.vmem %s0, 3544
  %v5513 = vld [vmem:[%s5512] sm:$0xf]
  %v5514 = vunpack.c.l.bf16 %v5513
  %v5515 = vunpack.c.h.bf16 %v5513
  %s5516 = scalar_lea.vmem %s1, 728
  %s5517 = scalar_lea.vmem %s0, 2520
  %v5518 = vld [vmem:[%s5517] sm:$0xf]
  %v5519 = vunpack.c.l.bf16 %v5518
  %v5520 = vunpack.c.h.bf16 %v5518
  %s5521 = scalar_lea.vmem %s1, 1752
  %s5522 = scalar_lea.vmem %s0, 1496
  %v5523 = vld [vmem:[%s5522] sm:$0xf]
  %v5524 = vunpack.c.l.bf16 %v5523
  %v5525 = vunpack.c.h.bf16 %v5523
  %s5526 = scalar_lea.vmem %s1, 2776
  %s5527 = scalar_lea.vmem %s0, 472
  %v5528 = vld [vmem:[%s5527] sm:$0xf]
  %v5529 = vunpack.c.l.bf16 %v5528
  %v5530 = vunpack.c.h.bf16 %v5528
  %s5531 = scalar_lea.vmem %s1, 3800
  %s5532 = scalar_lea.vmem %s0, 3288
  %v5533 = vld [vmem:[%s5532] sm:$0xf]
  %v5534 = vunpack.c.l.bf16 %v5533
  %v5535 = vunpack.c.h.bf16 %v5533
  %s5536 = scalar_lea.vmem %s1, 984
  %s5537 = scalar_lea.vmem %s0, 2264
  %v5538 = vld [vmem:[%s5537] sm:$0xf]
  %v5539 = vunpack.c.l.bf16 %v5538
  %v5540 = vunpack.c.h.bf16 %v5538
  %s5541 = scalar_lea.vmem %s1, 2008
  %s5542 = scalar_lea.vmem %s0, 1240
  %v5543 = vld [vmem:[%s5542] sm:$0xf]
  %v5544 = vunpack.c.l.bf16 %v5543
  %v5545 = vunpack.c.h.bf16 %v5543
  %s5546 = scalar_lea.vmem %s1, 3032
  %s5547 = scalar_lea.vmem %s0, 216
  %v5548 = vld [vmem:[%s5547] sm:$0xf]
  %v5549 = vunpack.c.l.bf16 %v5548
  %v5550 = vunpack.c.h.bf16 %v5548
  %s5551 = scalar_lea.vmem %s1, 4056
  %s5552 = scalar_lea.vmem %s0, 4088
  %v5553 = vld [vmem:[%s5552] sm:$0xf]
  %v5554 = vunpack.c.l.bf16 %v5553
  %v5555 = vunpack.c.h.bf16 %v5553
  %s5556 = scalar_lea.vmem %s1, 248
  %s5557 = scalar_lea.vmem %s0, 3064
  %v5558 = vld [vmem:[%s5557] sm:$0xf]
  %v5559 = vunpack.c.l.bf16 %v5558
  %v5560 = vunpack.c.h.bf16 %v5558
  %s5561 = scalar_lea.vmem %s1, 1272
  %s5562 = scalar_lea.vmem %s0, 2040
  %v5563 = vld [vmem:[%s5562] sm:$0xf]
  %v5564 = vunpack.c.l.bf16 %v5563
  %v5565 = vunpack.c.h.bf16 %v5563
  %s5566 = scalar_lea.vmem %s1, 2296
  %s5567 = scalar_lea.vmem %s0, 1016
  %v5568 = vld [vmem:[%s5567] sm:$0xf]
  %v5569 = vunpack.c.l.bf16 %v5568
  %v5570 = vunpack.c.h.bf16 %v5568
  %s5571 = scalar_lea.vmem %s1, 3320
  %s5572 = scalar_lea.vmem %s0, 3832
  %v5573 = vld [vmem:[%s5572] sm:$0xf]
  %v5574 = vunpack.c.l.bf16 %v5573
  %v5575 = vunpack.c.h.bf16 %v5573
  %s5576 = scalar_lea.vmem %s1, 504
  %s5577 = scalar_lea.vmem %s0, 2808
  %v5578 = vld [vmem:[%s5577] sm:$0xf]
  %v5579 = vunpack.c.l.bf16 %v5578
  %v5580 = vunpack.c.h.bf16 %v5578
  %s5581 = scalar_lea.vmem %s1, 1528
  %s5582 = scalar_lea.vmem %s0, 1784
  %v5583 = vld [vmem:[%s5582] sm:$0xf]
  %v5584 = vunpack.c.l.bf16 %v5583
  %v5585 = vunpack.c.h.bf16 %v5583
  %s5586 = scalar_lea.vmem %s1, 2552
  %s5587 = scalar_lea.vmem %s0, 760
  %v5588 = vld [vmem:[%s5587] sm:$0xf]
  %v5589 = vunpack.c.l.bf16 %v5588
  %v5590 = vunpack.c.h.bf16 %v5588
  %s5591 = scalar_lea.vmem %s1, 3576
  %s5592 = scalar_lea.vmem %s0, 3576
  %v5593 = vld [vmem:[%s5592] sm:$0xf]
  %v5594 = vunpack.c.l.bf16 %v5593
  %v5595 = vunpack.c.h.bf16 %v5593
  %s5596 = scalar_lea.vmem %s1, 760
  %s5597 = scalar_lea.vmem %s0, 2552
  %v5598 = vld [vmem:[%s5597] sm:$0xf]
  %v5599 = vunpack.c.l.bf16 %v5598
  %v5600 = vunpack.c.h.bf16 %v5598
  %s5601 = scalar_lea.vmem %s1, 1784
  %s5602 = scalar_lea.vmem %s0, 1528
  %v5603 = vld [vmem:[%s5602] sm:$0xf]
  %v5604 = vunpack.c.l.bf16 %v5603
  %v5605 = vunpack.c.h.bf16 %v5603
  %s5606 = scalar_lea.vmem %s1, 2808
  %s5607 = scalar_lea.vmem %s0, 504
  %v5608 = vld [vmem:[%s5607] sm:$0xf]
  %v5609 = vunpack.c.l.bf16 %v5608
  %v5610 = vunpack.c.h.bf16 %v5608
  %s5611 = scalar_lea.vmem %s1, 3832
  %s5612 = scalar_lea.vmem %s0, 3320
  %v5613 = vld [vmem:[%s5612] sm:$0xf]
  %v5614 = vunpack.c.l.bf16 %v5613
  %v5615 = vunpack.c.h.bf16 %v5613
  %s5616 = scalar_lea.vmem %s1, 1016
  %s5617 = scalar_lea.vmem %s0, 2296
  %v5618 = vld [vmem:[%s5617] sm:$0xf]
  %v5619 = vunpack.c.l.bf16 %v5618
  %v5620 = vunpack.c.h.bf16 %v5618
  %s5621 = scalar_lea.vmem %s1, 2040
  %s5622 = scalar_lea.vmem %s0, 1272
  %v5623 = vld [vmem:[%s5622] sm:$0xf]
  %v5624 = vunpack.c.l.bf16 %v5623
  %v5625 = vunpack.c.h.bf16 %v5623
  %s5626 = scalar_lea.vmem %s1, 3064
  %s5627 = scalar_lea.vmem %s0, 248
  %v5628 = vld [vmem:[%s5627] sm:$0xf]
  %v5629 = vunpack.c.l.bf16 %v5628
  %v5630 = vunpack.c.h.bf16 %v5628
  %s5631 = scalar_lea.vmem %s1, 4088
  %s5632 = scalar_lea.vmem %s0, 3868
  %v5633 = vld [vmem:[%s5632] sm:$0xf]
  %v5634 = vunpack.c.l.bf16 %v5633
  %v5635 = vunpack.c.h.bf16 %v5633
  %s5636 = scalar_lea.vmem %s1, 28
  %s5637 = scalar_lea.vmem %s5636, 4294967292
  %v5638 = vpack.c.bf16 %v5634, %v4994
  %5639 = vst [vmem:[%s5637] sm:$0xff] %v5638
  %s5640 = scalar_lea.vmem %s0, 2844
  %v5641 = vld [vmem:[%s5640] sm:$0xf]
  %v5642 = vunpack.c.l.bf16 %v5641
  %v5643 = vunpack.c.h.bf16 %v5641
  %s5644 = scalar_lea.vmem %s1, 1052
  %s5645 = scalar_lea.vmem %s5644, 4294967292
  %v5646 = vpack.c.bf16 %v5642, %v4999
  %5647 = vst [vmem:[%s5645] sm:$0xff] %v5646
  %s5648 = scalar_lea.vmem %s0, 1820
  %v5649 = vld [vmem:[%s5648] sm:$0xf]
  %v5650 = vunpack.c.l.bf16 %v5649
  %v5651 = vunpack.c.h.bf16 %v5649
  %s5652 = scalar_lea.vmem %s1, 2076
  %s5653 = scalar_lea.vmem %s5652, 4294967292
  %v5654 = vpack.c.bf16 %v5650, %v5004
  %5655 = vst [vmem:[%s5653] sm:$0xff] %v5654
  %s5656 = scalar_lea.vmem %s0, 796
  %v5657 = vld [vmem:[%s5656] sm:$0xf]
  %v5658 = vunpack.c.l.bf16 %v5657
  %v5659 = vunpack.c.h.bf16 %v5657
  %s5660 = scalar_lea.vmem %s1, 3100
  %s5661 = scalar_lea.vmem %s5660, 4294967292
  %v5662 = vpack.c.bf16 %v5658, %v5009
  %5663 = vst [vmem:[%s5661] sm:$0xff] %v5662
  %s5664 = scalar_lea.vmem %s0, 3612
  %v5665 = vld [vmem:[%s5664] sm:$0xf]
  %v5666 = vunpack.c.l.bf16 %v5665
  %v5667 = vunpack.c.h.bf16 %v5665
  %s5668 = scalar_lea.vmem %s1, 284
  %s5669 = scalar_lea.vmem %s5668, 4294967292
  %v5670 = vpack.c.bf16 %v5666, %v5014
  %5671 = vst [vmem:[%s5669] sm:$0xff] %v5670
  %s5672 = scalar_lea.vmem %s0, 2588
  %v5673 = vld [vmem:[%s5672] sm:$0xf]
  %v5674 = vunpack.c.l.bf16 %v5673
  %v5675 = vunpack.c.h.bf16 %v5673
  %s5676 = scalar_lea.vmem %s1, 1308
  %s5677 = scalar_lea.vmem %s5676, 4294967292
  %v5678 = vpack.c.bf16 %v5674, %v5019
  %5679 = vst [vmem:[%s5677] sm:$0xff] %v5678
  %s5680 = scalar_lea.vmem %s0, 1564
  %v5681 = vld [vmem:[%s5680] sm:$0xf]
  %v5682 = vunpack.c.l.bf16 %v5681
  %v5683 = vunpack.c.h.bf16 %v5681
  %s5684 = scalar_lea.vmem %s1, 2332
  %s5685 = scalar_lea.vmem %s5684, 4294967292
  %v5686 = vpack.c.bf16 %v5682, %v5024
  %5687 = vst [vmem:[%s5685] sm:$0xff] %v5686
  %s5688 = scalar_lea.vmem %s0, 540
  %v5689 = vld [vmem:[%s5688] sm:$0xf]
  %v5690 = vunpack.c.l.bf16 %v5689
  %v5691 = vunpack.c.h.bf16 %v5689
  %s5692 = scalar_lea.vmem %s1, 3356
  %s5693 = scalar_lea.vmem %s5692, 4294967292
  %v5694 = vpack.c.bf16 %v5690, %v5029
  %5695 = vst [vmem:[%s5693] sm:$0xff] %v5694
  %s5696 = scalar_lea.vmem %s0, 3356
  %v5697 = vld [vmem:[%s5696] sm:$0xf]
  %v5698 = vunpack.c.l.bf16 %v5697
  %v5699 = vunpack.c.h.bf16 %v5697
  %s5700 = scalar_lea.vmem %s1, 540
  %s5701 = scalar_lea.vmem %s5700, 4294967292
  %v5702 = vpack.c.bf16 %v5698, %v5034
  %5703 = vst [vmem:[%s5701] sm:$0xff] %v5702
  %s5704 = scalar_lea.vmem %s0, 2332
  %v5705 = vld [vmem:[%s5704] sm:$0xf]
  %v5706 = vunpack.c.l.bf16 %v5705
  %v5707 = vunpack.c.h.bf16 %v5705
  %s5708 = scalar_lea.vmem %s1, 1564
  %s5709 = scalar_lea.vmem %s5708, 4294967292
  %v5710 = vpack.c.bf16 %v5706, %v5039
  %5711 = vst [vmem:[%s5709] sm:$0xff] %v5710
  %s5712 = scalar_lea.vmem %s0, 1308
  %v5713 = vld [vmem:[%s5712] sm:$0xf]
  %v5714 = vunpack.c.l.bf16 %v5713
  %v5715 = vunpack.c.h.bf16 %v5713
  %s5716 = scalar_lea.vmem %s1, 2588
  %s5717 = scalar_lea.vmem %s5716, 4294967292
  %v5718 = vpack.c.bf16 %v5714, %v5044
  %5719 = vst [vmem:[%s5717] sm:$0xff] %v5718
  %s5720 = scalar_lea.vmem %s0, 284
  %v5721 = vld [vmem:[%s5720] sm:$0xf]
  %v5722 = vunpack.c.l.bf16 %v5721
  %v5723 = vunpack.c.h.bf16 %v5721
  %s5724 = scalar_lea.vmem %s1, 3612
  %s5725 = scalar_lea.vmem %s5724, 4294967292
  %v5726 = vpack.c.bf16 %v5722, %v5049
  %5727 = vst [vmem:[%s5725] sm:$0xff] %v5726
  %s5728 = scalar_lea.vmem %s0, 3100
  %v5729 = vld [vmem:[%s5728] sm:$0xf]
  %v5730 = vunpack.c.l.bf16 %v5729
  %v5731 = vunpack.c.h.bf16 %v5729
  %s5732 = scalar_lea.vmem %s1, 796
  %s5733 = scalar_lea.vmem %s5732, 4294967292
  %v5734 = vpack.c.bf16 %v5730, %v5054
  %5735 = vst [vmem:[%s5733] sm:$0xff] %v5734
  %s5736 = scalar_lea.vmem %s0, 2076
  %v5737 = vld [vmem:[%s5736] sm:$0xf]
  %v5738 = vunpack.c.l.bf16 %v5737
  %v5739 = vunpack.c.h.bf16 %v5737
  %s5740 = scalar_lea.vmem %s1, 1820
  %s5741 = scalar_lea.vmem %s5740, 4294967292
  %v5742 = vpack.c.bf16 %v5738, %v5059
  %5743 = vst [vmem:[%s5741] sm:$0xff] %v5742
  %s5744 = scalar_lea.vmem %s0, 1052
  %v5745 = vld [vmem:[%s5744] sm:$0xf]
  %v5746 = vunpack.c.l.bf16 %v5745
  %v5747 = vunpack.c.h.bf16 %v5745
  %s5748 = scalar_lea.vmem %s1, 2844
  %s5749 = scalar_lea.vmem %s5748, 4294967292
  %v5750 = vpack.c.bf16 %v5746, %v5064
  %5751 = vst [vmem:[%s5749] sm:$0xff] %v5750
  %s5752 = scalar_lea.vmem %s0, 28
  %v5753 = vld [vmem:[%s5752] sm:$0xf]
  %v5754 = vunpack.c.l.bf16 %v5753
  %v5755 = vunpack.c.h.bf16 %v5753
  %s5756 = scalar_lea.vmem %s1, 3868
  %s5757 = scalar_lea.vmem %s5756, 4294967292
  %v5758 = vpack.c.bf16 %v5754, %v5069
  %5759 = vst [vmem:[%s5757] sm:$0xff] %v5758
  %s5760 = scalar_lea.vmem %s0, 3900
  %v5761 = vld [vmem:[%s5760] sm:$0xf]
  %v5762 = vunpack.c.l.bf16 %v5761
  %v5763 = vunpack.c.h.bf16 %v5761
  %s5764 = scalar_lea.vmem %s1, 60
  %s5765 = scalar_lea.vmem %s5764, 4294967292
  %v5766 = vpack.c.bf16 %v5762, %v5074
  %5767 = vst [vmem:[%s5765] sm:$0xff] %v5766
  %s5768 = scalar_lea.vmem %s0, 2876
  %v5769 = vld [vmem:[%s5768] sm:$0xf]
  %v5770 = vunpack.c.l.bf16 %v5769
  %v5771 = vunpack.c.h.bf16 %v5769
  %s5772 = scalar_lea.vmem %s1, 1084
  %s5773 = scalar_lea.vmem %s5772, 4294967292
  %v5774 = vpack.c.bf16 %v5770, %v5079
  %5775 = vst [vmem:[%s5773] sm:$0xff] %v5774
  %s5776 = scalar_lea.vmem %s0, 1852
  %v5777 = vld [vmem:[%s5776] sm:$0xf]
  %v5778 = vunpack.c.l.bf16 %v5777
  %v5779 = vunpack.c.h.bf16 %v5777
  %s5780 = scalar_lea.vmem %s1, 2108
  %s5781 = scalar_lea.vmem %s5780, 4294967292
  %v5782 = vpack.c.bf16 %v5778, %v5084
  %5783 = vst [vmem:[%s5781] sm:$0xff] %v5782
  %s5784 = scalar_lea.vmem %s0, 828
  %v5785 = vld [vmem:[%s5784] sm:$0xf]
  %v5786 = vunpack.c.l.bf16 %v5785
  %v5787 = vunpack.c.h.bf16 %v5785
  %s5788 = scalar_lea.vmem %s1, 3132
  %s5789 = scalar_lea.vmem %s5788, 4294967292
  %v5790 = vpack.c.bf16 %v5786, %v5089
  %5791 = vst [vmem:[%s5789] sm:$0xff] %v5790
  %s5792 = scalar_lea.vmem %s0, 3644
  %v5793 = vld [vmem:[%s5792] sm:$0xf]
  %v5794 = vunpack.c.l.bf16 %v5793
  %v5795 = vunpack.c.h.bf16 %v5793
  %s5796 = scalar_lea.vmem %s1, 316
  %s5797 = scalar_lea.vmem %s5796, 4294967292
  %v5798 = vpack.c.bf16 %v5794, %v5094
  %5799 = vst [vmem:[%s5797] sm:$0xff] %v5798
  %s5800 = scalar_lea.vmem %s0, 2620
  %v5801 = vld [vmem:[%s5800] sm:$0xf]
  %v5802 = vunpack.c.l.bf16 %v5801
  %v5803 = vunpack.c.h.bf16 %v5801
  %s5804 = scalar_lea.vmem %s1, 1340
  %s5805 = scalar_lea.vmem %s5804, 4294967292
  %v5806 = vpack.c.bf16 %v5802, %v5099
  %5807 = vst [vmem:[%s5805] sm:$0xff] %v5806
  %s5808 = scalar_lea.vmem %s0, 1596
  %v5809 = vld [vmem:[%s5808] sm:$0xf]
  %v5810 = vunpack.c.l.bf16 %v5809
  %v5811 = vunpack.c.h.bf16 %v5809
  %s5812 = scalar_lea.vmem %s1, 2364
  %s5813 = scalar_lea.vmem %s5812, 4294967292
  %v5814 = vpack.c.bf16 %v5810, %v5104
  %5815 = vst [vmem:[%s5813] sm:$0xff] %v5814
  %s5816 = scalar_lea.vmem %s0, 572
  %v5817 = vld [vmem:[%s5816] sm:$0xf]
  %v5818 = vunpack.c.l.bf16 %v5817
  %v5819 = vunpack.c.h.bf16 %v5817
  %s5820 = scalar_lea.vmem %s1, 3388
  %s5821 = scalar_lea.vmem %s5820, 4294967292
  %v5822 = vpack.c.bf16 %v5818, %v5109
  %5823 = vst [vmem:[%s5821] sm:$0xff] %v5822
  %s5824 = scalar_lea.vmem %s0, 3388
  %v5825 = vld [vmem:[%s5824] sm:$0xf]
  %v5826 = vunpack.c.l.bf16 %v5825
  %v5827 = vunpack.c.h.bf16 %v5825
  %s5828 = scalar_lea.vmem %s1, 572
  %s5829 = scalar_lea.vmem %s5828, 4294967292
  %v5830 = vpack.c.bf16 %v5826, %v5114
  %5831 = vst [vmem:[%s5829] sm:$0xff] %v5830
  %s5832 = scalar_lea.vmem %s0, 2364
  %v5833 = vld [vmem:[%s5832] sm:$0xf]
  %v5834 = vunpack.c.l.bf16 %v5833
  %v5835 = vunpack.c.h.bf16 %v5833
  %s5836 = scalar_lea.vmem %s1, 1596
  %s5837 = scalar_lea.vmem %s5836, 4294967292
  %v5838 = vpack.c.bf16 %v5834, %v5119
  %5839 = vst [vmem:[%s5837] sm:$0xff] %v5838
  %s5840 = scalar_lea.vmem %s0, 1340
  %v5841 = vld [vmem:[%s5840] sm:$0xf]
  %v5842 = vunpack.c.l.bf16 %v5841
  %v5843 = vunpack.c.h.bf16 %v5841
  %s5844 = scalar_lea.vmem %s1, 2620
  %s5845 = scalar_lea.vmem %s5844, 4294967292
  %v5846 = vpack.c.bf16 %v5842, %v5124
  %5847 = vst [vmem:[%s5845] sm:$0xff] %v5846
  %s5848 = scalar_lea.vmem %s0, 316
  %v5849 = vld [vmem:[%s5848] sm:$0xf]
  %v5850 = vunpack.c.l.bf16 %v5849
  %v5851 = vunpack.c.h.bf16 %v5849
  %s5852 = scalar_lea.vmem %s1, 3644
  %s5853 = scalar_lea.vmem %s5852, 4294967292
  %v5854 = vpack.c.bf16 %v5850, %v5129
  %5855 = vst [vmem:[%s5853] sm:$0xff] %v5854
  %s5856 = scalar_lea.vmem %s0, 3132
  %v5857 = vld [vmem:[%s5856] sm:$0xf]
  %v5858 = vunpack.c.l.bf16 %v5857
  %v5859 = vunpack.c.h.bf16 %v5857
  %s5860 = scalar_lea.vmem %s1, 828
  %s5861 = scalar_lea.vmem %s5860, 4294967292
  %v5862 = vpack.c.bf16 %v5858, %v5134
  %5863 = vst [vmem:[%s5861] sm:$0xff] %v5862
  %s5864 = scalar_lea.vmem %s0, 2108
  %v5865 = vld [vmem:[%s5864] sm:$0xf]
  %v5866 = vunpack.c.l.bf16 %v5865
  %v5867 = vunpack.c.h.bf16 %v5865
  %s5868 = scalar_lea.vmem %s1, 1852
  %s5869 = scalar_lea.vmem %s5868, 4294967292
  %v5870 = vpack.c.bf16 %v5866, %v5139
  %5871 = vst [vmem:[%s5869] sm:$0xff] %v5870
  %s5872 = scalar_lea.vmem %s0, 1084
  %v5873 = vld [vmem:[%s5872] sm:$0xf]
  %v5874 = vunpack.c.l.bf16 %v5873
  %v5875 = vunpack.c.h.bf16 %v5873
  %s5876 = scalar_lea.vmem %s1, 2876
  %s5877 = scalar_lea.vmem %s5876, 4294967292
  %v5878 = vpack.c.bf16 %v5874, %v5144
  %5879 = vst [vmem:[%s5877] sm:$0xff] %v5878
  %s5880 = scalar_lea.vmem %s0, 60
  %v5881 = vld [vmem:[%s5880] sm:$0xf]
  %v5882 = vunpack.c.l.bf16 %v5881
  %v5883 = vunpack.c.h.bf16 %v5881
  %s5884 = scalar_lea.vmem %s1, 3900
  %s5885 = scalar_lea.vmem %s5884, 4294967292
  %v5886 = vpack.c.bf16 %v5882, %v5149
  %5887 = vst [vmem:[%s5885] sm:$0xff] %v5886
  %s5888 = scalar_lea.vmem %s0, 3932
  %v5889 = vld [vmem:[%s5888] sm:$0xf]
  %v5890 = vunpack.c.l.bf16 %v5889
  %v5891 = vunpack.c.h.bf16 %v5889
  %s5892 = scalar_lea.vmem %s1, 92
  %s5893 = scalar_lea.vmem %s5892, 4294967292
  %v5894 = vpack.c.bf16 %v5890, %v5154
  %5895 = vst [vmem:[%s5893] sm:$0xff] %v5894
  %s5896 = scalar_lea.vmem %s0, 2908
  %v5897 = vld [vmem:[%s5896] sm:$0xf]
  %v5898 = vunpack.c.l.bf16 %v5897
  %v5899 = vunpack.c.h.bf16 %v5897
  %s5900 = scalar_lea.vmem %s1, 1116
  %s5901 = scalar_lea.vmem %s5900, 4294967292
  %v5902 = vpack.c.bf16 %v5898, %v5159
  %5903 = vst [vmem:[%s5901] sm:$0xff] %v5902
  %s5904 = scalar_lea.vmem %s0, 1884
  %v5905 = vld [vmem:[%s5904] sm:$0xf]
  %v5906 = vunpack.c.l.bf16 %v5905
  %v5907 = vunpack.c.h.bf16 %v5905
  %s5908 = scalar_lea.vmem %s1, 2140
  %s5909 = scalar_lea.vmem %s5908, 4294967292
  %v5910 = vpack.c.bf16 %v5906, %v5164
  %5911 = vst [vmem:[%s5909] sm:$0xff] %v5910
  %s5912 = scalar_lea.vmem %s0, 860
  %v5913 = vld [vmem:[%s5912] sm:$0xf]
  %v5914 = vunpack.c.l.bf16 %v5913
  %v5915 = vunpack.c.h.bf16 %v5913
  %s5916 = scalar_lea.vmem %s1, 3164
  %s5917 = scalar_lea.vmem %s5916, 4294967292
  %v5918 = vpack.c.bf16 %v5914, %v5169
  %5919 = vst [vmem:[%s5917] sm:$0xff] %v5918
  %s5920 = scalar_lea.vmem %s0, 3676
  %v5921 = vld [vmem:[%s5920] sm:$0xf]
  %v5922 = vunpack.c.l.bf16 %v5921
  %v5923 = vunpack.c.h.bf16 %v5921
  %s5924 = scalar_lea.vmem %s1, 348
  %s5925 = scalar_lea.vmem %s5924, 4294967292
  %v5926 = vpack.c.bf16 %v5922, %v5174
  %5927 = vst [vmem:[%s5925] sm:$0xff] %v5926
  %s5928 = scalar_lea.vmem %s0, 2652
  %v5929 = vld [vmem:[%s5928] sm:$0xf]
  %v5930 = vunpack.c.l.bf16 %v5929
  %v5931 = vunpack.c.h.bf16 %v5929
  %s5932 = scalar_lea.vmem %s1, 1372
  %s5933 = scalar_lea.vmem %s5932, 4294967292
  %v5934 = vpack.c.bf16 %v5930, %v5179
  %5935 = vst [vmem:[%s5933] sm:$0xff] %v5934
  %s5936 = scalar_lea.vmem %s0, 1628
  %v5937 = vld [vmem:[%s5936] sm:$0xf]
  %v5938 = vunpack.c.l.bf16 %v5937
  %v5939 = vunpack.c.h.bf16 %v5937
  %s5940 = scalar_lea.vmem %s1, 2396
  %s5941 = scalar_lea.vmem %s5940, 4294967292
  %v5942 = vpack.c.bf16 %v5938, %v5184
  %5943 = vst [vmem:[%s5941] sm:$0xff] %v5942
  %s5944 = scalar_lea.vmem %s0, 604
  %v5945 = vld [vmem:[%s5944] sm:$0xf]
  %v5946 = vunpack.c.l.bf16 %v5945
  %v5947 = vunpack.c.h.bf16 %v5945
  %s5948 = scalar_lea.vmem %s1, 3420
  %s5949 = scalar_lea.vmem %s5948, 4294967292
  %v5950 = vpack.c.bf16 %v5946, %v5189
  %5951 = vst [vmem:[%s5949] sm:$0xff] %v5950
  %s5952 = scalar_lea.vmem %s0, 3420
  %v5953 = vld [vmem:[%s5952] sm:$0xf]
  %v5954 = vunpack.c.l.bf16 %v5953
  %v5955 = vunpack.c.h.bf16 %v5953
  %s5956 = scalar_lea.vmem %s1, 604
  %s5957 = scalar_lea.vmem %s5956, 4294967292
  %v5958 = vpack.c.bf16 %v5954, %v5194
  %5959 = vst [vmem:[%s5957] sm:$0xff] %v5958
  %s5960 = scalar_lea.vmem %s0, 2396
  %v5961 = vld [vmem:[%s5960] sm:$0xf]
  %v5962 = vunpack.c.l.bf16 %v5961
  %v5963 = vunpack.c.h.bf16 %v5961
  %s5964 = scalar_lea.vmem %s1, 1628
  %s5965 = scalar_lea.vmem %s5964, 4294967292
  %v5966 = vpack.c.bf16 %v5962, %v5199
  %5967 = vst [vmem:[%s5965] sm:$0xff] %v5966
  %s5968 = scalar_lea.vmem %s0, 1372
  %v5969 = vld [vmem:[%s5968] sm:$0xf]
  %v5970 = vunpack.c.l.bf16 %v5969
  %v5971 = vunpack.c.h.bf16 %v5969
  %s5972 = scalar_lea.vmem %s1, 2652
  %s5973 = scalar_lea.vmem %s5972, 4294967292
  %v5974 = vpack.c.bf16 %v5970, %v5204
  %5975 = vst [vmem:[%s5973] sm:$0xff] %v5974
  %s5976 = scalar_lea.vmem %s0, 348
  %v5977 = vld [vmem:[%s5976] sm:$0xf]
  %v5978 = vunpack.c.l.bf16 %v5977
  %v5979 = vunpack.c.h.bf16 %v5977
  %s5980 = scalar_lea.vmem %s1, 3676
  %s5981 = scalar_lea.vmem %s5980, 4294967292
  %v5982 = vpack.c.bf16 %v5978, %v5209
  %5983 = vst [vmem:[%s5981] sm:$0xff] %v5982
  %s5984 = scalar_lea.vmem %s0, 3164
  %v5985 = vld [vmem:[%s5984] sm:$0xf]
  %v5986 = vunpack.c.l.bf16 %v5985
  %v5987 = vunpack.c.h.bf16 %v5985
  %s5988 = scalar_lea.vmem %s1, 860
  %s5989 = scalar_lea.vmem %s5988, 4294967292
  %v5990 = vpack.c.bf16 %v5986, %v5214
  %5991 = vst [vmem:[%s5989] sm:$0xff] %v5990
  %s5992 = scalar_lea.vmem %s0, 2140
  %v5993 = vld [vmem:[%s5992] sm:$0xf]
  %v5994 = vunpack.c.l.bf16 %v5993
  %v5995 = vunpack.c.h.bf16 %v5993
  %s5996 = scalar_lea.vmem %s1, 1884
  %s5997 = scalar_lea.vmem %s5996, 4294967292
  %v5998 = vpack.c.bf16 %v5994, %v5219
  %5999 = vst [vmem:[%s5997] sm:$0xff] %v5998
  %s6000 = scalar_lea.vmem %s0, 1116
  %v6001 = vld [vmem:[%s6000] sm:$0xf]
  %v6002 = vunpack.c.l.bf16 %v6001
  %v6003 = vunpack.c.h.bf16 %v6001
  %s6004 = scalar_lea.vmem %s1, 2908
  %s6005 = scalar_lea.vmem %s6004, 4294967292
  %v6006 = vpack.c.bf16 %v6002, %v5224
  %6007 = vst [vmem:[%s6005] sm:$0xff] %v6006
  %s6008 = scalar_lea.vmem %s0, 92
  %v6009 = vld [vmem:[%s6008] sm:$0xf]
  %v6010 = vunpack.c.l.bf16 %v6009
  %v6011 = vunpack.c.h.bf16 %v6009
  %s6012 = scalar_lea.vmem %s1, 3932
  %s6013 = scalar_lea.vmem %s6012, 4294967292
  %v6014 = vpack.c.bf16 %v6010, %v5229
  %6015 = vst [vmem:[%s6013] sm:$0xff] %v6014
  %s6016 = scalar_lea.vmem %s0, 3964
  %v6017 = vld [vmem:[%s6016] sm:$0xf]
  %v6018 = vunpack.c.l.bf16 %v6017
  %v6019 = vunpack.c.h.bf16 %v6017
  %s6020 = scalar_lea.vmem %s1, 124
  %s6021 = scalar_lea.vmem %s6020, 4294967292
  %v6022 = vpack.c.bf16 %v6018, %v5234
  %6023 = vst [vmem:[%s6021] sm:$0xff] %v6022
  %s6024 = scalar_lea.vmem %s0, 2940
  %v6025 = vld [vmem:[%s6024] sm:$0xf]
  %v6026 = vunpack.c.l.bf16 %v6025
  %v6027 = vunpack.c.h.bf16 %v6025
  %s6028 = scalar_lea.vmem %s1, 1148
  %s6029 = scalar_lea.vmem %s6028, 4294967292
  %v6030 = vpack.c.bf16 %v6026, %v5239
  %6031 = vst [vmem:[%s6029] sm:$0xff] %v6030
  %s6032 = scalar_lea.vmem %s0, 1916
  %v6033 = vld [vmem:[%s6032] sm:$0xf]
  %v6034 = vunpack.c.l.bf16 %v6033
  %v6035 = vunpack.c.h.bf16 %v6033
  %s6036 = scalar_lea.vmem %s1, 2172
  %s6037 = scalar_lea.vmem %s6036, 4294967292
  %v6038 = vpack.c.bf16 %v6034, %v5244
  %6039 = vst [vmem:[%s6037] sm:$0xff] %v6038
  %s6040 = scalar_lea.vmem %s0, 892
  %v6041 = vld [vmem:[%s6040] sm:$0xf]
  %v6042 = vunpack.c.l.bf16 %v6041
  %v6043 = vunpack.c.h.bf16 %v6041
  %s6044 = scalar_lea.vmem %s1, 3196
  %s6045 = scalar_lea.vmem %s6044, 4294967292
  %v6046 = vpack.c.bf16 %v6042, %v5249
  %6047 = vst [vmem:[%s6045] sm:$0xff] %v6046
  %s6048 = scalar_lea.vmem %s0, 3708
  %v6049 = vld [vmem:[%s6048] sm:$0xf]
  %v6050 = vunpack.c.l.bf16 %v6049
  %v6051 = vunpack.c.h.bf16 %v6049
  %s6052 = scalar_lea.vmem %s1, 380
  %s6053 = scalar_lea.vmem %s6052, 4294967292
  %v6054 = vpack.c.bf16 %v6050, %v5254
  %6055 = vst [vmem:[%s6053] sm:$0xff] %v6054
  %s6056 = scalar_lea.vmem %s0, 2684
  %v6057 = vld [vmem:[%s6056] sm:$0xf]
  %v6058 = vunpack.c.l.bf16 %v6057
  %v6059 = vunpack.c.h.bf16 %v6057
  %s6060 = scalar_lea.vmem %s1, 1404
  %s6061 = scalar_lea.vmem %s6060, 4294967292
  %v6062 = vpack.c.bf16 %v6058, %v5259
  %6063 = vst [vmem:[%s6061] sm:$0xff] %v6062
  %s6064 = scalar_lea.vmem %s0, 1660
  %v6065 = vld [vmem:[%s6064] sm:$0xf]
  %v6066 = vunpack.c.l.bf16 %v6065
  %v6067 = vunpack.c.h.bf16 %v6065
  %s6068 = scalar_lea.vmem %s1, 2428
  %s6069 = scalar_lea.vmem %s6068, 4294967292
  %v6070 = vpack.c.bf16 %v6066, %v5264
  %6071 = vst [vmem:[%s6069] sm:$0xff] %v6070
  %s6072 = scalar_lea.vmem %s0, 636
  %v6073 = vld [vmem:[%s6072] sm:$0xf]
  %v6074 = vunpack.c.l.bf16 %v6073
  %v6075 = vunpack.c.h.bf16 %v6073
  %s6076 = scalar_lea.vmem %s1, 3452
  %s6077 = scalar_lea.vmem %s6076, 4294967292
  %v6078 = vpack.c.bf16 %v6074, %v5269
  %6079 = vst [vmem:[%s6077] sm:$0xff] %v6078
  %s6080 = scalar_lea.vmem %s0, 3452
  %v6081 = vld [vmem:[%s6080] sm:$0xf]
  %v6082 = vunpack.c.l.bf16 %v6081
  %v6083 = vunpack.c.h.bf16 %v6081
  %s6084 = scalar_lea.vmem %s1, 636
  %s6085 = scalar_lea.vmem %s6084, 4294967292
  %v6086 = vpack.c.bf16 %v6082, %v5274
  %6087 = vst [vmem:[%s6085] sm:$0xff] %v6086
  %s6088 = scalar_lea.vmem %s0, 2428
  %v6089 = vld [vmem:[%s6088] sm:$0xf]
  %v6090 = vunpack.c.l.bf16 %v6089
  %v6091 = vunpack.c.h.bf16 %v6089
  %s6092 = scalar_lea.vmem %s1, 1660
  %s6093 = scalar_lea.vmem %s6092, 4294967292
  %v6094 = vpack.c.bf16 %v6090, %v5279
  %6095 = vst [vmem:[%s6093] sm:$0xff] %v6094
  %s6096 = scalar_lea.vmem %s0, 1404
  %v6097 = vld [vmem:[%s6096] sm:$0xf]
  %v6098 = vunpack.c.l.bf16 %v6097
  %v6099 = vunpack.c.h.bf16 %v6097
  %s6100 = scalar_lea.vmem %s1, 2684
  %s6101 = scalar_lea.vmem %s6100, 4294967292
  %v6102 = vpack.c.bf16 %v6098, %v5284
  %6103 = vst [vmem:[%s6101] sm:$0xff] %v6102
  %s6104 = scalar_lea.vmem %s0, 380
  %v6105 = vld [vmem:[%s6104] sm:$0xf]
  %v6106 = vunpack.c.l.bf16 %v6105
  %v6107 = vunpack.c.h.bf16 %v6105
  %s6108 = scalar_lea.vmem %s1, 3708
  %s6109 = scalar_lea.vmem %s6108, 4294967292
  %v6110 = vpack.c.bf16 %v6106, %v5289
  %6111 = vst [vmem:[%s6109] sm:$0xff] %v6110
  %s6112 = scalar_lea.vmem %s0, 3196
  %v6113 = vld [vmem:[%s6112] sm:$0xf]
  %v6114 = vunpack.c.l.bf16 %v6113
  %v6115 = vunpack.c.h.bf16 %v6113
  %s6116 = scalar_lea.vmem %s1, 892
  %s6117 = scalar_lea.vmem %s6116, 4294967292
  %v6118 = vpack.c.bf16 %v6114, %v5294
  %6119 = vst [vmem:[%s6117] sm:$0xff] %v6118
  %s6120 = scalar_lea.vmem %s0, 2172
  %v6121 = vld [vmem:[%s6120] sm:$0xf]
  %v6122 = vunpack.c.l.bf16 %v6121
  %v6123 = vunpack.c.h.bf16 %v6121
  %s6124 = scalar_lea.vmem %s1, 1916
  %s6125 = scalar_lea.vmem %s6124, 4294967292
  %v6126 = vpack.c.bf16 %v6122, %v5299
  %6127 = vst [vmem:[%s6125] sm:$0xff] %v6126
  %s6128 = scalar_lea.vmem %s0, 1148
  %v6129 = vld [vmem:[%s6128] sm:$0xf]
  %v6130 = vunpack.c.l.bf16 %v6129
  %v6131 = vunpack.c.h.bf16 %v6129
  %s6132 = scalar_lea.vmem %s1, 2940
  %s6133 = scalar_lea.vmem %s6132, 4294967292
  %v6134 = vpack.c.bf16 %v6130, %v5304
  %6135 = vst [vmem:[%s6133] sm:$0xff] %v6134
  %s6136 = scalar_lea.vmem %s0, 124
  %v6137 = vld [vmem:[%s6136] sm:$0xf]
  %v6138 = vunpack.c.l.bf16 %v6137
  %v6139 = vunpack.c.h.bf16 %v6137
  %s6140 = scalar_lea.vmem %s1, 3964
  %s6141 = scalar_lea.vmem %s6140, 4294967292
  %v6142 = vpack.c.bf16 %v6138, %v5309
  %6143 = vst [vmem:[%s6141] sm:$0xff] %v6142
  %s6144 = scalar_lea.vmem %s0, 3996
  %v6145 = vld [vmem:[%s6144] sm:$0xf]
  %v6146 = vunpack.c.l.bf16 %v6145
  %v6147 = vunpack.c.h.bf16 %v6145
  %s6148 = scalar_lea.vmem %s1, 156
  %s6149 = scalar_lea.vmem %s6148, 4294967292
  %v6150 = vpack.c.bf16 %v6146, %v5314
  %6151 = vst [vmem:[%s6149] sm:$0xff] %v6150
  %s6152 = scalar_lea.vmem %s0, 2972
  %v6153 = vld [vmem:[%s6152] sm:$0xf]
  %v6154 = vunpack.c.l.bf16 %v6153
  %v6155 = vunpack.c.h.bf16 %v6153
  %s6156 = scalar_lea.vmem %s1, 1180
  %s6157 = scalar_lea.vmem %s6156, 4294967292
  %v6158 = vpack.c.bf16 %v6154, %v5319
  %6159 = vst [vmem:[%s6157] sm:$0xff] %v6158
  %s6160 = scalar_lea.vmem %s0, 1948
  %v6161 = vld [vmem:[%s6160] sm:$0xf]
  %v6162 = vunpack.c.l.bf16 %v6161
  %v6163 = vunpack.c.h.bf16 %v6161
  %s6164 = scalar_lea.vmem %s1, 2204
  %s6165 = scalar_lea.vmem %s6164, 4294967292
  %v6166 = vpack.c.bf16 %v6162, %v5324
  %6167 = vst [vmem:[%s6165] sm:$0xff] %v6166
  %s6168 = scalar_lea.vmem %s0, 924
  %v6169 = vld [vmem:[%s6168] sm:$0xf]
  %v6170 = vunpack.c.l.bf16 %v6169
  %v6171 = vunpack.c.h.bf16 %v6169
  %s6172 = scalar_lea.vmem %s1, 3228
  %s6173 = scalar_lea.vmem %s6172, 4294967292
  %v6174 = vpack.c.bf16 %v6170, %v5329
  %6175 = vst [vmem:[%s6173] sm:$0xff] %v6174
  %s6176 = scalar_lea.vmem %s0, 3740
  %v6177 = vld [vmem:[%s6176] sm:$0xf]
  %v6178 = vunpack.c.l.bf16 %v6177
  %v6179 = vunpack.c.h.bf16 %v6177
  %s6180 = scalar_lea.vmem %s1, 412
  %s6181 = scalar_lea.vmem %s6180, 4294967292
  %v6182 = vpack.c.bf16 %v6178, %v5334
  %6183 = vst [vmem:[%s6181] sm:$0xff] %v6182
  %s6184 = scalar_lea.vmem %s0, 2716
  %v6185 = vld [vmem:[%s6184] sm:$0xf]
  %v6186 = vunpack.c.l.bf16 %v6185
  %v6187 = vunpack.c.h.bf16 %v6185
  %s6188 = scalar_lea.vmem %s1, 1436
  %s6189 = scalar_lea.vmem %s6188, 4294967292
  %v6190 = vpack.c.bf16 %v6186, %v5339
  %6191 = vst [vmem:[%s6189] sm:$0xff] %v6190
  %s6192 = scalar_lea.vmem %s0, 1692
  %v6193 = vld [vmem:[%s6192] sm:$0xf]
  %v6194 = vunpack.c.l.bf16 %v6193
  %v6195 = vunpack.c.h.bf16 %v6193
  %s6196 = scalar_lea.vmem %s1, 2460
  %s6197 = scalar_lea.vmem %s6196, 4294967292
  %v6198 = vpack.c.bf16 %v6194, %v5344
  %6199 = vst [vmem:[%s6197] sm:$0xff] %v6198
  %s6200 = scalar_lea.vmem %s0, 668
  %v6201 = vld [vmem:[%s6200] sm:$0xf]
  %v6202 = vunpack.c.l.bf16 %v6201
  %v6203 = vunpack.c.h.bf16 %v6201
  %s6204 = scalar_lea.vmem %s1, 3484
  %s6205 = scalar_lea.vmem %s6204, 4294967292
  %v6206 = vpack.c.bf16 %v6202, %v5349
  %6207 = vst [vmem:[%s6205] sm:$0xff] %v6206
  %s6208 = scalar_lea.vmem %s0, 3484
  %v6209 = vld [vmem:[%s6208] sm:$0xf]
  %v6210 = vunpack.c.l.bf16 %v6209
  %v6211 = vunpack.c.h.bf16 %v6209
  %s6212 = scalar_lea.vmem %s1, 668
  %s6213 = scalar_lea.vmem %s6212, 4294967292
  %v6214 = vpack.c.bf16 %v6210, %v5354
  %6215 = vst [vmem:[%s6213] sm:$0xff] %v6214
  %s6216 = scalar_lea.vmem %s0, 2460
  %v6217 = vld [vmem:[%s6216] sm:$0xf]
  %v6218 = vunpack.c.l.bf16 %v6217
  %v6219 = vunpack.c.h.bf16 %v6217
  %s6220 = scalar_lea.vmem %s1, 1692
  %s6221 = scalar_lea.vmem %s6220, 4294967292
  %v6222 = vpack.c.bf16 %v6218, %v5359
  %6223 = vst [vmem:[%s6221] sm:$0xff] %v6222
  %s6224 = scalar_lea.vmem %s0, 1436
  %v6225 = vld [vmem:[%s6224] sm:$0xf]
  %v6226 = vunpack.c.l.bf16 %v6225
  %v6227 = vunpack.c.h.bf16 %v6225
  %s6228 = scalar_lea.vmem %s1, 2716
  %s6229 = scalar_lea.vmem %s6228, 4294967292
  %v6230 = vpack.c.bf16 %v6226, %v5364
  %6231 = vst [vmem:[%s6229] sm:$0xff] %v6230
  %s6232 = scalar_lea.vmem %s0, 412
  %v6233 = vld [vmem:[%s6232] sm:$0xf]
  %v6234 = vunpack.c.l.bf16 %v6233
  %v6235 = vunpack.c.h.bf16 %v6233
  %s6236 = scalar_lea.vmem %s1, 3740
  %s6237 = scalar_lea.vmem %s6236, 4294967292
  %v6238 = vpack.c.bf16 %v6234, %v5369
  %6239 = vst [vmem:[%s6237] sm:$0xff] %v6238
  %s6240 = scalar_lea.vmem %s0, 3228
  %v6241 = vld [vmem:[%s6240] sm:$0xf]
  %v6242 = vunpack.c.l.bf16 %v6241
  %v6243 = vunpack.c.h.bf16 %v6241
  %s6244 = scalar_lea.vmem %s1, 924
  %s6245 = scalar_lea.vmem %s6244, 4294967292
  %v6246 = vpack.c.bf16 %v6242, %v5374
  %6247 = vst [vmem:[%s6245] sm:$0xff] %v6246
  %s6248 = scalar_lea.vmem %s0, 2204
  %v6249 = vld [vmem:[%s6248] sm:$0xf]
  %v6250 = vunpack.c.l.bf16 %v6249
  %v6251 = vunpack.c.h.bf16 %v6249
  %s6252 = scalar_lea.vmem %s1, 1948
  %s6253 = scalar_lea.vmem %s6252, 4294967292
  %v6254 = vpack.c.bf16 %v6250, %v5379
  %6255 = vst [vmem:[%s6253] sm:$0xff] %v6254
  %s6256 = scalar_lea.vmem %s0, 1180
  %v6257 = vld [vmem:[%s6256] sm:$0xf]
  %v6258 = vunpack.c.l.bf16 %v6257
  %v6259 = vunpack.c.h.bf16 %v6257
  %s6260 = scalar_lea.vmem %s1, 2972
  %s6261 = scalar_lea.vmem %s6260, 4294967292
  %v6262 = vpack.c.bf16 %v6258, %v5384
  %6263 = vst [vmem:[%s6261] sm:$0xff] %v6262
  %s6264 = scalar_lea.vmem %s0, 156
  %v6265 = vld [vmem:[%s6264] sm:$0xf]
  %v6266 = vunpack.c.l.bf16 %v6265
  %v6267 = vunpack.c.h.bf16 %v6265
  %s6268 = scalar_lea.vmem %s1, 3996
  %s6269 = scalar_lea.vmem %s6268, 4294967292
  %v6270 = vpack.c.bf16 %v6266, %v5389
  %6271 = vst [vmem:[%s6269] sm:$0xff] %v6270
  %s6272 = scalar_lea.vmem %s0, 4028
  %v6273 = vld [vmem:[%s6272] sm:$0xf]
  %v6274 = vunpack.c.l.bf16 %v6273
  %v6275 = vunpack.c.h.bf16 %v6273
  %s6276 = scalar_lea.vmem %s1, 188
  %s6277 = scalar_lea.vmem %s6276, 4294967292
  %v6278 = vpack.c.bf16 %v6274, %v5394
  %6279 = vst [vmem:[%s6277] sm:$0xff] %v6278
  %s6280 = scalar_lea.vmem %s0, 3004
  %v6281 = vld [vmem:[%s6280] sm:$0xf]
  %v6282 = vunpack.c.l.bf16 %v6281
  %v6283 = vunpack.c.h.bf16 %v6281
  %s6284 = scalar_lea.vmem %s1, 1212
  %s6285 = scalar_lea.vmem %s6284, 4294967292
  %v6286 = vpack.c.bf16 %v6282, %v5399
  %6287 = vst [vmem:[%s6285] sm:$0xff] %v6286
  %s6288 = scalar_lea.vmem %s0, 1980
  %v6289 = vld [vmem:[%s6288] sm:$0xf]
  %v6290 = vunpack.c.l.bf16 %v6289
  %v6291 = vunpack.c.h.bf16 %v6289
  %s6292 = scalar_lea.vmem %s1, 2236
  %s6293 = scalar_lea.vmem %s6292, 4294967292
  %v6294 = vpack.c.bf16 %v6290, %v5404
  %6295 = vst [vmem:[%s6293] sm:$0xff] %v6294
  %s6296 = scalar_lea.vmem %s0, 956
  %v6297 = vld [vmem:[%s6296] sm:$0xf]
  %v6298 = vunpack.c.l.bf16 %v6297
  %v6299 = vunpack.c.h.bf16 %v6297
  %s6300 = scalar_lea.vmem %s1, 3260
  %s6301 = scalar_lea.vmem %s6300, 4294967292
  %v6302 = vpack.c.bf16 %v6298, %v5409
  %6303 = vst [vmem:[%s6301] sm:$0xff] %v6302
  %s6304 = scalar_lea.vmem %s0, 3772
  %v6305 = vld [vmem:[%s6304] sm:$0xf]
  %v6306 = vunpack.c.l.bf16 %v6305
  %v6307 = vunpack.c.h.bf16 %v6305
  %s6308 = scalar_lea.vmem %s1, 444
  %s6309 = scalar_lea.vmem %s6308, 4294967292
  %v6310 = vpack.c.bf16 %v6306, %v5414
  %6311 = vst [vmem:[%s6309] sm:$0xff] %v6310
  %s6312 = scalar_lea.vmem %s0, 2748
  %v6313 = vld [vmem:[%s6312] sm:$0xf]
  %v6314 = vunpack.c.l.bf16 %v6313
  %v6315 = vunpack.c.h.bf16 %v6313
  %s6316 = scalar_lea.vmem %s1, 1468
  %s6317 = scalar_lea.vmem %s6316, 4294967292
  %v6318 = vpack.c.bf16 %v6314, %v5419
  %6319 = vst [vmem:[%s6317] sm:$0xff] %v6318
  %s6320 = scalar_lea.vmem %s0, 1724
  %v6321 = vld [vmem:[%s6320] sm:$0xf]
  %v6322 = vunpack.c.l.bf16 %v6321
  %v6323 = vunpack.c.h.bf16 %v6321
  %s6324 = scalar_lea.vmem %s1, 2492
  %s6325 = scalar_lea.vmem %s6324, 4294967292
  %v6326 = vpack.c.bf16 %v6322, %v5424
  %6327 = vst [vmem:[%s6325] sm:$0xff] %v6326
  %s6328 = scalar_lea.vmem %s0, 700
  %v6329 = vld [vmem:[%s6328] sm:$0xf]
  %v6330 = vunpack.c.l.bf16 %v6329
  %v6331 = vunpack.c.h.bf16 %v6329
  %s6332 = scalar_lea.vmem %s1, 3516
  %s6333 = scalar_lea.vmem %s6332, 4294967292
  %v6334 = vpack.c.bf16 %v6330, %v5429
  %6335 = vst [vmem:[%s6333] sm:$0xff] %v6334
  %s6336 = scalar_lea.vmem %s0, 3516
  %v6337 = vld [vmem:[%s6336] sm:$0xf]
  %v6338 = vunpack.c.l.bf16 %v6337
  %v6339 = vunpack.c.h.bf16 %v6337
  %s6340 = scalar_lea.vmem %s1, 700
  %s6341 = scalar_lea.vmem %s6340, 4294967292
  %v6342 = vpack.c.bf16 %v6338, %v5434
  %6343 = vst [vmem:[%s6341] sm:$0xff] %v6342
  %s6344 = scalar_lea.vmem %s0, 2492
  %v6345 = vld [vmem:[%s6344] sm:$0xf]
  %v6346 = vunpack.c.l.bf16 %v6345
  %v6347 = vunpack.c.h.bf16 %v6345
  %s6348 = scalar_lea.vmem %s1, 1724
  %s6349 = scalar_lea.vmem %s6348, 4294967292
  %v6350 = vpack.c.bf16 %v6346, %v5439
  %6351 = vst [vmem:[%s6349] sm:$0xff] %v6350
  %s6352 = scalar_lea.vmem %s0, 1468
  %v6353 = vld [vmem:[%s6352] sm:$0xf]
  %v6354 = vunpack.c.l.bf16 %v6353
  %v6355 = vunpack.c.h.bf16 %v6353
  %s6356 = scalar_lea.vmem %s1, 2748
  %s6357 = scalar_lea.vmem %s6356, 4294967292
  %v6358 = vpack.c.bf16 %v6354, %v5444
  %6359 = vst [vmem:[%s6357] sm:$0xff] %v6358
  %s6360 = scalar_lea.vmem %s0, 444
  %v6361 = vld [vmem:[%s6360] sm:$0xf]
  %v6362 = vunpack.c.l.bf16 %v6361
  %v6363 = vunpack.c.h.bf16 %v6361
  %s6364 = scalar_lea.vmem %s1, 3772
  %s6365 = scalar_lea.vmem %s6364, 4294967292
  %v6366 = vpack.c.bf16 %v6362, %v5449
  %6367 = vst [vmem:[%s6365] sm:$0xff] %v6366
  %s6368 = scalar_lea.vmem %s0, 3260
  %v6369 = vld [vmem:[%s6368] sm:$0xf]
  %v6370 = vunpack.c.l.bf16 %v6369
  %v6371 = vunpack.c.h.bf16 %v6369
  %s6372 = scalar_lea.vmem %s1, 956
  %s6373 = scalar_lea.vmem %s6372, 4294967292
  %v6374 = vpack.c.bf16 %v6370, %v5454
  %6375 = vst [vmem:[%s6373] sm:$0xff] %v6374
  %s6376 = scalar_lea.vmem %s0, 2236
  %v6377 = vld [vmem:[%s6376] sm:$0xf]
  %v6378 = vunpack.c.l.bf16 %v6377
  %v6379 = vunpack.c.h.bf16 %v6377
  %s6380 = scalar_lea.vmem %s1, 1980
  %s6381 = scalar_lea.vmem %s6380, 4294967292
  %v6382 = vpack.c.bf16 %v6378, %v5459
  %6383 = vst [vmem:[%s6381] sm:$0xff] %v6382
  %s6384 = scalar_lea.vmem %s0, 1212
  %v6385 = vld [vmem:[%s6384] sm:$0xf]
  %v6386 = vunpack.c.l.bf16 %v6385
  %v6387 = vunpack.c.h.bf16 %v6385
  %s6388 = scalar_lea.vmem %s1, 3004
  %s6389 = scalar_lea.vmem %s6388, 4294967292
  %v6390 = vpack.c.bf16 %v6386, %v5464
  %6391 = vst [vmem:[%s6389] sm:$0xff] %v6390
  %s6392 = scalar_lea.vmem %s0, 188
  %v6393 = vld [vmem:[%s6392] sm:$0xf]
  %v6394 = vunpack.c.l.bf16 %v6393
  %v6395 = vunpack.c.h.bf16 %v6393
  %s6396 = scalar_lea.vmem %s1, 4028
  %s6397 = scalar_lea.vmem %s6396, 4294967292
  %v6398 = vpack.c.bf16 %v6394, %v5469
  %6399 = vst [vmem:[%s6397] sm:$0xff] %v6398
  %s6400 = scalar_lea.vmem %s0, 4060
  %v6401 = vld [vmem:[%s6400] sm:$0xf]
  %v6402 = vunpack.c.l.bf16 %v6401
  %v6403 = vunpack.c.h.bf16 %v6401
  %s6404 = scalar_lea.vmem %s1, 220
  %s6405 = scalar_lea.vmem %s6404, 4294967292
  %v6406 = vpack.c.bf16 %v6402, %v5474
  %6407 = vst [vmem:[%s6405] sm:$0xff] %v6406
  %s6408 = scalar_lea.vmem %s0, 3036
  %v6409 = vld [vmem:[%s6408] sm:$0xf]
  %v6410 = vunpack.c.l.bf16 %v6409
  %v6411 = vunpack.c.h.bf16 %v6409
  %s6412 = scalar_lea.vmem %s1, 1244
  %s6413 = scalar_lea.vmem %s6412, 4294967292
  %v6414 = vpack.c.bf16 %v6410, %v5479
  %6415 = vst [vmem:[%s6413] sm:$0xff] %v6414
  %s6416 = scalar_lea.vmem %s0, 2012
  %v6417 = vld [vmem:[%s6416] sm:$0xf]
  %v6418 = vunpack.c.l.bf16 %v6417
  %v6419 = vunpack.c.h.bf16 %v6417
  %s6420 = scalar_lea.vmem %s1, 2268
  %s6421 = scalar_lea.vmem %s6420, 4294967292
  %v6422 = vpack.c.bf16 %v6418, %v5484
  %6423 = vst [vmem:[%s6421] sm:$0xff] %v6422
  %s6424 = scalar_lea.vmem %s0, 988
  %v6425 = vld [vmem:[%s6424] sm:$0xf]
  %v6426 = vunpack.c.l.bf16 %v6425
  %v6427 = vunpack.c.h.bf16 %v6425
  %s6428 = scalar_lea.vmem %s1, 3292
  %s6429 = scalar_lea.vmem %s6428, 4294967292
  %v6430 = vpack.c.bf16 %v6426, %v5489
  %6431 = vst [vmem:[%s6429] sm:$0xff] %v6430
  %s6432 = scalar_lea.vmem %s0, 3804
  %v6433 = vld [vmem:[%s6432] sm:$0xf]
  %v6434 = vunpack.c.l.bf16 %v6433
  %v6435 = vunpack.c.h.bf16 %v6433
  %s6436 = scalar_lea.vmem %s1, 476
  %s6437 = scalar_lea.vmem %s6436, 4294967292
  %v6438 = vpack.c.bf16 %v6434, %v5494
  %6439 = vst [vmem:[%s6437] sm:$0xff] %v6438
  %s6440 = scalar_lea.vmem %s0, 2780
  %v6441 = vld [vmem:[%s6440] sm:$0xf]
  %v6442 = vunpack.c.l.bf16 %v6441
  %v6443 = vunpack.c.h.bf16 %v6441
  %s6444 = scalar_lea.vmem %s1, 1500
  %s6445 = scalar_lea.vmem %s6444, 4294967292
  %v6446 = vpack.c.bf16 %v6442, %v5499
  %6447 = vst [vmem:[%s6445] sm:$0xff] %v6446
  %s6448 = scalar_lea.vmem %s0, 1756
  %v6449 = vld [vmem:[%s6448] sm:$0xf]
  %v6450 = vunpack.c.l.bf16 %v6449
  %v6451 = vunpack.c.h.bf16 %v6449
  %s6452 = scalar_lea.vmem %s1, 2524
  %s6453 = scalar_lea.vmem %s6452, 4294967292
  %v6454 = vpack.c.bf16 %v6450, %v5504
  %6455 = vst [vmem:[%s6453] sm:$0xff] %v6454
  %s6456 = scalar_lea.vmem %s0, 732
  %v6457 = vld [vmem:[%s6456] sm:$0xf]
  %v6458 = vunpack.c.l.bf16 %v6457
  %v6459 = vunpack.c.h.bf16 %v6457
  %s6460 = scalar_lea.vmem %s1, 3548
  %s6461 = scalar_lea.vmem %s6460, 4294967292
  %v6462 = vpack.c.bf16 %v6458, %v5509
  %6463 = vst [vmem:[%s6461] sm:$0xff] %v6462
  %s6464 = scalar_lea.vmem %s0, 3548
  %v6465 = vld [vmem:[%s6464] sm:$0xf]
  %v6466 = vunpack.c.l.bf16 %v6465
  %v6467 = vunpack.c.h.bf16 %v6465
  %s6468 = scalar_lea.vmem %s1, 732
  %s6469 = scalar_lea.vmem %s6468, 4294967292
  %v6470 = vpack.c.bf16 %v6466, %v5514
  %6471 = vst [vmem:[%s6469] sm:$0xff] %v6470
  %s6472 = scalar_lea.vmem %s0, 2524
  %v6473 = vld [vmem:[%s6472] sm:$0xf]
  %v6474 = vunpack.c.l.bf16 %v6473
  %v6475 = vunpack.c.h.bf16 %v6473
  %s6476 = scalar_lea.vmem %s1, 1756
  %s6477 = scalar_lea.vmem %s6476, 4294967292
  %v6478 = vpack.c.bf16 %v6474, %v5519
  %6479 = vst [vmem:[%s6477] sm:$0xff] %v6478
  %s6480 = scalar_lea.vmem %s0, 1500
  %v6481 = vld [vmem:[%s6480] sm:$0xf]
  %v6482 = vunpack.c.l.bf16 %v6481
  %v6483 = vunpack.c.h.bf16 %v6481
  %s6484 = scalar_lea.vmem %s1, 2780
  %s6485 = scalar_lea.vmem %s6484, 4294967292
  %v6486 = vpack.c.bf16 %v6482, %v5524
  %6487 = vst [vmem:[%s6485] sm:$0xff] %v6486
  %s6488 = scalar_lea.vmem %s0, 476
  %v6489 = vld [vmem:[%s6488] sm:$0xf]
  %v6490 = vunpack.c.l.bf16 %v6489
  %v6491 = vunpack.c.h.bf16 %v6489
  %s6492 = scalar_lea.vmem %s1, 3804
  %s6493 = scalar_lea.vmem %s6492, 4294967292
  %v6494 = vpack.c.bf16 %v6490, %v5529
  %6495 = vst [vmem:[%s6493] sm:$0xff] %v6494
  %s6496 = scalar_lea.vmem %s0, 3292
  %v6497 = vld [vmem:[%s6496] sm:$0xf]
  %v6498 = vunpack.c.l.bf16 %v6497
  %v6499 = vunpack.c.h.bf16 %v6497
  %s6500 = scalar_lea.vmem %s1, 988
  %s6501 = scalar_lea.vmem %s6500, 4294967292
  %v6502 = vpack.c.bf16 %v6498, %v5534
  %6503 = vst [vmem:[%s6501] sm:$0xff] %v6502
  %s6504 = scalar_lea.vmem %s0, 2268
  %v6505 = vld [vmem:[%s6504] sm:$0xf]
  %v6506 = vunpack.c.l.bf16 %v6505
  %v6507 = vunpack.c.h.bf16 %v6505
  %s6508 = scalar_lea.vmem %s1, 2012
  %s6509 = scalar_lea.vmem %s6508, 4294967292
  %v6510 = vpack.c.bf16 %v6506, %v5539
  %6511 = vst [vmem:[%s6509] sm:$0xff] %v6510
  %s6512 = scalar_lea.vmem %s0, 1244
  %v6513 = vld [vmem:[%s6512] sm:$0xf]
  %v6514 = vunpack.c.l.bf16 %v6513
  %v6515 = vunpack.c.h.bf16 %v6513
  %s6516 = scalar_lea.vmem %s1, 3036
  %s6517 = scalar_lea.vmem %s6516, 4294967292
  %v6518 = vpack.c.bf16 %v6514, %v5544
  %6519 = vst [vmem:[%s6517] sm:$0xff] %v6518
  %s6520 = scalar_lea.vmem %s0, 220
  %v6521 = vld [vmem:[%s6520] sm:$0xf]
  %v6522 = vunpack.c.l.bf16 %v6521
  %v6523 = vunpack.c.h.bf16 %v6521
  %s6524 = scalar_lea.vmem %s1, 4060
  %s6525 = scalar_lea.vmem %s6524, 4294967292
  %v6526 = vpack.c.bf16 %v6522, %v5549
  %6527 = vst [vmem:[%s6525] sm:$0xff] %v6526
  %s6528 = scalar_lea.vmem %s0, 4092
  %v6529 = vld [vmem:[%s6528] sm:$0xf]
  %v6530 = vunpack.c.l.bf16 %v6529
  %v6531 = vunpack.c.h.bf16 %v6529
  %s6532 = scalar_lea.vmem %s1, 252
  %s6533 = scalar_lea.vmem %s6532, 4294967292
  %v6534 = vpack.c.bf16 %v6530, %v5554
  %6535 = vst [vmem:[%s6533] sm:$0xff] %v6534
  %s6536 = scalar_lea.vmem %s0, 3068
  %v6537 = vld [vmem:[%s6536] sm:$0xf]
  %v6538 = vunpack.c.l.bf16 %v6537
  %v6539 = vunpack.c.h.bf16 %v6537
  %s6540 = scalar_lea.vmem %s1, 1276
  %s6541 = scalar_lea.vmem %s6540, 4294967292
  %v6542 = vpack.c.bf16 %v6538, %v5559
  %6543 = vst [vmem:[%s6541] sm:$0xff] %v6542
  %s6544 = scalar_lea.vmem %s0, 2044
  %v6545 = vld [vmem:[%s6544] sm:$0xf]
  %v6546 = vunpack.c.l.bf16 %v6545
  %v6547 = vunpack.c.h.bf16 %v6545
  %s6548 = scalar_lea.vmem %s1, 2300
  %s6549 = scalar_lea.vmem %s6548, 4294967292
  %v6550 = vpack.c.bf16 %v6546, %v5564
  %6551 = vst [vmem:[%s6549] sm:$0xff] %v6550
  %s6552 = scalar_lea.vmem %s0, 1020
  %v6553 = vld [vmem:[%s6552] sm:$0xf]
  %v6554 = vunpack.c.l.bf16 %v6553
  %v6555 = vunpack.c.h.bf16 %v6553
  %s6556 = scalar_lea.vmem %s1, 3324
  %s6557 = scalar_lea.vmem %s6556, 4294967292
  %v6558 = vpack.c.bf16 %v6554, %v5569
  %6559 = vst [vmem:[%s6557] sm:$0xff] %v6558
  %s6560 = scalar_lea.vmem %s0, 3836
  %v6561 = vld [vmem:[%s6560] sm:$0xf]
  %v6562 = vunpack.c.l.bf16 %v6561
  %v6563 = vunpack.c.h.bf16 %v6561
  %s6564 = scalar_lea.vmem %s1, 508
  %s6565 = scalar_lea.vmem %s6564, 4294967292
  %v6566 = vpack.c.bf16 %v6562, %v5574
  %6567 = vst [vmem:[%s6565] sm:$0xff] %v6566
  %s6568 = scalar_lea.vmem %s0, 2812
  %v6569 = vld [vmem:[%s6568] sm:$0xf]
  %v6570 = vunpack.c.l.bf16 %v6569
  %v6571 = vunpack.c.h.bf16 %v6569
  %s6572 = scalar_lea.vmem %s1, 1532
  %s6573 = scalar_lea.vmem %s6572, 4294967292
  %v6574 = vpack.c.bf16 %v6570, %v5579
  %6575 = vst [vmem:[%s6573] sm:$0xff] %v6574
  %s6576 = scalar_lea.vmem %s0, 1788
  %v6577 = vld [vmem:[%s6576] sm:$0xf]
  %v6578 = vunpack.c.l.bf16 %v6577
  %v6579 = vunpack.c.h.bf16 %v6577
  %s6580 = scalar_lea.vmem %s1, 2556
  %s6581 = scalar_lea.vmem %s6580, 4294967292
  %v6582 = vpack.c.bf16 %v6578, %v5584
  %6583 = vst [vmem:[%s6581] sm:$0xff] %v6582
  %s6584 = scalar_lea.vmem %s0, 764
  %v6585 = vld [vmem:[%s6584] sm:$0xf]
  %v6586 = vunpack.c.l.bf16 %v6585
  %v6587 = vunpack.c.h.bf16 %v6585
  %s6588 = scalar_lea.vmem %s1, 3580
  %s6589 = scalar_lea.vmem %s6588, 4294967292
  %v6590 = vpack.c.bf16 %v6586, %v5589
  %6591 = vst [vmem:[%s6589] sm:$0xff] %v6590
  %s6592 = scalar_lea.vmem %s0, 3580
  %v6593 = vld [vmem:[%s6592] sm:$0xf]
  %v6594 = vunpack.c.l.bf16 %v6593
  %v6595 = vunpack.c.h.bf16 %v6593
  %s6596 = scalar_lea.vmem %s1, 764
  %s6597 = scalar_lea.vmem %s6596, 4294967292
  %v6598 = vpack.c.bf16 %v6594, %v5594
  %6599 = vst [vmem:[%s6597] sm:$0xff] %v6598
  %s6600 = scalar_lea.vmem %s0, 2556
  %v6601 = vld [vmem:[%s6600] sm:$0xf]
  %v6602 = vunpack.c.l.bf16 %v6601
  %v6603 = vunpack.c.h.bf16 %v6601
  %s6604 = scalar_lea.vmem %s1, 1788
  %s6605 = scalar_lea.vmem %s6604, 4294967292
  %v6606 = vpack.c.bf16 %v6602, %v5599
  %6607 = vst [vmem:[%s6605] sm:$0xff] %v6606
  %s6608 = scalar_lea.vmem %s0, 1532
  %v6609 = vld [vmem:[%s6608] sm:$0xf]
  %v6610 = vunpack.c.l.bf16 %v6609
  %v6611 = vunpack.c.h.bf16 %v6609
  %s6612 = scalar_lea.vmem %s1, 2812
  %s6613 = scalar_lea.vmem %s6612, 4294967292
  %v6614 = vpack.c.bf16 %v6610, %v5604
  %6615 = vst [vmem:[%s6613] sm:$0xff] %v6614
  %s6616 = scalar_lea.vmem %s0, 508
  %v6617 = vld [vmem:[%s6616] sm:$0xf]
  %v6618 = vunpack.c.l.bf16 %v6617
  %v6619 = vunpack.c.h.bf16 %v6617
  %s6620 = scalar_lea.vmem %s1, 3836
  %s6621 = scalar_lea.vmem %s6620, 4294967292
  %v6622 = vpack.c.bf16 %v6618, %v5609
  %6623 = vst [vmem:[%s6621] sm:$0xff] %v6622
  %s6624 = scalar_lea.vmem %s0, 3324
  %v6625 = vld [vmem:[%s6624] sm:$0xf]
  %v6626 = vunpack.c.l.bf16 %v6625
  %v6627 = vunpack.c.h.bf16 %v6625
  %s6628 = scalar_lea.vmem %s1, 1020
  %s6629 = scalar_lea.vmem %s6628, 4294967292
  %v6630 = vpack.c.bf16 %v6626, %v5614
  %6631 = vst [vmem:[%s6629] sm:$0xff] %v6630
  %s6632 = scalar_lea.vmem %s0, 2300
  %v6633 = vld [vmem:[%s6632] sm:$0xf]
  %v6634 = vunpack.c.l.bf16 %v6633
  %v6635 = vunpack.c.h.bf16 %v6633
  %s6636 = scalar_lea.vmem %s1, 2044
  %s6637 = scalar_lea.vmem %s6636, 4294967292
  %v6638 = vpack.c.bf16 %v6634, %v5619
  %6639 = vst [vmem:[%s6637] sm:$0xff] %v6638
  %s6640 = scalar_lea.vmem %s0, 1276
  %v6641 = vld [vmem:[%s6640] sm:$0xf]
  %v6642 = vunpack.c.l.bf16 %v6641
  %v6643 = vunpack.c.h.bf16 %v6641
  %s6644 = scalar_lea.vmem %s1, 3068
  %s6645 = scalar_lea.vmem %s6644, 4294967292
  %v6646 = vpack.c.bf16 %v6642, %v5624
  %6647 = vst [vmem:[%s6645] sm:$0xff] %v6646
  %s6648 = scalar_lea.vmem %s0, 252
  %v6649 = vld [vmem:[%s6648] sm:$0xf]
  %v6650 = vunpack.c.l.bf16 %v6649
  %v6651 = vunpack.c.h.bf16 %v6649
  %s6652 = scalar_lea.vmem %s1, 4092
  %s6653 = scalar_lea.vmem %s6652, 4294967292
  %v6654 = vpack.c.bf16 %v6650, %v5629
  %6655 = vst [vmem:[%s6653] sm:$0xff] %v6654

// kernel: tile.23
$region0: #{tile.23}
  #allocation0 [shape = 's32[1]{0}', space=sflag, size = 0x4, scoped, tag = 'scoped memory for tile.23']
  %s0 = inlined_call_operand.vmem [shape: f32[32], index: 0, kind: input, shape index: {}]
  %s1 = inlined_call_operand.vmem [shape: f32[4,32], index: 1, kind: output, shape index: {}]
  // Predicated region
  $region2: #{tile.23} parent=0 // pred_check
    _
  $region3: #{tile.23} parent=0 // pred_check_branch
    %3 = sbr.rel (0) target = $region5
  $region4: #{tile.23} parent=0 // pred_region
    _
  $region5: #{tile.23} parent=0 // pred_fallthru
    _
  %v4 = vld [vmem:[%s0] ss:$0 sm:$0xff]
  %5 = vst [vmem:[%s1] sm:$0xf] %v4

// kernel: tile.24
$region0: #{tile.24}
  %s0 = inlined_call_operand.vmem [shape: f32[4,32], index: 0, kind: input, shape index: {}]
  %s1 = inlined_call_operand.vmem [shape: f32[1,128], index: 1, kind: output, shape index: {}]
  $region1: #{tile.24} parent=0
    #allocation0 [shape = 'u8[4096]{0}', space=vmem, size = 0x1000, scoped, tag = 'scoped mem for output reshape']
    #allocation1 [shape = 'u8[4096]{0}', space=vmem, size = 0x1000, scoped, tag = 'scoped mem for input reshape']
    %s3 = ssub.s32 16, 1
    %v4 = vld [vmem:[%s0] sm:%s3]
    %5 = vst [vmem:[#allocation1] sm:%s3] %v4
    %v6 = vld [vmem:[#allocation1] sm:$0x1]
    %vm7 = vcmask 261120
    %8 = vst.msk [vmem:[#allocation0] sm:$0x1] %vm7, %v6
    %s9 = scalar_lea.vmem [#allocation1], 3
    %v10 = vld [vmem:[%s9] sm:$0x1]
    %11 = vrot.lane.b32.xlu0 %v10, 96
    %v12 = vpop.permute.xlu0 %11
    %vm13 = vcmask 1048320
    %14 = vst.msk [vmem:[#allocation0] sm:$0x1] %vm13, %v12
    %s15 = scalar_lea.vmem [#allocation1], 2
    %v16 = vld [vmem:[%s15] sm:$0x1]
    %17 = vrot.lane.b32.xlu0 %v16, 64
    %v18 = vpop.permute.xlu0 %17
    %vm19 = vcmask 785920
    %20 = vst.msk [vmem:[#allocation0] sm:$0x1] %vm19, %v18
    %s21 = scalar_lea.vmem [#allocation1], 1
    %v22 = vld [vmem:[%s21] sm:$0x1]
    %23 = vrot.lane.b32.xlu0 %v22, 32
    %v24 = vpop.permute.xlu0 %23
    %vm25 = vcmask 523520
    %26 = vst.msk [vmem:[#allocation0] sm:$0x1] %vm25, %v24
    %s28 = ssub.s32 2, 1
    %v29 = vld [vmem:[#allocation0] sm:%s28]
    %s31 = ssub.s32 2, 1
    %32 = vst [vmem:[%s1] sm:%s31] %v29

// kernel: autoencoder_forward.10
$region0: #{autoencoder_forward.10}
  #allocation0 [shape = 'u32[]', space=smem, size = 0x4, offset = 0x4, fixed_abs, tag = 'smem constant byte address 0x4 - core index']
  #allocation1 [shape = 'u32[72,128]{1,0:T(1,128)}', space=vmem, size = 0x9000, scoped, tag = 'internal scratch']
  %s0 = inlined_call_operand.vmem [shape: bf16[84,1024], index: 0, kind: input, shape index: {}]
  %s1 = inlined_call_operand.vmem [shape: bf16[1024,128], index: 1, kind: input, shape index: {}]
  %s2 = inlined_call_operand.vmem [shape: f32[1,128], index: 2, kind: input, shape index: {}]
  %s3 = inlined_call_operand.vmem [shape: f32[84,128], index: 3, kind: output, shape index: {}]
  %s4 = sld [smem:[#allocation0]]
  $region22: #{autoencoder_forward.10} parent=0
    _
  %s6 = ssub.s32 1, %s4
  %s7 = scalar_select 0, %s6, %s4
  // Predicated region
  $region2: #{autoencoder_forward.10} parent=0 // pred_check
    _
  $region3: #{autoencoder_forward.10} parent=0 // pred_check_branch
    %9 = sbr.rel (0) target = $region5
  $region4: #{autoencoder_forward.10} parent=0 // pred_region
    _
  $region5: #{autoencoder_forward.10} parent=0 // pred_fallthru
    _
  // Predicated region
  $region6: #{autoencoder_forward.10} parent=0 // pred_check
    _
  $region7: #{autoencoder_forward.10} parent=0 // pred_check_branch
    %11 = sbr.rel (0) target = $region9
  $region8: #{autoencoder_forward.10} parent=0 // pred_region
    _
  $region9: #{autoencoder_forward.10} parent=0 // pred_fallthru
    _
  // Predicated region
  $region10: #{autoencoder_forward.10} parent=0 // pred_check
    _
  $region11: #{autoencoder_forward.10} parent=0 // pred_check_branch
    %13 = sbr.rel (0) target = $region13
  $region12: #{autoencoder_forward.10} parent=0 // pred_region
    _
  $region13: #{autoencoder_forward.10} parent=0 // pred_fallthru
    _
  %v14 = vld [vmem:[%s0] sm:$0xff]
  %v15 = vld [vmem:[%s0 + $0x8] sm:$0xff]
  %v16 = vld [vmem:[%s0 + $0x10] sm:$0xff]
  %v17 = vld [vmem:[%s0 + $0x18] sm:$0xff]
  %v18 = vld [vmem:[%s0 + $0x20] sm:$0xff]
  %v19 = vld [vmem:[%s0 + $0x28] sm:$0xff]
  %v20 = vld [vmem:[%s0 + $0x30] sm:$0xff]
  %v21 = vld [vmem:[%s0 + $0x38] sm:$0xff]
  %v22 = vld [vmem:[%s0 + $0x40] sm:$0xff]
  %v23 = vld [vmem:[%s0 + $0x48] sm:$0xff]
  %v24 = vld [vmem:[%s0 + $0x50] sm:$0xff]
  %v25 = vld [vmem:[%s0 + $0x58] sm:$0xff]
  %v26 = vld [vmem:[%s0 + $0x60] sm:$0xff]
  %v27 = vld [vmem:[%s0 + $0x68] sm:$0xff]
  %v28 = vld [vmem:[%s0 + $0x70] sm:$0xff]
  %v29 = vld [vmem:[%s0 + $0x78] sm:$0xff]
  %v30 = vld [vmem:[%s0 + $0x80] sm:$0xff]
  %v31 = vld [vmem:[%s0 + $0x88] sm:$0xff]
  %v32 = vld [vmem:[%s0 + $0x90] sm:$0xff]
  %v33 = vld [vmem:[%s0 + $0x98] sm:$0xff]
  %v34 = vld [vmem:[%s0 + $0xa0] sm:$0xff]
  %v35 = vld [vmem:[%s0 + $0xa8] sm:$0xff]
  %v36 = vld [vmem:[%s0 + $0xb0] sm:$0xff]
  %v37 = vld [vmem:[%s0 + $0xb8] sm:$0xff]
  %v38 = vld [vmem:[%s0 + $0xc0] sm:$0xff]
  %v39 = vld [vmem:[%s0 + $0xc8] sm:$0xff]
  %v40 = vld [vmem:[%s0 + $0xd0] sm:$0xff]
  %v41 = vld [vmem:[%s0 + $0xd8] sm:$0xff]
  %v42 = vld [vmem:[%s0 + $0xe0] sm:$0xff]
  %v43 = vld [vmem:[%s0 + $0xe8] sm:$0xff]
  %v44 = vld [vmem:[%s0 + $0xf0] sm:$0xff]
  %v45 = vld [vmem:[%s0 + $0xf8] sm:$0xff]
  %v46 = vld [vmem:[%s0 + $0x100] sm:$0xff]
  %v47 = vld [vmem:[%s0 + $0x108] sm:$0xff]
  %v48 = vld [vmem:[%s0 + $0x110] sm:$0xff]
  %v49 = vld [vmem:[%s0 + $0x118] sm:$0xff]
  %v50 = vld [vmem:[%s0 + $0x120] sm:$0xff]
  %v51 = vld [vmem:[%s0 + $0x128] sm:$0xff]
  %v52 = vld [vmem:[%s0 + $0x130] sm:$0xff]
  %v53 = vld [vmem:[%s0 + $0x138] sm:$0xff]
  %v54 = vld [vmem:[%s0 + $0x140] sm:$0x33]
  %v55 = vld [vmem:[%s0 + $0x148] sm:$0x33]
  %v56 = vld [vmem:[%s0 + $0x150] sm:$0x33]
  %v57 = vld [vmem:[%s0 + $0x158] sm:$0x33]
  %v58 = vld [vmem:[%s1] sm:$0xf]
  %v59 = vld [vmem:[%s1 + $0x4] sm:$0xf]
  %v60 = vld [vmem:[%s1 + $0x8] sm:$0xf]
  %v61 = vld [vmem:[%s1 + $0xc] sm:$0xf]
  %v62 = vld [vmem:[%s1 + $0x10] sm:$0xf]
  %v63 = vld [vmem:[%s1 + $0x14] sm:$0xf]
  %v64 = vld [vmem:[%s1 + $0x18] sm:$0xf]
  %v65 = vld [vmem:[%s1 + $0x1c] sm:$0xf]
  %v66 = vld [vmem:[%s1 + $0x20] sm:$0xf]
  %v67 = vld [vmem:[%s1 + $0x24] sm:$0xf]
  %v68 = vld [vmem:[%s1 + $0x28] sm:$0xf]
  %v69 = vld [vmem:[%s1 + $0x2c] sm:$0xf]
  %v70 = vld [vmem:[%s1 + $0x30] sm:$0xf]
  %v71 = vld [vmem:[%s1 + $0x34] sm:$0xf]
  %v72 = vld [vmem:[%s1 + $0x38] sm:$0xf]
  %v73 = vld [vmem:[%s1 + $0x3c] sm:$0xf]
  %v74 = vld [vmem:[%s1 + $0x40] sm:$0xf]
  %v75 = vld [vmem:[%s1 + $0x44] sm:$0xf]
  %v76 = vld [vmem:[%s1 + $0x48] sm:$0xf]
  %v77 = vld [vmem:[%s1 + $0x4c] sm:$0xf]
  %v78 = vld [vmem:[%s1 + $0x50] sm:$0xf]
  %v79 = vld [vmem:[%s1 + $0x54] sm:$0xf]
  %v80 = vld [vmem:[%s1 + $0x58] sm:$0xf]
  %v81 = vld [vmem:[%s1 + $0x5c] sm:$0xf]
  %v82 = vld [vmem:[%s1 + $0x60] sm:$0xf]
  %v83 = vld [vmem:[%s1 + $0x64] sm:$0xf]
  %v84 = vld [vmem:[%s1 + $0x68] sm:$0xf]
  %v85 = vld [vmem:[%s1 + $0x6c] sm:$0xf]
  %v86 = vld [vmem:[%s1 + $0x70] sm:$0xf]
  %v87 = vld [vmem:[%s1 + $0x74] sm:$0xf]
  %v88 = vld [vmem:[%s1 + $0x78] sm:$0xf]
  %v89 = vld [vmem:[%s1 + $0x7c] sm:$0xf]
  %v90 = vld [vmem:[%s1 + $0x80] sm:$0xf]
  %v91 = vld [vmem:[%s1 + $0x84] sm:$0xf]
  %v92 = vld [vmem:[%s1 + $0x88] sm:$0xf]
  %v93 = vld [vmem:[%s1 + $0x8c] sm:$0xf]
  %v94 = vld [vmem:[%s1 + $0x90] sm:$0xf]
  %v95 = vld [vmem:[%s1 + $0x94] sm:$0xf]
  %v96 = vld [vmem:[%s1 + $0x98] sm:$0xf]
  %v97 = vld [vmem:[%s1 + $0x9c] sm:$0xf]
  %v98 = vld [vmem:[%s1 + $0xa0] sm:$0xf]
  %v99 = vld [vmem:[%s1 + $0xa4] sm:$0xf]
  %v100 = vld [vmem:[%s1 + $0xa8] sm:$0xf]
  %v101 = vld [vmem:[%s1 + $0xac] sm:$0xf]
  %v102 = vld [vmem:[%s1 + $0xb0] sm:$0xf]
  %v103 = vld [vmem:[%s1 + $0xb4] sm:$0xf]
  %v104 = vld [vmem:[%s1 + $0xb8] sm:$0xf]
  %v105 = vld [vmem:[%s1 + $0xbc] sm:$0xf]
  %v106 = vld [vmem:[%s1 + $0xc0] sm:$0xf]
  %v107 = vld [vmem:[%s1 + $0xc4] sm:$0xf]
  %v108 = vld [vmem:[%s1 + $0xc8] sm:$0xf]
  %v109 = vld [vmem:[%s1 + $0xcc] sm:$0xf]
  %v110 = vld [vmem:[%s1 + $0xd0] sm:$0xf]
  %v111 = vld [vmem:[%s1 + $0xd4] sm:$0xf]
  %v112 = vld [vmem:[%s1 + $0xd8] sm:$0xf]
  %v113 = vld [vmem:[%s1 + $0xdc] sm:$0xf]
  %v114 = vld [vmem:[%s1 + $0xe0] sm:$0xf]
  %v115 = vld [vmem:[%s1 + $0xe4] sm:$0xf]
  %v116 = vld [vmem:[%s1 + $0xe8] sm:$0xf]
  %v117 = vld [vmem:[%s1 + $0xec] sm:$0xf]
  %v118 = vld [vmem:[%s1 + $0xf0] sm:$0xf]
  %v119 = vld [vmem:[%s1 + $0xf4] sm:$0xf]
  %v120 = vld [vmem:[%s1 + $0xf8] sm:$0xf]
  %v121 = vld [vmem:[%s1 + $0xfc] sm:$0xf]
  %v122 = vld [vmem:[%s1 + $0x100] sm:$0xf]
  %v123 = vld [vmem:[%s1 + $0x104] sm:$0xf]
  %v124 = vld [vmem:[%s1 + $0x108] sm:$0xf]
  %v125 = vld [vmem:[%s1 + $0x10c] sm:$0xf]
  %v126 = vld [vmem:[%s1 + $0x110] sm:$0xf]
  %v127 = vld [vmem:[%s1 + $0x114] sm:$0xf]
  %v128 = vld [vmem:[%s1 + $0x118] sm:$0xf]
  %v129 = vld [vmem:[%s1 + $0x11c] sm:$0xf]
  %v130 = vld [vmem:[%s1 + $0x120] sm:$0xf]
  %v131 = vld [vmem:[%s1 + $0x124] sm:$0xf]
  %v132 = vld [vmem:[%s1 + $0x128] sm:$0xf]
  %v133 = vld [vmem:[%s1 + $0x12c] sm:$0xf]
  %v134 = vld [vmem:[%s1 + $0x130] sm:$0xf]
  %v135 = vld [vmem:[%s1 + $0x134] sm:$0xf]
  %v136 = vld [vmem:[%s1 + $0x138] sm:$0xf]
  %v137 = vld [vmem:[%s1 + $0x13c] sm:$0xf]
  %v138 = vld [vmem:[%s1 + $0x140] sm:$0xf]
  %v139 = vld [vmem:[%s1 + $0x144] sm:$0xf]
  %v140 = vld [vmem:[%s1 + $0x148] sm:$0xf]
  %v141 = vld [vmem:[%s1 + $0x14c] sm:$0xf]
  %v142 = vld [vmem:[%s1 + $0x150] sm:$0xf]
  %v143 = vld [vmem:[%s1 + $0x154] sm:$0xf]
  %v144 = vld [vmem:[%s1 + $0x158] sm:$0xf]
  %v145 = vld [vmem:[%s1 + $0x15c] sm:$0xf]
  %v146 = vld [vmem:[%s1 + $0x160] sm:$0xf]
  %v147 = vld [vmem:[%s1 + $0x164] sm:$0xf]
  %v148 = vld [vmem:[%s1 + $0x168] sm:$0xf]
  %v149 = vld [vmem:[%s1 + $0x16c] sm:$0xf]
  %v150 = vld [vmem:[%s1 + $0x170] sm:$0xf]
  %v151 = vld [vmem:[%s1 + $0x174] sm:$0xf]
  %v152 = vld [vmem:[%s1 + $0x178] sm:$0xf]
  %v153 = vld [vmem:[%s1 + $0x17c] sm:$0xf]
  %v154 = vld [vmem:[%s1 + $0x180] sm:$0xf]
  %v155 = vld [vmem:[%s1 + $0x184] sm:$0xf]
  %v156 = vld [vmem:[%s1 + $0x188] sm:$0xf]
  %v157 = vld [vmem:[%s1 + $0x18c] sm:$0xf]
  %v158 = vld [vmem:[%s1 + $0x190] sm:$0xf]
  %v159 = vld [vmem:[%s1 + $0x194] sm:$0xf]
  %v160 = vld [vmem:[%s1 + $0x198] sm:$0xf]
  %v161 = vld [vmem:[%s1 + $0x19c] sm:$0xf]
  %v162 = vld [vmem:[%s1 + $0x1a0] sm:$0xf]
  %v163 = vld [vmem:[%s1 + $0x1a4] sm:$0xf]
  %v164 = vld [vmem:[%s1 + $0x1a8] sm:$0xf]
  %v165 = vld [vmem:[%s1 + $0x1ac] sm:$0xf]
  %v166 = vld [vmem:[%s1 + $0x1b0] sm:$0xf]
  %v167 = vld [vmem:[%s1 + $0x1b4] sm:$0xf]
  %v168 = vld [vmem:[%s1 + $0x1b8] sm:$0xf]
  %v169 = vld [vmem:[%s1 + $0x1bc] sm:$0xf]
  %v170 = vld [vmem:[%s1 + $0x1c0] sm:$0xf]
  %v171 = vld [vmem:[%s1 + $0x1c4] sm:$0xf]
  %v172 = vld [vmem:[%s1 + $0x1c8] sm:$0xf]
  %v173 = vld [vmem:[%s1 + $0x1cc] sm:$0xf]
  %v174 = vld [vmem:[%s1 + $0x1d0] sm:$0xf]
  %v175 = vld [vmem:[%s1 + $0x1d4] sm:$0xf]
  %v176 = vld [vmem:[%s1 + $0x1d8] sm:$0xf]
  %v177 = vld [vmem:[%s1 + $0x1dc] sm:$0xf]
  %v178 = vld [vmem:[%s1 + $0x1e0] sm:$0xf]
  %v179 = vld [vmem:[%s1 + $0x1e4] sm:$0xf]
  %v180 = vld [vmem:[%s1 + $0x1e8] sm:$0xf]
  %v181 = vld [vmem:[%s1 + $0x1ec] sm:$0xf]
  %v182 = vld [vmem:[%s1 + $0x1f0] sm:$0xf]
  %v183 = vld [vmem:[%s1 + $0x1f4] sm:$0xf]
  %v184 = vld [vmem:[%s1 + $0x1f8] sm:$0xf]
  %v185 = vld [vmem:[%s1 + $0x1fc] sm:$0xf]
  %v186 = vld [vmem:[%s2] sm:$0x1]
  %v188 = vperm.slane %v186, 0
  %v234 = vunpack.c.l.b16 %v14
  %v235 = vunpack.c.h.b16 %v14
  %v236 = vunpack.c.l.b16 %v15
  %v237 = vunpack.c.h.b16 %v15
  %v238 = vunpack.c.l.b16 %v16
  %v239 = vunpack.c.h.b16 %v16
  %v240 = vunpack.c.l.b16 %v17
  %v241 = vunpack.c.h.b16 %v17
  %v242 = vunpack.c.l.b16 %v18
  %v243 = vunpack.c.h.b16 %v18
  %v244 = vunpack.c.l.b16 %v19
  %v245 = vunpack.c.h.b16 %v19
  %v246 = vunpack.c.l.b16 %v20
  %v247 = vunpack.c.h.b16 %v20
  %v248 = vunpack.c.l.b16 %v21
  %v249 = vunpack.c.h.b16 %v21
  %v250 = vunpack.c.l.b16 %v22
  %v251 = vunpack.c.h.b16 %v22
  %v252 = vunpack.c.l.b16 %v23
  %v253 = vunpack.c.h.b16 %v23
  %v254 = vunpack.c.l.b16 %v24
  %v255 = vunpack.c.h.b16 %v24
  %v256 = vunpack.c.l.b16 %v25
  %v257 = vunpack.c.h.b16 %v25
  %v258 = vunpack.c.l.b16 %v26
  %v259 = vunpack.c.h.b16 %v26
  %v260 = vunpack.c.l.b16 %v27
  %v261 = vunpack.c.h.b16 %v27
  %v262 = vunpack.c.l.b16 %v28
  %v263 = vunpack.c.h.b16 %v28
  %v264 = vunpack.c.l.b16 %v29
  %v265 = vunpack.c.h.b16 %v29
  %v266 = vunpack.c.l.b16 %v30
  %v267 = vunpack.c.h.b16 %v30
  %v268 = vunpack.c.l.b16 %v31
  %v269 = vunpack.c.h.b16 %v31
  %v270 = vunpack.c.l.b16 %v32
  %v271 = vunpack.c.h.b16 %v32
  %v272 = vunpack.c.l.b16 %v33
  %v273 = vunpack.c.h.b16 %v33
  %v274 = vunpack.c.l.b16 %v34
  %v275 = vunpack.c.h.b16 %v34
  %v276 = vunpack.c.l.b16 %v35
  %v277 = vunpack.c.h.b16 %v35
  %v278 = vunpack.c.l.b16 %v36
  %v279 = vunpack.c.h.b16 %v36
  %v280 = vunpack.c.l.b16 %v37
  %v281 = vunpack.c.h.b16 %v37
  %v282 = vunpack.c.l.b16 %v38
  %v283 = vunpack.c.h.b16 %v38
  %v284 = vunpack.c.l.b16 %v39
  %v285 = vunpack.c.h.b16 %v39
  %v286 = vunpack.c.l.b16 %v40
  %v287 = vunpack.c.h.b16 %v40
  %v288 = vunpack.c.l.b16 %v41
  %v289 = vunpack.c.h.b16 %v41
  %v290 = vunpack.c.l.b16 %v42
  %v291 = vunpack.c.h.b16 %v42
  %v292 = vunpack.c.l.b16 %v43
  %v293 = vunpack.c.h.b16 %v43
  %v294 = vunpack.c.l.b16 %v44
  %v295 = vunpack.c.h.b16 %v44
  %v296 = vunpack.c.l.b16 %v45
  %v297 = vunpack.c.h.b16 %v45
  %v298 = vunpack.c.l.b16 %v46
  %v299 = vunpack.c.h.b16 %v46
  %v300 = vunpack.c.l.b16 %v47
  %v301 = vunpack.c.h.b16 %v47
  %v302 = vunpack.c.l.b16 %v48
  %v303 = vunpack.c.h.b16 %v48
  %v304 = vunpack.c.l.b16 %v49
  %v305 = vunpack.c.h.b16 %v49
  %v306 = vunpack.c.l.b16 %v50
  %v307 = vunpack.c.h.b16 %v50
  %v308 = vunpack.c.l.b16 %v51
  %v309 = vunpack.c.h.b16 %v51
  %v310 = vunpack.c.l.b16 %v52
  %v311 = vunpack.c.h.b16 %v52
  %v312 = vunpack.c.l.b16 %v53
  %v313 = vunpack.c.h.b16 %v53
  %v314 = vunpack.c.l.b16 %v54
  %v315 = vunpack.c.h.b16 %v54
  %v316 = vunpack.c.l.b16 %v55
  %v317 = vunpack.c.h.b16 %v55
  %v318 = vunpack.c.l.b16 %v56
  %v319 = vunpack.c.h.b16 %v56
  %v320 = vunpack.c.l.b16 %v57
  %v321 = vunpack.c.h.b16 %v57
  %v322 = vpack.c.b16 %v242, %v234
  %v323 = vpack.c.b16 %v243, %v235
  %v324 = vpack.c.b16 %v244, %v236
  %v325 = vpack.c.b16 %v245, %v237
  %v326 = vpack.c.b16 %v246, %v238
  %v327 = vpack.c.b16 %v247, %v239
  %v328 = vpack.c.b16 %v248, %v240
  %v329 = vpack.c.b16 %v249, %v241
  %v330 = vpack.c.b16 %v258, %v250
  %v331 = vpack.c.b16 %v259, %v251
  %v332 = vpack.c.b16 %v260, %v252
  %v333 = vpack.c.b16 %v261, %v253
  %v334 = vpack.c.b16 %v262, %v254
  %v335 = vpack.c.b16 %v263, %v255
  %v336 = vpack.c.b16 %v264, %v256
  %v337 = vpack.c.b16 %v265, %v257
  %v338 = vpack.c.b16 %v274, %v266
  %v339 = vpack.c.b16 %v275, %v267
  %v340 = vpack.c.b16 %v276, %v268
  %v341 = vpack.c.b16 %v277, %v269
  %v342 = vpack.c.b16 %v278, %v270
  %v343 = vpack.c.b16 %v279, %v271
  %v344 = vpack.c.b16 %v280, %v272
  %v345 = vpack.c.b16 %v281, %v273
  %v346 = vpack.c.b16 %v290, %v282
  %v347 = vpack.c.b16 %v291, %v283
  %v348 = vpack.c.b16 %v292, %v284
  %v349 = vpack.c.b16 %v293, %v285
  %v350 = vpack.c.b16 %v294, %v286
  %v351 = vpack.c.b16 %v295, %v287
  %v352 = vpack.c.b16 %v296, %v288
  %v353 = vpack.c.b16 %v297, %v289
  %v354 = vpack.c.b16 %v306, %v298
  %v355 = vpack.c.b16 %v307, %v299
  %v356 = vpack.c.b16 %v308, %v300
  %v357 = vpack.c.b16 %v309, %v301
  %v358 = vpack.c.b16 %v310, %v302
  %v359 = vpack.c.b16 %v311, %v303
  %v360 = vpack.c.b16 %v312, %v304
  %v361 = vpack.c.b16 %v313, %v305
  %v362 = vpack.c.b16 %v314, %v314
  %v363 = vpack.c.b16 %v315, %v315
  %v364 = vpack.c.b16 %v316, %v316
  %v365 = vpack.c.b16 %v317, %v317
  %v366 = vpack.c.b16 %v318, %v318
  %v367 = vpack.c.b16 %v319, %v319
  %v368 = vpack.c.b16 %v320, %v320
  %v369 = vpack.c.b16 %v321, %v321
  %v546 = vunpack.c.l.b16 %v58
  %v547 = vunpack.c.l.b16 %v59
  %v548 = vunpack.c.l.b16 %v60
  %v549 = vunpack.c.l.b16 %v61
  %v550 = vunpack.c.l.b16 %v62
  %v551 = vunpack.c.l.b16 %v63
  %v552 = vunpack.c.l.b16 %v64
  %v553 = vunpack.c.l.b16 %v65
  %v554 = vunpack.c.l.b16 %v66
  %v555 = vunpack.c.l.b16 %v67
  %v556 = vunpack.c.l.b16 %v68
  %v557 = vunpack.c.l.b16 %v69
  %v558 = vunpack.c.l.b16 %v70
  %v559 = vunpack.c.l.b16 %v71
  %v560 = vunpack.c.l.b16 %v72
  %v561 = vunpack.c.l.b16 %v73
  %v562 = vunpack.c.l.b16 %v74
  %v563 = vunpack.c.l.b16 %v75
  %v564 = vunpack.c.l.b16 %v76
  %v565 = vunpack.c.l.b16 %v77
  %v566 = vunpack.c.l.b16 %v78
  %v567 = vunpack.c.l.b16 %v79
  %v568 = vunpack.c.l.b16 %v80
  %v569 = vunpack.c.l.b16 %v81
  %v570 = vunpack.c.l.b16 %v82
  %v571 = vunpack.c.l.b16 %v83
  %v572 = vunpack.c.l.b16 %v84
  %v573 = vunpack.c.l.b16 %v85
  %v574 = vunpack.c.l.b16 %v86
  %v575 = vunpack.c.l.b16 %v87
  %v576 = vunpack.c.l.b16 %v88
  %v577 = vunpack.c.l.b16 %v89
  %v578 = vunpack.c.l.b16 %v90
  %v579 = vunpack.c.l.b16 %v91
  %v580 = vunpack.c.l.b16 %v92
  %v581 = vunpack.c.l.b16 %v93
  %v582 = vunpack.c.l.b16 %v94
  %v583 = vunpack.c.l.b16 %v95
  %v584 = vunpack.c.l.b16 %v96
  %v585 = vunpack.c.l.b16 %v97
  %v586 = vunpack.c.l.b16 %v98
  %v587 = vunpack.c.l.b16 %v99
  %v588 = vunpack.c.l.b16 %v100
  %v589 = vunpack.c.l.b16 %v101
  %v590 = vunpack.c.l.b16 %v102
  %v591 = vunpack.c.l.b16 %v103
  %v592 = vunpack.c.l.b16 %v104
  %v593 = vunpack.c.l.b16 %v105
  %v594 = vunpack.c.l.b16 %v106
  %v595 = vunpack.c.l.b16 %v107
  %v596 = vunpack.c.l.b16 %v108
  %v597 = vunpack.c.l.b16 %v109
  %v598 = vunpack.c.l.b16 %v110
  %v599 = vunpack.c.l.b16 %v111
  %v600 = vunpack.c.l.b16 %v112
  %v601 = vunpack.c.l.b16 %v113
  %v602 = vunpack.c.l.b16 %v114
  %v603 = vunpack.c.l.b16 %v115
  %v604 = vunpack.c.l.b16 %v116
  %v605 = vunpack.c.l.b16 %v117
  %v606 = vunpack.c.l.b16 %v118
  %v607 = vunpack.c.l.b16 %v119
  %v608 = vunpack.c.l.b16 %v120
  %v609 = vunpack.c.l.b16 %v121
  %v610 = vunpack.c.l.b16 %v122
  %v611 = vunpack.c.l.b16 %v123
  %v612 = vunpack.c.l.b16 %v124
  %v613 = vunpack.c.l.b16 %v125
  %v614 = vunpack.c.l.b16 %v126
  %v615 = vunpack.c.l.b16 %v127
  %v616 = vunpack.c.l.b16 %v128
  %v617 = vunpack.c.l.b16 %v129
  %v618 = vunpack.c.l.b16 %v130
  %v619 = vunpack.c.l.b16 %v131
  %v620 = vunpack.c.l.b16 %v132
  %v621 = vunpack.c.l.b16 %v133
  %v622 = vunpack.c.l.b16 %v134
  %v623 = vunpack.c.l.b16 %v135
  %v624 = vunpack.c.l.b16 %v136
  %v625 = vunpack.c.l.b16 %v137
  %v626 = vunpack.c.l.b16 %v138
  %v627 = vunpack.c.l.b16 %v139
  %v628 = vunpack.c.l.b16 %v140
  %v629 = vunpack.c.l.b16 %v141
  %v630 = vunpack.c.l.b16 %v142
  %v631 = vunpack.c.l.b16 %v143
  %v632 = vunpack.c.l.b16 %v144
  %v633 = vunpack.c.l.b16 %v145
  %v634 = vunpack.c.l.b16 %v146
  %v635 = vunpack.c.l.b16 %v147
  %v636 = vunpack.c.l.b16 %v148
  %v637 = vunpack.c.l.b16 %v149
  %v638 = vunpack.c.l.b16 %v150
  %v639 = vunpack.c.l.b16 %v151
  %v640 = vunpack.c.l.b16 %v152
  %v641 = vunpack.c.l.b16 %v153
  %v642 = vunpack.c.l.b16 %v154
  %v643 = vunpack.c.l.b16 %v155
  %v644 = vunpack.c.l.b16 %v156
  %v645 = vunpack.c.l.b16 %v157
  %v646 = vunpack.c.l.b16 %v158
  %v647 = vunpack.c.l.b16 %v159
  %v648 = vunpack.c.l.b16 %v160
  %v649 = vunpack.c.l.b16 %v161
  %v650 = vunpack.c.l.b16 %v162
  %v651 = vunpack.c.l.b16 %v163
  %v652 = vunpack.c.l.b16 %v164
  %v653 = vunpack.c.l.b16 %v165
  %v654 = vunpack.c.l.b16 %v166
  %v655 = vunpack.c.l.b16 %v167
  %v656 = vunpack.c.l.b16 %v168
  %v657 = vunpack.c.l.b16 %v169
  %v658 = vunpack.c.l.b16 %v170
  %v659 = vunpack.c.l.b16 %v171
  %v660 = vunpack.c.l.b16 %v172
  %v661 = vunpack.c.l.b16 %v173
  %v662 = vunpack.c.l.b16 %v174
  %v663 = vunpack.c.l.b16 %v175
  %v664 = vunpack.c.l.b16 %v176
  %v665 = vunpack.c.l.b16 %v177
  %v666 = vunpack.c.l.b16 %v178
  %v667 = vunpack.c.l.b16 %v179
  %v668 = vunpack.c.l.b16 %v180
  %v669 = vunpack.c.l.b16 %v181
  %v670 = vunpack.c.l.b16 %v182
  %v671 = vunpack.c.l.b16 %v183
  %v672 = vunpack.c.l.b16 %v184
  %v673 = vunpack.c.l.b16 %v185
  %v674 = vpack.c.b16 %v547, %v546
  %v675 = vpack.c.b16 %v549, %v548
  %v676 = vpack.c.b16 %v551, %v550
  %v677 = vpack.c.b16 %v553, %v552
  %v678 = vpack.c.b16 %v555, %v554
  %v679 = vpack.c.b16 %v557, %v556
  %v680 = vpack.c.b16 %v559, %v558
  %v681 = vpack.c.b16 %v561, %v560
  %v682 = vpack.c.b16 %v563, %v562
  %v683 = vpack.c.b16 %v565, %v564
  %v684 = vpack.c.b16 %v567, %v566
  %v685 = vpack.c.b16 %v569, %v568
  %v686 = vpack.c.b16 %v571, %v570
  %v687 = vpack.c.b16 %v573, %v572
  %v688 = vpack.c.b16 %v575, %v574
  %v689 = vpack.c.b16 %v577, %v576
  %v690 = vpack.c.b16 %v579, %v578
  %v691 = vpack.c.b16 %v581, %v580
  %v692 = vpack.c.b16 %v583, %v582
  %v693 = vpack.c.b16 %v585, %v584
  %v694 = vpack.c.b16 %v587, %v586
  %v695 = vpack.c.b16 %v589, %v588
  %v696 = vpack.c.b16 %v591, %v590
  %v697 = vpack.c.b16 %v593, %v592
  %v698 = vpack.c.b16 %v595, %v594
  %v699 = vpack.c.b16 %v597, %v596
  %v700 = vpack.c.b16 %v599, %v598
  %v701 = vpack.c.b16 %v601, %v600
  %v702 = vpack.c.b16 %v603, %v602
  %v703 = vpack.c.b16 %v605, %v604
  %v704 = vpack.c.b16 %v607, %v606
  %v705 = vpack.c.b16 %v609, %v608
  %v706 = vpack.c.b16 %v611, %v610
  %v707 = vpack.c.b16 %v613, %v612
  %v708 = vpack.c.b16 %v615, %v614
  %v709 = vpack.c.b16 %v617, %v616
  %v710 = vpack.c.b16 %v619, %v618
  %v711 = vpack.c.b16 %v621, %v620
  %v712 = vpack.c.b16 %v623, %v622
  %v713 = vpack.c.b16 %v625, %v624
  %v714 = vpack.c.b16 %v627, %v626
  %v715 = vpack.c.b16 %v629, %v628
  %v716 = vpack.c.b16 %v631, %v630
  %v717 = vpack.c.b16 %v633, %v632
  %v718 = vpack.c.b16 %v635, %v634
  %v719 = vpack.c.b16 %v637, %v636
  %v720 = vpack.c.b16 %v639, %v638
  %v721 = vpack.c.b16 %v641, %v640
  %v722 = vpack.c.b16 %v643, %v642
  %v723 = vpack.c.b16 %v645, %v644
  %v724 = vpack.c.b16 %v647, %v646
  %v725 = vpack.c.b16 %v649, %v648
  %v726 = vpack.c.b16 %v651, %v650
  %v727 = vpack.c.b16 %v653, %v652
  %v728 = vpack.c.b16 %v655, %v654
  %v729 = vpack.c.b16 %v657, %v656
  %v730 = vpack.c.b16 %v659, %v658
  %v731 = vpack.c.b16 %v661, %v660
  %v732 = vpack.c.b16 %v663, %v662
  %v733 = vpack.c.b16 %v665, %v664
  %v734 = vpack.c.b16 %v667, %v666
  %v735 = vpack.c.b16 %v669, %v668
  %v736 = vpack.c.b16 %v671, %v670
  %v737 = vpack.c.b16 %v673, %v672
  %802 = vmatpush.bf16.msra.mxu0 %v681
  %803 = vmatpush.bf16.msra.mxu0 %v680
  %804 = vmatpush.bf16.msra.mxu0 %v679
  %805 = vmatpush.bf16.msra.mxu0 %v678
  %806 = vmatpush.bf16.msra.mxu0 %v677
  %807 = vmatpush.bf16.msra.mxu0 %v676
  %808 = vmatpush.bf16.msra.mxu0 %v675
  %809 = vmatpush.bf16.msra.mxu0 %v674
  %810 = vmatmul.bf16.gmra.mxu0 %v322
  %v811 = vpop.f32.mrf.mxu0
  %v812 = vadd.f32 %v188, %v811
  %v813 = vpop.f32.mrf.mxu0
  %v814 = vadd.f32 %v188, %v813
  %815 = vmatmul.bf16.gmra.mxu0 %v330
  %v816 = vpop.f32.mrf.mxu0
  %v817 = vadd.f32 %v188, %v816
  %v818 = vpop.f32.mrf.mxu0
  %v819 = vadd.f32 %v188, %v818
  %820 = vmatmul.bf16.gmra.mxu0 %v338
  %v821 = vpop.f32.mrf.mxu0
  %v822 = vadd.f32 %v188, %v821
  %v823 = vpop.f32.mrf.mxu0
  %v824 = vadd.f32 %v188, %v823
  %825 = vmatmul.bf16.gmra.mxu0 %v346
  %v826 = vpop.f32.mrf.mxu0
  %v827 = vadd.f32 %v188, %v826
  %v828 = vpop.f32.mrf.mxu0
  %v829 = vadd.f32 %v188, %v828
  %830 = vmatmul.bf16.gmra.mxu0 %v354
  %v831 = vpop.f32.mrf.mxu0
  %v832 = vadd.f32 %v188, %v831
  %v833 = vpop.f32.mrf.mxu0
  %v834 = vadd.f32 %v188, %v833
  %835 = vmatmul.bf16.gmra.mxu0 %v362
  %v836 = vpop.f32.mrf.mxu0
  %v837 = vadd.f32 %v188, %v836
  %v838 = vpop.f32.mrf.mxu0
  %839 = vdwg.mxu0
  %840 = vmatpush.bf16.msra.mxu0 %v689
  %841 = vmatpush.bf16.msra.mxu0 %v688
  %842 = vmatpush.bf16.msra.mxu0 %v687
  %843 = vmatpush.bf16.msra.mxu0 %v686
  %844 = vmatpush.bf16.msra.mxu0 %v685
  %845 = vmatpush.bf16.msra.mxu0 %v684
  %846 = vmatpush.bf16.msra.mxu0 %v683
  %847 = vmatpush.bf16.msra.mxu0 %v682
  %848 = vmatmul.bf16.gmra.mxu0 %v323
  %v849 = vpop.f32.mrf.mxu0
  %v850 = vadd.f32 %v812, %v849
  %v851 = vpop.f32.mrf.mxu0
  %v852 = vadd.f32 %v814, %v851
  %853 = vmatmul.bf16.gmra.mxu0 %v331
  %v854 = vpop.f32.mrf.mxu0
  %v855 = vadd.f32 %v817, %v854
  %v856 = vpop.f32.mrf.mxu0
  %v857 = vadd.f32 %v819, %v856
  %858 = vmatmul.bf16.gmra.mxu0 %v339
  %v859 = vpop.f32.mrf.mxu0
  %v860 = vadd.f32 %v822, %v859
  %v861 = vpop.f32.mrf.mxu0
  %v862 = vadd.f32 %v824, %v861
  %863 = vmatmul.bf16.gmra.mxu0 %v347
  %v864 = vpop.f32.mrf.mxu0
  %v865 = vadd.f32 %v827, %v864
  %v866 = vpop.f32.mrf.mxu0
  %v867 = vadd.f32 %v829, %v866
  %868 = vmatmul.bf16.gmra.mxu0 %v355
  %v869 = vpop.f32.mrf.mxu0
  %v870 = vadd.f32 %v832, %v869
  %v871 = vpop.f32.mrf.mxu0
  %v872 = vadd.f32 %v834, %v871
  %873 = vmatmul.bf16.gmra.mxu0 %v363
  %v874 = vpop.f32.mrf.mxu0
  %v875 = vadd.f32 %v837, %v874
  %v876 = vpop.f32.mrf.mxu0
  %877 = vdwg.mxu0
  %878 = vmatpush.bf16.msra.mxu0 %v697
  %879 = vmatpush.bf16.msra.mxu0 %v696
  %880 = vmatpush.bf16.msra.mxu0 %v695
  %881 = vmatpush.bf16.msra.mxu0 %v694
  %882 = vmatpush.bf16.msra.mxu0 %v693
  %883 = vmatpush.bf16.msra.mxu0 %v692
  %884 = vmatpush.bf16.msra.mxu0 %v691
  %885 = vmatpush.bf16.msra.mxu0 %v690
  %886 = vmatmul.bf16.gmra.mxu0 %v324
  %v887 = vpop.f32.mrf.mxu0
  %v888 = vadd.f32 %v850, %v887
  %v889 = vpop.f32.mrf.mxu0
  %v890 = vadd.f32 %v852, %v889
  %891 = vmatmul.bf16.gmra.mxu0 %v332
  %v892 = vpop.f32.mrf.mxu0
  %v893 = vadd.f32 %v855, %v892
  %v894 = vpop.f32.mrf.mxu0
  %v895 = vadd.f32 %v857, %v894
  %896 = vmatmul.bf16.gmra.mxu0 %v340
  %v897 = vpop.f32.mrf.mxu0
  %v898 = vadd.f32 %v860, %v897
  %v899 = vpop.f32.mrf.mxu0
  %v900 = vadd.f32 %v862, %v899
  %901 = vmatmul.bf16.gmra.mxu0 %v348
  %v902 = vpop.f32.mrf.mxu0
  %v903 = vadd.f32 %v865, %v902
  %v904 = vpop.f32.mrf.mxu0
  %v905 = vadd.f32 %v867, %v904
  %906 = vmatmul.bf16.gmra.mxu0 %v356
  %v907 = vpop.f32.mrf.mxu0
  %v908 = vadd.f32 %v870, %v907
  %v909 = vpop.f32.mrf.mxu0
  %v910 = vadd.f32 %v872, %v909
  %911 = vmatmul.bf16.gmra.mxu0 %v364
  %v912 = vpop.f32.mrf.mxu0
  %v913 = vadd.f32 %v875, %v912
  %v914 = vpop.f32.mrf.mxu0
  %915 = vdwg.mxu0
  %916 = vmatpush.bf16.msra.mxu0 %v705
  %917 = vmatpush.bf16.msra.mxu0 %v704
  %918 = vmatpush.bf16.msra.mxu0 %v703
  %919 = vmatpush.bf16.msra.mxu0 %v702
  %920 = vmatpush.bf16.msra.mxu0 %v701
  %921 = vmatpush.bf16.msra.mxu0 %v700
  %922 = vmatpush.bf16.msra.mxu0 %v699
  %923 = vmatpush.bf16.msra.mxu0 %v698
  %924 = vmatmul.bf16.gmra.mxu0 %v325
  %v925 = vpop.f32.mrf.mxu0
  %v926 = vadd.f32 %v888, %v925
  %v927 = vpop.f32.mrf.mxu0
  %v928 = vadd.f32 %v890, %v927
  %929 = vmatmul.bf16.gmra.mxu0 %v333
  %v930 = vpop.f32.mrf.mxu0
  %v931 = vadd.f32 %v893, %v930
  %v932 = vpop.f32.mrf.mxu0
  %v933 = vadd.f32 %v895, %v932
  %934 = vmatmul.bf16.gmra.mxu0 %v341
  %v935 = vpop.f32.mrf.mxu0
  %v936 = vadd.f32 %v898, %v935
  %v937 = vpop.f32.mrf.mxu0
  %v938 = vadd.f32 %v900, %v937
  %939 = vmatmul.bf16.gmra.mxu0 %v349
  %v940 = vpop.f32.mrf.mxu0
  %v941 = vadd.f32 %v903, %v940
  %v942 = vpop.f32.mrf.mxu0
  %v943 = vadd.f32 %v905, %v942
  %944 = vmatmul.bf16.gmra.mxu0 %v357
  %v945 = vpop.f32.mrf.mxu0
  %v946 = vadd.f32 %v908, %v945
  %v947 = vpop.f32.mrf.mxu0
  %v948 = vadd.f32 %v910, %v947
  %949 = vmatmul.bf16.gmra.mxu0 %v365
  %v950 = vpop.f32.mrf.mxu0
  %v951 = vadd.f32 %v913, %v950
  %v952 = vpop.f32.mrf.mxu0
  %953 = vdwg.mxu0
  %954 = vmatpush.bf16.msra.mxu0 %v713
  %955 = vmatpush.bf16.msra.mxu0 %v712
  %956 = vmatpush.bf16.msra.mxu0 %v711
  %957 = vmatpush.bf16.msra.mxu0 %v710
  %958 = vmatpush.bf16.msra.mxu0 %v709
  %959 = vmatpush.bf16.msra.mxu0 %v708
  %960 = vmatpush.bf16.msra.mxu0 %v707
  %961 = vmatpush.bf16.msra.mxu0 %v706
  %962 = vmatmul.bf16.gmra.mxu0 %v326
  %v963 = vpop.f32.mrf.mxu0
  %v964 = vadd.f32 %v926, %v963
  %v965 = vpop.f32.mrf.mxu0
  %v966 = vadd.f32 %v928, %v965
  %967 = vmatmul.bf16.gmra.mxu0 %v334
  %v968 = vpop.f32.mrf.mxu0
  %v969 = vadd.f32 %v931, %v968
  %v970 = vpop.f32.mrf.mxu0
  %v971 = vadd.f32 %v933, %v970
  %972 = vmatmul.bf16.gmra.mxu0 %v342
  %v973 = vpop.f32.mrf.mxu0
  %v974 = vadd.f32 %v936, %v973
  %v975 = vpop.f32.mrf.mxu0
  %v976 = vadd.f32 %v938, %v975
  %977 = vmatmul.bf16.gmra.mxu0 %v350
  %v978 = vpop.f32.mrf.mxu0
  %v979 = vadd.f32 %v941, %v978
  %v980 = vpop.f32.mrf.mxu0
  %v981 = vadd.f32 %v943, %v980
  %982 = vmatmul.bf16.gmra.mxu0 %v358
  %v983 = vpop.f32.mrf.mxu0
  %v984 = vadd.f32 %v946, %v983
  %v985 = vpop.f32.mrf.mxu0
  %v986 = vadd.f32 %v948, %v985
  %987 = vmatmul.bf16.gmra.mxu0 %v366
  %v988 = vpop.f32.mrf.mxu0
  %v989 = vadd.f32 %v951, %v988
  %v990 = vpop.f32.mrf.mxu0
  %991 = vdwg.mxu0
  %992 = vmatpush.bf16.msra.mxu0 %v721
  %993 = vmatpush.bf16.msra.mxu0 %v720
  %994 = vmatpush.bf16.msra.mxu0 %v719
  %995 = vmatpush.bf16.msra.mxu0 %v718
  %996 = vmatpush.bf16.msra.mxu0 %v717
  %997 = vmatpush.bf16.msra.mxu0 %v716
  %998 = vmatpush.bf16.msra.mxu0 %v715
  %999 = vmatpush.bf16.msra.mxu0 %v714
  %1000 = vmatmul.bf16.gmra.mxu0 %v327
  %v1001 = vpop.f32.mrf.mxu0
  %v1002 = vadd.f32 %v964, %v1001
  %v1003 = vpop.f32.mrf.mxu0
  %v1004 = vadd.f32 %v966, %v1003
  %1005 = vmatmul.bf16.gmra.mxu0 %v335
  %v1006 = vpop.f32.mrf.mxu0
  %v1007 = vadd.f32 %v969, %v1006
  %v1008 = vpop.f32.mrf.mxu0
  %v1009 = vadd.f32 %v971, %v1008
  %1010 = vmatmul.bf16.gmra.mxu0 %v343
  %v1011 = vpop.f32.mrf.mxu0
  %v1012 = vadd.f32 %v974, %v1011
  %v1013 = vpop.f32.mrf.mxu0
  %v1014 = vadd.f32 %v976, %v1013
  %1015 = vmatmul.bf16.gmra.mxu0 %v351
  %v1016 = vpop.f32.mrf.mxu0
  %v1017 = vadd.f32 %v979, %v1016
  %v1018 = vpop.f32.mrf.mxu0
  %v1019 = vadd.f32 %v981, %v1018
  %1020 = vmatmul.bf16.gmra.mxu0 %v359
  %v1021 = vpop.f32.mrf.mxu0
  %v1022 = vadd.f32 %v984, %v1021
  %v1023 = vpop.f32.mrf.mxu0
  %v1024 = vadd.f32 %v986, %v1023
  %1025 = vmatmul.bf16.gmra.mxu0 %v367
  %v1026 = vpop.f32.mrf.mxu0
  %v1027 = vadd.f32 %v989, %v1026
  %v1028 = vpop.f32.mrf.mxu0
  %1029 = vdwg.mxu0
  %1030 = vmatpush.bf16.msra.mxu0 %v729
  %1031 = vmatpush.bf16.msra.mxu0 %v728
  %1032 = vmatpush.bf16.msra.mxu0 %v727
  %1033 = vmatpush.bf16.msra.mxu0 %v726
  %1034 = vmatpush.bf16.msra.mxu0 %v725
  %1035 = vmatpush.bf16.msra.mxu0 %v724
  %1036 = vmatpush.bf16.msra.mxu0 %v723
  %1037 = vmatpush.bf16.msra.mxu0 %v722
  %1038 = vmatmul.bf16.gmra.mxu0 %v328
  %v1039 = vpop.f32.mrf.mxu0
  %v1040 = vadd.f32 %v1002, %v1039
  %v1041 = vpop.f32.mrf.mxu0
  %v1042 = vadd.f32 %v1004, %v1041
  %1043 = vmatmul.bf16.gmra.mxu0 %v336
  %v1044 = vpop.f32.mrf.mxu0
  %v1045 = vadd.f32 %v1007, %v1044
  %v1046 = vpop.f32.mrf.mxu0
  %v1047 = vadd.f32 %v1009, %v1046
  %1048 = vmatmul.bf16.gmra.mxu0 %v344
  %v1049 = vpop.f32.mrf.mxu0
  %v1050 = vadd.f32 %v1012, %v1049
  %v1051 = vpop.f32.mrf.mxu0
  %v1052 = vadd.f32 %v1014, %v1051
  %1053 = vmatmul.bf16.gmra.mxu0 %v352
  %v1054 = vpop.f32.mrf.mxu0
  %v1055 = vadd.f32 %v1017, %v1054
  %v1056 = vpop.f32.mrf.mxu0
  %v1057 = vadd.f32 %v1019, %v1056
  %1058 = vmatmul.bf16.gmra.mxu0 %v360
  %v1059 = vpop.f32.mrf.mxu0
  %v1060 = vadd.f32 %v1022, %v1059
  %v1061 = vpop.f32.mrf.mxu0
  %v1062 = vadd.f32 %v1024, %v1061
  %1063 = vmatmul.bf16.gmra.mxu0 %v368
  %v1064 = vpop.f32.mrf.mxu0
  %v1065 = vadd.f32 %v1027, %v1064
  %v1066 = vpop.f32.mrf.mxu0
  %1067 = vdwg.mxu0
  %1068 = vmatpush.bf16.msra.mxu0 %v737
  %1069 = vmatpush.bf16.msra.mxu0 %v736
  %1070 = vmatpush.bf16.msra.mxu0 %v735
  %1071 = vmatpush.bf16.msra.mxu0 %v734
  %1072 = vmatpush.bf16.msra.mxu0 %v733
  %1073 = vmatpush.bf16.msra.mxu0 %v732
  %1074 = vmatpush.bf16.msra.mxu0 %v731
  %1075 = vmatpush.bf16.msra.mxu0 %v730
  %1076 = vmatmul.bf16.gmra.mxu0 %v329
  %v1077 = vpop.f32.mrf.mxu0
  %v1078 = vadd.f32 %v1040, %v1077
  %v1079 = vpop.f32.mrf.mxu0
  %v1080 = vadd.f32 %v1042, %v1079
  %1081 = vmatmul.bf16.gmra.mxu0 %v337
  %v1082 = vpop.f32.mrf.mxu0
  %v1083 = vadd.f32 %v1045, %v1082
  %v1084 = vpop.f32.mrf.mxu0
  %v1085 = vadd.f32 %v1047, %v1084
  %1086 = vmatmul.bf16.gmra.mxu0 %v345
  %v1087 = vpop.f32.mrf.mxu0
  %v1088 = vadd.f32 %v1050, %v1087
  %v1089 = vpop.f32.mrf.mxu0
  %v1090 = vadd.f32 %v1052, %v1089
  %1091 = vmatmul.bf16.gmra.mxu0 %v353
  %v1092 = vpop.f32.mrf.mxu0
  %v1093 = vadd.f32 %v1055, %v1092
  %v1094 = vpop.f32.mrf.mxu0
  %v1095 = vadd.f32 %v1057, %v1094
  %1096 = vmatmul.bf16.gmra.mxu0 %v361
  %v1097 = vpop.f32.mrf.mxu0
  %v1098 = vadd.f32 %v1060, %v1097
  %v1099 = vpop.f32.mrf.mxu0
  %v1100 = vadd.f32 %v1062, %v1099
  %1101 = vmatmul.bf16.gmra.mxu0 %v369
  %v1102 = vpop.f32.mrf.mxu0
  %v1103 = vadd.f32 %v1065, %v1102
  %v1104 = vpop.f32.mrf.mxu0
  %1105 = vdwg.mxu0
  %v1106 = vmax.f32 %v1078, 0.0
  %v1107 = vmax.f32 %v1080, 0.0
  %v1108 = vmax.f32 %v1083, 0.0
  %v1109 = vmax.f32 %v1085, 0.0
  %v1110 = vmax.f32 %v1088, 0.0
  %v1111 = vmax.f32 %v1090, 0.0
  %v1112 = vmax.f32 %v1093, 0.0
  %v1113 = vmax.f32 %v1095, 0.0
  %v1114 = vmax.f32 %v1098, 0.0
  %v1115 = vmax.f32 %v1100, 0.0
  %v1116 = vmax.f32 %v1103, 0.0
  %1117 = vst [vmem:[%s3] sm:$0xff] %v1106
  %1118 = vst [vmem:[%s3 + $0x8] sm:$0xff] %v1107
  %1119 = vst [vmem:[%s3 + $0x10] sm:$0xff] %v1108
  %1120 = vst [vmem:[%s3 + $0x18] sm:$0xff] %v1109
  %1121 = vst [vmem:[%s3 + $0x20] sm:$0xff] %v1110
  %1122 = vst [vmem:[%s3 + $0x28] sm:$0xff] %v1111
  %1123 = vst [vmem:[%s3 + $0x30] sm:$0xff] %v1112
  %1124 = vst [vmem:[%s3 + $0x38] sm:$0xff] %v1113
  %1125 = vst [vmem:[%s3 + $0x40] sm:$0xff] %v1114
  %1126 = vst [vmem:[%s3 + $0x48] sm:$0xff] %v1115
  %1127 = vst [vmem:[%s3 + $0x50] sm:$0xf] %v1116
  // Predicated region
  $region14: #{autoencoder_forward.10} parent=0 // pred_check
    _
  $region15: #{autoencoder_forward.10} parent=0 // pred_check_branch
    %1129 = sbr.rel (0) target = $region17
  $region16: #{autoencoder_forward.10} parent=0 // pred_region
    _
  $region17: #{autoencoder_forward.10} parent=0 // pred_fallthru
    _
  // Predicated region
  $region18: #{autoencoder_forward.10} parent=0 // pred_check
    _
  $region19: #{autoencoder_forward.10} parent=0 // pred_check_branch
    %1131 = sbr.rel (0) target = $region21
  $region20: #{autoencoder_forward.10} parent=0 // pred_region
    _
  $region21: #{autoencoder_forward.10} parent=0 // pred_fallthru
    _

// kernel: tile.28
$region0: #{tile.28}
  #allocation0 [shape = 's32[1]{0}', space=sflag, size = 0x4, scoped, tag = 'scoped memory for tile.28']
  %s0 = inlined_call_operand.vmem [shape: f32[3], index: 0, kind: input, shape index: {}]
  %s1 = inlined_call_operand.vmem [shape: f32[16,3], index: 1, kind: output, shape index: {}]
  // Predicated region
  $region2: #{tile.28} parent=0 // pred_check
    _
  $region3: #{tile.28} parent=0 // pred_check_branch
    %3 = sbr.rel (0) target = $region5
  $region4: #{tile.28} parent=0 // pred_region
    _
  $region5: #{tile.28} parent=0 // pred_fallthru
    _
  %v4 = vld [vmem:[%s0] ss:$0 sm:$0xff]
  %5 = vst [vmem:[%s1] sm:$0xff] %v4
  %s6 = scalar_lea.vmem %s1, 8
  %7 = vst [vmem:[%s6] sm:$0xff] %v4

// kernel: tile.29
$region0: #{tile.29}
  %s0 = inlined_call_operand.vmem [shape: f32[16,3], index: 0, kind: input, shape index: {}]
  %s1 = inlined_call_operand.vmem [shape: f32[1,48], index: 1, kind: output, shape index: {}]
  $region1: #{tile.29} parent=0
    #allocation0 [shape = 'u8[4096]{0}', space=vmem, size = 0x1000, scoped, tag = 'scoped mem for output reshape']
    %v2 = vld [vmem:[%s0] sm:$0x1]
    %vm3 = vcmask 23552
    %4 = vst.msk [vmem:[#allocation0] sm:$0x1] %vm3, %v2
    %s5 = scalar_lea.vmem %s0, 15
    %v6 = vld [vmem:[%s5] sm:$0x1]
    %7 = vrot.lane.b32.xlu0 %v6, 45
    %v8 = vpop.permute.xlu0 %7
    %vm9 = vcmask 392552
    %10 = vst.msk [vmem:[#allocation0] sm:$0x1] %vm9, %v8
    %s11 = scalar_lea.vmem %s0, 14
    %v12 = vld [vmem:[%s11] sm:$0x1]
    %13 = vrot.lane.b32.xlu0 %v12, 42
    %v14 = vpop.permute.xlu0 %13
    %vm15 = vcmask 367952
    %16 = vst.msk [vmem:[#allocation0] sm:$0x1] %vm15, %v14
    %s17 = scalar_lea.vmem %s0, 13
    %v18 = vld [vmem:[%s17] sm:$0x1]
    %19 = vrot.lane.b32.xlu0 %v18, 39
    %v20 = vpop.permute.xlu0 %19
    %vm21 = vcmask 343352
    %22 = vst.msk [vmem:[#allocation0] sm:$0x1] %vm21, %v20
    %s23 = scalar_lea.vmem %s0, 12
    %v24 = vld [vmem:[%s23] sm:$0x1]
    %25 = vrot.lane.b32.xlu0 %v24, 36
    %v26 = vpop.permute.xlu0 %25
    %vm27 = vcmask 318752
    %28 = vst.msk [vmem:[#allocation0] sm:$0x1] %vm27, %v26
    %s29 = scalar_lea.vmem %s0, 11
    %v30 = vld [vmem:[%s29] sm:$0x1]
    %31 = vrot.lane.b32.xlu0 %v30, 33
    %v32 = vpop.permute.xlu0 %31
    %vm33 = vcmask 294152
    %34 = vst.msk [vmem:[#allocation0] sm:$0x1] %vm33, %v32
    %s35 = scalar_lea.vmem %s0, 10
    %v36 = vld [vmem:[%s35] sm:$0x1]
    %37 = vrot.lane.b32.xlu0 %v36, 30
    %v38 = vpop.permute.xlu0 %37
    %vm39 = vcmask 269552
    %40 = vst.msk [vmem:[#allocation0] sm:$0x1] %vm39, %v38
    %s41 = scalar_lea.vmem %s0, 9
    %v42 = vld [vmem:[%s41] sm:$0x1]
    %43 = vrot.lane.b32.xlu0 %v42, 27
    %v44 = vpop.permute.xlu0 %43
    %vm45 = vcmask 244952
    %46 = vst.msk [vmem:[#allocation0] sm:$0x1] %vm45, %v44
    %s47 = scalar_lea.vmem %s0, 8
    %v48 = vld [vmem:[%s47] sm:$0x1]
    %49 = vrot.lane.b32.xlu0 %v48, 24
    %v50 = vpop.permute.xlu0 %49
    %vm51 = vcmask 220352
    %52 = vst.msk [vmem:[#allocation0] sm:$0x1] %vm51, %v50
    %s53 = scalar_lea.vmem %s0, 7
    %v54 = vld [vmem:[%s53] sm:$0x1]
    %55 = vrot.lane.b32.xlu0 %v54, 21
    %v56 = vpop.permute.xlu0 %55
    %vm57 = vcmask 195752
    %58 = vst.msk [vmem:[#allocation0] sm:$0x1] %vm57, %v56
    %s59 = scalar_lea.vmem %s0, 6
    %v60 = vld [vmem:[%s59] sm:$0x1]
    %61 = vrot.lane.b32.xlu0 %v60, 18
    %v62 = vpop.permute.xlu0 %61
    %vm63 = vcmask 171152
    %64 = vst.msk [vmem:[#allocation0] sm:$0x1] %vm63, %v62
    %s65 = scalar_lea.vmem %s0, 5
    %v66 = vld [vmem:[%s65] sm:$0x1]
    %67 = vrot.lane.b32.xlu0 %v66, 15
    %v68 = vpop.permute.xlu0 %67
    %vm69 = vcmask 146552
    %70 = vst.msk [vmem:[#allocation0] sm:$0x1] %vm69, %v68
    %s71 = scalar_lea.vmem %s0, 4
    %v72 = vld [vmem:[%s71] sm:$0x1]
    %73 = vrot.lane.b32.xlu0 %v72, 12
    %v74 = vpop.permute.xlu0 %73
    %vm75 = vcmask 121952
    %76 = vst.msk [vmem:[#allocation0] sm:$0x1] %vm75, %v74
    %s77 = scalar_lea.vmem %s0, 3
    %v78 = vld [vmem:[%s77] sm:$0x1]
    %79 = vrot.lane.b32.xlu0 %v78, 9
    %v80 = vpop.permute.xlu0 %79
    %vm81 = vcmask 97352
    %82 = vst.msk [vmem:[#allocation0] sm:$0x1] %vm81, %v80
    %s83 = scalar_lea.vmem %s0, 2
    %v84 = vld [vmem:[%s83] sm:$0x1]
    %85 = vrot.lane.b32.xlu0 %v84, 6
    %v86 = vpop.permute.xlu0 %85
    %vm87 = vcmask 72752
    %88 = vst.msk [vmem:[#allocation0] sm:$0x1] %vm87, %v86
    %s89 = scalar_lea.vmem %s0, 1
    %v90 = vld [vmem:[%s89] sm:$0x1]
    %91 = vrot.lane.b32.xlu0 %v90, 3
    %v92 = vpop.permute.xlu0 %91
    %vm93 = vcmask 48152
    %94 = vst.msk [vmem:[#allocation0] sm:$0x1] %vm93, %v92
    %s96 = ssub.s32 2, 1
    %v97 = vld [vmem:[#allocation0] sm:%s96]
    %s99 = ssub.s32 2, 1
    %100 = vst [vmem:[%s1] sm:%s99] %v97

// kernel: autoencoder_forward.11
$region0: #{autoencoder_forward.11}
  #allocation0 [shape = 'u32[]', space=smem, size = 0x4, offset = 0x4, fixed_abs, tag = 'smem constant byte address 0x4 - core index']
  #allocation1 [shape = 'u32[72,128]{1,0:T(1,128)}', space=vmem, size = 0x9000, scoped, tag = 'internal scratch']
  %s0 = inlined_call_operand.vmem [shape: bf16[448,288], index: 0, kind: input, shape index: {}]
  %s1 = inlined_call_operand.vmem [shape: bf16[288,48], index: 1, kind: input, shape index: {}]
  %s2 = inlined_call_operand.vmem [shape: f32[1,48], index: 2, kind: input, shape index: {}]
  %s3 = inlined_call_operand.vmem [shape: f32[448,48], index: 3, kind: output, shape index: {}]
  %s4 = sld [smem:[#allocation0]]
  $region45: #{autoencoder_forward.11} parent=0
    _
  %s6 = ssub.s32 1, %s4
  %s7 = scalar_select 0, %s6, %s4
  loop: start=0, step=1, limit=4
  $region2: #{autoencoder_forward.11} parent=0 // loop_pre_header
    _
  $region3: #{autoencoder_forward.11} parent=0 // loop_header
    %s9 = sphi 0, %s13
    %p10 = scmp.ge.s32.totalorder %s9, 4
    %s16 = sphi 0, %s35
    %s17 = sphi 0, %s31
    %s18 = sphi 0, %s27
    %s19 = sphi 0, %s16
    %s20 = sphi 0, %s17
    %s21 = sphi 0, %s18
    %s22 = sphi 0, %s19
    %s23 = sphi 0, %s20
    %s24 = sphi 0, %s21
    %s40 = sphi 0, %s42
    %s43 = sphi 0, %s40
    %s44 = sphi 0, %s43
    %s60 = sphi 0, %s44
    %s68 = sphi 0, %s70
    %s71 = sphi 0, %s68
    %s72 = sphi 0, %s71
    %s88 = sphi 0, %s72
    %s94 = sphi 0, %s96
    %s97 = sphi 0, %s94
    %s98 = sphi 0, %s97
    %s114 = sphi 0, %s98
    %s122 = sphi 0, %s124
    %s125 = sphi 0, %s122
    %s126 = sphi 0, %s125
    %s142 = sphi 0, %s126
  $region4: #{autoencoder_forward.11} parent=0 // loop_header_branch
    %12 = sbr.rel (%p10) target = $region8
  $region5: #{autoencoder_forward.11} parent=0 // loop_body
    %s14 = ssub.s32 %s9, 1
    %s15 = ssub.s32 %s9, 2
    %s25 = sadd.s32 1, %s18
    %p26 = scmp.ge.s32.totalorder %s25, 1
    %s27 = scalar_select %p26, 0, %s25
    %s28 = sadd.s32 1, %s17
    %s29 = scalar_select %p26, %s28, %s17
    %p30 = scmp.ge.s32.totalorder %s29, 1
    %s31 = scalar_select %p30, 0, %s29
    %s32 = sadd.s32 1, %s16
    %s33 = scalar_select %p30, %s32, %s16
    %p34 = scmp.ge.s32.totalorder %s33, 2
    %s35 = scalar_select %p34, 0, %s33
    %s36 = ssub.s32 %s16, %s35
    %s37 = ssub.s32 %s18, %s27
    %s38 = sor.u32 %s36, %s37
    %p39 = scmp.eq.s32.totalorder %s38, 0
    %s41 = sadd.s32 %s40, 1
    %s42 = scalar_select %p39, %s40, %s41
    %p45 = pneg %p39
    %p46 = scmp.eq.s32.totalorder %s9, 1
    %p47 = por %p45, %p46
    %p48 = scmp.ne.s32.totalorder %s40, %s43
    %p49 = scmp.eq.s32.totalorder %s9, 0
    %p50 = por %p48, %p49
    %p51 = scmp.ne.s32.totalorder %s40, %s43
    %p52 = scmp.eq.s32.totalorder %s14, 1
    %p53 = por %p51, %p52
    %p54 = scmp.ne.s32.totalorder %s43, %s44
    %p55 = scmp.eq.s32.totalorder %s14, 0
    %p56 = por %p54, %p55
    %p57 = scmp.ne.s32.totalorder %s43, %s44
    %p58 = scmp.eq.s32.totalorder %s15, 1
    %p59 = por %p57, %p58
    %p61 = scmp.ne.s32.totalorder %s44, %s60
    %p62 = scmp.eq.s32.totalorder %s15, 0
    %p63 = por %p61, %p62
    %s64 = ssub.s32 %s18, %s27
    %s65 = ssub.s32 %s17, %s31
    %s66 = sor.u32 %s64, %s65
    %p67 = scmp.eq.s32.totalorder %s66, 0
    %s69 = sadd.s32 %s68, 1
    %s70 = scalar_select %p67, %s68, %s69
    %p73 = pneg %p67
    %p74 = scmp.eq.s32.totalorder %s9, 1
    %p75 = por %p73, %p74
    %p76 = scmp.ne.s32.totalorder %s68, %s71
    %p77 = scmp.eq.s32.totalorder %s9, 0
    %p78 = por %p76, %p77
    %p79 = scmp.ne.s32.totalorder %s68, %s71
    %p80 = scmp.eq.s32.totalorder %s14, 1
    %p81 = por %p79, %p80
    %p82 = scmp.ne.s32.totalorder %s71, %s72
    %p83 = scmp.eq.s32.totalorder %s14, 0
    %p84 = por %p82, %p83
    %p85 = scmp.ne.s32.totalorder %s71, %s72
    %p86 = scmp.eq.s32.totalorder %s15, 1
    %p87 = por %p85, %p86
    %p89 = scmp.ne.s32.totalorder %s72, %s88
    %p90 = scmp.eq.s32.totalorder %s15, 0
    %p91 = por %p89, %p90
    %s92 = ssub.s32 %s17, %s31
    %p93 = scmp.eq.s32.totalorder %s92, 0
    %s95 = sadd.s32 %s94, 1
    %s96 = scalar_select %p93, %s94, %s95
    %p99 = pneg %p93
    %p100 = scmp.eq.s32.totalorder %s9, 1
    %p101 = por %p99, %p100
    %p102 = scmp.ne.s32.totalorder %s94, %s97
    %p103 = scmp.eq.s32.totalorder %s9, 0
    %p104 = por %p102, %p103
    %p105 = scmp.ne.s32.totalorder %s94, %s97
    %p106 = scmp.eq.s32.totalorder %s14, 1
    %p107 = por %p105, %p106
    %p108 = scmp.ne.s32.totalorder %s97, %s98
    %p109 = scmp.eq.s32.totalorder %s14, 0
    %p110 = por %p108, %p109
    %p111 = scmp.ne.s32.totalorder %s97, %s98
    %p112 = scmp.eq.s32.totalorder %s15, 1
    %p113 = por %p111, %p112
    %p115 = scmp.ne.s32.totalorder %s98, %s114
    %p116 = scmp.eq.s32.totalorder %s15, 0
    %p117 = por %p115, %p116
    %s118 = ssub.s32 %s16, %s35
    %s119 = ssub.s32 %s17, %s31
    %s120 = sor.u32 %s118, %s119
    %p121 = scmp.eq.s32.totalorder %s120, 0
    %s123 = sadd.s32 %s122, 1
    %s124 = scalar_select %p121, %s122, %s123
    %p127 = pneg %p121
    %p128 = scmp.eq.s32.totalorder %s9, 1
    %p129 = por %p127, %p128
    %p130 = scmp.ne.s32.totalorder %s122, %s125
    %p131 = scmp.eq.s32.totalorder %s9, 0
    %p132 = por %p130, %p131
    %p133 = scmp.ne.s32.totalorder %s122, %s125
    %p134 = scmp.eq.s32.totalorder %s14, 1
    %p135 = por %p133, %p134
    %p136 = scmp.ne.s32.totalorder %s125, %s126
    %p137 = scmp.eq.s32.totalorder %s14, 0
    %p138 = por %p136, %p137
    %p139 = scmp.ne.s32.totalorder %s125, %s126
    %p140 = scmp.eq.s32.totalorder %s15, 1
    %p141 = por %p139, %p140
    %p143 = scmp.ne.s32.totalorder %s126, %s142
    %p144 = scmp.eq.s32.totalorder %s15, 0
    %p145 = por %p143, %p144
    %p146 = scmp.le.s32.totalorder 1, %s9
    %p147 = scmp.lt.s32.totalorder %s9, 3
    %p148 = pnand %p146, %p147
    %p149 = pneg %p148
    // Predicated region
    $region9: #{autoencoder_forward.11} parent=5 // pred_check
      _
    $region10: #{autoencoder_forward.11} parent=5 // pred_check_branch
      %151 = sbr.rel (%p148) target = $region12
    $region11: #{autoencoder_forward.11} parent=5 // pred_region
      %s152 = ssub.s32 %s9, 1
      // Predicated region
      $region13: #{autoencoder_forward.11} parent=11 // pred_check
        %p153 = pneg %p84
      $region14: #{autoencoder_forward.11} parent=11 // pred_check_branch
        %155 = sbr.rel (%p153) target = $region16
      $region15: #{autoencoder_forward.11} parent=11 // pred_region
        %s156 = smul.u32 36, %s21
        %p157 = scmp.lt.s32.totalorder %s156, 35
        %s158 = scalar_select %p157, %s156, 35
        %p159 = scmp.lt.s32.totalorder %s20, 0
        %s160 = scalar_select %p159, %s20, 0
        %s161 = sadd.s32 %s160, %s158
        %s162 = smul.addr %s161, 4
        %s163 = scalar_lea.vmem %s1, %s162
        %s164 = smul.u32 36, %s21
      $region16: #{autoencoder_forward.11} parent=11 // pred_fallthru
        _
      // Predicated region
      $region17: #{autoencoder_forward.11} parent=11 // pred_check
        %p165 = pneg %p110
      $region18: #{autoencoder_forward.11} parent=11 // pred_check_branch
        %167 = sbr.rel (%p165) target = $region20
      $region19: #{autoencoder_forward.11} parent=11 // pred_region
        %p168 = scmp.lt.s32.totalorder %s20, 0
        %s169 = scalar_select %p168, %s20, 0
        %s170 = scalar_lea.vmem %s2, %s169
      $region20: #{autoencoder_forward.11} parent=11 // pred_fallthru
        _
    $region12: #{autoencoder_forward.11} parent=5 // pred_fallthru
      _
    %p171 = scmp.lt.s32.totalorder %s9, 2
    // Predicated region
    $region21: #{autoencoder_forward.11} parent=5 // pred_check
      %p172 = pneg %p171
    $region22: #{autoencoder_forward.11} parent=5 // pred_check_branch
      %174 = sbr.rel (%p172) target = $region24
    $region23: #{autoencoder_forward.11} parent=5 // pred_region
      // Predicated region
      $region25: #{autoencoder_forward.11} parent=23 // pred_check
        %p175 = pneg %p50
      $region26: #{autoencoder_forward.11} parent=23 // pred_check_branch
        %177 = sbr.rel (%p175) target = $region28
      $region27: #{autoencoder_forward.11} parent=23 // pred_region
        %s178 = smul.u32 28, %s16
        %s179 = smul.u32 3, %s18
        %p180 = scmp.lt.s32.totalorder %s178, 55
        %s181 = scalar_select %p180, %s178, 55
        %p182 = scmp.lt.s32.totalorder %s179, 2
        %s183 = scalar_select %p182, %s179, 2
        %s184 = smul.addr %s181, 3
        %s185 = sadd.s32 %s183, %s184
        %s186 = smul.addr %s185, 4
        %s187 = scalar_lea.vmem %s0, %s186
        %s188 = smul.u32 28, %s16
        %s189 = smul.u32 3, %s18
      $region28: #{autoencoder_forward.11} parent=23 // pred_fallthru
        _
    $region24: #{autoencoder_forward.11} parent=5 // pred_fallthru
      _
    %p190 = scmp.le.s32.totalorder 1, %s9
    %p191 = scmp.lt.s32.totalorder %s9, 3
    %p192 = pnand %p190, %p191
    %p193 = pneg %p192
    // Predicated region
    $region29: #{autoencoder_forward.11} parent=5 // pred_check
      _
    $region30: #{autoencoder_forward.11} parent=5 // pred_check_branch
      %195 = sbr.rel (%p192) target = $region32
    $region31: #{autoencoder_forward.11} parent=5 // pred_region
      %s196 = ssub.s32 %s9, 1
      %s197 = smul.u32 28, %s19
      %s198 = smul.u32 3, %s21
      %p199 = scmp.lt.s32.totalorder %s197, 55
      %s200 = scalar_select %p199, %s197, 55
      %p201 = scmp.lt.s32.totalorder %s198, 2
      %s202 = scalar_select %p201, %s198, 2
      %s203 = smul.addr %s200, 3
      %s204 = sadd.s32 %s202, %s203
      %s205 = smul.addr %s204, 4
      %s206 = scalar_lea.vmem %s0, %s205
      %p207 = pneg %p56
      %p208 = pneg %p53
      %s209 = smul.u32 36, %s21
      %p210 = scmp.lt.s32.totalorder %s209, 35
      %s211 = scalar_select %p210, %s209, 35
      %p212 = scmp.lt.s32.totalorder %s20, 0
      %s213 = scalar_select %p212, %s20, 0
      %s214 = sadd.s32 %s213, %s211
      %s215 = smul.addr %s214, 4
      %s216 = scalar_lea.vmem %s1, %s215
      %p217 = pneg %p84
      %p218 = pneg %p81
      %p219 = scmp.lt.s32.totalorder %s20, 0
      %s220 = scalar_select %p219, %s20, 0
      %s221 = scalar_lea.vmem %s2, %s220
      %p222 = pneg %p110
      %p223 = pneg %p107
      %p224 = pneg %p138
      %p225 = pneg %p135
      %s226 = smul.u32 28, %s19
      %p227 = scmp.lt.s32.totalorder %s226, 55
      %s228 = scalar_select %p227, %s226, 55
      %p229 = scmp.lt.s32.totalorder %s20, 0
      %s230 = scalar_select %p229, %s20, 0
      %s231 = sadd.s32 %s230, %s228
      %s232 = smul.addr %s231, 8
      %s233 = scalar_lea.vmem %s3, %s232
      %s234 = smul.u32 28, %s19
      %s235 = smul.u32 3, %s21
      %p236 = scmp.lt.s32.totalorder %s234, 55
      %s237 = scalar_select %p236, %s234, 55
      %p238 = scmp.lt.s32.totalorder %s235, 2
      %s239 = scalar_select %p238, %s235, 2
      %s240 = smul.addr %s237, 3
      %s241 = sadd.s32 %s239, %s240
      %s242 = smul.addr %s241, 4
      %s243 = scalar_lea.vmem %s0, %s242
      %s244 = smul.u32 28, %s19
      %s245 = smul.u32 3, %s21
      %s246 = smul.u32 36, %s21
      %p247 = scmp.lt.s32.totalorder %s246, 35
      %s248 = scalar_select %p247, %s246, 35
      %p249 = scmp.lt.s32.totalorder %s20, 0
      %s250 = scalar_select %p249, %s20, 0
      %s251 = sadd.s32 %s250, %s248
      %s252 = smul.addr %s251, 4
      %s253 = scalar_lea.vmem %s1, %s252
      %s254 = smul.u32 36, %s21
      %p255 = scmp.lt.s32.totalorder %s20, 0
      %s256 = scalar_select %p255, %s20, 0
      %s257 = scalar_lea.vmem %s2, %s256
      %s258 = smul.u32 28, %s19
      %p259 = scmp.lt.s32.totalorder %s258, 55
      %s260 = scalar_select %p259, %s258, 55
      %p261 = scmp.lt.s32.totalorder %s20, 0
      %s262 = scalar_select %p261, %s20, 0
      %s263 = sadd.s32 %s262, %s260
      %s264 = smul.addr %s263, 8
      %s265 = scalar_lea.vmem %s3, %s264
      %s266 = smul.u32 28, %s19
      %v268 = vld [vmem:[%s243] sm:$0xff]
      %v269 = vld [vmem:[%s243 + $0x8] sm:$0xf]
      %v270 = vld [vmem:[%s243 + $0xc] sm:$0xff]
      %v271 = vld [vmem:[%s243 + $0x14] sm:$0xf]
      %v272 = vld [vmem:[%s243 + $0x18] sm:$0xff]
      %v273 = vld [vmem:[%s243 + $0x20] sm:$0xf]
      %v274 = vld [vmem:[%s243 + $0x24] sm:$0xff]
      %v275 = vld [vmem:[%s243 + $0x2c] sm:$0xf]
      %v276 = vld [vmem:[%s243 + $0x30] sm:$0xff]
      %v277 = vld [vmem:[%s243 + $0x38] sm:$0xf]
      %v278 = vld [vmem:[%s243 + $0x3c] sm:$0xff]
      %v279 = vld [vmem:[%s243 + $0x44] sm:$0xf]
      %v280 = vld [vmem:[%s243 + $0x48] sm:$0xff]
      %v281 = vld [vmem:[%s243 + $0x50] sm:$0xf]
      %v282 = vld [vmem:[%s243 + $0x54] sm:$0xff]
      %v283 = vld [vmem:[%s243 + $0x5c] sm:$0xf]
      %v284 = vld [vmem:[%s243 + $0x60] sm:$0xff]
      %v285 = vld [vmem:[%s243 + $0x68] sm:$0xf]
      %v286 = vld [vmem:[%s243 + $0x6c] sm:$0xff]
      %v287 = vld [vmem:[%s243 + $0x74] sm:$0xf]
      %v288 = vld [vmem:[%s243 + $0x78] sm:$0xff]
      %v289 = vld [vmem:[%s243 + $0x80] sm:$0xf]
      %v290 = vld [vmem:[%s243 + $0x84] sm:$0xff]
      %v291 = vld [vmem:[%s243 + $0x8c] sm:$0xf]
      %v292 = vld [vmem:[%s243 + $0x90] sm:$0xff]
      %v293 = vld [vmem:[%s243 + $0x98] sm:$0xf]
      %v294 = vld [vmem:[%s243 + $0x9c] sm:$0xff]
      %v295 = vld [vmem:[%s243 + $0xa4] sm:$0xf]
      %v296 = vld [vmem:[%s243 + $0xa8] sm:$0xff]
      %v297 = vld [vmem:[%s243 + $0xb0] sm:$0xf]
      %v298 = vld [vmem:[%s243 + $0xb4] sm:$0xff]
      %v299 = vld [vmem:[%s243 + $0xbc] sm:$0xf]
      %v300 = vld [vmem:[%s243 + $0xc0] sm:$0xff]
      %v301 = vld [vmem:[%s243 + $0xc8] sm:$0xf]
      %v302 = vld [vmem:[%s243 + $0xcc] sm:$0xff]
      %v303 = vld [vmem:[%s243 + $0xd4] sm:$0xf]
      %v304 = vld [vmem:[%s243 + $0xd8] sm:$0xff]
      %v305 = vld [vmem:[%s243 + $0xe0] sm:$0xf]
      %v306 = vld [vmem:[%s243 + $0xe4] sm:$0xff]
      %v307 = vld [vmem:[%s243 + $0xec] sm:$0xf]
      %v308 = vld [vmem:[%s243 + $0xf0] sm:$0xff]
      %v309 = vld [vmem:[%s243 + $0xf8] sm:$0xf]
      %v310 = vld [vmem:[%s243 + $0xfc] sm:$0xff]
      %v311 = vld [vmem:[%s243 + $0x104] sm:$0xf]
      %v312 = vld [vmem:[%s243 + $0x108] sm:$0xff]
      %v313 = vld [vmem:[%s243 + $0x110] sm:$0xf]
      %v314 = vld [vmem:[%s243 + $0x114] sm:$0xff]
      %v315 = vld [vmem:[%s243 + $0x11c] sm:$0xf]
      %v316 = vld [vmem:[%s243 + $0x120] sm:$0xff]
      %v317 = vld [vmem:[%s243 + $0x128] sm:$0xf]
      %v318 = vld [vmem:[%s243 + $0x12c] sm:$0xff]
      %v319 = vld [vmem:[%s243 + $0x134] sm:$0xf]
      %v320 = vld [vmem:[%s243 + $0x138] sm:$0xff]
      %v321 = vld [vmem:[%s243 + $0x140] sm:$0xf]
      %v322 = vld [vmem:[%s243 + $0x144] sm:$0xff]
      %v323 = vld [vmem:[%s243 + $0x14c] sm:$0xf]
      %v324 = vld [vmem:[%s253] sm:$0xf]
      %v325 = vld [vmem:[%s253 + $0x4] sm:$0xf]
      %v326 = vld [vmem:[%s253 + $0x8] sm:$0xf]
      %v327 = vld [vmem:[%s253 + $0xc] sm:$0xf]
      %v328 = vld [vmem:[%s253 + $0x10] sm:$0xf]
      %v329 = vld [vmem:[%s253 + $0x14] sm:$0xf]
      %v330 = vld [vmem:[%s253 + $0x18] sm:$0xf]
      %v331 = vld [vmem:[%s253 + $0x1c] sm:$0xf]
      %v332 = vld [vmem:[%s253 + $0x20] sm:$0xf]
      %v333 = vld [vmem:[%s253 + $0x24] sm:$0xf]
      %v334 = vld [vmem:[%s253 + $0x28] sm:$0xf]
      %v335 = vld [vmem:[%s253 + $0x2c] sm:$0xf]
      %v336 = vld [vmem:[%s253 + $0x30] sm:$0xf]
      %v337 = vld [vmem:[%s253 + $0x34] sm:$0xf]
      %v338 = vld [vmem:[%s253 + $0x38] sm:$0xf]
      %v339 = vld [vmem:[%s253 + $0x3c] sm:$0xf]
      %v340 = vld [vmem:[%s253 + $0x40] sm:$0xf]
      %v341 = vld [vmem:[%s253 + $0x44] sm:$0xf]
      %v342 = vld [vmem:[%s253 + $0x48] sm:$0xf]
      %v343 = vld [vmem:[%s253 + $0x4c] sm:$0xf]
      %v344 = vld [vmem:[%s253 + $0x50] sm:$0xf]
      %v345 = vld [vmem:[%s253 + $0x54] sm:$0xf]
      %v346 = vld [vmem:[%s253 + $0x58] sm:$0xf]
      %v347 = vld [vmem:[%s253 + $0x5c] sm:$0xf]
      %v348 = vld [vmem:[%s253 + $0x60] sm:$0xf]
      %v349 = vld [vmem:[%s253 + $0x64] sm:$0xf]
      %v350 = vld [vmem:[%s253 + $0x68] sm:$0xf]
      %v351 = vld [vmem:[%s253 + $0x6c] sm:$0xf]
      %v352 = vld [vmem:[%s253 + $0x70] sm:$0xf]
      %v353 = vld [vmem:[%s253 + $0x74] sm:$0xf]
      %v354 = vld [vmem:[%s253 + $0x78] sm:$0xf]
      %v355 = vld [vmem:[%s253 + $0x7c] sm:$0xf]
      %v356 = vld [vmem:[%s253 + $0x80] sm:$0xf]
      %v357 = vld [vmem:[%s253 + $0x84] sm:$0xf]
      %v358 = vld [vmem:[%s253 + $0x88] sm:$0xf]
      %v359 = vld [vmem:[%s253 + $0x8c] sm:$0xf]
      %v360 = vld [vmem:[%s257] sm:$0x1]
      %v362 = vperm.slane %v360, 0
      %v420 = vunpack.c.l.b16 %v268
      %v421 = vunpack.c.h.b16 %v268
      %v422 = vunpack.c.l.b16 %v269
      %v423 = vunpack.c.l.b16 %v270
      %v424 = vunpack.c.h.b16 %v270
      %v425 = vunpack.c.l.b16 %v271
      %v426 = vunpack.c.l.b16 %v272
      %v427 = vunpack.c.h.b16 %v272
      %v428 = vunpack.c.l.b16 %v273
      %v429 = vunpack.c.l.b16 %v274
      %v430 = vunpack.c.h.b16 %v274
      %v431 = vunpack.c.l.b16 %v275
      %v432 = vunpack.c.l.b16 %v276
      %v433 = vunpack.c.h.b16 %v276
      %v434 = vunpack.c.l.b16 %v277
      %v435 = vunpack.c.l.b16 %v278
      %v436 = vunpack.c.h.b16 %v278
      %v437 = vunpack.c.l.b16 %v279
      %v438 = vunpack.c.l.b16 %v280
      %v439 = vunpack.c.h.b16 %v280
      %v440 = vunpack.c.l.b16 %v281
      %v441 = vunpack.c.l.b16 %v282
      %v442 = vunpack.c.h.b16 %v282
      %v443 = vunpack.c.l.b16 %v283
      %v444 = vunpack.c.l.b16 %v284
      %v445 = vunpack.c.h.b16 %v284
      %v446 = vunpack.c.l.b16 %v285
      %v447 = vunpack.c.l.b16 %v286
      %v448 = vunpack.c.h.b16 %v286
      %v449 = vunpack.c.l.b16 %v287
      %v450 = vunpack.c.l.b16 %v288
      %v451 = vunpack.c.h.b16 %v288
      %v452 = vunpack.c.l.b16 %v289
      %v453 = vunpack.c.l.b16 %v290
      %v454 = vunpack.c.h.b16 %v290
      %v455 = vunpack.c.l.b16 %v291
      %v456 = vunpack.c.l.b16 %v292
      %v457 = vunpack.c.h.b16 %v292
      %v458 = vunpack.c.l.b16 %v293
      %v459 = vunpack.c.l.b16 %v294
      %v460 = vunpack.c.h.b16 %v294
      %v461 = vunpack.c.l.b16 %v295
      %v462 = vunpack.c.l.b16 %v296
      %v463 = vunpack.c.h.b16 %v296
      %v464 = vunpack.c.l.b16 %v297
      %v465 = vunpack.c.l.b16 %v298
      %v466 = vunpack.c.h.b16 %v298
      %v467 = vunpack.c.l.b16 %v299
      %v468 = vunpack.c.l.b16 %v300
      %v469 = vunpack.c.h.b16 %v300
      %v470 = vunpack.c.l.b16 %v301
      %v471 = vunpack.c.l.b16 %v302
      %v472 = vunpack.c.h.b16 %v302
      %v473 = vunpack.c.l.b16 %v303
      %v474 = vunpack.c.l.b16 %v304
      %v475 = vunpack.c.h.b16 %v304
      %v476 = vunpack.c.l.b16 %v305
      %v477 = vunpack.c.l.b16 %v306
      %v478 = vunpack.c.h.b16 %v306
      %v479 = vunpack.c.l.b16 %v307
      %v480 = vunpack.c.l.b16 %v308
      %v481 = vunpack.c.h.b16 %v308
      %v482 = vunpack.c.l.b16 %v309
      %v483 = vunpack.c.l.b16 %v310
      %v484 = vunpack.c.h.b16 %v310
      %v485 = vunpack.c.l.b16 %v311
      %v486 = vunpack.c.l.b16 %v312
      %v487 = vunpack.c.h.b16 %v312
      %v488 = vunpack.c.l.b16 %v313
      %v489 = vunpack.c.l.b16 %v314
      %v490 = vunpack.c.h.b16 %v314
      %v491 = vunpack.c.l.b16 %v315
      %v492 = vunpack.c.l.b16 %v316
      %v493 = vunpack.c.h.b16 %v316
      %v494 = vunpack.c.l.b16 %v317
      %v495 = vunpack.c.l.b16 %v318
      %v496 = vunpack.c.h.b16 %v318
      %v497 = vunpack.c.l.b16 %v319
      %v498 = vunpack.c.l.b16 %v320
      %v499 = vunpack.c.h.b16 %v320
      %v500 = vunpack.c.l.b16 %v321
      %v501 = vunpack.c.l.b16 %v322
      %v502 = vunpack.c.h.b16 %v322
      %v503 = vunpack.c.l.b16 %v323
      %v504 = vpack.c.b16 %v423, %v420
      %v505 = vpack.c.b16 %v424, %v421
      %v506 = vpack.c.b16 %v425, %v422
      %v507 = vpack.c.b16 %v429, %v426
      %v508 = vpack.c.b16 %v430, %v427
      %v509 = vpack.c.b16 %v431, %v428
      %v510 = vpack.c.b16 %v435, %v432
      %v511 = vpack.c.b16 %v436, %v433
      %v512 = vpack.c.b16 %v437, %v434
      %v513 = vpack.c.b16 %v441, %v438
      %v514 = vpack.c.b16 %v442, %v439
      %v515 = vpack.c.b16 %v443, %v440
      %v516 = vpack.c.b16 %v447, %v444
      %v517 = vpack.c.b16 %v448, %v445
      %v518 = vpack.c.b16 %v449, %v446
      %v519 = vpack.c.b16 %v453, %v450
      %v520 = vpack.c.b16 %v454, %v451
      %v521 = vpack.c.b16 %v455, %v452
      %v522 = vpack.c.b16 %v459, %v456
      %v523 = vpack.c.b16 %v460, %v457
      %v524 = vpack.c.b16 %v461, %v458
      %v525 = vpack.c.b16 %v465, %v462
      %v526 = vpack.c.b16 %v466, %v463
      %v527 = vpack.c.b16 %v467, %v464
      %v528 = vpack.c.b16 %v471, %v468
      %v529 = vpack.c.b16 %v472, %v469
      %v530 = vpack.c.b16 %v473, %v470
      %v531 = vpack.c.b16 %v477, %v474
      %v532 = vpack.c.b16 %v478, %v475
      %v533 = vpack.c.b16 %v479, %v476
      %v534 = vpack.c.b16 %v483, %v480
      %v535 = vpack.c.b16 %v484, %v481
      %v536 = vpack.c.b16 %v485, %v482
      %v537 = vpack.c.b16 %v489, %v486
      %v538 = vpack.c.b16 %v490, %v487
      %v539 = vpack.c.b16 %v491, %v488
      %v540 = vpack.c.b16 %v495, %v492
      %v541 = vpack.c.b16 %v496, %v493
      %v542 = vpack.c.b16 %v497, %v494
      %v543 = vpack.c.b16 %v501, %v498
      %v544 = vpack.c.b16 %v502, %v499
      %v545 = vpack.c.b16 %v503, %v500
      %v610 = vunpack.c.l.b16 %v324
      %v611 = vunpack.c.l.b16 %v325
      %v612 = vunpack.c.l.b16 %v326
      %v613 = vunpack.c.l.b16 %v327
      %v614 = vunpack.c.l.b16 %v328
      %v615 = vunpack.c.l.b16 %v329
      %v616 = vunpack.c.l.b16 %v330
      %v617 = vunpack.c.l.b16 %v331
      %v618 = vunpack.c.l.b16 %v332
      %v619 = vunpack.c.l.b16 %v333
      %v620 = vunpack.c.l.b16 %v334
      %v621 = vunpack.c.l.b16 %v335
      %v622 = vunpack.c.l.b16 %v336
      %v623 = vunpack.c.l.b16 %v337
      %v624 = vunpack.c.l.b16 %v338
      %v625 = vunpack.c.l.b16 %v339
      %v626 = vunpack.c.l.b16 %v340
      %v627 = vunpack.c.l.b16 %v341
      %v628 = vunpack.c.l.b16 %v342
      %v629 = vunpack.c.l.b16 %v343
      %v630 = vunpack.c.l.b16 %v344
      %v631 = vunpack.c.l.b16 %v345
      %v632 = vunpack.c.l.b16 %v346
      %v633 = vunpack.c.l.b16 %v347
      %v634 = vunpack.c.l.b16 %v348
      %v635 = vunpack.c.l.b16 %v349
      %v636 = vunpack.c.l.b16 %v350
      %v637 = vunpack.c.l.b16 %v351
      %v638 = vunpack.c.l.b16 %v352
      %v639 = vunpack.c.l.b16 %v353
      %v640 = vunpack.c.l.b16 %v354
      %v641 = vunpack.c.l.b16 %v355
      %v642 = vunpack.c.l.b16 %v356
      %v643 = vunpack.c.l.b16 %v357
      %v644 = vunpack.c.l.b16 %v358
      %v645 = vunpack.c.l.b16 %v359
      %v646 = vpack.c.b16 %v611, %v610
      %v647 = vpack.c.b16 %v613, %v612
      %v648 = vpack.c.b16 %v615, %v614
      %v649 = vpack.c.b16 %v617, %v616
      %v650 = vpack.c.b16 %v619, %v618
      %v651 = vpack.c.b16 %v621, %v620
      %v652 = vpack.c.b16 %v623, %v622
      %v653 = vpack.c.b16 %v625, %v624
      %v654 = vpack.c.b16 %v627, %v626
      %v655 = vpack.c.b16 %v629, %v628
      %v656 = vpack.c.b16 %v631, %v630
      %v657 = vpack.c.b16 %v633, %v632
      %v658 = vpack.c.b16 %v635, %v634
      %v659 = vpack.c.b16 %v637, %v636
      %v660 = vpack.c.b16 %v639, %v638
      %v661 = vpack.c.b16 %v641, %v640
      %v662 = vpack.c.b16 %v643, %v642
      %v663 = vpack.c.b16 %v645, %v644
      %vm682 = vcmask 261120
      %v684 = vsel %vm682, %v506, 0
      %v687 = vsel %vm682, %v509, 0
      %v690 = vsel %vm682, %v512, 0
      %v693 = vsel %vm682, %v515, 0
      %v696 = vsel %vm682, %v518, 0
      %v699 = vsel %vm682, %v521, 0
      %v702 = vsel %vm682, %v524, 0
      %v705 = vsel %vm682, %v527, 0
      %v708 = vsel %vm682, %v530, 0
      %v711 = vsel %vm682, %v533, 0
      %v714 = vsel %vm682, %v536, 0
      %v717 = vsel %vm682, %v539, 0
      %v720 = vsel %vm682, %v542, 0
      %v723 = vsel %vm682, %v545, 0
      %725 = vmatpush.bf16.msra.mxu0 %v653
      %726 = vmatpush.bf16.msra.mxu0 %v652
      %727 = vmatpush.bf16.msra.mxu0 %v651
      %728 = vmatpush.bf16.msra.mxu0 %v650
      %729 = vmatpush.bf16.msra.mxu0 %v649
      %730 = vmatpush.bf16.msra.mxu0 %v648
      %731 = vmatpush.bf16.msra.mxu0 %v647
      %732 = vmatpush.bf16.msra.mxu0 %v646
      %733 = vmatmul.bf16.gmra.mxu0 %v504
      %v734 = vpop.f32.mrf.mxu0
      %v735 = vadd.f32 %v362, %v734
      %v736 = vpop.f32.mrf.mxu0
      %v737 = vadd.f32 %v362, %v736
      %738 = vmatmul.bf16.gmra.mxu0 %v507
      %v739 = vpop.f32.mrf.mxu0
      %v740 = vadd.f32 %v362, %v739
      %v741 = vpop.f32.mrf.mxu0
      %v742 = vadd.f32 %v362, %v741
      %743 = vmatmul.bf16.gmra.mxu0 %v510
      %v744 = vpop.f32.mrf.mxu0
      %v745 = vadd.f32 %v362, %v744
      %v746 = vpop.f32.mrf.mxu0
      %v747 = vadd.f32 %v362, %v746
      %748 = vmatmul.bf16.gmra.mxu0 %v513
      %v749 = vpop.f32.mrf.mxu0
      %v750 = vadd.f32 %v362, %v749
      %v751 = vpop.f32.mrf.mxu0
      %v752 = vadd.f32 %v362, %v751
      %753 = vmatmul.bf16.gmra.mxu0 %v516
      %v754 = vpop.f32.mrf.mxu0
      %v755 = vadd.f32 %v362, %v754
      %v756 = vpop.f32.mrf.mxu0
      %v757 = vadd.f32 %v362, %v756
      %758 = vmatmul.bf16.gmra.mxu0 %v519
      %v759 = vpop.f32.mrf.mxu0
      %v760 = vadd.f32 %v362, %v759
      %v761 = vpop.f32.mrf.mxu0
      %v762 = vadd.f32 %v362, %v761
      %763 = vmatmul.bf16.gmra.mxu0 %v522
      %v764 = vpop.f32.mrf.mxu0
      %v765 = vadd.f32 %v362, %v764
      %v766 = vpop.f32.mrf.mxu0
      %v767 = vadd.f32 %v362, %v766
      %768 = vmatmul.bf16.gmra.mxu0 %v525
      %v769 = vpop.f32.mrf.mxu0
      %v770 = vadd.f32 %v362, %v769
      %v771 = vpop.f32.mrf.mxu0
      %v772 = vadd.f32 %v362, %v771
      %773 = vmatmul.bf16.gmra.mxu0 %v528
      %v774 = vpop.f32.mrf.mxu0
      %v775 = vadd.f32 %v362, %v774
      %v776 = vpop.f32.mrf.mxu0
      %v777 = vadd.f32 %v362, %v776
      %778 = vmatmul.bf16.gmra.mxu0 %v531
      %v779 = vpop.f32.mrf.mxu0
      %v780 = vadd.f32 %v362, %v779
      %v781 = vpop.f32.mrf.mxu0
      %v782 = vadd.f32 %v362, %v781
      %783 = vmatmul.bf16.gmra.mxu0 %v534
      %v784 = vpop.f32.mrf.mxu0
      %v785 = vadd.f32 %v362, %v784
      %v786 = vpop.f32.mrf.mxu0
      %v787 = vadd.f32 %v362, %v786
      %788 = vmatmul.bf16.gmra.mxu0 %v537
      %v789 = vpop.f32.mrf.mxu0
      %v790 = vadd.f32 %v362, %v789
      %v791 = vpop.f32.mrf.mxu0
      %v792 = vadd.f32 %v362, %v791
      %793 = vmatmul.bf16.gmra.mxu0 %v540
      %v794 = vpop.f32.mrf.mxu0
      %v795 = vadd.f32 %v362, %v794
      %v796 = vpop.f32.mrf.mxu0
      %v797 = vadd.f32 %v362, %v796
      %798 = vmatmul.bf16.gmra.mxu0 %v543
      %v799 = vpop.f32.mrf.mxu0
      %v800 = vadd.f32 %v362, %v799
      %v801 = vpop.f32.mrf.mxu0
      %v802 = vadd.f32 %v362, %v801
      %803 = vdwg.mxu0
      %804 = vmatpush.bf16.msra.mxu0 %v661
      %805 = vmatpush.bf16.msra.mxu0 %v660
      %806 = vmatpush.bf16.msra.mxu0 %v659
      %807 = vmatpush.bf16.msra.mxu0 %v658
      %808 = vmatpush.bf16.msra.mxu0 %v657
      %809 = vmatpush.bf16.msra.mxu0 %v656
      %810 = vmatpush.bf16.msra.mxu0 %v655
      %811 = vmatpush.bf16.msra.mxu0 %v654
      %812 = vmatmul.bf16.gmra.mxu0 %v505
      %v813 = vpop.f32.mrf.mxu0
      %v814 = vadd.f32 %v735, %v813
      %v815 = vpop.f32.mrf.mxu0
      %v816 = vadd.f32 %v737, %v815
      %817 = vmatmul.bf16.gmra.mxu0 %v508
      %v818 = vpop.f32.mrf.mxu0
      %v819 = vadd.f32 %v740, %v818
      %v820 = vpop.f32.mrf.mxu0
      %v821 = vadd.f32 %v742, %v820
      %822 = vmatmul.bf16.gmra.mxu0 %v511
      %v823 = vpop.f32.mrf.mxu0
      %v824 = vadd.f32 %v745, %v823
      %v825 = vpop.f32.mrf.mxu0
      %v826 = vadd.f32 %v747, %v825
      %827 = vmatmul.bf16.gmra.mxu0 %v514
      %v828 = vpop.f32.mrf.mxu0
      %v829 = vadd.f32 %v750, %v828
      %v830 = vpop.f32.mrf.mxu0
      %v831 = vadd.f32 %v752, %v830
      %832 = vmatmul.bf16.gmra.mxu0 %v517
      %v833 = vpop.f32.mrf.mxu0
      %v834 = vadd.f32 %v755, %v833
      %v835 = vpop.f32.mrf.mxu0
      %v836 = vadd.f32 %v757, %v835
      %837 = vmatmul.bf16.gmra.mxu0 %v520
      %v838 = vpop.f32.mrf.mxu0
      %v839 = vadd.f32 %v760, %v838
      %v840 = vpop.f32.mrf.mxu0
      %v841 = vadd.f32 %v762, %v840
      %842 = vmatmul.bf16.gmra.mxu0 %v523
      %v843 = vpop.f32.mrf.mxu0
      %v844 = vadd.f32 %v765, %v843
      %v845 = vpop.f32.mrf.mxu0
      %v846 = vadd.f32 %v767, %v845
      %847 = vmatmul.bf16.gmra.mxu0 %v526
      %v848 = vpop.f32.mrf.mxu0
      %v849 = vadd.f32 %v770, %v848
      %v850 = vpop.f32.mrf.mxu0
      %v851 = vadd.f32 %v772, %v850
      %852 = vmatmul.bf16.gmra.mxu0 %v529
      %v853 = vpop.f32.mrf.mxu0
      %v854 = vadd.f32 %v775, %v853
      %v855 = vpop.f32.mrf.mxu0
      %v856 = vadd.f32 %v777, %v855
      %857 = vmatmul.bf16.gmra.mxu0 %v532
      %v858 = vpop.f32.mrf.mxu0
      %v859 = vadd.f32 %v780, %v858
      %v860 = vpop.f32.mrf.mxu0
      %v861 = vadd.f32 %v782, %v860
      %862 = vmatmul.bf16.gmra.mxu0 %v535
      %v863 = vpop.f32.mrf.mxu0
      %v864 = vadd.f32 %v785, %v863
      %v865 = vpop.f32.mrf.mxu0
      %v866 = vadd.f32 %v787, %v865
      %867 = vmatmul.bf16.gmra.mxu0 %v538
      %v868 = vpop.f32.mrf.mxu0
      %v869 = vadd.f32 %v790, %v868
      %v870 = vpop.f32.mrf.mxu0
      %v871 = vadd.f32 %v792, %v870
      %872 = vmatmul.bf16.gmra.mxu0 %v541
      %v873 = vpop.f32.mrf.mxu0
      %v874 = vadd.f32 %v795, %v873
      %v875 = vpop.f32.mrf.mxu0
      %v876 = vadd.f32 %v797, %v875
      %877 = vmatmul.bf16.gmra.mxu0 %v544
      %v878 = vpop.f32.mrf.mxu0
      %v879 = vadd.f32 %v800, %v878
      %v880 = vpop.f32.mrf.mxu0
      %v881 = vadd.f32 %v802, %v880
      %882 = vdwg.mxu0
      %883 = vmatpush.bf16.msra.mxu0 0
      %884 = vmatpush.bf16.msra.mxu0 0
      %885 = vmatpush.bf16.msra.mxu0 0
      %886 = vmatpush.bf16.msra.mxu0 0
      %887 = vmatpush.bf16.msra.mxu0 0
      %888 = vmatpush.bf16.msra.mxu0 0
      %889 = vmatpush.bf16.msra.mxu0 %v663
      %890 = vmatpush.bf16.msra.mxu0 %v662
      %891 = vmatmul.bf16.gmra.mxu0 %v684
      %v892 = vpop.f32.mrf.mxu0
      %v893 = vadd.f32 %v814, %v892
      %v894 = vpop.f32.mrf.mxu0
      %v895 = vadd.f32 %v816, %v894
      %896 = vmatmul.bf16.gmra.mxu0 %v687
      %v897 = vpop.f32.mrf.mxu0
      %v898 = vadd.f32 %v819, %v897
      %v899 = vpop.f32.mrf.mxu0
      %v900 = vadd.f32 %v821, %v899
      %901 = vmatmul.bf16.gmra.mxu0 %v690
      %v902 = vpop.f32.mrf.mxu0
      %v903 = vadd.f32 %v824, %v902
      %v904 = vpop.f32.mrf.mxu0
      %v905 = vadd.f32 %v826, %v904
      %906 = vmatmul.bf16.gmra.mxu0 %v693
      %v907 = vpop.f32.mrf.mxu0
      %v908 = vadd.f32 %v829, %v907
      %v909 = vpop.f32.mrf.mxu0
      %v910 = vadd.f32 %v831, %v909
      %911 = vmatmul.bf16.gmra.mxu0 %v696
      %v912 = vpop.f32.mrf.mxu0
      %v913 = vadd.f32 %v834, %v912
      %v914 = vpop.f32.mrf.mxu0
      %v915 = vadd.f32 %v836, %v914
      %916 = vmatmul.bf16.gmra.mxu0 %v699
      %v917 = vpop.f32.mrf.mxu0
      %v918 = vadd.f32 %v839, %v917
      %v919 = vpop.f32.mrf.mxu0
      %v920 = vadd.f32 %v841, %v919
      %921 = vmatmul.bf16.gmra.mxu0 %v702
      %v922 = vpop.f32.mrf.mxu0
      %v923 = vadd.f32 %v844, %v922
      %v924 = vpop.f32.mrf.mxu0
      %v925 = vadd.f32 %v846, %v924
      %926 = vmatmul.bf16.gmra.mxu0 %v705
      %v927 = vpop.f32.mrf.mxu0
      %v928 = vadd.f32 %v849, %v927
      %v929 = vpop.f32.mrf.mxu0
      %v930 = vadd.f32 %v851, %v929
      %931 = vmatmul.bf16.gmra.mxu0 %v708
      %v932 = vpop.f32.mrf.mxu0
      %v933 = vadd.f32 %v854, %v932
      %v934 = vpop.f32.mrf.mxu0
      %v935 = vadd.f32 %v856, %v934
      %936 = vmatmul.bf16.gmra.mxu0 %v711
      %v937 = vpop.f32.mrf.mxu0
      %v938 = vadd.f32 %v859, %v937
      %v939 = vpop.f32.mrf.mxu0
      %v940 = vadd.f32 %v861, %v939
      %941 = vmatmul.bf16.gmra.mxu0 %v714
      %v942 = vpop.f32.mrf.mxu0
      %v943 = vadd.f32 %v864, %v942
      %v944 = vpop.f32.mrf.mxu0
      %v945 = vadd.f32 %v866, %v944
      %946 = vmatmul.bf16.gmra.mxu0 %v717
      %v947 = vpop.f32.mrf.mxu0
      %v948 = vadd.f32 %v869, %v947
      %v949 = vpop.f32.mrf.mxu0
      %v950 = vadd.f32 %v871, %v949
      %951 = vmatmul.bf16.gmra.mxu0 %v720
      %v952 = vpop.f32.mrf.mxu0
      %v953 = vadd.f32 %v874, %v952
      %v954 = vpop.f32.mrf.mxu0
      %v955 = vadd.f32 %v876, %v954
      %956 = vmatmul.bf16.gmra.mxu0 %v723
      %v957 = vpop.f32.mrf.mxu0
      %v958 = vadd.f32 %v879, %v957
      %v959 = vpop.f32.mrf.mxu0
      %v960 = vadd.f32 %v881, %v959
      %961 = vdwg.mxu0
      %vm962 = vcmask 392192
      %963 = vst.msk [vmem:[%s265] sm:$0xff] %vm962, %v893
      %964 = vst.msk [vmem:[%s265 + $0x8] sm:$0xff] %vm962, %v895
      %965 = vst.msk [vmem:[%s265 + $0x10] sm:$0xff] %vm962, %v898
      %966 = vst.msk [vmem:[%s265 + $0x18] sm:$0xff] %vm962, %v900
      %967 = vst.msk [vmem:[%s265 + $0x20] sm:$0xff] %vm962, %v903
      %968 = vst.msk [vmem:[%s265 + $0x28] sm:$0xff] %vm962, %v905
      %969 = vst.msk [vmem:[%s265 + $0x30] sm:$0xff] %vm962, %v908
      %970 = vst.msk [vmem:[%s265 + $0x38] sm:$0xff] %vm962, %v910
      %971 = vst.msk [vmem:[%s265 + $0x40] sm:$0xff] %vm962, %v913
      %972 = vst.msk [vmem:[%s265 + $0x48] sm:$0xff] %vm962, %v915
      %973 = vst.msk [vmem:[%s265 + $0x50] sm:$0xff] %vm962, %v918
      %974 = vst.msk [vmem:[%s265 + $0x58] sm:$0xff] %vm962, %v920
      %975 = vst.msk [vmem:[%s265 + $0x60] sm:$0xff] %vm962, %v923
      %976 = vst.msk [vmem:[%s265 + $0x68] sm:$0xff] %vm962, %v925
      %977 = vst.msk [vmem:[%s265 + $0x70] sm:$0xff] %vm962, %v928
      %978 = vst.msk [vmem:[%s265 + $0x78] sm:$0xff] %vm962, %v930
      %979 = vst.msk [vmem:[%s265 + $0x80] sm:$0xff] %vm962, %v933
      %980 = vst.msk [vmem:[%s265 + $0x88] sm:$0xff] %vm962, %v935
      %981 = vst.msk [vmem:[%s265 + $0x90] sm:$0xff] %vm962, %v938
      %982 = vst.msk [vmem:[%s265 + $0x98] sm:$0xff] %vm962, %v940
      %983 = vst.msk [vmem:[%s265 + $0xa0] sm:$0xff] %vm962, %v943
      %984 = vst.msk [vmem:[%s265 + $0xa8] sm:$0xff] %vm962, %v945
      %985 = vst.msk [vmem:[%s265 + $0xb0] sm:$0xff] %vm962, %v948
      %986 = vst.msk [vmem:[%s265 + $0xb8] sm:$0xff] %vm962, %v950
      %987 = vst.msk [vmem:[%s265 + $0xc0] sm:$0xff] %vm962, %v953
      %988 = vst.msk [vmem:[%s265 + $0xc8] sm:$0xff] %vm962, %v955
      %989 = vst.msk [vmem:[%s265 + $0xd0] sm:$0xff] %vm962, %v958
      %990 = vst.msk [vmem:[%s265 + $0xd8] sm:$0xff] %vm962, %v960
      %s991 = smul.u32 28, %s19
      %p992 = scmp.lt.s32.totalorder %s991, 55
      %s993 = scalar_select %p992, %s991, 55
      %p994 = scmp.lt.s32.totalorder %s20, 0
      %s995 = scalar_select %p994, %s20, 0
      %s996 = sadd.s32 %s995, %s993
      %s997 = smul.addr %s996, 8
      %s998 = scalar_lea.vmem %s3, %s997
      // Predicated region
      $region33: #{autoencoder_forward.11} parent=31 // pred_check
        %p999 = pneg %p135
      $region34: #{autoencoder_forward.11} parent=31 // pred_check_branch
        %1001 = sbr.rel (%p999) target = $region36
      $region35: #{autoencoder_forward.11} parent=31 // pred_region
        %s1002 = smul.u32 28, %s19
      $region36: #{autoencoder_forward.11} parent=31 // pred_fallthru
        _
    $region32: #{autoencoder_forward.11} parent=5 // pred_fallthru
      _
    %p1003 = scmp.le.s32.totalorder 2, %s9
    // Predicated region
    $region37: #{autoencoder_forward.11} parent=5 // pred_check
      %p1004 = pneg %p1003
    $region38: #{autoencoder_forward.11} parent=5 // pred_check_branch
      %1006 = sbr.rel (%p1004) target = $region40
    $region39: #{autoencoder_forward.11} parent=5 // pred_region
      %s1007 = ssub.s32 %s9, 2
      // Predicated region
      $region41: #{autoencoder_forward.11} parent=39 // pred_check
        %p1008 = pneg %p141
      $region42: #{autoencoder_forward.11} parent=39 // pred_check_branch
        %1010 = sbr.rel (%p1008) target = $region44
      $region43: #{autoencoder_forward.11} parent=39 // pred_region
        %s1011 = smul.u32 28, %s22
        %p1012 = scmp.lt.s32.totalorder %s1011, 55
        %s1013 = scalar_select %p1012, %s1011, 55
        %p1014 = scmp.lt.s32.totalorder %s23, 0
        %s1015 = scalar_select %p1014, %s23, 0
        %s1016 = sadd.s32 %s1015, %s1013
        %s1017 = smul.addr %s1016, 8
        %s1018 = scalar_lea.vmem %s3, %s1017
      $region44: #{autoencoder_forward.11} parent=39 // pred_fallthru
        _
    $region40: #{autoencoder_forward.11} parent=5 // pred_fallthru
      _
  $region6: #{autoencoder_forward.11} parent=0 // loop_footer
    %s13 = sadd.s32 1, %s9
  $region7: #{autoencoder_forward.11} parent=0 // loop_footer_branch
    %8 = sbr.rel target = $region3
  $region8: #{autoencoder_forward.11} parent=0 // loop_exit
    _

</llo_original>
